<compile_context>
chip_gen: v7x
topology: tpu7x:2x2x1
jax: 0.10.0
libtpu: 0.0.40
codegen_flags: <defaults>
</compile_context>

<pallas_src>
import math
from functools import partial

import numpy as np

import jax
import jax.numpy as jnp
from jax.experimental import pallas as pl
from jax.experimental.pallas import tpu as pltpu

BN_EPS = 1e-3        # BatchNorm2d(eps=0.001) in DSConvBlock
FUSE_EPS = 1e-4      # BiFPNBlock epsilon
LEAKY_SLOPE = 0.01   # LeakyReLU negative_slope


# ----------------------------------------------------------------------------
# Host-side: bilinear (align_corners=True) interpolation matrices.
#   out[oh, ow] = sum_{h,w} A[oh, h] * A[ow, w] * in[h, w]
# Flattened (row-major) this is a single matmul with R = kron(A, A).
# We pass R^T so the kernel computes  (C, P_in) @ (P_in, P_out).
# ----------------------------------------------------------------------------
def _interp_matrix(out_size, in_size):
    A = np.zeros((out_size, in_size), np.float32)
    if out_size == 1:
        A[0, 0] = 1.0
        return A
    scale = (in_size - 1) / (out_size - 1)
    for o in range(out_size):
        src = o * scale
        i0 = int(np.floor(src))
        i0 = min(max(i0, 0), in_size - 1)
        i1 = min(i0 + 1, in_size - 1)
        f = src - i0
        A[o, i0] += 1.0 - f
        A[o, i1] += f
    return A


def _resize_matrix_T(out_hw, in_hw):
    A = _interp_matrix(out_hw, in_hw)          # (O, I)
    R = np.kron(A, A)                          # (O*O, I*I)
    return jnp.asarray(R.T, dtype=jnp.float32) # (P_in, P_out)


# ----------------------------------------------------------------------------
# The single fused BiFPN kernel.  One grid step == one batch element.
# Every feature map inside the kernel is (C, P) with P = H*W (row-major).
# ----------------------------------------------------------------------------
def _bifpn_kernel(w1_ref, w2_ref,
                  f1_ref, f2_ref, f3_ref, f4_ref, f5_ref,
                  dwb_ref, pw_ref,
                  up54_ref, up43_ref, up32_ref, up21_ref,
                  dn12_ref, dn23_ref, dn34_ref, dn45_ref,
                  o1_ref, o2_ref, o3_ref, o4_ref, o5_ref,
                  pad_ref, *, C, sizes):
    f32 = jnp.float32

    def resize(x, rt_ref):
        # x: (C, P_in); rt_ref: (P_in, P_out) Kronecker bilinear matrix (transposed).
        return jnp.dot(x, rt_ref[...], preferred_element_type=f32)

    # ---- memoised W-border masks (trace-time cache, one iota per size). ----
    mask_cache = {}

    def border_masks(W, P):
        if W not in mask_cache:
            idx = jax.lax.broadcasted_iota(jnp.int32, (1, P), 1)
            widx = (idx & (W - 1)) if (W & (W - 1)) == 0 else (idx % W)
            mL = jnp.where(widx != 0, f32(1.0), f32(0.0))       # kill w == 0 taps
            mR = jnp.where(widx != W - 1, f32(1.0), f32(0.0))   # kill w == W-1 taps
            mask_cache[W] = (mL, mR)
        return mask_cache[W]

    def dsconv(blk, x, W):
        # x: (C, P) fused input of a square W x W feature map, P = W*W.
        P = x.shape[1]

        # ---- zero-pad by one pixel: in flattened form that is W+1 zeros on
        #      each side; H-border reads then land in the zero pad and the
        #      W-border reads are killed by the left/right masks below. ----
        pad_ref[:, 0:W + 1] = jnp.zeros((C, W + 1), f32)
        pad_ref[:, W + 1:W + 1 + P] = x
        pad_ref[:, W + 1 + P:2 * W + 2 + P] = jnp.zeros((C, W + 1), f32)

        # ---- 3x3 depthwise conv (dw-BN scale folded into the taps):
        #      9 shifted whole-image slices (VPU). ----
        dwb = dwb_ref[blk]                                 # (C, 10): 9 taps + bias
        accL = jnp.zeros((C, P), f32)
        accM = jnp.zeros((C, P), f32)
        accR = jnp.zeros((C, P), f32)
        for di in range(3):
            base = di * W
            accL = accL + pad_ref[:, base + 0:base + 0 + P] * dwb[:, 3 * di + 0:3 * di + 1]
            accM = accM + pad_ref[:, base + 1:base + 1 + P] * dwb[:, 3 * di + 1:3 * di + 2]
            accR = accR + pad_ref[:, base + 2:base + 2 + P] * dwb[:, 3 * di + 2:3 * di + 3]

        mL, mR = border_masks(W, P)
        y = accL * mL + accM + accR * mR

        # ---- 1x1 pointwise conv (both BNs folded) == channel matmul on the
        #      MXU, plus a single folded bias and LeakyReLU(0.01). ----
        r = jnp.dot(pw_ref[blk], y, preferred_element_type=f32)   # (C, P)
        r = r + dwb[:, 9:10]
        return jnp.maximum(r, LEAKY_SLOPE * r)

    s1, s2, s3, s4, s5 = sizes
    p1 = f1_ref[0]
    p2 = f2_ref[0]
    p3 = f3_ref[0]
    p4 = f4_ref[0]
    p5 = f5_ref[0]

    # ---- top-down path (2-term fusion; no zero-weighted third operand). ----
    p5_td = p5
    p4_td = dsconv(0, w1_ref[0, 0] * p4 + w1_ref[1, 0] * resize(p5_td, up54_ref), s4)
    p3_td = dsconv(1, w1_ref[0, 1] * p3 + w1_ref[1, 1] * resize(p4_td, up43_ref), s3)
    p2_td = dsconv(2, w1_ref[0, 2] * p2 + w1_ref[1, 2] * resize(p3_td, up32_ref), s2)
    p1_td = dsconv(3, w1_ref[0, 3] * p1 + w1_ref[1, 3] * resize(p2_td, up21_ref), s1)

    # ---- bottom-up path (3-term fusion). ----
    p1_out = p1_td
    p2_out = dsconv(4, w2_ref[0, 0] * p2 + w2_ref[1, 0] * p2_td
                       + w2_ref[2, 0] * resize(p1_out, dn12_ref), s2)
    p3_out = dsconv(5, w2_ref[0, 1] * p3 + w2_ref[1, 1] * p3_td
                       + w2_ref[2, 1] * resize(p2_out, dn23_ref), s3)
    p4_out = dsconv(6, w2_ref[0, 2] * p4 + w2_ref[1, 2] * p4_td
                       + w2_ref[2, 2] * resize(p3_out, dn34_ref), s4)
    p5_out = dsconv(7, w2_ref[0, 3] * p5 + w2_ref[1, 3] * p5_td
                       + w2_ref[2, 3] * resize(p4_out, dn45_ref), s5)

    o1_ref[0] = p1_out
    o2_ref[0] = p2_out
    o3_ref[0] = p3_out
    o4_ref[0] = p4_out
    o5_ref[0] = p5_out


# ----------------------------------------------------------------------------
# Wrapper: fold BN into weights, build resize matrices, launch the fused kernel.
# Inputs / outputs are NCHW (exactly the PyTorch layout).
# ----------------------------------------------------------------------------
_BLOCK_ORDER = ["p4_td", "p3_td", "p2_td", "p1_td",
                "p2_out", "p3_out", "p4_out", "p5_out"]


def _fold_dsconv(p):
    """Fold both inference BatchNorms into (dw taps | bias) and pw matrix."""
    dw, bn, pw = p["dw"], p["bn"], p["pw"]
    dbs, dbb, pbs, pbb = bn[:, 0], bn[:, 1], bn[:, 2], bn[:, 3]
    dw_f = dw * dbs[:, None]                                 # (C, 9)
    pw_f = pw * pbs[:, None]                                 # (C, C)
    bias = pbs * (pw @ dbb) + pbb                            # (C,)
    dwb = jnp.concatenate([dw_f, bias[:, None]], axis=1)     # (C, 10)
    return dwb, pw_f


def bifpn_forward(inputs, params):
    N, C = inputs[0].shape[:2]
    sizes = tuple(int(x.shape[2]) for x in inputs)          # (s1..s5), s_i == 2*s_{i+1}
    Ps = tuple(s * s for s in sizes)

    # w1 / w2 ReLU-normalisation (matches the torch forward).
    w1 = jax.nn.relu(params["w1"])
    w1 = w1 / (jnp.sum(w1, axis=0) + FUSE_EPS)
    w2 = jax.nn.relu(params["w2"])
    w2 = w2 / (jnp.sum(w2, axis=0) + FUSE_EPS)

    # Flatten spatial dims onto the lane axis: (N, C, H, W) -> (N, C, H*W). Free.
    feats = [x.reshape(N, C, -1) for x in inputs]

    folded = [_fold_dsconv(params[n]) for n in _BLOCK_ORDER]
    dwb_all = jnp.stack([f[0] for f in folded])              # (8, C, 10)
    pw_all = jnp.stack([f[1] for f in folded])               # (8, C, C)

    # Bilinear (align_corners=True) resize matrices, transposed: (P_in, P_out).
    up_mats = [_resize_matrix_T(sizes[i], sizes[i + 1]) for i in (3, 2, 1, 0)]
    dn_mats = [_resize_matrix_T(sizes[i + 1], sizes[i]) for i in (0, 1, 2, 3)]

    def feat_spec(P):
        return pl.BlockSpec((1, C, P), lambda n: (n, 0, 0))

    def const_spec(shp):
        return pl.BlockSpec(shp, lambda n, L=len(shp): (0,) * L)

    smem_spec = pl.BlockSpec(memory_space=pltpu.MemorySpace.SMEM)

    in_specs = ([smem_spec, smem_spec]
                + [feat_spec(P) for P in Ps]
                + [const_spec(dwb_all.shape), const_spec(pw_all.shape)]
                + [const_spec(m.shape) for m in up_mats]
                + [const_spec(m.shape) for m in dn_mats])
    out_specs = [feat_spec(P) for P in Ps]
    out_shape = tuple(jax.ShapeDtypeStruct((N, C, P), jnp.float32) for P in Ps)

    pad_width = max(Ps) + 2 * max(sizes) + 2

    kernel = partial(_bifpn_kernel, C=C, sizes=sizes)
    outs = pl.pallas_call(
        kernel,
        grid=(N,),
        in_specs=in_specs,
        out_specs=out_specs,
        out_shape=out_shape,
        scratch_shapes=[pltpu.VMEM((C, pad_width), jnp.float32)],
        compiler_params=pltpu.CompilerParams(
            dimension_semantics=("parallel",),          # batch elems independent
            vmem_limit_bytes=32 * 1024 * 1024),
    )(w1, w2, *feats, dwb_all, pw_all, *up_mats, *dn_mats)

    return tuple(o.reshape(N, C, s, s) for o, s in zip(outs, sizes))


# ----------------------------------------------------------------------------
# Deterministic parameter construction (DSConvBlock shapes, BN as folded affine
# columns — the Pallas wrapper folds these further into the conv weights).
#   dw : torch (C,1,3,3)        -> (C, 9), column = di*3 + dj
#   pw : torch (C_out,C_in,1,1) -> (C_out, C_in)
#   bn : folded affine columns [dbs, dbb, pbs, pbb], each (C,)
# ----------------------------------------------------------------------------
def make_dsconv_params(key, C):
    ks = jax.random.split(key, 10)
    dw = 0.2 * jax.random.normal(ks[0], (C, 9), jnp.float32)
    dg = 1.0 + 0.1 * jax.random.normal(ks[1], (C,), jnp.float32)
    db = 0.1 * jax.random.normal(ks[2], (C,), jnp.float32)
    dm = 0.05 * jax.random.normal(ks[3], (C,), jnp.float32)
    dv = jax.random.uniform(ks[4], (C,), jnp.float32, minval=0.5, maxval=1.5)
    pw = (1.0 / math.sqrt(C)) * jax.random.normal(ks[5], (C, C), jnp.float32)
    pg = 1.0 + 0.1 * jax.random.normal(ks[6], (C,), jnp.float32)
    pb = 0.1 * jax.random.normal(ks[7], (C,), jnp.float32)
    pm = 0.05 * jax.random.normal(ks[8], (C,), jnp.float32)
    pv = jax.random.uniform(ks[9], (C,), jnp.float32, minval=0.5, maxval=1.5)

    dbs = dg / jnp.sqrt(dv + BN_EPS)
    dbb = db - dm * dbs
    pbs = pg / jnp.sqrt(pv + BN_EPS)
    pbb = pb - pm * pbs
    bn = jnp.stack([dbs, dbb, pbs, pbb], axis=1)   # (C, 4)
    return dict(dw=dw, bn=bn, pw=pw)


# ----------------------------------------------------------------------------
# Pure-JAX reference (mirrors the PyTorch module) for a correctness check.
# ----------------------------------------------------------------------------
def _ref_dsconv(x, p):
    C = x.shape[1]
    dw = p["dw"].reshape(C, 1, 3, 3)
    y = jax.lax.conv_general_dilated(
        x, dw, window_strides=(1, 1), padding=((1, 1), (1, 1)),
        dimension_numbers=("NCHW", "OIHW", "NCHW"), feature_group_count=C)
    bc = lambda v: v.reshape(1, C, 1, 1)
    bn = p["bn"]
    y = y * bc(bn[:, 0]) + bc(bn[:, 1])
    r = jnp.einsum("oi,nihw->nohw", p["pw"], y)
    r = r * bc(bn[:, 2]) + bc(bn[:, 3])
    return jnp.where(r > 0, r, LEAKY_SLOPE * r)


def _ref_resize(x, out_hw):
    N, C, H, W = x.shape

    def coords(O, I):
        if O > 1:
            c = jnp.arange(O, dtype=jnp.float32) * ((I - 1) / (O - 1))
        else:
            c = jnp.zeros((O,), jnp.float32)
        i0 = jnp.clip(jnp.floor(c).astype(jnp.int32), 0, I - 1)
        i1 = jnp.clip(i0 + 1, 0, I - 1)
        return i0, i1, c - i0.astype(jnp.float32)

    h0, h1, fh = coords(out_hw, H)
    w0, w1, fw = coords(out_hw, W)
    xh0 = x[:, :, h0]
    xh1 = x[:, :, h1]
    fw_ = fw[None, None, None, :]
    top = xh0[:, :, :, w0] * (1.0 - fw_) + xh0[:, :, :, w1] * fw_
    bot = xh1[:, :, :, w0] * (1.0 - fw_) + xh1[:, :, :, w1] * fw_
    fh_ = fh[None, None, :, None]
    return top * (1.0 - fh_) + bot * fh_


def _ref_bifpn(inputs, params):
    p1_x, p2_x, p3_x, p4_x, p5_x = inputs
    w1 = jax.nn.relu(params["w1"])
    w1 = w1 / (jnp.sum(w1, axis=0) + FUSE_EPS)
    w2 = jax.nn.relu(params["w2"])
    w2 = w2 / (jnp.sum(w2, axis=0) + FUSE_EPS)
    up = lambda x: _ref_resize(x, x.shape[2] * 2)
    dn = lambda x: _ref_resize(x, x.shape[2] // 2)

    p5_td = p5_x
    p4_td = _ref_dsconv(w1[0, 0] * p4_x + w1[1, 0] * up(p5_td), params["p4_td"])
    p3_td = _ref_dsconv(w1[0, 1] * p3_x + w1[1, 1] * up(p4_td), params["p3_td"])
    p2_td = _ref_dsconv(w1[0, 2] * p2_x + w1[1, 2] * up(p3_td), params["p2_td"])
    p1_td = _ref_dsconv(w1[0, 3] * p1_x + w1[1, 3] * up(p2_td), params["p1_td"])
    p1_out = p1_td
    p2_out = _ref_dsconv(w2[0, 0] * p2_x + w2[1, 0] * p2_td + w2[2, 0] * dn(p1_out), params["p2_out"])
    p3_out = _ref_dsconv(w2[0, 1] * p3_x + w2[1, 1] * p3_td + w2[2, 1] * dn(p2_out), params["p3_out"])
    p4_out = _ref_dsconv(w2[0, 2] * p4_x + w2[1, 2] * p4_td + w2[2, 2] * dn(p3_out), params["p4_out"])
    p5_out = _ref_dsconv(w2[0, 3] * p5_x + w2[1, 3] * p5_td + w2[2, 3] * dn(p4_out), params["p5_out"])
    return (p1_out, p2_out, p3_out, p4_out, p5_out)


if __name__ == "__main__":
    N = 2          # batch
    C = 16         # feature_size
    sizes = [32, 16, 8, 4, 2]   # p1 .. p5 spatial resolutions (p_i is 2x p_{i+1})

    key = jax.random.PRNGKey(0)
    k_in, k_par = jax.random.split(key)

    kin = jax.random.split(k_in, 5)
    inputs = tuple(
        jax.random.normal(kin[i], (N, C, s, s), jnp.float32)   # NCHW, as in PyTorch
        for i, s in enumerate(sizes))

    kpar = jax.random.split(k_par, len(_BLOCK_ORDER))
    params = {n: make_dsconv_params(kpar[i], C) for i, n in enumerate(_BLOCK_ORDER)}
    params["w1"] = jnp.full((2, 4), 0.5, jnp.float32)   # nn.Parameter fill_(0.5)
    params["w2"] = jnp.full((3, 4), 0.5, jnp.float32)

    outs = bifpn_forward(inputs, params)
    outs = jax.block_until_ready(outs)

    refs = _ref_bifpn(inputs, params)
    for o, x, r in zip(outs, inputs, refs):
        assert o.shape == x.shape and o.dtype == jnp.float32
        assert bool(jnp.all(jnp.isfinite(o)))
        err = float(jnp.max(jnp.abs(o - r)))
        assert err < 5e-2, f"kernel vs reference mismatch: max abs err = {err}"

    print("KERNEL_OK")
</pallas_src>

<mosaic_0001>
module attributes {stable_mosaic.version = 11 : i64} {
  func.func @_bifpn_kernel(%arg0: i32, %arg1: memref<2x4xf32, #tpu.memory_space<smem>>, %arg2: memref<3x4xf32, #tpu.memory_space<smem>>, %arg3: memref<1x16x1024xf32, #tpu.memory_space<vmem>>, %arg4: memref<1x16x256xf32, #tpu.memory_space<vmem>>, %arg5: memref<1x16x64xf32, #tpu.memory_space<vmem>>, %arg6: memref<1x16x16xf32, #tpu.memory_space<vmem>>, %arg7: memref<1x16x4xf32, #tpu.memory_space<vmem>>, %arg8: memref<8x16x10xf32, #tpu.memory_space<vmem>>, %arg9: memref<8x16x16xf32, #tpu.memory_space<vmem>>, %arg10: memref<4x16xf32, #tpu.memory_space<vmem>>, %arg11: memref<16x64xf32, #tpu.memory_space<vmem>>, %arg12: memref<64x256xf32, #tpu.memory_space<vmem>>, %arg13: memref<256x1024xf32, #tpu.memory_space<vmem>>, %arg14: memref<1024x256xf32, #tpu.memory_space<vmem>>, %arg15: memref<256x64xf32, #tpu.memory_space<vmem>>, %arg16: memref<64x16xf32, #tpu.memory_space<vmem>>, %arg17: memref<16x4xf32, #tpu.memory_space<vmem>>, %arg18: memref<1x16x1024xf32, #tpu.memory_space<vmem>>, %arg19: memref<1x16x256xf32, #tpu.memory_space<vmem>>, %arg20: memref<1x16x64xf32, #tpu.memory_space<vmem>>, %arg21: memref<1x16x16xf32, #tpu.memory_space<vmem>>, %arg22: memref<1x16x4xf32, #tpu.memory_space<vmem>>, %arg23: memref<16x1090xf32, #tpu.memory_space<vmem>>) attributes {dimension_semantics = [#tpu.dimension_semantics<parallel>], iteration_bounds = array<i64: 2>, scalar_prefetch = 0 : i64, scratch_operands = 1 : i64, tpu.core_type = #tpu.core_type<tc>, window_params = [{transform_indices = @transform_0, window_bounds = array<i64: 2, 4>}, {transform_indices = @transform_1, window_bounds = array<i64: 3, 4>}, {transform_indices = @transform_2, window_bounds = array<i64: 1, 16, 1024>}, {transform_indices = @transform_3, window_bounds = array<i64: 1, 16, 256>}, {transform_indices = @transform_4, window_bounds = array<i64: 1, 16, 64>}, {transform_indices = @transform_5, window_bounds = array<i64: 1, 16, 16>}, {transform_indices = @transform_6, window_bounds = array<i64: 1, 16, 4>}, {pipeline_mode = #tpu.pipeline_mode<synchronous>, transform_indices = @transform_7, window_bounds = array<i64: 8, 16, 10>}, {pipeline_mode = #tpu.pipeline_mode<synchronous>, transform_indices = @transform_8, window_bounds = array<i64: 8, 16, 16>}, {pipeline_mode = #tpu.pipeline_mode<synchronous>, transform_indices = @transform_9, window_bounds = array<i64: 4, 16>}, {pipeline_mode = #tpu.pipeline_mode<synchronous>, transform_indices = @transform_10, window_bounds = array<i64: 16, 64>}, {pipeline_mode = #tpu.pipeline_mode<synchronous>, transform_indices = @transform_11, window_bounds = array<i64: 64, 256>}, {pipeline_mode = #tpu.pipeline_mode<synchronous>, transform_indices = @transform_12, window_bounds = array<i64: 256, 1024>}, {pipeline_mode = #tpu.pipeline_mode<synchronous>, transform_indices = @transform_13, window_bounds = array<i64: 1024, 256>}, {pipeline_mode = #tpu.pipeline_mode<synchronous>, transform_indices = @transform_14, window_bounds = array<i64: 256, 64>}, {pipeline_mode = #tpu.pipeline_mode<synchronous>, transform_indices = @transform_15, window_bounds = array<i64: 64, 16>}, {pipeline_mode = #tpu.pipeline_mode<synchronous>, transform_indices = @transform_16, window_bounds = array<i64: 16, 4>}, {transform_indices = @transform_17, window_bounds = array<i64: 1, 16, 1024>}, {transform_indices = @transform_18, window_bounds = array<i64: 1, 16, 256>}, {transform_indices = @transform_19, window_bounds = array<i64: 1, 16, 64>}, {transform_indices = @transform_20, window_bounds = array<i64: 1, 16, 16>}, {transform_indices = @transform_21, window_bounds = array<i64: 1, 16, 4>}]} {
    %c0 = arith.constant 0 : index
    %c0_0 = arith.constant 0 : index
    %c0_1 = arith.constant 0 : index
    %0 = vector.load %arg3[%c0, %c0_0, %c0_1] : memref<1x16x1024xf32, #tpu.memory_space<vmem>>, vector<1x16x1024xf32>
    %1 = vector.shape_cast %0 : vector<1x16x1024xf32> to vector<16x1024xf32>
    %c0_2 = arith.constant 0 : index
    %c0_3 = arith.constant 0 : index
    %c0_4 = arith.constant 0 : index
    %2 = vector.load %arg4[%c0_2, %c0_3, %c0_4] : memref<1x16x256xf32, #tpu.memory_space<vmem>>, vector<1x16x256xf32>
    %3 = vector.shape_cast %2 : vector<1x16x256xf32> to vector<16x256xf32>
    %c0_5 = arith.constant 0 : index
    %c0_6 = arith.constant 0 : index
    %c0_7 = arith.constant 0 : index
    %4 = vector.load %arg5[%c0_5, %c0_6, %c0_7] : memref<1x16x64xf32, #tpu.memory_space<vmem>>, vector<1x16x64xf32>
    %5 = vector.shape_cast %4 : vector<1x16x64xf32> to vector<16x64xf32>
    %c0_8 = arith.constant 0 : index
    %c0_9 = arith.constant 0 : index
    %c0_10 = arith.constant 0 : index
    %6 = vector.load %arg6[%c0_8, %c0_9, %c0_10] : memref<1x16x16xf32, #tpu.memory_space<vmem>>, vector<1x16x16xf32>
    %7 = vector.shape_cast %6 : vector<1x16x16xf32> to vector<16x16xf32>
    %c0_11 = arith.constant 0 : index
    %c0_12 = arith.constant 0 : index
    %c0_13 = arith.constant 0 : index
    %8 = vector.load %arg7[%c0_11, %c0_12, %c0_13] : memref<1x16x4xf32, #tpu.memory_space<vmem>>, vector<1x16x4xf32>
    %9 = vector.shape_cast %8 : vector<1x16x4xf32> to vector<16x4xf32>
    %c0_14 = arith.constant 0 : index
    %c0_15 = arith.constant 0 : index
    %10 = memref.load %arg1[%c0_14, %c0_15] : memref<2x4xf32, #tpu.memory_space<smem>>
    %11 = vector.broadcast %10 : f32 to vector<16x16xf32>
    %12 = arith.mulf %11, %7 : vector<16x16xf32>
    %c1 = arith.constant 1 : index
    %c0_16 = arith.constant 0 : index
    %13 = memref.load %arg1[%c1, %c0_16] : memref<2x4xf32, #tpu.memory_space<smem>>
    %c0_17 = arith.constant 0 : index
    %c0_18 = arith.constant 0 : index
    %14 = vector.load %arg10[%c0_17, %c0_18] : memref<4x16xf32, #tpu.memory_space<vmem>>, vector<4x16xf32>
    %cst = arith.constant dense<0.000000e+00> : vector<16x16xf32>
    %15 = tpu.matmul %9, %14, %cst {dimension_numbers = #tpu.dot_dimension_numbers<[1], [0], [0], [1], [0, 0, 1, 1], [], []>} : vector<16x4xf32>, vector<4x16xf32>, vector<16x16xf32> -> vector<16x16xf32>
    %16 = vector.broadcast %13 : f32 to vector<16x16xf32>
    %17 = arith.mulf %16, %15 : vector<16x16xf32>
    %18 = arith.addf %12, %17 : vector<16x16xf32>
    %cst_19 = arith.constant 0.000000e+00 : f32
    %19 = vector.broadcast %cst_19 : f32 to vector<16x5xf32>
    %c0_20 = arith.constant 0 : index
    %c0_21 = arith.constant 0 : index
    %20 = vector.load %arg23[%c0_20, %c0_21] : memref<16x1090xf32, #tpu.memory_space<vmem>>, vector<16x5xf32>
    tpu.vector_store %arg23[%c0_20, %c0_21], %19 {strides = array<i32>} : memref<16x1090xf32, #tpu.memory_space<vmem>>, vector<16x5xf32>,
    %c0_22 = arith.constant 0 : index
    %c5 = arith.constant 5 : index
    %21 = vector.load %arg23[%c0_22, %c5] : memref<16x1090xf32, #tpu.memory_space<vmem>>, vector<16x16xf32>
    tpu.vector_store %arg23[%c0_22, %c5], %18 {strides = array<i32>} : memref<16x1090xf32, #tpu.memory_space<vmem>>, vector<16x16xf32>,
    %cst_23 = arith.constant 0.000000e+00 : f32
    %22 = vector.broadcast %cst_23 : f32 to vector<16x5xf32>
    %c0_24 = arith.constant 0 : index
    %c21 = arith.constant 21 : index
    %23 = vector.load %arg23[%c0_24, %c21] : memref<16x1090xf32, #tpu.memory_space<vmem>>, vector<16x5xf32>
    tpu.vector_store %arg23[%c0_24, %c21], %22 {strides = array<i32>} : memref<16x1090xf32, #tpu.memory_space<vmem>>, vector<16x5xf32>,
    %c0_25 = arith.constant 0 : index
    %c0_26 = arith.constant 0 : index
    %c0_27 = arith.constant 0 : index
    %24 = vector.load %arg8[%c0_25, %c0_26, %c0_27] : memref<8x16x10xf32, #tpu.memory_space<vmem>>, vector<1x16x10xf32>
    %25 = vector.shape_cast %24 : vector<1x16x10xf32> to vector<16x10xf32>
    %cst_28 = arith.constant 0.000000e+00 : f32
    %26 = vector.broadcast %cst_28 : f32 to vector<16x16xf32>
    %cst_29 = arith.constant 0.000000e+00 : f32
    %27 = vector.broadcast %cst_29 : f32 to vector<16x16xf32>
    %cst_30 = arith.constant 0.000000e+00 : f32
    %28 = vector.broadcast %cst_30 : f32 to vector<16x16xf32>
    %c0_31 = arith.constant 0 : index
    %c0_32 = arith.constant 0 : index
    %29 = vector.load %arg23[%c0_31, %c0_32] : memref<16x1090xf32, #tpu.memory_space<vmem>>, vector<16x16xf32>
    %30 = vector.extract_strided_slice %25 {offsets = [0, 0], sizes = [16, 1], strides = [1, 1]} : vector<16x10xf32> to vector<16x1xf32>
    %31 = vector.broadcast %30 : vector<16x1xf32> to vector<16x16xf32>
    %32 = arith.mulf %29, %31 : vector<16x16xf32>
    %33 = arith.addf %26, %32 : vector<16x16xf32>
    %c0_33 = arith.constant 0 : index
    %c1_34 = arith.constant 1 : index
    %34 = vector.load %arg23[%c0_33, %c1_34] : memref<16x1090xf32, #tpu.memory_space<vmem>>, vector<16x16xf32>
    %35 = vector.extract_strided_slice %25 {offsets = [0, 1], sizes = [16, 1], strides = [1, 1]} : vector<16x10xf32> to vector<16x1xf32>
    %36 = vector.broadcast %35 : vector<16x1xf32> to vector<16x16xf32>
    %37 = arith.mulf %34, %36 : vector<16x16xf32>
    %38 = arith.addf %27, %37 : vector<16x16xf32>
    %c0_35 = arith.constant 0 : index
    %c2 = arith.constant 2 : index
    %39 = vector.load %arg23[%c0_35, %c2] : memref<16x1090xf32, #tpu.memory_space<vmem>>, vector<16x16xf32>
    %40 = vector.extract_strided_slice %25 {offsets = [0, 2], sizes = [16, 1], strides = [1, 1]} : vector<16x10xf32> to vector<16x1xf32>
    %41 = vector.broadcast %40 : vector<16x1xf32> to vector<16x16xf32>
    %42 = arith.mulf %39, %41 : vector<16x16xf32>
    %43 = arith.addf %28, %42 : vector<16x16xf32>
    %c0_36 = arith.constant 0 : index
    %c4 = arith.constant 4 : index
    %44 = vector.load %arg23[%c0_36, %c4] : memref<16x1090xf32, #tpu.memory_space<vmem>>, vector<16x16xf32>
    %45 = vector.extract_strided_slice %25 {offsets = [0, 3], sizes = [16, 1], strides = [1, 1]} : vector<16x10xf32> to vector<16x1xf32>
    %46 = vector.broadcast %45 : vector<16x1xf32> to vector<16x16xf32>
    %47 = arith.mulf %44, %46 : vector<16x16xf32>
    %48 = arith.addf %33, %47 : vector<16x16xf32>
    %c0_37 = arith.constant 0 : index
    %c5_38 = arith.constant 5 : index
    %49 = vector.load %arg23[%c0_37, %c5_38] : memref<16x1090xf32, #tpu.memory_space<vmem>>, vector<16x16xf32>
    %50 = vector.extract_strided_slice %25 {offsets = [0, 4], sizes = [16, 1], strides = [1, 1]} : vector<16x10xf32> to vector<16x1xf32>
    %51 = vector.broadcast %50 : vector<16x1xf32> to vector<16x16xf32>
    %52 = arith.mulf %49, %51 : vector<16x16xf32>
    %53 = arith.addf %38, %52 : vector<16x16xf32>
    %c0_39 = arith.constant 0 : index
    %c6 = arith.constant 6 : index
    %54 = vector.load %arg23[%c0_39, %c6] : memref<16x1090xf32, #tpu.memory_space<vmem>>, vector<16x16xf32>
    %55 = vector.extract_strided_slice %25 {offsets = [0, 5], sizes = [16, 1], strides = [1, 1]} : vector<16x10xf32> to vector<16x1xf32>
    %56 = vector.broadcast %55 : vector<16x1xf32> to vector<16x16xf32>
    %57 = arith.mulf %54, %56 : vector<16x16xf32>
    %58 = arith.addf %43, %57 : vector<16x16xf32>
    %c0_40 = arith.constant 0 : index
    %c8 = arith.constant 8 : index
    %59 = vector.load %arg23[%c0_40, %c8] : memref<16x1090xf32, #tpu.memory_space<vmem>>, vector<16x16xf32>
    %60 = vector.extract_strided_slice %25 {offsets = [0, 6], sizes = [16, 1], strides = [1, 1]} : vector<16x10xf32> to vector<16x1xf32>
    %61 = vector.broadcast %60 : vector<16x1xf32> to vector<16x16xf32>
    %62 = arith.mulf %59, %61 : vector<16x16xf32>
    %63 = arith.addf %48, %62 : vector<16x16xf32>
    %c0_41 = arith.constant 0 : index
    %c9 = arith.constant 9 : index
    %64 = vector.load %arg23[%c0_41, %c9] : memref<16x1090xf32, #tpu.memory_space<vmem>>, vector<16x16xf32>
    %65 = vector.extract_strided_slice %25 {offsets = [0, 7], sizes = [16, 1], strides = [1, 1]} : vector<16x10xf32> to vector<16x1xf32>
    %66 = vector.broadcast %65 : vector<16x1xf32> to vector<16x16xf32>
    %67 = arith.mulf %64, %66 : vector<16x16xf32>
    %68 = arith.addf %53, %67 : vector<16x16xf32>
    %c0_42 = arith.constant 0 : index
    %c10 = arith.constant 10 : index
    %69 = vector.load %arg23[%c0_42, %c10] : memref<16x1090xf32, #tpu.memory_space<vmem>>, vector<16x16xf32>
    %70 = vector.extract_strided_slice %25 {offsets = [0, 8], sizes = [16, 1], strides = [1, 1]} : vector<16x10xf32> to vector<16x1xf32>
    %71 = vector.broadcast %70 : vector<16x1xf32> to vector<16x16xf32>
    %72 = arith.mulf %69, %71 : vector<16x16xf32>
    %73 = arith.addf %58, %72 : vector<16x16xf32>
    %74 = tpu.iota {dimensions = array<i32: 1>} : vector<1x16xi32>
    %c3_i32 = arith.constant 3 : i32
    %75 = vector.broadcast %c3_i32 : i32 to vector<1x16xi32>
    %76 = arith.andi %74, %75 : vector<1x16xi32>
    %c0_i32 = arith.constant 0 : i32
    %77 = vector.broadcast %c0_i32 : i32 to vector<1x16xi32>
    %78 = arith.cmpi ne, %76, %77 : vector<1x16xi32>
    %cst_43 = arith.constant 1.000000e+00 : f32
    %cst_44 = arith.constant 0.000000e+00 : f32
    %79 = vector.broadcast %cst_43 : f32 to vector<1x16xf32>
    %80 = vector.broadcast %cst_44 : f32 to vector<1x16xf32>
    %81 = arith.select %78, %79, %80 : vector<1x16xi1>, vector<1x16xf32>
    %c3_i32_45 = arith.constant 3 : i32
    %82 = vector.broadcast %c3_i32_45 : i32 to vector<1x16xi32>
    %83 = arith.cmpi ne, %76, %82 : vector<1x16xi32>
    %cst_46 = arith.constant 1.000000e+00 : f32
    %cst_47 = arith.constant 0.000000e+00 : f32
    %84 = vector.broadcast %cst_46 : f32 to vector<1x16xf32>
    %85 = vector.broadcast %cst_47 : f32 to vector<1x16xf32>
    %86 = arith.select %83, %84, %85 : vector<1x16xi1>, vector<1x16xf32>
    %87 = vector.broadcast %81 : vector<1x16xf32> to vector<16x16xf32>
    %88 = arith.mulf %63, %87 : vector<16x16xf32>
    %89 = arith.addf %88, %68 : vector<16x16xf32>
    %90 = vector.broadcast %86 : vector<1x16xf32> to vector<16x16xf32>
    %91 = arith.mulf %73, %90 : vector<16x16xf32>
    %92 = arith.addf %89, %91 : vector<16x16xf32>
    %c0_48 = arith.constant 0 : index
    %c0_49 = arith.constant 0 : index
    %c0_50 = arith.constant 0 : index
    %93 = vector.load %arg9[%c0_48, %c0_49, %c0_50] : memref<8x16x16xf32, #tpu.memory_space<vmem>>, vector<1x16x16xf32>
    %94 = vector.shape_cast %93 : vector<1x16x16xf32> to vector<16x16xf32>
    %cst_51 = arith.constant dense<0.000000e+00> : vector<16x16xf32>
    %95 = tpu.matmul %94, %92, %cst_51 {dimension_numbers = #tpu.dot_dimension_numbers<[1], [0], [0], [1], [0, 0, 1, 1], [], []>} : vector<16x16xf32>, vector<16x16xf32>, vector<16x16xf32> -> vector<16x16xf32>
    %96 = vector.extract_strided_slice %25 {offsets = [0, 9], sizes = [16, 1], strides = [1, 1]} : vector<16x10xf32> to vector<16x1xf32>
    %97 = vector.broadcast %96 : vector<16x1xf32> to vector<16x16xf32>
    %98 = arith.addf %95, %97 : vector<16x16xf32>
    %cst_52 = arith.constant 0.00999999977 : f32
    %99 = vector.broadcast %cst_52 : f32 to vector<16x16xf32>
    %100 = arith.mulf %99, %98 : vector<16x16xf32>
    %101 = arith.maximumf %98, %100 : vector<16x16xf32>
    %c0_53 = arith.constant 0 : index
    %c1_54 = arith.constant 1 : index
    %102 = memref.load %arg1[%c0_53, %c1_54] : memref<2x4xf32, #tpu.memory_space<smem>>
    %103 = vector.broadcast %102 : f32 to vector<16x64xf32>
    %104 = arith.mulf %103, %5 : vector<16x64xf32>
    %c1_55 = arith.constant 1 : index
    %c1_56 = arith.constant 1 : index
    %105 = memref.load %arg1[%c1_55, %c1_56] : memref<2x4xf32, #tpu.memory_space<smem>>
    %c0_57 = arith.constant 0 : index
    %c0_58 = arith.constant 0 : index
    %106 = vector.load %arg11[%c0_57, %c0_58] : memref<16x64xf32, #tpu.memory_space<vmem>>, vector<16x64xf32>
    %cst_59 = arith.constant dense<0.000000e+00> : vector<16x64xf32>
    %107 = tpu.matmul %101, %106, %cst_59 {dimension_numbers = #tpu.dot_dimension_numbers<[1], [0], [0], [1], [0, 0, 1, 1], [], []>} : vector<16x16xf32>, vector<16x64xf32>, vector<16x64xf32> -> vector<16x64xf32>
    %108 = vector.broadcast %105 : f32 to vector<16x64xf32>
    %109 = arith.mulf %108, %107 : vector<16x64xf32>
    %110 = arith.addf %104, %109 : vector<16x64xf32>
    %cst_60 = arith.constant 0.000000e+00 : f32
    %111 = vector.broadcast %cst_60 : f32 to vector<16x9xf32>
    %c0_61 = arith.constant 0 : index
    %c0_62 = arith.constant 0 : index
    %112 = vector.load %arg23[%c0_61, %c0_62] : memref<16x1090xf32, #tpu.memory_space<vmem>>, vector<16x9xf32>
    tpu.vector_store %arg23[%c0_61, %c0_62], %111 {strides = array<i32>} : memref<16x1090xf32, #tpu.memory_space<vmem>>, vector<16x9xf32>,
    %c0_63 = arith.constant 0 : index
    %c9_64 = arith.constant 9 : index
    %113 = vector.load %arg23[%c0_63, %c9_64] : memref<16x1090xf32, #tpu.memory_space<vmem>>, vector<16x64xf32>
    tpu.vector_store %arg23[%c0_63, %c9_64], %110 {strides = array<i32>} : memref<16x1090xf32, #tpu.memory_space<vmem>>, vector<16x64xf32>,
    %cst_65 = arith.constant 0.000000e+00 : f32
    %114 = vector.broadcast %cst_65 : f32 to vector<16x9xf32>
    %c0_66 = arith.constant 0 : index
    %c73 = arith.constant 73 : index
    %115 = vector.load %arg23[%c0_66, %c73] : memref<16x1090xf32, #tpu.memory_space<vmem>>, vector<16x9xf32>
    tpu.vector_store %arg23[%c0_66, %c73], %114 {strides = array<i32>} : memref<16x1090xf32, #tpu.memory_space<vmem>>, vector<16x9xf32>,
    %c1_67 = arith.constant 1 : index
    %c0_68 = arith.constant 0 : index
    %c0_69 = arith.constant 0 : index
    %116 = vector.load %arg8[%c1_67, %c0_68, %c0_69] : memref<8x16x10xf32, #tpu.memory_space<vmem>>, vector<1x16x10xf32>
    %117 = vector.shape_cast %116 : vector<1x16x10xf32> to vector<16x10xf32>
    %cst_70 = arith.constant 0.000000e+00 : f32
    %118 = vector.broadcast %cst_70 : f32 to vector<16x64xf32>
    %cst_71 = arith.constant 0.000000e+00 : f32
    %119 = vector.broadcast %cst_71 : f32 to vector<16x64xf32>
    %cst_72 = arith.constant 0.000000e+00 : f32
    %120 = vector.broadcast %cst_72 : f32 to vector<16x64xf32>
    %c0_73 = arith.constant 0 : index
    %c0_74 = arith.constant 0 : index
    %121 = vector.load %arg23[%c0_73, %c0_74] : memref<16x1090xf32, #tpu.memory_space<vmem>>, vector<16x64xf32>
    %122 = vector.extract_strided_slice %117 {offsets = [0, 0], sizes = [16, 1], strides = [1, 1]} : vector<16x10xf32> to vector<16x1xf32>
    %123 = vector.broadcast %122 : vector<16x1xf32> to vector<16x64xf32>
    %124 = arith.mulf %121, %123 : vector<16x64xf32>
    %125 = arith.addf %118, %124 : vector<16x64xf32>
    %c0_75 = arith.constant 0 : index
    %c1_76 = arith.constant 1 : index
    %126 = vector.load %arg23[%c0_75, %c1_76] : memref<16x1090xf32, #tpu.memory_space<vmem>>, vector<16x64xf32>
    %127 = vector.extract_strided_slice %117 {offsets = [0, 1], sizes = [16, 1], strides = [1, 1]} : vector<16x10xf32> to vector<16x1xf32>
    %128 = vector.broadcast %127 : vector<16x1xf32> to vector<16x64xf32>
    %129 = arith.mulf %126, %128 : vector<16x64xf32>
    %130 = arith.addf %119, %129 : vector<16x64xf32>
    %c0_77 = arith.constant 0 : index
    %c2_78 = arith.constant 2 : index
    %131 = vector.load %arg23[%c0_77, %c2_78] : memref<16x1090xf32, #tpu.memory_space<vmem>>, vector<16x64xf32>
    %132 = vector.extract_strided_slice %117 {offsets = [0, 2], sizes = [16, 1], strides = [1, 1]} : vector<16x10xf32> to vector<16x1xf32>
    %133 = vector.broadcast %132 : vector<16x1xf32> to vector<16x64xf32>
    %134 = arith.mulf %131, %133 : vector<16x64xf32>
    %135 = arith.addf %120, %134 : vector<16x64xf32>
    %c0_79 = arith.constant 0 : index
    %c8_80 = arith.constant 8 : index
    %136 = vector.load %arg23[%c0_79, %c8_80] : memref<16x1090xf32, #tpu.memory_space<vmem>>, vector<16x64xf32>
    %137 = vector.extract_strided_slice %117 {offsets = [0, 3], sizes = [16, 1], strides = [1, 1]} : vector<16x10xf32> to vector<16x1xf32>
    %138 = vector.broadcast %137 : vector<16x1xf32> to vector<16x64xf32>
    %139 = arith.mulf %136, %138 : vector<16x64xf32>
    %140 = arith.addf %125, %139 : vector<16x64xf32>
    %c0_81 = arith.constant 0 : index
    %c9_82 = arith.constant 9 : index
    %141 = vector.load %arg23[%c0_81, %c9_82] : memref<16x1090xf32, #tpu.memory_space<vmem>>, vector<16x64xf32>
    %142 = vector.extract_strided_slice %117 {offsets = [0, 4], sizes = [16, 1], strides = [1, 1]} : vector<16x10xf32> to vector<16x1xf32>
    %143 = vector.broadcast %142 : vector<16x1xf32> to vector<16x64xf32>
    %144 = arith.mulf %141, %143 : vector<16x64xf32>
    %145 = arith.addf %130, %144 : vector<16x64xf32>
    %c0_83 = arith.constant 0 : index
    %c10_84 = arith.constant 10 : index
    %146 = vector.load %arg23[%c0_83, %c10_84] : memref<16x1090xf32, #tpu.memory_space<vmem>>, vector<16x64xf32>
    %147 = vector.extract_strided_slice %117 {offsets = [0, 5], sizes = [16, 1], strides = [1, 1]} : vector<16x10xf32> to vector<16x1xf32>
    %148 = vector.broadcast %147 : vector<16x1xf32> to vector<16x64xf32>
    %149 = arith.mulf %146, %148 : vector<16x64xf32>
    %150 = arith.addf %135, %149 : vector<16x64xf32>
    %c0_85 = arith.constant 0 : index
    %c16 = arith.constant 16 : index
    %151 = vector.load %arg23[%c0_85, %c16] : memref<16x1090xf32, #tpu.memory_space<vmem>>, vector<16x64xf32>
    %152 = vector.extract_strided_slice %117 {offsets = [0, 6], sizes = [16, 1], strides = [1, 1]} : vector<16x10xf32> to vector<16x1xf32>
    %153 = vector.broadcast %152 : vector<16x1xf32> to vector<16x64xf32>
    %154 = arith.mulf %151, %153 : vector<16x64xf32>
    %155 = arith.addf %140, %154 : vector<16x64xf32>
    %c0_86 = arith.constant 0 : index
    %c17 = arith.constant 17 : index
    %156 = vector.load %arg23[%c0_86, %c17] : memref<16x1090xf32, #tpu.memory_space<vmem>>, vector<16x64xf32>
    %157 = vector.extract_strided_slice %117 {offsets = [0, 7], sizes = [16, 1], strides = [1, 1]} : vector<16x10xf32> to vector<16x1xf32>
    %158 = vector.broadcast %157 : vector<16x1xf32> to vector<16x64xf32>
    %159 = arith.mulf %156, %158 : vector<16x64xf32>
    %160 = arith.addf %145, %159 : vector<16x64xf32>
    %c0_87 = arith.constant 0 : index
    %c18 = arith.constant 18 : index
    %161 = vector.load %arg23[%c0_87, %c18] : memref<16x1090xf32, #tpu.memory_space<vmem>>, vector<16x64xf32>
    %162 = vector.extract_strided_slice %117 {offsets = [0, 8], sizes = [16, 1], strides = [1, 1]} : vector<16x10xf32> to vector<16x1xf32>
    %163 = vector.broadcast %162 : vector<16x1xf32> to vector<16x64xf32>
    %164 = arith.mulf %161, %163 : vector<16x64xf32>
    %165 = arith.addf %150, %164 : vector<16x64xf32>
    %166 = tpu.iota {dimensions = array<i32: 1>} : vector<1x64xi32>
    %c7_i32 = arith.constant 7 : i32
    %167 = vector.broadcast %c7_i32 : i32 to vector<1x64xi32>
    %168 = arith.andi %166, %167 : vector<1x64xi32>
    %c0_i32_88 = arith.constant 0 : i32
    %169 = vector.broadcast %c0_i32_88 : i32 to vector<1x64xi32>
    %170 = arith.cmpi ne, %168, %169 : vector<1x64xi32>
    %cst_89 = arith.constant 1.000000e+00 : f32
    %cst_90 = arith.constant 0.000000e+00 : f32
    %171 = vector.broadcast %cst_89 : f32 to vector<1x64xf32>
    %172 = vector.broadcast %cst_90 : f32 to vector<1x64xf32>
    %173 = arith.select %170, %171, %172 : vector<1x64xi1>, vector<1x64xf32>
    %c7_i32_91 = arith.constant 7 : i32
    %174 = vector.broadcast %c7_i32_91 : i32 to vector<1x64xi32>
    %175 = arith.cmpi ne, %168, %174 : vector<1x64xi32>
    %cst_92 = arith.constant 1.000000e+00 : f32
    %cst_93 = arith.constant 0.000000e+00 : f32
    %176 = vector.broadcast %cst_92 : f32 to vector<1x64xf32>
    %177 = vector.broadcast %cst_93 : f32 to vector<1x64xf32>
    %178 = arith.select %175, %176, %177 : vector<1x64xi1>, vector<1x64xf32>
    %179 = vector.broadcast %173 : vector<1x64xf32> to vector<16x64xf32>
    %180 = arith.mulf %155, %179 : vector<16x64xf32>
    %181 = arith.addf %180, %160 : vector<16x64xf32>
    %182 = vector.broadcast %178 : vector<1x64xf32> to vector<16x64xf32>
    %183 = arith.mulf %165, %182 : vector<16x64xf32>
    %184 = arith.addf %181, %183 : vector<16x64xf32>
    %c1_94 = arith.constant 1 : index
    %c0_95 = arith.constant 0 : index
    %c0_96 = arith.constant 0 : index
    %185 = vector.load %arg9[%c1_94, %c0_95, %c0_96] : memref<8x16x16xf32, #tpu.memory_space<vmem>>, vector<1x16x16xf32>
    %186 = vector.shape_cast %185 : vector<1x16x16xf32> to vector<16x16xf32>
    %cst_97 = arith.constant dense<0.000000e+00> : vector<16x64xf32>
    %187 = tpu.matmul %186, %184, %cst_97 {dimension_numbers = #tpu.dot_dimension_numbers<[1], [0], [0], [1], [0, 0, 1, 1], [], []>} : vector<16x16xf32>, vector<16x64xf32>, vector<16x64xf32> -> vector<16x64xf32>
    %188 = vector.extract_strided_slice %117 {offsets = [0, 9], sizes = [16, 1], strides = [1, 1]} : vector<16x10xf32> to vector<16x1xf32>
    %189 = vector.broadcast %188 : vector<16x1xf32> to vector<16x64xf32>
    %190 = arith.addf %187, %189 : vector<16x64xf32>
    %cst_98 = arith.constant 0.00999999977 : f32
    %191 = vector.broadcast %cst_98 : f32 to vector<16x64xf32>
    %192 = arith.mulf %191, %190 : vector<16x64xf32>
    %193 = arith.maximumf %190, %192 : vector<16x64xf32>
    %c0_99 = arith.constant 0 : index
    %c2_100 = arith.constant 2 : index
    %194 = memref.load %arg1[%c0_99, %c2_100] : memref<2x4xf32, #tpu.memory_space<smem>>
    %195 = vector.broadcast %194 : f32 to vector<16x256xf32>
    %196 = arith.mulf %195, %3 : vector<16x256xf32>
    %c1_101 = arith.constant 1 : index
    %c2_102 = arith.constant 2 : index
    %197 = memref.load %arg1[%c1_101, %c2_102] : memref<2x4xf32, #tpu.memory_space<smem>>
    %c0_103 = arith.constant 0 : index
    %c0_104 = arith.constant 0 : index
    %198 = vector.load %arg12[%c0_103, %c0_104] : memref<64x256xf32, #tpu.memory_space<vmem>>, vector<64x256xf32>
    %cst_105 = arith.constant dense<0.000000e+00> : vector<16x256xf32>
    %199 = tpu.matmul %193, %198, %cst_105 {dimension_numbers = #tpu.dot_dimension_numbers<[1], [0], [0], [1], [0, 0, 1, 1], [], []>} : vector<16x64xf32>, vector<64x256xf32>, vector<16x256xf32> -> vector<16x256xf32>
    %200 = vector.broadcast %197 : f32 to vector<16x256xf32>
    %201 = arith.mulf %200, %199 : vector<16x256xf32>
    %202 = arith.addf %196, %201 : vector<16x256xf32>
    %cst_106 = arith.constant 0.000000e+00 : f32
    %203 = vector.broadcast %cst_106 : f32 to vector<16x17xf32>
    %c0_107 = arith.constant 0 : index
    %c0_108 = arith.constant 0 : index
    %204 = vector.load %arg23[%c0_107, %c0_108] : memref<16x1090xf32, #tpu.memory_space<vmem>>, vector<16x17xf32>
    tpu.vector_store %arg23[%c0_107, %c0_108], %203 {strides = array<i32>} : memref<16x1090xf32, #tpu.memory_space<vmem>>, vector<16x17xf32>,
    %c0_109 = arith.constant 0 : index
    %c17_110 = arith.constant 17 : index
    %205 = vector.load %arg23[%c0_109, %c17_110] : memref<16x1090xf32, #tpu.memory_space<vmem>>, vector<16x256xf32>
    tpu.vector_store %arg23[%c0_109, %c17_110], %202 {strides = array<i32>} : memref<16x1090xf32, #tpu.memory_space<vmem>>, vector<16x256xf32>,
    %cst_111 = arith.constant 0.000000e+00 : f32
    %206 = vector.broadcast %cst_111 : f32 to vector<16x17xf32>
    %c0_112 = arith.constant 0 : index
    %c273 = arith.constant 273 : index
    %207 = vector.load %arg23[%c0_112, %c273] : memref<16x1090xf32, #tpu.memory_space<vmem>>, vector<16x17xf32>
    tpu.vector_store %arg23[%c0_112, %c273], %206 {strides = array<i32>} : memref<16x1090xf32, #tpu.memory_space<vmem>>, vector<16x17xf32>,
    %c2_113 = arith.constant 2 : index
    %c0_114 = arith.constant 0 : index
    %c0_115 = arith.constant 0 : index
    %208 = vector.load %arg8[%c2_113, %c0_114, %c0_115] : memref<8x16x10xf32, #tpu.memory_space<vmem>>, vector<1x16x10xf32>
    %209 = vector.shape_cast %208 : vector<1x16x10xf32> to vector<16x10xf32>
    %cst_116 = arith.constant 0.000000e+00 : f32
    %210 = vector.broadcast %cst_116 : f32 to vector<16x256xf32>
    %cst_117 = arith.constant 0.000000e+00 : f32
    %211 = vector.broadcast %cst_117 : f32 to vector<16x256xf32>
    %cst_118 = arith.constant 0.000000e+00 : f32
    %212 = vector.broadcast %cst_118 : f32 to vector<16x256xf32>
    %c0_119 = arith.constant 0 : index
    %c0_120 = arith.constant 0 : index
    %213 = vector.load %arg23[%c0_119, %c0_120] : memref<16x1090xf32, #tpu.memory_space<vmem>>, vector<16x256xf32>
    %214 = vector.extract_strided_slice %209 {offsets = [0, 0], sizes = [16, 1], strides = [1, 1]} : vector<16x10xf32> to vector<16x1xf32>
    %215 = vector.broadcast %214 : vector<16x1xf32> to vector<16x256xf32>
    %216 = arith.mulf %213, %215 : vector<16x256xf32>
    %217 = arith.addf %210, %216 : vector<16x256xf32>
    %c0_121 = arith.constant 0 : index
    %c1_122 = arith.constant 1 : index
    %218 = vector.load %arg23[%c0_121, %c1_122] : memref<16x1090xf32, #tpu.memory_space<vmem>>, vector<16x256xf32>
    %219 = vector.extract_strided_slice %209 {offsets = [0, 1], sizes = [16, 1], strides = [1, 1]} : vector<16x10xf32> to vector<16x1xf32>
    %220 = vector.broadcast %219 : vector<16x1xf32> to vector<16x256xf32>
    %221 = arith.mulf %218, %220 : vector<16x256xf32>
    %222 = arith.addf %211, %221 : vector<16x256xf32>
    %c0_123 = arith.constant 0 : index
    %c2_124 = arith.constant 2 : index
    %223 = vector.load %arg23[%c0_123, %c2_124] : memref<16x1090xf32, #tpu.memory_space<vmem>>, vector<16x256xf32>
    %224 = vector.extract_strided_slice %209 {offsets = [0, 2], sizes = [16, 1], strides = [1, 1]} : vector<16x10xf32> to vector<16x1xf32>
    %225 = vector.broadcast %224 : vector<16x1xf32> to vector<16x256xf32>
    %226 = arith.mulf %223, %225 : vector<16x256xf32>
    %227 = arith.addf %212, %226 : vector<16x256xf32>
    %c0_125 = arith.constant 0 : index
    %c16_126 = arith.constant 16 : index
    %228 = vector.load %arg23[%c0_125, %c16_126] : memref<16x1090xf32, #tpu.memory_space<vmem>>, vector<16x256xf32>
    %229 = vector.extract_strided_slice %209 {offsets = [0, 3], sizes = [16, 1], strides = [1, 1]} : vector<16x10xf32> to vector<16x1xf32>
    %230 = vector.broadcast %229 : vector<16x1xf32> to vector<16x256xf32>
    %231 = arith.mulf %228, %230 : vector<16x256xf32>
    %232 = arith.addf %217, %231 : vector<16x256xf32>
    %c0_127 = arith.constant 0 : index
    %c17_128 = arith.constant 17 : index
    %233 = vector.load %arg23[%c0_127, %c17_128] : memref<16x1090xf32, #tpu.memory_space<vmem>>, vector<16x256xf32>
    %234 = vector.extract_strided_slice %209 {offsets = [0, 4], sizes = [16, 1], strides = [1, 1]} : vector<16x10xf32> to vector<16x1xf32>
    %235 = vector.broadcast %234 : vector<16x1xf32> to vector<16x256xf32>
    %236 = arith.mulf %233, %235 : vector<16x256xf32>
    %237 = arith.addf %222, %236 : vector<16x256xf32>
    %c0_129 = arith.constant 0 : index
    %c18_130 = arith.constant 18 : index
    %238 = vector.load %arg23[%c0_129, %c18_130] : memref<16x1090xf32, #tpu.memory_space<vmem>>, vector<16x256xf32>
    %239 = vector.extract_strided_slice %209 {offsets = [0, 5], sizes = [16, 1], strides = [1, 1]} : vector<16x10xf32> to vector<16x1xf32>
    %240 = vector.broadcast %239 : vector<16x1xf32> to vector<16x256xf32>
    %241 = arith.mulf %238, %240 : vector<16x256xf32>
    %242 = arith.addf %227, %241 : vector<16x256xf32>
    %c0_131 = arith.constant 0 : index
    %c32 = arith.constant 32 : index
    %243 = vector.load %arg23[%c0_131, %c32] : memref<16x1090xf32, #tpu.memory_space<vmem>>, vector<16x256xf32>
    %244 = vector.extract_strided_slice %209 {offsets = [0, 6], sizes = [16, 1], strides = [1, 1]} : vector<16x10xf32> to vector<16x1xf32>
    %245 = vector.broadcast %244 : vector<16x1xf32> to vector<16x256xf32>
    %246 = arith.mulf %243, %245 : vector<16x256xf32>
    %247 = arith.addf %232, %246 : vector<16x256xf32>
    %c0_132 = arith.constant 0 : index
    %c33 = arith.constant 33 : index
    %248 = vector.load %arg23[%c0_132, %c33] : memref<16x1090xf32, #tpu.memory_space<vmem>>, vector<16x256xf32>
    %249 = vector.extract_strided_slice %209 {offsets = [0, 7], sizes = [16, 1], strides = [1, 1]} : vector<16x10xf32> to vector<16x1xf32>
    %250 = vector.broadcast %249 : vector<16x1xf32> to vector<16x256xf32>
    %251 = arith.mulf %248, %250 : vector<16x256xf32>
    %252 = arith.addf %237, %251 : vector<16x256xf32>
    %c0_133 = arith.constant 0 : index
    %c34 = arith.constant 34 : index
    %253 = vector.load %arg23[%c0_133, %c34] : memref<16x1090xf32, #tpu.memory_space<vmem>>, vector<16x256xf32>
    %254 = vector.extract_strided_slice %209 {offsets = [0, 8], sizes = [16, 1], strides = [1, 1]} : vector<16x10xf32> to vector<16x1xf32>
    %255 = vector.broadcast %254 : vector<16x1xf32> to vector<16x256xf32>
    %256 = arith.mulf %253, %255 : vector<16x256xf32>
    %257 = arith.addf %242, %256 : vector<16x256xf32>
    %258 = tpu.iota {dimensions = array<i32: 1>} : vector<1x256xi32>
    %c15_i32 = arith.constant 15 : i32
    %259 = vector.broadcast %c15_i32 : i32 to vector<1x256xi32>
    %260 = arith.andi %258, %259 : vector<1x256xi32>
    %c0_i32_134 = arith.constant 0 : i32
    %261 = vector.broadcast %c0_i32_134 : i32 to vector<1x256xi32>
    %262 = arith.cmpi ne, %260, %261 : vector<1x256xi32>
    %cst_135 = arith.constant 1.000000e+00 : f32
    %cst_136 = arith.constant 0.000000e+00 : f32
    %263 = vector.broadcast %cst_135 : f32 to vector<1x256xf32>
    %264 = vector.broadcast %cst_136 : f32 to vector<1x256xf32>
    %265 = arith.select %262, %263, %264 : vector<1x256xi1>, vector<1x256xf32>
    %c15_i32_137 = arith.constant 15 : i32
    %266 = vector.broadcast %c15_i32_137 : i32 to vector<1x256xi32>
    %267 = arith.cmpi ne, %260, %266 : vector<1x256xi32>
    %cst_138 = arith.constant 1.000000e+00 : f32
    %cst_139 = arith.constant 0.000000e+00 : f32
    %268 = vector.broadcast %cst_138 : f32 to vector<1x256xf32>
    %269 = vector.broadcast %cst_139 : f32 to vector<1x256xf32>
    %270 = arith.select %267, %268, %269 : vector<1x256xi1>, vector<1x256xf32>
    %271 = vector.broadcast %265 : vector<1x256xf32> to vector<16x256xf32>
    %272 = arith.mulf %247, %271 : vector<16x256xf32>
    %273 = arith.addf %272, %252 : vector<16x256xf32>
    %274 = vector.broadcast %270 : vector<1x256xf32> to vector<16x256xf32>
    %275 = arith.mulf %257, %274 : vector<16x256xf32>
    %276 = arith.addf %273, %275 : vector<16x256xf32>
    %c2_140 = arith.constant 2 : index
    %c0_141 = arith.constant 0 : index
    %c0_142 = arith.constant 0 : index
    %277 = vector.load %arg9[%c2_140, %c0_141, %c0_142] : memref<8x16x16xf32, #tpu.memory_space<vmem>>, vector<1x16x16xf32>
    %278 = vector.shape_cast %277 : vector<1x16x16xf32> to vector<16x16xf32>
    %cst_143 = arith.constant dense<0.000000e+00> : vector<16x256xf32>
    %279 = tpu.matmul %278, %276, %cst_143 {dimension_numbers = #tpu.dot_dimension_numbers<[1], [0], [0], [1], [0, 0, 1, 1], [], []>} : vector<16x16xf32>, vector<16x256xf32>, vector<16x256xf32> -> vector<16x256xf32>
    %280 = vector.extract_strided_slice %209 {offsets = [0, 9], sizes = [16, 1], strides = [1, 1]} : vector<16x10xf32> to vector<16x1xf32>
    %281 = vector.broadcast %280 : vector<16x1xf32> to vector<16x256xf32>
    %282 = arith.addf %279, %281 : vector<16x256xf32>
    %cst_144 = arith.constant 0.00999999977 : f32
    %283 = vector.broadcast %cst_144 : f32 to vector<16x256xf32>
    %284 = arith.mulf %283, %282 : vector<16x256xf32>
    %285 = arith.maximumf %282, %284 : vector<16x256xf32>
    %c0_145 = arith.constant 0 : index
    %c3 = arith.constant 3 : index
    %286 = memref.load %arg1[%c0_145, %c3] : memref<2x4xf32, #tpu.memory_space<smem>>
    %287 = vector.broadcast %286 : f32 to vector<16x1024xf32>
    %288 = arith.mulf %287, %1 : vector<16x1024xf32>
    %c1_146 = arith.constant 1 : index
    %c3_147 = arith.constant 3 : index
    %289 = memref.load %arg1[%c1_146, %c3_147] : memref<2x4xf32, #tpu.memory_space<smem>>
    %c0_148 = arith.constant 0 : index
    %c0_149 = arith.constant 0 : index
    %290 = vector.load %arg13[%c0_148, %c0_149] : memref<256x1024xf32, #tpu.memory_space<vmem>>, vector<256x1024xf32>
    %cst_150 = arith.constant dense<0.000000e+00> : vector<16x1024xf32>
    %291 = tpu.matmul %285, %290, %cst_150 {dimension_numbers = #tpu.dot_dimension_numbers<[1], [0], [0], [1], [0, 0, 1, 1], [], []>} : vector<16x256xf32>, vector<256x1024xf32>, vector<16x1024xf32> -> vector<16x1024xf32>
    %292 = vector.broadcast %289 : f32 to vector<16x1024xf32>
    %293 = arith.mulf %292, %291 : vector<16x1024xf32>
    %294 = arith.addf %288, %293 : vector<16x1024xf32>
    %cst_151 = arith.constant 0.000000e+00 : f32
    %295 = vector.broadcast %cst_151 : f32 to vector<16x33xf32>
    %c0_152 = arith.constant 0 : index
    %c0_153 = arith.constant 0 : index
    %296 = vector.load %arg23[%c0_152, %c0_153] : memref<16x1090xf32, #tpu.memory_space<vmem>>, vector<16x33xf32>
    tpu.vector_store %arg23[%c0_152, %c0_153], %295 {strides = array<i32>} : memref<16x1090xf32, #tpu.memory_space<vmem>>, vector<16x33xf32>,
    %c0_154 = arith.constant 0 : index
    %c33_155 = arith.constant 33 : index
    %297 = vector.load %arg23[%c0_154, %c33_155] : memref<16x1090xf32, #tpu.memory_space<vmem>>, vector<16x1024xf32>
    tpu.vector_store %arg23[%c0_154, %c33_155], %294 {strides = array<i32>} : memref<16x1090xf32, #tpu.memory_space<vmem>>, vector<16x1024xf32>,
    %cst_156 = arith.constant 0.000000e+00 : f32
    %298 = vector.broadcast %cst_156 : f32 to vector<16x33xf32>
    %c0_157 = arith.constant 0 : index
    %c1057 = arith.constant 1057 : index
    %299 = vector.load %arg23[%c0_157, %c1057] : memref<16x1090xf32, #tpu.memory_space<vmem>>, vector<16x33xf32>
    tpu.vector_store %arg23[%c0_157, %c1057], %298 {strides = array<i32>} : memref<16x1090xf32, #tpu.memory_space<vmem>>, vector<16x33xf32>,
    %c3_158 = arith.constant 3 : index
    %c0_159 = arith.constant 0 : index
    %c0_160 = arith.constant 0 : index
    %300 = vector.load %arg8[%c3_158, %c0_159, %c0_160] : memref<8x16x10xf32, #tpu.memory_space<vmem>>, vector<1x16x10xf32>
    %301 = vector.shape_cast %300 : vector<1x16x10xf32> to vector<16x10xf32>
    %cst_161 = arith.constant 0.000000e+00 : f32
    %302 = vector.broadcast %cst_161 : f32 to vector<16x1024xf32>
    %cst_162 = arith.constant 0.000000e+00 : f32
    %303 = vector.broadcast %cst_162 : f32 to vector<16x1024xf32>
    %cst_163 = arith.constant 0.000000e+00 : f32
    %304 = vector.broadcast %cst_163 : f32 to vector<16x1024xf32>
    %c0_164 = arith.constant 0 : index
    %c0_165 = arith.constant 0 : index
    %305 = vector.load %arg23[%c0_164, %c0_165] : memref<16x1090xf32, #tpu.memory_space<vmem>>, vector<16x1024xf32>
    %306 = vector.extract_strided_slice %301 {offsets = [0, 0], sizes = [16, 1], strides = [1, 1]} : vector<16x10xf32> to vector<16x1xf32>
    %307 = vector.broadcast %306 : vector<16x1xf32> to vector<16x1024xf32>
    %308 = arith.mulf %305, %307 : vector<16x1024xf32>
    %309 = arith.addf %302, %308 : vector<16x1024xf32>
    %c0_166 = arith.constant 0 : index
    %c1_167 = arith.constant 1 : index
    %310 = vector.load %arg23[%c0_166, %c1_167] : memref<16x1090xf32, #tpu.memory_space<vmem>>, vector<16x1024xf32>
    %311 = vector.extract_strided_slice %301 {offsets = [0, 1], sizes = [16, 1], strides = [1, 1]} : vector<16x10xf32> to vector<16x1xf32>
    %312 = vector.broadcast %311 : vector<16x1xf32> to vector<16x1024xf32>
    %313 = arith.mulf %310, %312 : vector<16x1024xf32>
    %314 = arith.addf %303, %313 : vector<16x1024xf32>
    %c0_168 = arith.constant 0 : index
    %c2_169 = arith.constant 2 : index
    %315 = vector.load %arg23[%c0_168, %c2_169] : memref<16x1090xf32, #tpu.memory_space<vmem>>, vector<16x1024xf32>
    %316 = vector.extract_strided_slice %301 {offsets = [0, 2], sizes = [16, 1], strides = [1, 1]} : vector<16x10xf32> to vector<16x1xf32>
    %317 = vector.broadcast %316 : vector<16x1xf32> to vector<16x1024xf32>
    %318 = arith.mulf %315, %317 : vector<16x1024xf32>
    %319 = arith.addf %304, %318 : vector<16x1024xf32>
    %c0_170 = arith.constant 0 : index
    %c32_171 = arith.constant 32 : index
    %320 = vector.load %arg23[%c0_170, %c32_171] : memref<16x1090xf32, #tpu.memory_space<vmem>>, vector<16x1024xf32>
    %321 = vector.extract_strided_slice %301 {offsets = [0, 3], sizes = [16, 1], strides = [1, 1]} : vector<16x10xf32> to vector<16x1xf32>
    %322 = vector.broadcast %321 : vector<16x1xf32> to vector<16x1024xf32>
    %323 = arith.mulf %320, %322 : vector<16x1024xf32>
    %324 = arith.addf %309, %323 : vector<16x1024xf32>
    %c0_172 = arith.constant 0 : index
    %c33_173 = arith.constant 33 : index
    %325 = vector.load %arg23[%c0_172, %c33_173] : memref<16x1090xf32, #tpu.memory_space<vmem>>, vector<16x1024xf32>
    %326 = vector.extract_strided_slice %301 {offsets = [0, 4], sizes = [16, 1], strides = [1, 1]} : vector<16x10xf32> to vector<16x1xf32>
    %327 = vector.broadcast %326 : vector<16x1xf32> to vector<16x1024xf32>
    %328 = arith.mulf %325, %327 : vector<16x1024xf32>
    %329 = arith.addf %314, %328 : vector<16x1024xf32>
    %c0_174 = arith.constant 0 : index
    %c34_175 = arith.constant 34 : index
    %330 = vector.load %arg23[%c0_174, %c34_175] : memref<16x1090xf32, #tpu.memory_space<vmem>>, vector<16x1024xf32>
    %331 = vector.extract_strided_slice %301 {offsets = [0, 5], sizes = [16, 1], strides = [1, 1]} : vector<16x10xf32> to vector<16x1xf32>
    %332 = vector.broadcast %331 : vector<16x1xf32> to vector<16x1024xf32>
    %333 = arith.mulf %330, %332 : vector<16x1024xf32>
    %334 = arith.addf %319, %333 : vector<16x1024xf32>
    %c0_176 = arith.constant 0 : index
    %c64 = arith.constant 64 : index
    %335 = vector.load %arg23[%c0_176, %c64] : memref<16x1090xf32, #tpu.memory_space<vmem>>, vector<16x1024xf32>
    %336 = vector.extract_strided_slice %301 {offsets = [0, 6], sizes = [16, 1], strides = [1, 1]} : vector<16x10xf32> to vector<16x1xf32>
    %337 = vector.broadcast %336 : vector<16x1xf32> to vector<16x1024xf32>
    %338 = arith.mulf %335, %337 : vector<16x1024xf32>
    %339 = arith.addf %324, %338 : vector<16x1024xf32>
    %c0_177 = arith.constant 0 : index
    %c65 = arith.constant 65 : index
    %340 = vector.load %arg23[%c0_177, %c65] : memref<16x1090xf32, #tpu.memory_space<vmem>>, vector<16x1024xf32>
    %341 = vector.extract_strided_slice %301 {offsets = [0, 7], sizes = [16, 1], strides = [1, 1]} : vector<16x10xf32> to vector<16x1xf32>
    %342 = vector.broadcast %341 : vector<16x1xf32> to vector<16x1024xf32>
    %343 = arith.mulf %340, %342 : vector<16x1024xf32>
    %344 = arith.addf %329, %343 : vector<16x1024xf32>
    %c0_178 = arith.constant 0 : index
    %c66 = arith.constant 66 : index
    %345 = vector.load %arg23[%c0_178, %c66] : memref<16x1090xf32, #tpu.memory_space<vmem>>, vector<16x1024xf32>
    %346 = vector.extract_strided_slice %301 {offsets = [0, 8], sizes = [16, 1], strides = [1, 1]} : vector<16x10xf32> to vector<16x1xf32>
    %347 = vector.broadcast %346 : vector<16x1xf32> to vector<16x1024xf32>
    %348 = arith.mulf %345, %347 : vector<16x1024xf32>
    %349 = arith.addf %334, %348 : vector<16x1024xf32>
    %350 = tpu.iota {dimensions = array<i32: 1>} : vector<1x1024xi32>
    %c31_i32 = arith.constant 31 : i32
    %351 = vector.broadcast %c31_i32 : i32 to vector<1x1024xi32>
    %352 = arith.andi %350, %351 : vector<1x1024xi32>
    %c0_i32_179 = arith.constant 0 : i32
    %353 = vector.broadcast %c0_i32_179 : i32 to vector<1x1024xi32>
    %354 = arith.cmpi ne, %352, %353 : vector<1x1024xi32>
    %cst_180 = arith.constant 1.000000e+00 : f32
    %cst_181 = arith.constant 0.000000e+00 : f32
    %355 = vector.broadcast %cst_180 : f32 to vector<1x1024xf32>
    %356 = vector.broadcast %cst_181 : f32 to vector<1x1024xf32>
    %357 = arith.select %354, %355, %356 : vector<1x1024xi1>, vector<1x1024xf32>
    %c31_i32_182 = arith.constant 31 : i32
    %358 = vector.broadcast %c31_i32_182 : i32 to vector<1x1024xi32>
    %359 = arith.cmpi ne, %352, %358 : vector<1x1024xi32>
    %cst_183 = arith.constant 1.000000e+00 : f32
    %cst_184 = arith.constant 0.000000e+00 : f32
    %360 = vector.broadcast %cst_183 : f32 to vector<1x1024xf32>
    %361 = vector.broadcast %cst_184 : f32 to vector<1x1024xf32>
    %362 = arith.select %359, %360, %361 : vector<1x1024xi1>, vector<1x1024xf32>
    %363 = vector.broadcast %357 : vector<1x1024xf32> to vector<16x1024xf32>
    %364 = arith.mulf %339, %363 : vector<16x1024xf32>
    %365 = arith.addf %364, %344 : vector<16x1024xf32>
    %366 = vector.broadcast %362 : vector<1x1024xf32> to vector<16x1024xf32>
    %367 = arith.mulf %349, %366 : vector<16x1024xf32>
    %368 = arith.addf %365, %367 : vector<16x1024xf32>
    %c3_185 = arith.constant 3 : index
    %c0_186 = arith.constant 0 : index
    %c0_187 = arith.constant 0 : index
    %369 = vector.load %arg9[%c3_185, %c0_186, %c0_187] : memref<8x16x16xf32, #tpu.memory_space<vmem>>, vector<1x16x16xf32>
    %370 = vector.shape_cast %369 : vector<1x16x16xf32> to vector<16x16xf32>
    %cst_188 = arith.constant dense<0.000000e+00> : vector<16x1024xf32>
    %371 = tpu.matmul %370, %368, %cst_188 {dimension_numbers = #tpu.dot_dimension_numbers<[1], [0], [0], [1], [0, 0, 1, 1], [], []>} : vector<16x16xf32>, vector<16x1024xf32>, vector<16x1024xf32> -> vector<16x1024xf32>
    %372 = vector.extract_strided_slice %301 {offsets = [0, 9], sizes = [16, 1], strides = [1, 1]} : vector<16x10xf32> to vector<16x1xf32>
    %373 = vector.broadcast %372 : vector<16x1xf32> to vector<16x1024xf32>
    %374 = arith.addf %371, %373 : vector<16x1024xf32>
    %cst_189 = arith.constant 0.00999999977 : f32
    %375 = vector.broadcast %cst_189 : f32 to vector<16x1024xf32>
    %376 = arith.mulf %375, %374 : vector<16x1024xf32>
    %377 = arith.maximumf %374, %376 : vector<16x1024xf32>
    %c0_190 = arith.constant 0 : index
    %c0_191 = arith.constant 0 : index
    %378 = memref.load %arg2[%c0_190, %c0_191] : memref<3x4xf32, #tpu.memory_space<smem>>
    %379 = vector.broadcast %378 : f32 to vector<16x256xf32>
    %380 = arith.mulf %379, %3 : vector<16x256xf32>
    %c1_192 = arith.constant 1 : index
    %c0_193 = arith.constant 0 : index
    %381 = memref.load %arg2[%c1_192, %c0_193] : memref<3x4xf32, #tpu.memory_space<smem>>
    %382 = vector.broadcast %381 : f32 to vector<16x256xf32>
    %383 = arith.mulf %382, %285 : vector<16x256xf32>
    %384 = arith.addf %380, %383 : vector<16x256xf32>
    %c2_194 = arith.constant 2 : index
    %c0_195 = arith.constant 0 : index
    %385 = memref.load %arg2[%c2_194, %c0_195] : memref<3x4xf32, #tpu.memory_space<smem>>
    %c0_196 = arith.constant 0 : index
    %c0_197 = arith.constant 0 : index
    %386 = vector.load %arg14[%c0_196, %c0_197] : memref<1024x256xf32, #tpu.memory_space<vmem>>, vector<1024x256xf32>
    %cst_198 = arith.constant dense<0.000000e+00> : vector<16x256xf32>
    %387 = tpu.matmul %377, %386, %cst_198 {dimension_numbers = #tpu.dot_dimension_numbers<[1], [0], [0], [1], [0, 0, 1, 1], [], []>} : vector<16x1024xf32>, vector<1024x256xf32>, vector<16x256xf32> -> vector<16x256xf32>
    %388 = vector.broadcast %385 : f32 to vector<16x256xf32>
    %389 = arith.mulf %388, %387 : vector<16x256xf32>
    %390 = arith.addf %384, %389 : vector<16x256xf32>
    %cst_199 = arith.constant 0.000000e+00 : f32
    %391 = vector.broadcast %cst_199 : f32 to vector<16x17xf32>
    %c0_200 = arith.constant 0 : index
    %c0_201 = arith.constant 0 : index
    %392 = vector.load %arg23[%c0_200, %c0_201] : memref<16x1090xf32, #tpu.memory_space<vmem>>, vector<16x17xf32>
    tpu.vector_store %arg23[%c0_200, %c0_201], %391 {strides = array<i32>} : memref<16x1090xf32, #tpu.memory_space<vmem>>, vector<16x17xf32>,
    %c0_202 = arith.constant 0 : index
    %c17_203 = arith.constant 17 : index
    %393 = vector.load %arg23[%c0_202, %c17_203] : memref<16x1090xf32, #tpu.memory_space<vmem>>, vector<16x256xf32>
    tpu.vector_store %arg23[%c0_202, %c17_203], %390 {strides = array<i32>} : memref<16x1090xf32, #tpu.memory_space<vmem>>, vector<16x256xf32>,
    %cst_204 = arith.constant 0.000000e+00 : f32
    %394 = vector.broadcast %cst_204 : f32 to vector<16x17xf32>
    %c0_205 = arith.constant 0 : index
    %c273_206 = arith.constant 273 : index
    %395 = vector.load %arg23[%c0_205, %c273_206] : memref<16x1090xf32, #tpu.memory_space<vmem>>, vector<16x17xf32>
    tpu.vector_store %arg23[%c0_205, %c273_206], %394 {strides = array<i32>} : memref<16x1090xf32, #tpu.memory_space<vmem>>, vector<16x17xf32>,
    %c4_207 = arith.constant 4 : index
    %c0_208 = arith.constant 0 : index
    %c0_209 = arith.constant 0 : index
    %396 = vector.load %arg8[%c4_207, %c0_208, %c0_209] : memref<8x16x10xf32, #tpu.memory_space<vmem>>, vector<1x16x10xf32>
    %397 = vector.shape_cast %396 : vector<1x16x10xf32> to vector<16x10xf32>
    %cst_210 = arith.constant 0.000000e+00 : f32
    %398 = vector.broadcast %cst_210 : f32 to vector<16x256xf32>
    %cst_211 = arith.constant 0.000000e+00 : f32
    %399 = vector.broadcast %cst_211 : f32 to vector<16x256xf32>
    %cst_212 = arith.constant 0.000000e+00 : f32
    %400 = vector.broadcast %cst_212 : f32 to vector<16x256xf32>
    %c0_213 = arith.constant 0 : index
    %c0_214 = arith.constant 0 : index
    %401 = vector.load %arg23[%c0_213, %c0_214] : memref<16x1090xf32, #tpu.memory_space<vmem>>, vector<16x256xf32>
    %402 = vector.extract_strided_slice %397 {offsets = [0, 0], sizes = [16, 1], strides = [1, 1]} : vector<16x10xf32> to vector<16x1xf32>
    %403 = vector.broadcast %402 : vector<16x1xf32> to vector<16x256xf32>
    %404 = arith.mulf %401, %403 : vector<16x256xf32>
    %405 = arith.addf %398, %404 : vector<16x256xf32>
    %c0_215 = arith.constant 0 : index
    %c1_216 = arith.constant 1 : index
    %406 = vector.load %arg23[%c0_215, %c1_216] : memref<16x1090xf32, #tpu.memory_space<vmem>>, vector<16x256xf32>
    %407 = vector.extract_strided_slice %397 {offsets = [0, 1], sizes = [16, 1], strides = [1, 1]} : vector<16x10xf32> to vector<16x1xf32>
    %408 = vector.broadcast %407 : vector<16x1xf32> to vector<16x256xf32>
    %409 = arith.mulf %406, %408 : vector<16x256xf32>
    %410 = arith.addf %399, %409 : vector<16x256xf32>
    %c0_217 = arith.constant 0 : index
    %c2_218 = arith.constant 2 : index
    %411 = vector.load %arg23[%c0_217, %c2_218] : memref<16x1090xf32, #tpu.memory_space<vmem>>, vector<16x256xf32>
    %412 = vector.extract_strided_slice %397 {offsets = [0, 2], sizes = [16, 1], strides = [1, 1]} : vector<16x10xf32> to vector<16x1xf32>
    %413 = vector.broadcast %412 : vector<16x1xf32> to vector<16x256xf32>
    %414 = arith.mulf %411, %413 : vector<16x256xf32>
    %415 = arith.addf %400, %414 : vector<16x256xf32>
    %c0_219 = arith.constant 0 : index
    %c16_220 = arith.constant 16 : index
    %416 = vector.load %arg23[%c0_219, %c16_220] : memref<16x1090xf32, #tpu.memory_space<vmem>>, vector<16x256xf32>
    %417 = vector.extract_strided_slice %397 {offsets = [0, 3], sizes = [16, 1], strides = [1, 1]} : vector<16x10xf32> to vector<16x1xf32>
    %418 = vector.broadcast %417 : vector<16x1xf32> to vector<16x256xf32>
    %419 = arith.mulf %416, %418 : vector<16x256xf32>
    %420 = arith.addf %405, %419 : vector<16x256xf32>
    %c0_221 = arith.constant 0 : index
    %c17_222 = arith.constant 17 : index
    %421 = vector.load %arg23[%c0_221, %c17_222] : memref<16x1090xf32, #tpu.memory_space<vmem>>, vector<16x256xf32>
    %422 = vector.extract_strided_slice %397 {offsets = [0, 4], sizes = [16, 1], strides = [1, 1]} : vector<16x10xf32> to vector<16x1xf32>
    %423 = vector.broadcast %422 : vector<16x1xf32> to vector<16x256xf32>
    %424 = arith.mulf %421, %423 : vector<16x256xf32>
    %425 = arith.addf %410, %424 : vector<16x256xf32>
    %c0_223 = arith.constant 0 : index
    %c18_224 = arith.constant 18 : index
    %426 = vector.load %arg23[%c0_223, %c18_224] : memref<16x1090xf32, #tpu.memory_space<vmem>>, vector<16x256xf32>
    %427 = vector.extract_strided_slice %397 {offsets = [0, 5], sizes = [16, 1], strides = [1, 1]} : vector<16x10xf32> to vector<16x1xf32>
    %428 = vector.broadcast %427 : vector<16x1xf32> to vector<16x256xf32>
    %429 = arith.mulf %426, %428 : vector<16x256xf32>
    %430 = arith.addf %415, %429 : vector<16x256xf32>
    %c0_225 = arith.constant 0 : index
    %c32_226 = arith.constant 32 : index
    %431 = vector.load %arg23[%c0_225, %c32_226] : memref<16x1090xf32, #tpu.memory_space<vmem>>, vector<16x256xf32>
    %432 = vector.extract_strided_slice %397 {offsets = [0, 6], sizes = [16, 1], strides = [1, 1]} : vector<16x10xf32> to vector<16x1xf32>
    %433 = vector.broadcast %432 : vector<16x1xf32> to vector<16x256xf32>
    %434 = arith.mulf %431, %433 : vector<16x256xf32>
    %435 = arith.addf %420, %434 : vector<16x256xf32>
    %c0_227 = arith.constant 0 : index
    %c33_228 = arith.constant 33 : index
    %436 = vector.load %arg23[%c0_227, %c33_228] : memref<16x1090xf32, #tpu.memory_space<vmem>>, vector<16x256xf32>
    %437 = vector.extract_strided_slice %397 {offsets = [0, 7], sizes = [16, 1], strides = [1, 1]} : vector<16x10xf32> to vector<16x1xf32>
    %438 = vector.broadcast %437 : vector<16x1xf32> to vector<16x256xf32>
    %439 = arith.mulf %436, %438 : vector<16x256xf32>
    %440 = arith.addf %425, %439 : vector<16x256xf32>
    %c0_229 = arith.constant 0 : index
    %c34_230 = arith.constant 34 : index
    %441 = vector.load %arg23[%c0_229, %c34_230] : memref<16x1090xf32, #tpu.memory_space<vmem>>, vector<16x256xf32>
    %442 = vector.extract_strided_slice %397 {offsets = [0, 8], sizes = [16, 1], strides = [1, 1]} : vector<16x10xf32> to vector<16x1xf32>
    %443 = vector.broadcast %442 : vector<16x1xf32> to vector<16x256xf32>
    %444 = arith.mulf %441, %443 : vector<16x256xf32>
    %445 = arith.addf %430, %444 : vector<16x256xf32>
    %446 = vector.broadcast %265 : vector<1x256xf32> to vector<16x256xf32>
    %447 = arith.mulf %435, %446 : vector<16x256xf32>
    %448 = arith.addf %447, %440 : vector<16x256xf32>
    %449 = vector.broadcast %270 : vector<1x256xf32> to vector<16x256xf32>
    %450 = arith.mulf %445, %449 : vector<16x256xf32>
    %451 = arith.addf %448, %450 : vector<16x256xf32>
    %c4_231 = arith.constant 4 : index
    %c0_232 = arith.constant 0 : index
    %c0_233 = arith.constant 0 : index
    %452 = vector.load %arg9[%c4_231, %c0_232, %c0_233] : memref<8x16x16xf32, #tpu.memory_space<vmem>>, vector<1x16x16xf32>
    %453 = vector.shape_cast %452 : vector<1x16x16xf32> to vector<16x16xf32>
    %cst_234 = arith.constant dense<0.000000e+00> : vector<16x256xf32>
    %454 = tpu.matmul %453, %451, %cst_234 {dimension_numbers = #tpu.dot_dimension_numbers<[1], [0], [0], [1], [0, 0, 1, 1], [], []>} : vector<16x16xf32>, vector<16x256xf32>, vector<16x256xf32> -> vector<16x256xf32>
    %455 = vector.extract_strided_slice %397 {offsets = [0, 9], sizes = [16, 1], strides = [1, 1]} : vector<16x10xf32> to vector<16x1xf32>
    %456 = vector.broadcast %455 : vector<16x1xf32> to vector<16x256xf32>
    %457 = arith.addf %454, %456 : vector<16x256xf32>
    %cst_235 = arith.constant 0.00999999977 : f32
    %458 = vector.broadcast %cst_235 : f32 to vector<16x256xf32>
    %459 = arith.mulf %458, %457 : vector<16x256xf32>
    %460 = arith.maximumf %457, %459 : vector<16x256xf32>
    %c0_236 = arith.constant 0 : index
    %c1_237 = arith.constant 1 : index
    %461 = memref.load %arg2[%c0_236, %c1_237] : memref<3x4xf32, #tpu.memory_space<smem>>
    %462 = vector.broadcast %461 : f32 to vector<16x64xf32>
    %463 = arith.mulf %462, %5 : vector<16x64xf32>
    %c1_238 = arith.constant 1 : index
    %c1_239 = arith.constant 1 : index
    %464 = memref.load %arg2[%c1_238, %c1_239] : memref<3x4xf32, #tpu.memory_space<smem>>
    %465 = vector.broadcast %464 : f32 to vector<16x64xf32>
    %466 = arith.mulf %465, %193 : vector<16x64xf32>
    %467 = arith.addf %463, %466 : vector<16x64xf32>
    %c2_240 = arith.constant 2 : index
    %c1_241 = arith.constant 1 : index
    %468 = memref.load %arg2[%c2_240, %c1_241] : memref<3x4xf32, #tpu.memory_space<smem>>
    %c0_242 = arith.constant 0 : index
    %c0_243 = arith.constant 0 : index
    %469 = vector.load %arg15[%c0_242, %c0_243] : memref<256x64xf32, #tpu.memory_space<vmem>>, vector<256x64xf32>
    %cst_244 = arith.constant dense<0.000000e+00> : vector<16x64xf32>
    %470 = tpu.matmul %460, %469, %cst_244 {dimension_numbers = #tpu.dot_dimension_numbers<[1], [0], [0], [1], [0, 0, 1, 1], [], []>} : vector<16x256xf32>, vector<256x64xf32>, vector<16x64xf32> -> vector<16x64xf32>
    %471 = vector.broadcast %468 : f32 to vector<16x64xf32>
    %472 = arith.mulf %471, %470 : vector<16x64xf32>
    %473 = arith.addf %467, %472 : vector<16x64xf32>
    %cst_245 = arith.constant 0.000000e+00 : f32
    %474 = vector.broadcast %cst_245 : f32 to vector<16x9xf32>
    %c0_246 = arith.constant 0 : index
    %c0_247 = arith.constant 0 : index
    %475 = vector.load %arg23[%c0_246, %c0_247] : memref<16x1090xf32, #tpu.memory_space<vmem>>, vector<16x9xf32>
    tpu.vector_store %arg23[%c0_246, %c0_247], %474 {strides = array<i32>} : memref<16x1090xf32, #tpu.memory_space<vmem>>, vector<16x9xf32>,
    %c0_248 = arith.constant 0 : index
    %c9_249 = arith.constant 9 : index
    %476 = vector.load %arg23[%c0_248, %c9_249] : memref<16x1090xf32, #tpu.memory_space<vmem>>, vector<16x64xf32>
    tpu.vector_store %arg23[%c0_248, %c9_249], %473 {strides = array<i32>} : memref<16x1090xf32, #tpu.memory_space<vmem>>, vector<16x64xf32>,
    %cst_250 = arith.constant 0.000000e+00 : f32
    %477 = vector.broadcast %cst_250 : f32 to vector<16x9xf32>
    %c0_251 = arith.constant 0 : index
    %c73_252 = arith.constant 73 : index
    %478 = vector.load %arg23[%c0_251, %c73_252] : memref<16x1090xf32, #tpu.memory_space<vmem>>, vector<16x9xf32>
    tpu.vector_store %arg23[%c0_251, %c73_252], %477 {strides = array<i32>} : memref<16x1090xf32, #tpu.memory_space<vmem>>, vector<16x9xf32>,
    %c5_253 = arith.constant 5 : index
    %c0_254 = arith.constant 0 : index
    %c0_255 = arith.constant 0 : index
    %479 = vector.load %arg8[%c5_253, %c0_254, %c0_255] : memref<8x16x10xf32, #tpu.memory_space<vmem>>, vector<1x16x10xf32>
    %480 = vector.shape_cast %479 : vector<1x16x10xf32> to vector<16x10xf32>
    %cst_256 = arith.constant 0.000000e+00 : f32
    %481 = vector.broadcast %cst_256 : f32 to vector<16x64xf32>
    %cst_257 = arith.constant 0.000000e+00 : f32
    %482 = vector.broadcast %cst_257 : f32 to vector<16x64xf32>
    %cst_258 = arith.constant 0.000000e+00 : f32
    %483 = vector.broadcast %cst_258 : f32 to vector<16x64xf32>
    %c0_259 = arith.constant 0 : index
    %c0_260 = arith.constant 0 : index
    %484 = vector.load %arg23[%c0_259, %c0_260] : memref<16x1090xf32, #tpu.memory_space<vmem>>, vector<16x64xf32>
    %485 = vector.extract_strided_slice %480 {offsets = [0, 0], sizes = [16, 1], strides = [1, 1]} : vector<16x10xf32> to vector<16x1xf32>
    %486 = vector.broadcast %485 : vector<16x1xf32> to vector<16x64xf32>
    %487 = arith.mulf %484, %486 : vector<16x64xf32>
    %488 = arith.addf %481, %487 : vector<16x64xf32>
    %c0_261 = arith.constant 0 : index
    %c1_262 = arith.constant 1 : index
    %489 = vector.load %arg23[%c0_261, %c1_262] : memref<16x1090xf32, #tpu.memory_space<vmem>>, vector<16x64xf32>
    %490 = vector.extract_strided_slice %480 {offsets = [0, 1], sizes = [16, 1], strides = [1, 1]} : vector<16x10xf32> to vector<16x1xf32>
    %491 = vector.broadcast %490 : vector<16x1xf32> to vector<16x64xf32>
    %492 = arith.mulf %489, %491 : vector<16x64xf32>
    %493 = arith.addf %482, %492 : vector<16x64xf32>
    %c0_263 = arith.constant 0 : index
    %c2_264 = arith.constant 2 : index
    %494 = vector.load %arg23[%c0_263, %c2_264] : memref<16x1090xf32, #tpu.memory_space<vmem>>, vector<16x64xf32>
    %495 = vector.extract_strided_slice %480 {offsets = [0, 2], sizes = [16, 1], strides = [1, 1]} : vector<16x10xf32> to vector<16x1xf32>
    %496 = vector.broadcast %495 : vector<16x1xf32> to vector<16x64xf32>
    %497 = arith.mulf %494, %496 : vector<16x64xf32>
    %498 = arith.addf %483, %497 : vector<16x64xf32>
    %c0_265 = arith.constant 0 : index
    %c8_266 = arith.constant 8 : index
    %499 = vector.load %arg23[%c0_265, %c8_266] : memref<16x1090xf32, #tpu.memory_space<vmem>>, vector<16x64xf32>
    %500 = vector.extract_strided_slice %480 {offsets = [0, 3], sizes = [16, 1], strides = [1, 1]} : vector<16x10xf32> to vector<16x1xf32>
    %501 = vector.broadcast %500 : vector<16x1xf32> to vector<16x64xf32>
    %502 = arith.mulf %499, %501 : vector<16x64xf32>
    %503 = arith.addf %488, %502 : vector<16x64xf32>
    %c0_267 = arith.constant 0 : index
    %c9_268 = arith.constant 9 : index
    %504 = vector.load %arg23[%c0_267, %c9_268] : memref<16x1090xf32, #tpu.memory_space<vmem>>, vector<16x64xf32>
    %505 = vector.extract_strided_slice %480 {offsets = [0, 4], sizes = [16, 1], strides = [1, 1]} : vector<16x10xf32> to vector<16x1xf32>
    %506 = vector.broadcast %505 : vector<16x1xf32> to vector<16x64xf32>
    %507 = arith.mulf %504, %506 : vector<16x64xf32>
    %508 = arith.addf %493, %507 : vector<16x64xf32>
    %c0_269 = arith.constant 0 : index
    %c10_270 = arith.constant 10 : index
    %509 = vector.load %arg23[%c0_269, %c10_270] : memref<16x1090xf32, #tpu.memory_space<vmem>>, vector<16x64xf32>
    %510 = vector.extract_strided_slice %480 {offsets = [0, 5], sizes = [16, 1], strides = [1, 1]} : vector<16x10xf32> to vector<16x1xf32>
    %511 = vector.broadcast %510 : vector<16x1xf32> to vector<16x64xf32>
    %512 = arith.mulf %509, %511 : vector<16x64xf32>
    %513 = arith.addf %498, %512 : vector<16x64xf32>
    %c0_271 = arith.constant 0 : index
    %c16_272 = arith.constant 16 : index
    %514 = vector.load %arg23[%c0_271, %c16_272] : memref<16x1090xf32, #tpu.memory_space<vmem>>, vector<16x64xf32>
    %515 = vector.extract_strided_slice %480 {offsets = [0, 6], sizes = [16, 1], strides = [1, 1]} : vector<16x10xf32> to vector<16x1xf32>
    %516 = vector.broadcast %515 : vector<16x1xf32> to vector<16x64xf32>
    %517 = arith.mulf %514, %516 : vector<16x64xf32>
    %518 = arith.addf %503, %517 : vector<16x64xf32>
    %c0_273 = arith.constant 0 : index
    %c17_274 = arith.constant 17 : index
    %519 = vector.load %arg23[%c0_273, %c17_274] : memref<16x1090xf32, #tpu.memory_space<vmem>>, vector<16x64xf32>
    %520 = vector.extract_strided_slice %480 {offsets = [0, 7], sizes = [16, 1], strides = [1, 1]} : vector<16x10xf32> to vector<16x1xf32>
    %521 = vector.broadcast %520 : vector<16x1xf32> to vector<16x64xf32>
    %522 = arith.mulf %519, %521 : vector<16x64xf32>
    %523 = arith.addf %508, %522 : vector<16x64xf32>
    %c0_275 = arith.constant 0 : index
    %c18_276 = arith.constant 18 : index
    %524 = vector.load %arg23[%c0_275, %c18_276] : memref<16x1090xf32, #tpu.memory_space<vmem>>, vector<16x64xf32>
    %525 = vector.extract_strided_slice %480 {offsets = [0, 8], sizes = [16, 1], strides = [1, 1]} : vector<16x10xf32> to vector<16x1xf32>
    %526 = vector.broadcast %525 : vector<16x1xf32> to vector<16x64xf32>
    %527 = arith.mulf %524, %526 : vector<16x64xf32>
    %528 = arith.addf %513, %527 : vector<16x64xf32>
    %529 = vector.broadcast %173 : vector<1x64xf32> to vector<16x64xf32>
    %530 = arith.mulf %518, %529 : vector<16x64xf32>
    %531 = arith.addf %530, %523 : vector<16x64xf32>
    %532 = vector.broadcast %178 : vector<1x64xf32> to vector<16x64xf32>
    %533 = arith.mulf %528, %532 : vector<16x64xf32>
    %534 = arith.addf %531, %533 : vector<16x64xf32>
    %c5_277 = arith.constant 5 : index
    %c0_278 = arith.constant 0 : index
    %c0_279 = arith.constant 0 : index
    %535 = vector.load %arg9[%c5_277, %c0_278, %c0_279] : memref<8x16x16xf32, #tpu.memory_space<vmem>>, vector<1x16x16xf32>
    %536 = vector.shape_cast %535 : vector<1x16x16xf32> to vector<16x16xf32>
    %cst_280 = arith.constant dense<0.000000e+00> : vector<16x64xf32>
    %537 = tpu.matmul %536, %534, %cst_280 {dimension_numbers = #tpu.dot_dimension_numbers<[1], [0], [0], [1], [0, 0, 1, 1], [], []>} : vector<16x16xf32>, vector<16x64xf32>, vector<16x64xf32> -> vector<16x64xf32>
    %538 = vector.extract_strided_slice %480 {offsets = [0, 9], sizes = [16, 1], strides = [1, 1]} : vector<16x10xf32> to vector<16x1xf32>
    %539 = vector.broadcast %538 : vector<16x1xf32> to vector<16x64xf32>
    %540 = arith.addf %537, %539 : vector<16x64xf32>
    %cst_281 = arith.constant 0.00999999977 : f32
    %541 = vector.broadcast %cst_281 : f32 to vector<16x64xf32>
    %542 = arith.mulf %541, %540 : vector<16x64xf32>
    %543 = arith.maximumf %540, %542 : vector<16x64xf32>
    %c0_282 = arith.constant 0 : index
    %c2_283 = arith.constant 2 : index
    %544 = memref.load %arg2[%c0_282, %c2_283] : memref<3x4xf32, #tpu.memory_space<smem>>
    %545 = vector.broadcast %544 : f32 to vector<16x16xf32>
    %546 = arith.mulf %545, %7 : vector<16x16xf32>
    %c1_284 = arith.constant 1 : index
    %c2_285 = arith.constant 2 : index
    %547 = memref.load %arg2[%c1_284, %c2_285] : memref<3x4xf32, #tpu.memory_space<smem>>
    %548 = vector.broadcast %547 : f32 to vector<16x16xf32>
    %549 = arith.mulf %548, %101 : vector<16x16xf32>
    %550 = arith.addf %546, %549 : vector<16x16xf32>
    %c2_286 = arith.constant 2 : index
    %c2_287 = arith.constant 2 : index
    %551 = memref.load %arg2[%c2_286, %c2_287] : memref<3x4xf32, #tpu.memory_space<smem>>
    %c0_288 = arith.constant 0 : index
    %c0_289 = arith.constant 0 : index
    %552 = vector.load %arg16[%c0_288, %c0_289] : memref<64x16xf32, #tpu.memory_space<vmem>>, vector<64x16xf32>
    %cst_290 = arith.constant dense<0.000000e+00> : vector<16x16xf32>
    %553 = tpu.matmul %543, %552, %cst_290 {dimension_numbers = #tpu.dot_dimension_numbers<[1], [0], [0], [1], [0, 0, 1, 1], [], []>} : vector<16x64xf32>, vector<64x16xf32>, vector<16x16xf32> -> vector<16x16xf32>
    %554 = vector.broadcast %551 : f32 to vector<16x16xf32>
    %555 = arith.mulf %554, %553 : vector<16x16xf32>
    %556 = arith.addf %550, %555 : vector<16x16xf32>
    %cst_291 = arith.constant 0.000000e+00 : f32
    %557 = vector.broadcast %cst_291 : f32 to vector<16x5xf32>
    %c0_292 = arith.constant 0 : index
    %c0_293 = arith.constant 0 : index
    %558 = vector.load %arg23[%c0_292, %c0_293] : memref<16x1090xf32, #tpu.memory_space<vmem>>, vector<16x5xf32>
    tpu.vector_store %arg23[%c0_292, %c0_293], %557 {strides = array<i32>} : memref<16x1090xf32, #tpu.memory_space<vmem>>, vector<16x5xf32>,
    %c0_294 = arith.constant 0 : index
    %c5_295 = arith.constant 5 : index
    %559 = vector.load %arg23[%c0_294, %c5_295] : memref<16x1090xf32, #tpu.memory_space<vmem>>, vector<16x16xf32>
    tpu.vector_store %arg23[%c0_294, %c5_295], %556 {strides = array<i32>} : memref<16x1090xf32, #tpu.memory_space<vmem>>, vector<16x16xf32>,
    %cst_296 = arith.constant 0.000000e+00 : f32
    %560 = vector.broadcast %cst_296 : f32 to vector<16x5xf32>
    %c0_297 = arith.constant 0 : index
    %c21_298 = arith.constant 21 : index
    %561 = vector.load %arg23[%c0_297, %c21_298] : memref<16x1090xf32, #tpu.memory_space<vmem>>, vector<16x5xf32>
    tpu.vector_store %arg23[%c0_297, %c21_298], %560 {strides = array<i32>} : memref<16x1090xf32, #tpu.memory_space<vmem>>, vector<16x5xf32>,
    %c6_299 = arith.constant 6 : index
    %c0_300 = arith.constant 0 : index
    %c0_301 = arith.constant 0 : index
    %562 = vector.load %arg8[%c6_299, %c0_300, %c0_301] : memref<8x16x10xf32, #tpu.memory_space<vmem>>, vector<1x16x10xf32>
    %563 = vector.shape_cast %562 : vector<1x16x10xf32> to vector<16x10xf32>
    %cst_302 = arith.constant 0.000000e+00 : f32
    %564 = vector.broadcast %cst_302 : f32 to vector<16x16xf32>
    %cst_303 = arith.constant 0.000000e+00 : f32
    %565 = vector.broadcast %cst_303 : f32 to vector<16x16xf32>
    %cst_304 = arith.constant 0.000000e+00 : f32
    %566 = vector.broadcast %cst_304 : f32 to vector<16x16xf32>
    %c0_305 = arith.constant 0 : index
    %c0_306 = arith.constant 0 : index
    %567 = vector.load %arg23[%c0_305, %c0_306] : memref<16x1090xf32, #tpu.memory_space<vmem>>, vector<16x16xf32>
    %568 = vector.extract_strided_slice %563 {offsets = [0, 0], sizes = [16, 1], strides = [1, 1]} : vector<16x10xf32> to vector<16x1xf32>
    %569 = vector.broadcast %568 : vector<16x1xf32> to vector<16x16xf32>
    %570 = arith.mulf %567, %569 : vector<16x16xf32>
    %571 = arith.addf %564, %570 : vector<16x16xf32>
    %c0_307 = arith.constant 0 : index
    %c1_308 = arith.constant 1 : index
    %572 = vector.load %arg23[%c0_307, %c1_308] : memref<16x1090xf32, #tpu.memory_space<vmem>>, vector<16x16xf32>
    %573 = vector.extract_strided_slice %563 {offsets = [0, 1], sizes = [16, 1], strides = [1, 1]} : vector<16x10xf32> to vector<16x1xf32>
    %574 = vector.broadcast %573 : vector<16x1xf32> to vector<16x16xf32>
    %575 = arith.mulf %572, %574 : vector<16x16xf32>
    %576 = arith.addf %565, %575 : vector<16x16xf32>
    %c0_309 = arith.constant 0 : index
    %c2_310 = arith.constant 2 : index
    %577 = vector.load %arg23[%c0_309, %c2_310] : memref<16x1090xf32, #tpu.memory_space<vmem>>, vector<16x16xf32>
    %578 = vector.extract_strided_slice %563 {offsets = [0, 2], sizes = [16, 1], strides = [1, 1]} : vector<16x10xf32> to vector<16x1xf32>
    %579 = vector.broadcast %578 : vector<16x1xf32> to vector<16x16xf32>
    %580 = arith.mulf %577, %579 : vector<16x16xf32>
    %581 = arith.addf %566, %580 : vector<16x16xf32>
    %c0_311 = arith.constant 0 : index
    %c4_312 = arith.constant 4 : index
    %582 = vector.load %arg23[%c0_311, %c4_312] : memref<16x1090xf32, #tpu.memory_space<vmem>>, vector<16x16xf32>
    %583 = vector.extract_strided_slice %563 {offsets = [0, 3], sizes = [16, 1], strides = [1, 1]} : vector<16x10xf32> to vector<16x1xf32>
    %584 = vector.broadcast %583 : vector<16x1xf32> to vector<16x16xf32>
    %585 = arith.mulf %582, %584 : vector<16x16xf32>
    %586 = arith.addf %571, %585 : vector<16x16xf32>
    %c0_313 = arith.constant 0 : index
    %c5_314 = arith.constant 5 : index
    %587 = vector.load %arg23[%c0_313, %c5_314] : memref<16x1090xf32, #tpu.memory_space<vmem>>, vector<16x16xf32>
    %588 = vector.extract_strided_slice %563 {offsets = [0, 4], sizes = [16, 1], strides = [1, 1]} : vector<16x10xf32> to vector<16x1xf32>
    %589 = vector.broadcast %588 : vector<16x1xf32> to vector<16x16xf32>
    %590 = arith.mulf %587, %589 : vector<16x16xf32>
    %591 = arith.addf %576, %590 : vector<16x16xf32>
    %c0_315 = arith.constant 0 : index
    %c6_316 = arith.constant 6 : index
    %592 = vector.load %arg23[%c0_315, %c6_316] : memref<16x1090xf32, #tpu.memory_space<vmem>>, vector<16x16xf32>
    %593 = vector.extract_strided_slice %563 {offsets = [0, 5], sizes = [16, 1], strides = [1, 1]} : vector<16x10xf32> to vector<16x1xf32>
    %594 = vector.broadcast %593 : vector<16x1xf32> to vector<16x16xf32>
    %595 = arith.mulf %592, %594 : vector<16x16xf32>
    %596 = arith.addf %581, %595 : vector<16x16xf32>
    %c0_317 = arith.constant 0 : index
    %c8_318 = arith.constant 8 : index
    %597 = vector.load %arg23[%c0_317, %c8_318] : memref<16x1090xf32, #tpu.memory_space<vmem>>, vector<16x16xf32>
    %598 = vector.extract_strided_slice %563 {offsets = [0, 6], sizes = [16, 1], strides = [1, 1]} : vector<16x10xf32> to vector<16x1xf32>
    %599 = vector.broadcast %598 : vector<16x1xf32> to vector<16x16xf32>
    %600 = arith.mulf %597, %599 : vector<16x16xf32>
    %601 = arith.addf %586, %600 : vector<16x16xf32>
    %c0_319 = arith.constant 0 : index
    %c9_320 = arith.constant 9 : index
    %602 = vector.load %arg23[%c0_319, %c9_320] : memref<16x1090xf32, #tpu.memory_space<vmem>>, vector<16x16xf32>
    %603 = vector.extract_strided_slice %563 {offsets = [0, 7], sizes = [16, 1], strides = [1, 1]} : vector<16x10xf32> to vector<16x1xf32>
    %604 = vector.broadcast %603 : vector<16x1xf32> to vector<16x16xf32>
    %605 = arith.mulf %602, %604 : vector<16x16xf32>
    %606 = arith.addf %591, %605 : vector<16x16xf32>
    %c0_321 = arith.constant 0 : index
    %c10_322 = arith.constant 10 : index
    %607 = vector.load %arg23[%c0_321, %c10_322] : memref<16x1090xf32, #tpu.memory_space<vmem>>, vector<16x16xf32>
    %608 = vector.extract_strided_slice %563 {offsets = [0, 8], sizes = [16, 1], strides = [1, 1]} : vector<16x10xf32> to vector<16x1xf32>
    %609 = vector.broadcast %608 : vector<16x1xf32> to vector<16x16xf32>
    %610 = arith.mulf %607, %609 : vector<16x16xf32>
    %611 = arith.addf %596, %610 : vector<16x16xf32>
    %612 = vector.broadcast %81 : vector<1x16xf32> to vector<16x16xf32>
    %613 = arith.mulf %601, %612 : vector<16x16xf32>
    %614 = arith.addf %613, %606 : vector<16x16xf32>
    %615 = vector.broadcast %86 : vector<1x16xf32> to vector<16x16xf32>
    %616 = arith.mulf %611, %615 : vector<16x16xf32>
    %617 = arith.addf %614, %616 : vector<16x16xf32>
    %c6_323 = arith.constant 6 : index
    %c0_324 = arith.constant 0 : index
    %c0_325 = arith.constant 0 : index
    %618 = vector.load %arg9[%c6_323, %c0_324, %c0_325] : memref<8x16x16xf32, #tpu.memory_space<vmem>>, vector<1x16x16xf32>
    %619 = vector.shape_cast %618 : vector<1x16x16xf32> to vector<16x16xf32>
    %cst_326 = arith.constant dense<0.000000e+00> : vector<16x16xf32>
    %620 = tpu.matmul %619, %617, %cst_326 {dimension_numbers = #tpu.dot_dimension_numbers<[1], [0], [0], [1], [0, 0, 1, 1], [], []>} : vector<16x16xf32>, vector<16x16xf32>, vector<16x16xf32> -> vector<16x16xf32>
    %621 = vector.extract_strided_slice %563 {offsets = [0, 9], sizes = [16, 1], strides = [1, 1]} : vector<16x10xf32> to vector<16x1xf32>
    %622 = vector.broadcast %621 : vector<16x1xf32> to vector<16x16xf32>
    %623 = arith.addf %620, %622 : vector<16x16xf32>
    %cst_327 = arith.constant 0.00999999977 : f32
    %624 = vector.broadcast %cst_327 : f32 to vector<16x16xf32>
    %625 = arith.mulf %624, %623 : vector<16x16xf32>
    %626 = arith.maximumf %623, %625 : vector<16x16xf32>
    %c0_328 = arith.constant 0 : index
    %c3_329 = arith.constant 3 : index
    %627 = memref.load %arg2[%c0_328, %c3_329] : memref<3x4xf32, #tpu.memory_space<smem>>
    %628 = vector.broadcast %627 : f32 to vector<16x4xf32>
    %629 = arith.mulf %628, %9 : vector<16x4xf32>
    %c1_330 = arith.constant 1 : index
    %c3_331 = arith.constant 3 : index
    %630 = memref.load %arg2[%c1_330, %c3_331] : memref<3x4xf32, #tpu.memory_space<smem>>
    %631 = vector.broadcast %630 : f32 to vector<16x4xf32>
    %632 = arith.mulf %631, %9 : vector<16x4xf32>
    %633 = arith.addf %629, %632 : vector<16x4xf32>
    %c2_332 = arith.constant 2 : index
    %c3_333 = arith.constant 3 : index
    %634 = memref.load %arg2[%c2_332, %c3_333] : memref<3x4xf32, #tpu.memory_space<smem>>
    %c0_334 = arith.constant 0 : index
    %c0_335 = arith.constant 0 : index
    %635 = vector.load %arg17[%c0_334, %c0_335] : memref<16x4xf32, #tpu.memory_space<vmem>>, vector<16x4xf32>
    %cst_336 = arith.constant dense<0.000000e+00> : vector<16x4xf32>
    %636 = tpu.matmul %626, %635, %cst_336 {dimension_numbers = #tpu.dot_dimension_numbers<[1], [0], [0], [1], [0, 0, 1, 1], [], []>} : vector<16x16xf32>, vector<16x4xf32>, vector<16x4xf32> -> vector<16x4xf32>
    %637 = vector.broadcast %634 : f32 to vector<16x4xf32>
    %638 = arith.mulf %637, %636 : vector<16x4xf32>
    %639 = arith.addf %633, %638 : vector<16x4xf32>
    %cst_337 = arith.constant 0.000000e+00 : f32
    %640 = vector.broadcast %cst_337 : f32 to vector<16x3xf32>
    %c0_338 = arith.constant 0 : index
    %c0_339 = arith.constant 0 : index
    %641 = vector.load %arg23[%c0_338, %c0_339] : memref<16x1090xf32, #tpu.memory_space<vmem>>, vector<16x3xf32>
    tpu.vector_store %arg23[%c0_338, %c0_339], %640 {strides = array<i32>} : memref<16x1090xf32, #tpu.memory_space<vmem>>, vector<16x3xf32>,
    %c0_340 = arith.constant 0 : index
    %c3_341 = arith.constant 3 : index
    %642 = vector.load %arg23[%c0_340, %c3_341] : memref<16x1090xf32, #tpu.memory_space<vmem>>, vector<16x4xf32>
    tpu.vector_store %arg23[%c0_340, %c3_341], %639 {strides = array<i32>} : memref<16x1090xf32, #tpu.memory_space<vmem>>, vector<16x4xf32>,
    %cst_342 = arith.constant 0.000000e+00 : f32
    %643 = vector.broadcast %cst_342 : f32 to vector<16x3xf32>
    %c0_343 = arith.constant 0 : index
    %c7 = arith.constant 7 : index
    %644 = vector.load %arg23[%c0_343, %c7] : memref<16x1090xf32, #tpu.memory_space<vmem>>, vector<16x3xf32>
    tpu.vector_store %arg23[%c0_343, %c7], %643 {strides = array<i32>} : memref<16x1090xf32, #tpu.memory_space<vmem>>, vector<16x3xf32>,
    %c7_344 = arith.constant 7 : index
    %c0_345 = arith.constant 0 : index
    %c0_346 = arith.constant 0 : index
    %645 = vector.load %arg8[%c7_344, %c0_345, %c0_346] : memref<8x16x10xf32, #tpu.memory_space<vmem>>, vector<1x16x10xf32>
    %646 = vector.shape_cast %645 : vector<1x16x10xf32> to vector<16x10xf32>
    %cst_347 = arith.constant 0.000000e+00 : f32
    %647 = vector.broadcast %cst_347 : f32 to vector<16x4xf32>
    %cst_348 = arith.constant 0.000000e+00 : f32
    %648 = vector.broadcast %cst_348 : f32 to vector<16x4xf32>
    %cst_349 = arith.constant 0.000000e+00 : f32
    %649 = vector.broadcast %cst_349 : f32 to vector<16x4xf32>
    %c0_350 = arith.constant 0 : index
    %c0_351 = arith.constant 0 : index
    %650 = vector.load %arg23[%c0_350, %c0_351] : memref<16x1090xf32, #tpu.memory_space<vmem>>, vector<16x4xf32>
    %651 = vector.extract_strided_slice %646 {offsets = [0, 0], sizes = [16, 1], strides = [1, 1]} : vector<16x10xf32> to vector<16x1xf32>
    %652 = vector.broadcast %651 : vector<16x1xf32> to vector<16x4xf32>
    %653 = arith.mulf %650, %652 : vector<16x4xf32>
    %654 = arith.addf %647, %653 : vector<16x4xf32>
    %c0_352 = arith.constant 0 : index
    %c1_353 = arith.constant 1 : index
    %655 = vector.load %arg23[%c0_352, %c1_353] : memref<16x1090xf32, #tpu.memory_space<vmem>>, vector<16x4xf32>
    %656 = vector.extract_strided_slice %646 {offsets = [0, 1], sizes = [16, 1], strides = [1, 1]} : vector<16x10xf32> to vector<16x1xf32>
    %657 = vector.broadcast %656 : vector<16x1xf32> to vector<16x4xf32>
    %658 = arith.mulf %655, %657 : vector<16x4xf32>
    %659 = arith.addf %648, %658 : vector<16x4xf32>
    %c0_354 = arith.constant 0 : index
    %c2_355 = arith.constant 2 : index
    %660 = vector.load %arg23[%c0_354, %c2_355] : memref<16x1090xf32, #tpu.memory_space<vmem>>, vector<16x4xf32>
    %661 = vector.extract_strided_slice %646 {offsets = [0, 2], sizes = [16, 1], strides = [1, 1]} : vector<16x10xf32> to vector<16x1xf32>
    %662 = vector.broadcast %661 : vector<16x1xf32> to vector<16x4xf32>
    %663 = arith.mulf %660, %662 : vector<16x4xf32>
    %664 = arith.addf %649, %663 : vector<16x4xf32>
    %c0_356 = arith.constant 0 : index
    %c2_357 = arith.constant 2 : index
    %665 = vector.load %arg23[%c0_356, %c2_357] : memref<16x1090xf32, #tpu.memory_space<vmem>>, vector<16x4xf32>
    %666 = vector.extract_strided_slice %646 {offsets = [0, 3], sizes = [16, 1], strides = [1, 1]} : vector<16x10xf32> to vector<16x1xf32>
    %667 = vector.broadcast %666 : vector<16x1xf32> to vector<16x4xf32>
    %668 = arith.mulf %665, %667 : vector<16x4xf32>
    %669 = arith.addf %654, %668 : vector<16x4xf32>
    %c0_358 = arith.constant 0 : index
    %c3_359 = arith.constant 3 : index
    %670 = vector.load %arg23[%c0_358, %c3_359] : memref<16x1090xf32, #tpu.memory_space<vmem>>, vector<16x4xf32>
    %671 = vector.extract_strided_slice %646 {offsets = [0, 4], sizes = [16, 1], strides = [1, 1]} : vector<16x10xf32> to vector<16x1xf32>
    %672 = vector.broadcast %671 : vector<16x1xf32> to vector<16x4xf32>
    %673 = arith.mulf %670, %672 : vector<16x4xf32>
    %674 = arith.addf %659, %673 : vector<16x4xf32>
    %c0_360 = arith.constant 0 : index
    %c4_361 = arith.constant 4 : index
    %675 = vector.load %arg23[%c0_360, %c4_361] : memref<16x1090xf32, #tpu.memory_space<vmem>>, vector<16x4xf32>
    %676 = vector.extract_strided_slice %646 {offsets = [0, 5], sizes = [16, 1], strides = [1, 1]} : vector<16x10xf32> to vector<16x1xf32>
    %677 = vector.broadcast %676 : vector<16x1xf32> to vector<16x4xf32>
    %678 = arith.mulf %675, %677 : vector<16x4xf32>
    %679 = arith.addf %664, %678 : vector<16x4xf32>
    %c0_362 = arith.constant 0 : index
    %c4_363 = arith.constant 4 : index
    %680 = vector.load %arg23[%c0_362, %c4_363] : memref<16x1090xf32, #tpu.memory_space<vmem>>, vector<16x4xf32>
    %681 = vector.extract_strided_slice %646 {offsets = [0, 6], sizes = [16, 1], strides = [1, 1]} : vector<16x10xf32> to vector<16x1xf32>
    %682 = vector.broadcast %681 : vector<16x1xf32> to vector<16x4xf32>
    %683 = arith.mulf %680, %682 : vector<16x4xf32>
    %684 = arith.addf %669, %683 : vector<16x4xf32>
    %c0_364 = arith.constant 0 : index
    %c5_365 = arith.constant 5 : index
    %685 = vector.load %arg23[%c0_364, %c5_365] : memref<16x1090xf32, #tpu.memory_space<vmem>>, vector<16x4xf32>
    %686 = vector.extract_strided_slice %646 {offsets = [0, 7], sizes = [16, 1], strides = [1, 1]} : vector<16x10xf32> to vector<16x1xf32>
    %687 = vector.broadcast %686 : vector<16x1xf32> to vector<16x4xf32>
    %688 = arith.mulf %685, %687 : vector<16x4xf32>
    %689 = arith.addf %674, %688 : vector<16x4xf32>
    %c0_366 = arith.constant 0 : index
    %c6_367 = arith.constant 6 : index
    %690 = vector.load %arg23[%c0_366, %c6_367] : memref<16x1090xf32, #tpu.memory_space<vmem>>, vector<16x4xf32>
    %691 = vector.extract_strided_slice %646 {offsets = [0, 8], sizes = [16, 1], strides = [1, 1]} : vector<16x10xf32> to vector<16x1xf32>
    %692 = vector.broadcast %691 : vector<16x1xf32> to vector<16x4xf32>
    %693 = arith.mulf %690, %692 : vector<16x4xf32>
    %694 = arith.addf %679, %693 : vector<16x4xf32>
    %695 = tpu.iota {dimensions = array<i32: 1>} : vector<1x4xi32>
    %c1_i32 = arith.constant 1 : i32
    %696 = vector.broadcast %c1_i32 : i32 to vector<1x4xi32>
    %697 = arith.andi %695, %696 : vector<1x4xi32>
    %c0_i32_368 = arith.constant 0 : i32
    %698 = vector.broadcast %c0_i32_368 : i32 to vector<1x4xi32>
    %699 = arith.cmpi ne, %697, %698 : vector<1x4xi32>
    %cst_369 = arith.constant 1.000000e+00 : f32
    %cst_370 = arith.constant 0.000000e+00 : f32
    %700 = vector.broadcast %cst_369 : f32 to vector<1x4xf32>
    %701 = vector.broadcast %cst_370 : f32 to vector<1x4xf32>
    %702 = arith.select %699, %700, %701 : vector<1x4xi1>, vector<1x4xf32>
    %c1_i32_371 = arith.constant 1 : i32
    %703 = vector.broadcast %c1_i32_371 : i32 to vector<1x4xi32>
    %704 = arith.cmpi ne, %697, %703 : vector<1x4xi32>
    %cst_372 = arith.constant 1.000000e+00 : f32
    %cst_373 = arith.constant 0.000000e+00 : f32
    %705 = vector.broadcast %cst_372 : f32 to vector<1x4xf32>
    %706 = vector.broadcast %cst_373 : f32 to vector<1x4xf32>
    %707 = arith.select %704, %705, %706 : vector<1x4xi1>, vector<1x4xf32>
    %708 = vector.broadcast %702 : vector<1x4xf32> to vector<16x4xf32>
    %709 = arith.mulf %684, %708 : vector<16x4xf32>
    %710 = arith.addf %709, %689 : vector<16x4xf32>
    %711 = vector.broadcast %707 : vector<1x4xf32> to vector<16x4xf32>
    %712 = arith.mulf %694, %711 : vector<16x4xf32>
    %713 = arith.addf %710, %712 : vector<16x4xf32>
    %c7_374 = arith.constant 7 : index
    %c0_375 = arith.constant 0 : index
    %c0_376 = arith.constant 0 : index
    %714 = vector.load %arg9[%c7_374, %c0_375, %c0_376] : memref<8x16x16xf32, #tpu.memory_space<vmem>>, vector<1x16x16xf32>
    %715 = vector.shape_cast %714 : vector<1x16x16xf32> to vector<16x16xf32>
    %cst_377 = arith.constant dense<0.000000e+00> : vector<16x4xf32>
    %716 = tpu.matmul %715, %713, %cst_377 {dimension_numbers = #tpu.dot_dimension_numbers<[1], [0], [0], [1], [0, 0, 1, 1], [], []>} : vector<16x16xf32>, vector<16x4xf32>, vector<16x4xf32> -> vector<16x4xf32>
    %717 = vector.extract_strided_slice %646 {offsets = [0, 9], sizes = [16, 1], strides = [1, 1]} : vector<16x10xf32> to vector<16x1xf32>
    %718 = vector.broadcast %717 : vector<16x1xf32> to vector<16x4xf32>
    %719 = arith.addf %716, %718 : vector<16x4xf32>
    %cst_378 = arith.constant 0.00999999977 : f32
    %720 = vector.broadcast %cst_378 : f32 to vector<16x4xf32>
    %721 = arith.mulf %720, %719 : vector<16x4xf32>
    %722 = arith.maximumf %719, %721 : vector<16x4xf32>
    %c0_379 = arith.constant 0 : index
    %c0_380 = arith.constant 0 : index
    %c0_381 = arith.constant 0 : index
    %723 = vector.load %arg18[%c0_379, %c0_380, %c0_381] : memref<1x16x1024xf32, #tpu.memory_space<vmem>>, vector<1x16x1024xf32>
    %724 = vector.shape_cast %723 : vector<1x16x1024xf32> to vector<16x1024xf32>
    %725 = vector.shape_cast %377 : vector<16x1024xf32> to vector<1x16x1024xf32>
    tpu.vector_store %arg18[%c0_379, %c0_380, %c0_381], %725 {strides = array<i32>} : memref<1x16x1024xf32, #tpu.memory_space<vmem>>, vector<1x16x1024xf32>,
    %c0_382 = arith.constant 0 : index
    %c0_383 = arith.constant 0 : index
    %c0_384 = arith.constant 0 : index
    %726 = vector.load %arg19[%c0_382, %c0_383, %c0_384] : memref<1x16x256xf32, #tpu.memory_space<vmem>>, vector<1x16x256xf32>
    %727 = vector.shape_cast %726 : vector<1x16x256xf32> to vector<16x256xf32>
    %728 = vector.shape_cast %460 : vector<16x256xf32> to vector<1x16x256xf32>
    tpu.vector_store %arg19[%c0_382, %c0_383, %c0_384], %728 {strides = array<i32>} : memref<1x16x256xf32, #tpu.memory_space<vmem>>, vector<1x16x256xf32>,
    %c0_385 = arith.constant 0 : index
    %c0_386 = arith.constant 0 : index
    %c0_387 = arith.constant 0 : index
    %729 = vector.load %arg20[%c0_385, %c0_386, %c0_387] : memref<1x16x64xf32, #tpu.memory_space<vmem>>, vector<1x16x64xf32>
    %730 = vector.shape_cast %729 : vector<1x16x64xf32> to vector<16x64xf32>
    %731 = vector.shape_cast %543 : vector<16x64xf32> to vector<1x16x64xf32>
    tpu.vector_store %arg20[%c0_385, %c0_386, %c0_387], %731 {strides = array<i32>} : memref<1x16x64xf32, #tpu.memory_space<vmem>>, vector<1x16x64xf32>,
    %c0_388 = arith.constant 0 : index
    %c0_389 = arith.constant 0 : index
    %c0_390 = arith.constant 0 : index
    %732 = vector.load %arg21[%c0_388, %c0_389, %c0_390] : memref<1x16x16xf32, #tpu.memory_space<vmem>>, vector<1x16x16xf32>
    %733 = vector.shape_cast %732 : vector<1x16x16xf32> to vector<16x16xf32>
    %734 = vector.shape_cast %626 : vector<16x16xf32> to vector<1x16x16xf32>
    tpu.vector_store %arg21[%c0_388, %c0_389, %c0_390], %734 {strides = array<i32>} : memref<1x16x16xf32, #tpu.memory_space<vmem>>, vector<1x16x16xf32>,
    %c0_391 = arith.constant 0 : index
    %c0_392 = arith.constant 0 : index
    %c0_393 = arith.constant 0 : index
    %735 = vector.load %arg22[%c0_391, %c0_392, %c0_393] : memref<1x16x4xf32, #tpu.memory_space<vmem>>, vector<1x16x4xf32>
    %736 = vector.shape_cast %735 : vector<1x16x4xf32> to vector<16x4xf32>
    %737 = vector.shape_cast %722 : vector<16x4xf32> to vector<1x16x4xf32>
    tpu.vector_store %arg22[%c0_391, %c0_392, %c0_393], %737 {strides = array<i32>} : memref<1x16x4xf32, #tpu.memory_space<vmem>>, vector<1x16x4xf32>,
    return
  }
  func.func @transform_0(%arg0: i32) -> (i32, i32) {
    %c0_i32 = arith.constant 0 : i32
    %c0_i32_0 = arith.constant 0 : i32
    %c0_i32_1 = arith.constant 0 : i32
    return %c0_i32, %c0_i32_0 : i32, i32
  }
  func.func @transform_1(%arg0: i32) -> (i32, i32) {
    %c0_i32 = arith.constant 0 : i32
    %c0_i32_0 = arith.constant 0 : i32
    %c0_i32_1 = arith.constant 0 : i32
    return %c0_i32, %c0_i32_0 : i32, i32
  }
  func.func @transform_2(%arg0: i32) -> (i32, i32, i32) {
    %c0_i32 = arith.constant 0 : i32
    %c0_i32_0 = arith.constant 0 : i32
    %c0_i32_1 = arith.constant 0 : i32
    return %arg0, %c0_i32, %c0_i32_0 : i32, i32, i32
  }
  func.func @transform_3(%arg0: i32) -> (i32, i32, i32) {
    %c0_i32 = arith.constant 0 : i32
    %c0_i32_0 = arith.constant 0 : i32
    %c0_i32_1 = arith.constant 0 : i32
    return %arg0, %c0_i32, %c0_i32_0 : i32, i32, i32
  }
  func.func @transform_4(%arg0: i32) -> (i32, i32, i32) {
    %c0_i32 = arith.constant 0 : i32
    %c0_i32_0 = arith.constant 0 : i32
    %c0_i32_1 = arith.constant 0 : i32
    return %arg0, %c0_i32, %c0_i32_0 : i32, i32, i32
  }
  func.func @transform_5(%arg0: i32) -> (i32, i32, i32) {
    %c0_i32 = arith.constant 0 : i32
    %c0_i32_0 = arith.constant 0 : i32
    %c0_i32_1 = arith.constant 0 : i32
    return %arg0, %c0_i32, %c0_i32_0 : i32, i32, i32
  }
  func.func @transform_6(%arg0: i32) -> (i32, i32, i32) {
    %c0_i32 = arith.constant 0 : i32
    %c0_i32_0 = arith.constant 0 : i32
    %c0_i32_1 = arith.constant 0 : i32
    return %arg0, %c0_i32, %c0_i32_0 : i32, i32, i32
  }
  func.func @transform_7(%arg0: i32) -> (i32, i32, i32) {
    %c0_i32 = arith.constant 0 : i32
    %c0_i32_0 = arith.constant 0 : i32
    %c0_i32_1 = arith.constant 0 : i32
    %c0_i32_2 = arith.constant 0 : i32
    return %c0_i32, %c0_i32_0, %c0_i32_1 : i32, i32, i32
  }
  func.func @transform_8(%arg0: i32) -> (i32, i32, i32) {
    %c0_i32 = arith.constant 0 : i32
    %c0_i32_0 = arith.constant 0 : i32
    %c0_i32_1 = arith.constant 0 : i32
    %c0_i32_2 = arith.constant 0 : i32
    return %c0_i32, %c0_i32_0, %c0_i32_1 : i32, i32, i32
  }
  func.func @transform_9(%arg0: i32) -> (i32, i32) {
    %c0_i32 = arith.constant 0 : i32
    %c0_i32_0 = arith.constant 0 : i32
    %c0_i32_1 = arith.constant 0 : i32
    return %c0_i32, %c0_i32_0 : i32, i32
  }
  func.func @transform_10(%arg0: i32) -> (i32, i32) {
    %c0_i32 = arith.constant 0 : i32
    %c0_i32_0 = arith.constant 0 : i32
    %c0_i32_1 = arith.constant 0 : i32
    return %c0_i32, %c0_i32_0 : i32, i32
  }
  func.func @transform_11(%arg0: i32) -> (i32, i32) {
    %c0_i32 = arith.constant 0 : i32
    %c0_i32_0 = arith.constant 0 : i32
    %c0_i32_1 = arith.constant 0 : i32
    return %c0_i32, %c0_i32_0 : i32, i32
  }
  func.func @transform_12(%arg0: i32) -> (i32, i32) {
    %c0_i32 = arith.constant 0 : i32
    %c0_i32_0 = arith.constant 0 : i32
    %c0_i32_1 = arith.constant 0 : i32
    return %c0_i32, %c0_i32_0 : i32, i32
  }
  func.func @transform_13(%arg0: i32) -> (i32, i32) {
    %c0_i32 = arith.constant 0 : i32
    %c0_i32_0 = arith.constant 0 : i32
    %c0_i32_1 = arith.constant 0 : i32
    return %c0_i32, %c0_i32_0 : i32, i32
  }
  func.func @transform_14(%arg0: i32) -> (i32, i32) {
    %c0_i32 = arith.constant 0 : i32
    %c0_i32_0 = arith.constant 0 : i32
    %c0_i32_1 = arith.constant 0 : i32
    return %c0_i32, %c0_i32_0 : i32, i32
  }
  func.func @transform_15(%arg0: i32) -> (i32, i32) {
    %c0_i32 = arith.constant 0 : i32
    %c0_i32_0 = arith.constant 0 : i32
    %c0_i32_1 = arith.constant 0 : i32
    return %c0_i32, %c0_i32_0 : i32, i32
  }
  func.func @transform_16(%arg0: i32) -> (i32, i32) {
    %c0_i32 = arith.constant 0 : i32
    %c0_i32_0 = arith.constant 0 : i32
    %c0_i32_1 = arith.constant 0 : i32
    return %c0_i32, %c0_i32_0 : i32, i32
  }
  func.func @transform_17(%arg0: i32) -> (i32, i32, i32) {
    %c0_i32 = arith.constant 0 : i32
    %c0_i32_0 = arith.constant 0 : i32
    %c0_i32_1 = arith.constant 0 : i32
    return %arg0, %c0_i32, %c0_i32_0 : i32, i32, i32
  }
  func.func @transform_18(%arg0: i32) -> (i32, i32, i32) {
    %c0_i32 = arith.constant 0 : i32
    %c0_i32_0 = arith.constant 0 : i32
    %c0_i32_1 = arith.constant 0 : i32
    return %arg0, %c0_i32, %c0_i32_0 : i32, i32, i32
  }
  func.func @transform_19(%arg0: i32) -> (i32, i32, i32) {
    %c0_i32 = arith.constant 0 : i32
    %c0_i32_0 = arith.constant 0 : i32
    %c0_i32_1 = arith.constant 0 : i32
    return %arg0, %c0_i32, %c0_i32_0 : i32, i32, i32
  }
  func.func @transform_20(%arg0: i32) -> (i32, i32, i32) {
    %c0_i32 = arith.constant 0 : i32
    %c0_i32_0 = arith.constant 0 : i32
    %c0_i32_1 = arith.constant 0 : i32
    return %arg0, %c0_i32, %c0_i32_0 : i32, i32, i32
  }
  func.func @transform_21(%arg0: i32) -> (i32, i32, i32) {
    %c0_i32 = arith.constant 0 : i32
    %c0_i32_0 = arith.constant 0 : i32
    %c0_i32_1 = arith.constant 0 : i32
    return %arg0, %c0_i32, %c0_i32_0 : i32, i32, i32
  }
}

</mosaic_0001>

<llo_original>
// kernel: tpu_custom_call.1
$region0: #{tpu_custom_call.1}
  #allocation0 [shape = 'u32[]', space=smem, size = 0x4, offset = 0x4, fixed_abs, tag = 'smem constant byte address 0x4 - core index']
  #allocation1 [shape = 'u32[144,128]{1,0:T(1,128)}', space=vmem, size = 0x12000, scoped, tag = 'internal scratch']
  #allocation2 [shape = 'f32[16,1090]{1,0:T(8,128)}', space=vmem, size = 0x12000, scoped, tag = 'scratch operand']
  %s0 = inlined_call_operand.vmem [shape: f32[2,4], index: 0, kind: input, shape index: {}]
  %s1 = inlined_call_operand.hbm [shape: f32[3,4], index: 1, kind: input, shape index: {}]
  %s2 = inlined_call_operand.vmem [shape: f32[2,16,1024], index: 2, kind: input, shape index: {}]
  %s3 = inlined_call_operand.hbm [shape: f32[2,16,256], index: 3, kind: input, shape index: {}]
  %s4 = inlined_call_operand.hbm [shape: f32[2,16,64], index: 4, kind: input, shape index: {}]
  %s5 = inlined_call_operand.hbm [shape: f32[2,16,16], index: 5, kind: input, shape index: {}]
  %s6 = inlined_call_operand.vmem [shape: f32[2,16,4], index: 6, kind: input, shape index: {}]
  %s7 = inlined_call_operand.vmem [shape: f32[8,16,10], index: 7, kind: input, shape index: {}]
  %s8 = inlined_call_operand.vmem [shape: f32[8,16,16], index: 8, kind: input, shape index: {}]
  %s9 = inlined_call_operand.vmem [shape: f32[4,16], index: 9, kind: input, shape index: {}]
  %s10 = inlined_call_operand.vmem [shape: f32[16,64], index: 10, kind: input, shape index: {}]
  %s11 = inlined_call_operand.vmem [shape: f32[64,256], index: 11, kind: input, shape index: {}]
  %s12 = inlined_call_operand.hbm [shape: f32[256,1024], index: 12, kind: input, shape index: {}]
  %s13 = inlined_call_operand.hbm [shape: f32[1024,256], index: 13, kind: input, shape index: {}]
  %s14 = inlined_call_operand.vmem [shape: f32[256,64], index: 14, kind: input, shape index: {}]
  %s15 = inlined_call_operand.vmem [shape: f32[64,16], index: 15, kind: input, shape index: {}]
  %s16 = inlined_call_operand.vmem [shape: f32[16,4], index: 16, kind: input, shape index: {}]
  %s17 = inlined_call_operand.hbm [shape: f32[2,16,1024], index: 17, kind: output, shape index: {0}]
  %s18 = inlined_call_operand.hbm [shape: f32[2,16,256], index: 18, kind: output, shape index: {1}]
  %s19 = inlined_call_operand.hbm [shape: f32[2,16,64], index: 19, kind: output, shape index: {2}]
  %s20 = inlined_call_operand.hbm [shape: f32[2,16,16], index: 20, kind: output, shape index: {3}]
  %s21 = inlined_call_operand.vmem [shape: f32[2,16,4], index: 21, kind: output, shape index: {4}]
  %22 = xla_tuple %s17, %s18, %s19, %s20, %s21
  %s23 = sld [smem:[#allocation0]]
  $region161: #{tpu_custom_call.1} parent=0
    _
  %s25 = ssub.s32 1, %s23
  %s26 = scalar_select 0, %s25, %s23
  $region1: #{tpu_custom_call.1} parent=0
    #allocation3 [shape = 'u8[1024]{0}', space=smem, size = 0x400, scoped, tag = 'input window, operand 0, single buffered']
    #allocation4 [shape = 's32[2]{0}', space=sflag, size = 0x8, scoped, tag = 'scoped memory for tpu_custom_call.1']
    #allocation5 [shape = 's32[2]{0}', space=sflag, size = 0x8, scoped, tag = 'scoped memory for tpu_custom_call.1']
    #allocation6 [shape = 's32[2]{0}', space=sflag, size = 0x8, scoped, tag = 'scoped memory for tpu_custom_call.1']
    #allocation7 [shape = 's32[2]{0}', space=sflag, size = 0x8, scoped, tag = 'scoped memory for tpu_custom_call.1']
    #allocation8 [shape = 'u8[2048]{0}', space=smem, size = 0x800, scoped, tag = 'input window, operand 1, single buffered']
    #allocation9 [shape = 'u8[32768]{0}', space=vmem, size = 0x8000, scoped, tag = 'input window, operand 3']
    #allocation10 [shape = 'u8[16384]{0}', space=vmem, size = 0x4000, scoped, tag = 'input window, operand 4']
    #allocation11 [shape = 's32[2]{0}', space=sflag, size = 0x8, scoped, tag = 'scoped memory for tpu_custom_call.1']
    #allocation12 [shape = 'u8[16384]{0}', space=vmem, size = 0x4000, scoped, tag = 'input window, operand 5']
    #allocation13 [shape = 'u8[1048576]{0}', space=vmem, size = 0x100000, scoped, tag = 'input window, operand 12, single buffered']
    #allocation14 [shape = 's32[1]{0}', space=sflag, size = 0x4, scoped, tag = 'scoped memory for tpu_custom_call.1']
    #allocation15 [shape = 'u8[1048576]{0}', space=vmem, size = 0x100000, scoped, tag = 'input window, operand 13, single buffered']
    #allocation16 [shape = 'u8[131072]{0}', space=vmem, size = 0x20000, scoped, tag = 'output window, operand 0']
    #allocation17 [shape = 'u8[32768]{0}', space=vmem, size = 0x8000, scoped, tag = 'output window, operand 1']
    #allocation18 [shape = 's32[2]{0}', space=sflag, size = 0x8, scoped, tag = 'scoped memory for tpu_custom_call.1']
    #allocation19 [shape = 'u8[16384]{0}', space=vmem, size = 0x4000, scoped, tag = 'output window, operand 2']
    #allocation20 [shape = 'u8[16384]{0}', space=vmem, size = 0x4000, scoped, tag = 'output window, operand 3']
    #allocation21 [shape = 's32[2]{0}', space=sflag, size = 0x8, scoped, tag = 'scoped memory for tpu_custom_call.1']
    %27 = vsyncpa [#allocation7], 0
    %28 = vsyncpa [#allocation6], 0
    %29 = vsyncpa [#allocation4], 0
    %s30 = scalar_lea.sflag [#allocation4], 1
    %31 = vsyncpa %s30, 0
    %32 = vsyncpa [#allocation11], 0
    %s33 = scalar_lea.sflag [#allocation11], 1
    %34 = vsyncpa %s33, 0
    %35 = vsyncpa [#allocation14], 0
    %36 = vsyncpa [#allocation5], 0
    %s37 = scalar_lea.sflag [#allocation5], 1
    %38 = vsyncpa %s37, 0
    %39 = vsyncpa [#allocation18], 0
    %s40 = scalar_lea.sflag [#allocation18], 1
    %41 = vsyncpa %s40, 0
    %42 = vsyncpa [#allocation21], 0
    %s43 = scalar_lea.sflag [#allocation21], 1
    %44 = vsyncpa %s43, 0
    loop: start=0, step=1, limit=4
    $region2: #{tpu_custom_call.1} parent=1 // loop_pre_header
      _
    $region3: #{tpu_custom_call.1} parent=1 // loop_header
      %s46 = sphi 0, %s50
      %p47 = scmp.ge.s32.totalorder %s46, 4
      %s54 = sphi 0, %s54
      %s56 = sphi 0, %s54
      %s57 = sphi 0, %s56
      %s71 = sphi 0, %s57
      %s75 = sphi 0, %s75
      %s77 = sphi 0, %s75
      %s78 = sphi 0, %s77
      %s92 = sphi 0, %s78
      %s98 = sphi 0, %s100
      %s101 = sphi 0, %s98
      %s102 = sphi 0, %s101
      %s118 = sphi 0, %s102
      %s124 = sphi 0, %s126
      %s127 = sphi 0, %s124
      %s128 = sphi 0, %s127
      %s144 = sphi 0, %s128
      %s150 = sphi 0, %s152
      %s153 = sphi 0, %s150
      %s154 = sphi 0, %s153
      %s170 = sphi 0, %s154
      %s176 = sphi 0, %s178
      %s179 = sphi 0, %s176
      %s180 = sphi 0, %s179
      %s196 = sphi 0, %s180
      %s202 = sphi 0, %s204
      %s205 = sphi 0, %s202
      %s206 = sphi 0, %s205
      %s222 = sphi 0, %s206
      %s226 = sphi 0, %s226
      %s228 = sphi 0, %s226
      %s229 = sphi 0, %s228
      %s243 = sphi 0, %s229
      %s247 = sphi 0, %s247
      %s249 = sphi 0, %s247
      %s250 = sphi 0, %s249
      %s264 = sphi 0, %s250
      %s268 = sphi 0, %s268
      %s270 = sphi 0, %s268
      %s271 = sphi 0, %s270
      %s285 = sphi 0, %s271
      %s289 = sphi 0, %s289
      %s291 = sphi 0, %s289
      %s292 = sphi 0, %s291
      %s306 = sphi 0, %s292
      %s310 = sphi 0, %s310
      %s312 = sphi 0, %s310
      %s313 = sphi 0, %s312
      %s327 = sphi 0, %s313
      %s331 = sphi 0, %s331
      %s333 = sphi 0, %s331
      %s334 = sphi 0, %s333
      %s348 = sphi 0, %s334
      %s352 = sphi 0, %s352
      %s354 = sphi 0, %s352
      %s355 = sphi 0, %s354
      %s369 = sphi 0, %s355
      %s373 = sphi 0, %s373
      %s375 = sphi 0, %s373
      %s376 = sphi 0, %s375
      %s390 = sphi 0, %s376
      %s394 = sphi 0, %s394
      %s396 = sphi 0, %s394
      %s397 = sphi 0, %s396
      %s411 = sphi 0, %s397
      %s415 = sphi 0, %s415
      %s417 = sphi 0, %s415
      %s418 = sphi 0, %s417
      %s432 = sphi 0, %s418
      %s438 = sphi 0, %s440
      %s441 = sphi 0, %s438
      %s442 = sphi 0, %s441
      %s458 = sphi 0, %s442
      %s464 = sphi 0, %s466
      %s467 = sphi 0, %s464
      %s468 = sphi 0, %s467
      %s484 = sphi 0, %s468
      %s490 = sphi 0, %s492
      %s493 = sphi 0, %s490
      %s494 = sphi 0, %s493
      %s510 = sphi 0, %s494
      %s516 = sphi 0, %s518
      %s519 = sphi 0, %s516
      %s520 = sphi 0, %s519
      %s536 = sphi 0, %s520
      %s542 = sphi 0, %s544
      %s545 = sphi 0, %s542
      %s546 = sphi 0, %s545
      %s562 = sphi 0, %s546
    $region4: #{tpu_custom_call.1} parent=1 // loop_header_branch
      %49 = sbr.rel (%p47) target = $region8
    $region5: #{tpu_custom_call.1} parent=1 // loop_body
      %s51 = ssub.s32 %s46, 1
      %s52 = ssub.s32 %s46, 2
      %s53 = sadd.s32 %s46, 1
      %s55 = sadd.s32 %s54, 1
      %p58 = scmp.eq.s32.totalorder %s46, 1
      %p59 = scmp.ne.s32.totalorder %s54, %s56
      %p60 = scmp.eq.s32.totalorder %s46, 0
      %p61 = por %p59, %p60
      %p62 = scmp.ne.s32.totalorder %s54, %s56
      %p63 = scmp.eq.s32.totalorder %s51, 1
      %p64 = por %p62, %p63
      %p65 = scmp.ne.s32.totalorder %s56, %s57
      %p66 = scmp.eq.s32.totalorder %s51, 0
      %p67 = por %p65, %p66
      %p68 = scmp.ne.s32.totalorder %s56, %s57
      %p69 = scmp.eq.s32.totalorder %s52, 1
      %p70 = por %p68, %p69
      %p72 = scmp.ne.s32.totalorder %s57, %s71
      %p73 = scmp.eq.s32.totalorder %s52, 0
      %p74 = por %p72, %p73
      %s76 = sadd.s32 %s75, 1
      %p79 = scmp.eq.s32.totalorder %s46, 1
      %p80 = scmp.ne.s32.totalorder %s75, %s77
      %p81 = scmp.eq.s32.totalorder %s46, 0
      %p82 = por %p80, %p81
      %p83 = scmp.ne.s32.totalorder %s75, %s77
      %p84 = scmp.eq.s32.totalorder %s51, 1
      %p85 = por %p83, %p84
      %p86 = scmp.ne.s32.totalorder %s77, %s78
      %p87 = scmp.eq.s32.totalorder %s51, 0
      %p88 = por %p86, %p87
      %p89 = scmp.ne.s32.totalorder %s77, %s78
      %p90 = scmp.eq.s32.totalorder %s52, 1
      %p91 = por %p89, %p90
      %p93 = scmp.ne.s32.totalorder %s78, %s92
      %p94 = scmp.eq.s32.totalorder %s52, 0
      %p95 = por %p93, %p94
      %s96 = ssub.s32 %s46, %s53
      %p97 = scmp.eq.s32.totalorder %s96, 0
      %s99 = sadd.s32 %s98, 1
      %s100 = scalar_select %p97, %s98, %s99
      %p103 = pneg %p97
      %p104 = scmp.eq.s32.totalorder %s46, 1
      %p105 = por %p103, %p104
      %p106 = scmp.ne.s32.totalorder %s98, %s101
      %p107 = scmp.eq.s32.totalorder %s46, 0
      %p108 = por %p106, %p107
      %p109 = scmp.ne.s32.totalorder %s98, %s101
      %p110 = scmp.eq.s32.totalorder %s51, 1
      %p111 = por %p109, %p110
      %p112 = scmp.ne.s32.totalorder %s101, %s102
      %p113 = scmp.eq.s32.totalorder %s51, 0
      %p114 = por %p112, %p113
      %p115 = scmp.ne.s32.totalorder %s101, %s102
      %p116 = scmp.eq.s32.totalorder %s52, 1
      %p117 = por %p115, %p116
      %p119 = scmp.ne.s32.totalorder %s102, %s118
      %p120 = scmp.eq.s32.totalorder %s52, 0
      %p121 = por %p119, %p120
      %s122 = ssub.s32 %s46, %s53
      %p123 = scmp.eq.s32.totalorder %s122, 0
      %s125 = sadd.s32 %s124, 1
      %s126 = scalar_select %p123, %s124, %s125
      %p129 = pneg %p123
      %p130 = scmp.eq.s32.totalorder %s46, 1
      %p131 = por %p129, %p130
      %p132 = scmp.ne.s32.totalorder %s124, %s127
      %p133 = scmp.eq.s32.totalorder %s46, 0
      %p134 = por %p132, %p133
      %p135 = scmp.ne.s32.totalorder %s124, %s127
      %p136 = scmp.eq.s32.totalorder %s51, 1
      %p137 = por %p135, %p136
      %p138 = scmp.ne.s32.totalorder %s127, %s128
      %p139 = scmp.eq.s32.totalorder %s51, 0
      %p140 = por %p138, %p139
      %p141 = scmp.ne.s32.totalorder %s127, %s128
      %p142 = scmp.eq.s32.totalorder %s52, 1
      %p143 = por %p141, %p142
      %p145 = scmp.ne.s32.totalorder %s128, %s144
      %p146 = scmp.eq.s32.totalorder %s52, 0
      %p147 = por %p145, %p146
      %s148 = ssub.s32 %s46, %s53
      %p149 = scmp.eq.s32.totalorder %s148, 0
      %s151 = sadd.s32 %s150, 1
      %s152 = scalar_select %p149, %s150, %s151
      %p155 = pneg %p149
      %p156 = scmp.eq.s32.totalorder %s46, 1
      %p157 = por %p155, %p156
      %p158 = scmp.ne.s32.totalorder %s150, %s153
      %p159 = scmp.eq.s32.totalorder %s46, 0
      %p160 = por %p158, %p159
      %p161 = scmp.ne.s32.totalorder %s150, %s153
      %p162 = scmp.eq.s32.totalorder %s51, 1
      %p163 = por %p161, %p162
      %p164 = scmp.ne.s32.totalorder %s153, %s154
      %p165 = scmp.eq.s32.totalorder %s51, 0
      %p166 = por %p164, %p165
      %p167 = scmp.ne.s32.totalorder %s153, %s154
      %p168 = scmp.eq.s32.totalorder %s52, 1
      %p169 = por %p167, %p168
      %p171 = scmp.ne.s32.totalorder %s154, %s170
      %p172 = scmp.eq.s32.totalorder %s52, 0
      %p173 = por %p171, %p172
      %s174 = ssub.s32 %s46, %s53
      %p175 = scmp.eq.s32.totalorder %s174, 0
      %s177 = sadd.s32 %s176, 1
      %s178 = scalar_select %p175, %s176, %s177
      %p181 = pneg %p175
      %p182 = scmp.eq.s32.totalorder %s46, 1
      %p183 = por %p181, %p182
      %p184 = scmp.ne.s32.totalorder %s176, %s179
      %p185 = scmp.eq.s32.totalorder %s46, 0
      %p186 = por %p184, %p185
      %p187 = scmp.ne.s32.totalorder %s176, %s179
      %p188 = scmp.eq.s32.totalorder %s51, 1
      %p189 = por %p187, %p188
      %p190 = scmp.ne.s32.totalorder %s179, %s180
      %p191 = scmp.eq.s32.totalorder %s51, 0
      %p192 = por %p190, %p191
      %p193 = scmp.ne.s32.totalorder %s179, %s180
      %p194 = scmp.eq.s32.totalorder %s52, 1
      %p195 = por %p193, %p194
      %p197 = scmp.ne.s32.totalorder %s180, %s196
      %p198 = scmp.eq.s32.totalorder %s52, 0
      %p199 = por %p197, %p198
      %s200 = ssub.s32 %s46, %s53
      %p201 = scmp.eq.s32.totalorder %s200, 0
      %s203 = sadd.s32 %s202, 1
      %s204 = scalar_select %p201, %s202, %s203
      %p207 = pneg %p201
      %p208 = scmp.eq.s32.totalorder %s46, 1
      %p209 = por %p207, %p208
      %p210 = scmp.ne.s32.totalorder %s202, %s205
      %p211 = scmp.eq.s32.totalorder %s46, 0
      %p212 = por %p210, %p211
      %p213 = scmp.ne.s32.totalorder %s202, %s205
      %p214 = scmp.eq.s32.totalorder %s51, 1
      %p215 = por %p213, %p214
      %p216 = scmp.ne.s32.totalorder %s205, %s206
      %p217 = scmp.eq.s32.totalorder %s51, 0
      %p218 = por %p216, %p217
      %p219 = scmp.ne.s32.totalorder %s205, %s206
      %p220 = scmp.eq.s32.totalorder %s52, 1
      %p221 = por %p219, %p220
      %p223 = scmp.ne.s32.totalorder %s206, %s222
      %p224 = scmp.eq.s32.totalorder %s52, 0
      %p225 = por %p223, %p224
      %s227 = sadd.s32 %s226, 1
      %p230 = scmp.eq.s32.totalorder %s46, 1
      %p231 = scmp.ne.s32.totalorder %s226, %s228
      %p232 = scmp.eq.s32.totalorder %s46, 0
      %p233 = por %p231, %p232
      %p234 = scmp.ne.s32.totalorder %s226, %s228
      %p235 = scmp.eq.s32.totalorder %s51, 1
      %p236 = por %p234, %p235
      %p237 = scmp.ne.s32.totalorder %s228, %s229
      %p238 = scmp.eq.s32.totalorder %s51, 0
      %p239 = por %p237, %p238
      %p240 = scmp.ne.s32.totalorder %s228, %s229
      %p241 = scmp.eq.s32.totalorder %s52, 1
      %p242 = por %p240, %p241
      %p244 = scmp.ne.s32.totalorder %s229, %s243
      %p245 = scmp.eq.s32.totalorder %s52, 0
      %p246 = por %p244, %p245
      %s248 = sadd.s32 %s247, 1
      %p251 = scmp.eq.s32.totalorder %s46, 1
      %p252 = scmp.ne.s32.totalorder %s247, %s249
      %p253 = scmp.eq.s32.totalorder %s46, 0
      %p254 = por %p252, %p253
      %p255 = scmp.ne.s32.totalorder %s247, %s249
      %p256 = scmp.eq.s32.totalorder %s51, 1
      %p257 = por %p255, %p256
      %p258 = scmp.ne.s32.totalorder %s249, %s250
      %p259 = scmp.eq.s32.totalorder %s51, 0
      %p260 = por %p258, %p259
      %p261 = scmp.ne.s32.totalorder %s249, %s250
      %p262 = scmp.eq.s32.totalorder %s52, 1
      %p263 = por %p261, %p262
      %p265 = scmp.ne.s32.totalorder %s250, %s264
      %p266 = scmp.eq.s32.totalorder %s52, 0
      %p267 = por %p265, %p266
      %s269 = sadd.s32 %s268, 1
      %p272 = scmp.eq.s32.totalorder %s46, 1
      %p273 = scmp.ne.s32.totalorder %s268, %s270
      %p274 = scmp.eq.s32.totalorder %s46, 0
      %p275 = por %p273, %p274
      %p276 = scmp.ne.s32.totalorder %s268, %s270
      %p277 = scmp.eq.s32.totalorder %s51, 1
      %p278 = por %p276, %p277
      %p279 = scmp.ne.s32.totalorder %s270, %s271
      %p280 = scmp.eq.s32.totalorder %s51, 0
      %p281 = por %p279, %p280
      %p282 = scmp.ne.s32.totalorder %s270, %s271
      %p283 = scmp.eq.s32.totalorder %s52, 1
      %p284 = por %p282, %p283
      %p286 = scmp.ne.s32.totalorder %s271, %s285
      %p287 = scmp.eq.s32.totalorder %s52, 0
      %p288 = por %p286, %p287
      %s290 = sadd.s32 %s289, 1
      %p293 = scmp.eq.s32.totalorder %s46, 1
      %p294 = scmp.ne.s32.totalorder %s289, %s291
      %p295 = scmp.eq.s32.totalorder %s46, 0
      %p296 = por %p294, %p295
      %p297 = scmp.ne.s32.totalorder %s289, %s291
      %p298 = scmp.eq.s32.totalorder %s51, 1
      %p299 = por %p297, %p298
      %p300 = scmp.ne.s32.totalorder %s291, %s292
      %p301 = scmp.eq.s32.totalorder %s51, 0
      %p302 = por %p300, %p301
      %p303 = scmp.ne.s32.totalorder %s291, %s292
      %p304 = scmp.eq.s32.totalorder %s52, 1
      %p305 = por %p303, %p304
      %p307 = scmp.ne.s32.totalorder %s292, %s306
      %p308 = scmp.eq.s32.totalorder %s52, 0
      %p309 = por %p307, %p308
      %s311 = sadd.s32 %s310, 1
      %p314 = scmp.eq.s32.totalorder %s46, 1
      %p315 = scmp.ne.s32.totalorder %s310, %s312
      %p316 = scmp.eq.s32.totalorder %s46, 0
      %p317 = por %p315, %p316
      %p318 = scmp.ne.s32.totalorder %s310, %s312
      %p319 = scmp.eq.s32.totalorder %s51, 1
      %p320 = por %p318, %p319
      %p321 = scmp.ne.s32.totalorder %s312, %s313
      %p322 = scmp.eq.s32.totalorder %s51, 0
      %p323 = por %p321, %p322
      %p324 = scmp.ne.s32.totalorder %s312, %s313
      %p325 = scmp.eq.s32.totalorder %s52, 1
      %p326 = por %p324, %p325
      %p328 = scmp.ne.s32.totalorder %s313, %s327
      %p329 = scmp.eq.s32.totalorder %s52, 0
      %p330 = por %p328, %p329
      %s332 = sadd.s32 %s331, 1
      %p335 = scmp.eq.s32.totalorder %s46, 1
      %p336 = scmp.ne.s32.totalorder %s331, %s333
      %p337 = scmp.eq.s32.totalorder %s46, 0
      %p338 = por %p336, %p337
      %p339 = scmp.ne.s32.totalorder %s331, %s333
      %p340 = scmp.eq.s32.totalorder %s51, 1
      %p341 = por %p339, %p340
      %p342 = scmp.ne.s32.totalorder %s333, %s334
      %p343 = scmp.eq.s32.totalorder %s51, 0
      %p344 = por %p342, %p343
      %p345 = scmp.ne.s32.totalorder %s333, %s334
      %p346 = scmp.eq.s32.totalorder %s52, 1
      %p347 = por %p345, %p346
      %p349 = scmp.ne.s32.totalorder %s334, %s348
      %p350 = scmp.eq.s32.totalorder %s52, 0
      %p351 = por %p349, %p350
      %s353 = sadd.s32 %s352, 1
      %p356 = scmp.eq.s32.totalorder %s46, 1
      %p357 = scmp.ne.s32.totalorder %s352, %s354
      %p358 = scmp.eq.s32.totalorder %s46, 0
      %p359 = por %p357, %p358
      %p360 = scmp.ne.s32.totalorder %s352, %s354
      %p361 = scmp.eq.s32.totalorder %s51, 1
      %p362 = por %p360, %p361
      %p363 = scmp.ne.s32.totalorder %s354, %s355
      %p364 = scmp.eq.s32.totalorder %s51, 0
      %p365 = por %p363, %p364
      %p366 = scmp.ne.s32.totalorder %s354, %s355
      %p367 = scmp.eq.s32.totalorder %s52, 1
      %p368 = por %p366, %p367
      %p370 = scmp.ne.s32.totalorder %s355, %s369
      %p371 = scmp.eq.s32.totalorder %s52, 0
      %p372 = por %p370, %p371
      %s374 = sadd.s32 %s373, 1
      %p377 = scmp.eq.s32.totalorder %s46, 1
      %p378 = scmp.ne.s32.totalorder %s373, %s375
      %p379 = scmp.eq.s32.totalorder %s46, 0
      %p380 = por %p378, %p379
      %p381 = scmp.ne.s32.totalorder %s373, %s375
      %p382 = scmp.eq.s32.totalorder %s51, 1
      %p383 = por %p381, %p382
      %p384 = scmp.ne.s32.totalorder %s375, %s376
      %p385 = scmp.eq.s32.totalorder %s51, 0
      %p386 = por %p384, %p385
      %p387 = scmp.ne.s32.totalorder %s375, %s376
      %p388 = scmp.eq.s32.totalorder %s52, 1
      %p389 = por %p387, %p388
      %p391 = scmp.ne.s32.totalorder %s376, %s390
      %p392 = scmp.eq.s32.totalorder %s52, 0
      %p393 = por %p391, %p392
      %s395 = sadd.s32 %s394, 1
      %p398 = scmp.eq.s32.totalorder %s46, 1
      %p399 = scmp.ne.s32.totalorder %s394, %s396
      %p400 = scmp.eq.s32.totalorder %s46, 0
      %p401 = por %p399, %p400
      %p402 = scmp.ne.s32.totalorder %s394, %s396
      %p403 = scmp.eq.s32.totalorder %s51, 1
      %p404 = por %p402, %p403
      %p405 = scmp.ne.s32.totalorder %s396, %s397
      %p406 = scmp.eq.s32.totalorder %s51, 0
      %p407 = por %p405, %p406
      %p408 = scmp.ne.s32.totalorder %s396, %s397
      %p409 = scmp.eq.s32.totalorder %s52, 1
      %p410 = por %p408, %p409
      %p412 = scmp.ne.s32.totalorder %s397, %s411
      %p413 = scmp.eq.s32.totalorder %s52, 0
      %p414 = por %p412, %p413
      %s416 = sadd.s32 %s415, 1
      %p419 = scmp.eq.s32.totalorder %s46, 1
      %p420 = scmp.ne.s32.totalorder %s415, %s417
      %p421 = scmp.eq.s32.totalorder %s46, 0
      %p422 = por %p420, %p421
      %p423 = scmp.ne.s32.totalorder %s415, %s417
      %p424 = scmp.eq.s32.totalorder %s51, 1
      %p425 = por %p423, %p424
      %p426 = scmp.ne.s32.totalorder %s417, %s418
      %p427 = scmp.eq.s32.totalorder %s51, 0
      %p428 = por %p426, %p427
      %p429 = scmp.ne.s32.totalorder %s417, %s418
      %p430 = scmp.eq.s32.totalorder %s52, 1
      %p431 = por %p429, %p430
      %p433 = scmp.ne.s32.totalorder %s418, %s432
      %p434 = scmp.eq.s32.totalorder %s52, 0
      %p435 = por %p433, %p434
      %s436 = ssub.s32 %s46, %s53
      %p437 = scmp.eq.s32.totalorder %s436, 0
      %s439 = sadd.s32 %s438, 1
      %s440 = scalar_select %p437, %s438, %s439
      %p443 = pneg %p437
      %p444 = scmp.eq.s32.totalorder %s46, 1
      %p445 = por %p443, %p444
      %p446 = scmp.ne.s32.totalorder %s438, %s441
      %p447 = scmp.eq.s32.totalorder %s46, 0
      %p448 = por %p446, %p447
      %p449 = scmp.ne.s32.totalorder %s438, %s441
      %p450 = scmp.eq.s32.totalorder %s51, 1
      %p451 = por %p449, %p450
      %p452 = scmp.ne.s32.totalorder %s441, %s442
      %p453 = scmp.eq.s32.totalorder %s51, 0
      %p454 = por %p452, %p453
      %p455 = scmp.ne.s32.totalorder %s441, %s442
      %p456 = scmp.eq.s32.totalorder %s52, 1
      %p457 = por %p455, %p456
      %p459 = scmp.ne.s32.totalorder %s442, %s458
      %p460 = scmp.eq.s32.totalorder %s52, 0
      %p461 = por %p459, %p460
      %s462 = ssub.s32 %s46, %s53
      %p463 = scmp.eq.s32.totalorder %s462, 0
      %s465 = sadd.s32 %s464, 1
      %s466 = scalar_select %p463, %s464, %s465
      %p469 = pneg %p463
      %p470 = scmp.eq.s32.totalorder %s46, 1
      %p471 = por %p469, %p470
      %p472 = scmp.ne.s32.totalorder %s464, %s467
      %p473 = scmp.eq.s32.totalorder %s46, 0
      %p474 = por %p472, %p473
      %p475 = scmp.ne.s32.totalorder %s464, %s467
      %p476 = scmp.eq.s32.totalorder %s51, 1
      %p477 = por %p475, %p476
      %p478 = scmp.ne.s32.totalorder %s467, %s468
      %p479 = scmp.eq.s32.totalorder %s51, 0
      %p480 = por %p478, %p479
      %p481 = scmp.ne.s32.totalorder %s467, %s468
      %p482 = scmp.eq.s32.totalorder %s52, 1
      %p483 = por %p481, %p482
      %p485 = scmp.ne.s32.totalorder %s468, %s484
      %p486 = scmp.eq.s32.totalorder %s52, 0
      %p487 = por %p485, %p486
      %s488 = ssub.s32 %s46, %s53
      %p489 = scmp.eq.s32.totalorder %s488, 0
      %s491 = sadd.s32 %s490, 1
      %s492 = scalar_select %p489, %s490, %s491
      %p495 = pneg %p489
      %p496 = scmp.eq.s32.totalorder %s46, 1
      %p497 = por %p495, %p496
      %p498 = scmp.ne.s32.totalorder %s490, %s493
      %p499 = scmp.eq.s32.totalorder %s46, 0
      %p500 = por %p498, %p499
      %p501 = scmp.ne.s32.totalorder %s490, %s493
      %p502 = scmp.eq.s32.totalorder %s51, 1
      %p503 = por %p501, %p502
      %p504 = scmp.ne.s32.totalorder %s493, %s494
      %p505 = scmp.eq.s32.totalorder %s51, 0
      %p506 = por %p504, %p505
      %p507 = scmp.ne.s32.totalorder %s493, %s494
      %p508 = scmp.eq.s32.totalorder %s52, 1
      %p509 = por %p507, %p508
      %p511 = scmp.ne.s32.totalorder %s494, %s510
      %p512 = scmp.eq.s32.totalorder %s52, 0
      %p513 = por %p511, %p512
      %s514 = ssub.s32 %s46, %s53
      %p515 = scmp.eq.s32.totalorder %s514, 0
      %s517 = sadd.s32 %s516, 1
      %s518 = scalar_select %p515, %s516, %s517
      %p521 = pneg %p515
      %p522 = scmp.eq.s32.totalorder %s46, 1
      %p523 = por %p521, %p522
      %p524 = scmp.ne.s32.totalorder %s516, %s519
      %p525 = scmp.eq.s32.totalorder %s46, 0
      %p526 = por %p524, %p525
      %p527 = scmp.ne.s32.totalorder %s516, %s519
      %p528 = scmp.eq.s32.totalorder %s51, 1
      %p529 = por %p527, %p528
      %p530 = scmp.ne.s32.totalorder %s519, %s520
      %p531 = scmp.eq.s32.totalorder %s51, 0
      %p532 = por %p530, %p531
      %p533 = scmp.ne.s32.totalorder %s519, %s520
      %p534 = scmp.eq.s32.totalorder %s52, 1
      %p535 = por %p533, %p534
      %p537 = scmp.ne.s32.totalorder %s520, %s536
      %p538 = scmp.eq.s32.totalorder %s52, 0
      %p539 = por %p537, %p538
      %s540 = ssub.s32 %s46, %s53
      %p541 = scmp.eq.s32.totalorder %s540, 0
      %s543 = sadd.s32 %s542, 1
      %s544 = scalar_select %p541, %s542, %s543
      %p547 = pneg %p541
      %p548 = scmp.eq.s32.totalorder %s46, 1
      %p549 = por %p547, %p548
      %p550 = scmp.ne.s32.totalorder %s542, %s545
      %p551 = scmp.eq.s32.totalorder %s46, 0
      %p552 = por %p550, %p551
      %p553 = scmp.ne.s32.totalorder %s542, %s545
      %p554 = scmp.eq.s32.totalorder %s51, 1
      %p555 = por %p553, %p554
      %p556 = scmp.ne.s32.totalorder %s545, %s546
      %p557 = scmp.eq.s32.totalorder %s51, 0
      %p558 = por %p556, %p557
      %p559 = scmp.ne.s32.totalorder %s545, %s546
      %p560 = scmp.eq.s32.totalorder %s52, 1
      %p561 = por %p559, %p560
      %p563 = scmp.ne.s32.totalorder %s546, %s562
      %p564 = scmp.eq.s32.totalorder %s52, 0
      %p565 = por %p563, %p564
      %p566 = scmp.le.s32.totalorder 1, %s46
      %p567 = scmp.lt.s32.totalorder %s46, 3
      %p568 = pnand %p566, %p567
      %p569 = pneg %p568
      // Predicated region
      $region9: #{tpu_custom_call.1} parent=5 // pred_check
        _
      $region10: #{tpu_custom_call.1} parent=5 // pred_check_branch
        %571 = sbr.rel (%p568) target = $region12
      $region11: #{tpu_custom_call.1} parent=5 // pred_region
        %s572 = ssub.s32 %s46, 1
        // Predicated region
        $region13: #{tpu_custom_call.1} parent=11 // pred_check
          %p573 = pneg %p67
        $region14: #{tpu_custom_call.1} parent=11 // pred_check_branch
          %575 = sbr.rel (%p573) target = $region16
        $region15: #{tpu_custom_call.1} parent=11 // pred_region
          %s577 = ssub.s32 32, 32
          %578 = vsyncadd [#allocation7], %s577
          %s580 = sshll.u32 %s0, 4
          %s581 = int_to_ptr.vmem [resolvable:$true] %s580
          %583 = dma.vmem_to_smem %s581, 32, [#allocation3], [#allocation7]
        $region16: #{tpu_custom_call.1} parent=11 // pred_fallthru
          _
        // Predicated region
        $region17: #{tpu_custom_call.1} parent=11 // pred_check
          %p584 = pneg %p88
        $region18: #{tpu_custom_call.1} parent=11 // pred_check_branch
          %586 = sbr.rel (%p584) target = $region20
        $region19: #{tpu_custom_call.1} parent=11 // pred_region
          %s588 = ssub.s32 64, 64
          %589 = vsyncadd [#allocation6], %s588
          %592 = dma.hbm_to_smem %s1, 64, [#allocation8], [#allocation6]
        $region20: #{tpu_custom_call.1} parent=11 // pred_fallthru
          _
        // Predicated region
        $region21: #{tpu_custom_call.1} parent=11 // pred_check
          %p593 = pneg %p239
        $region22: #{tpu_custom_call.1} parent=11 // pred_check_branch
          %595 = sbr.rel (%p593) target = $region24
        $region23: #{tpu_custom_call.1} parent=11 // pred_region
          _
        $region24: #{tpu_custom_call.1} parent=11 // pred_fallthru
          _
        // Predicated region
        $region25: #{tpu_custom_call.1} parent=11 // pred_check
          %p596 = pneg %p260
        $region26: #{tpu_custom_call.1} parent=11 // pred_check_branch
          %598 = sbr.rel (%p596) target = $region28
        $region27: #{tpu_custom_call.1} parent=11 // pred_region
          _
        $region28: #{tpu_custom_call.1} parent=11 // pred_fallthru
          _
        // Predicated region
        $region29: #{tpu_custom_call.1} parent=11 // pred_check
          %p599 = pneg %p281
        $region30: #{tpu_custom_call.1} parent=11 // pred_check_branch
          %601 = sbr.rel (%p599) target = $region32
        $region31: #{tpu_custom_call.1} parent=11 // pred_region
          _
        $region32: #{tpu_custom_call.1} parent=11 // pred_fallthru
          _
        // Predicated region
        $region33: #{tpu_custom_call.1} parent=11 // pred_check
          %p602 = pneg %p302
        $region34: #{tpu_custom_call.1} parent=11 // pred_check_branch
          %604 = sbr.rel (%p602) target = $region36
        $region35: #{tpu_custom_call.1} parent=11 // pred_region
          _
        $region36: #{tpu_custom_call.1} parent=11 // pred_fallthru
          _
        // Predicated region
        $region37: #{tpu_custom_call.1} parent=11 // pred_check
          %p605 = pneg %p323
        $region38: #{tpu_custom_call.1} parent=11 // pred_check_branch
          %607 = sbr.rel (%p605) target = $region40
        $region39: #{tpu_custom_call.1} parent=11 // pred_region
          _
        $region40: #{tpu_custom_call.1} parent=11 // pred_fallthru
          _
        // Predicated region
        $region41: #{tpu_custom_call.1} parent=11 // pred_check
          %p608 = pneg %p344
        $region42: #{tpu_custom_call.1} parent=11 // pred_check_branch
          %610 = sbr.rel (%p608) target = $region44
        $region43: #{tpu_custom_call.1} parent=11 // pred_region
          %s612 = ssub.s32 32768, 32768
          %613 = vsyncadd [#allocation14], %s612
          %s614 = sshll.u32 [#allocation13], 4
          %s615 = int_to_ptr.vmem [resolvable:$true] %s614
          %620 = dma.hbm_to_vmem [thread:$0]  %s12, 32768, %s615, [#allocation14], 1024, 1024, 64
        $region44: #{tpu_custom_call.1} parent=11 // pred_fallthru
          _
        // Predicated region
        $region45: #{tpu_custom_call.1} parent=11 // pred_check
          %p621 = pneg %p365
        $region46: #{tpu_custom_call.1} parent=11 // pred_check_branch
          %623 = sbr.rel (%p621) target = $region48
        $region47: #{tpu_custom_call.1} parent=11 // pred_region
          %s625 = ssub.s32 32768, 32768
          %626 = vsyncadd [#allocation14], %s625
          %s627 = sshll.u32 [#allocation15], 4
          %s628 = int_to_ptr.vmem [resolvable:$true] %s627
          %633 = dma.hbm_to_vmem [thread:$0]  %s13, 32768, %s628, [#allocation14], 256, 256, 16
        $region48: #{tpu_custom_call.1} parent=11 // pred_fallthru
          _
        // Predicated region
        $region49: #{tpu_custom_call.1} parent=11 // pred_check
          %p634 = pneg %p386
        $region50: #{tpu_custom_call.1} parent=11 // pred_check_branch
          %636 = sbr.rel (%p634) target = $region52
        $region51: #{tpu_custom_call.1} parent=11 // pred_region
          _
        $region52: #{tpu_custom_call.1} parent=11 // pred_fallthru
          _
        // Predicated region
        $region53: #{tpu_custom_call.1} parent=11 // pred_check
          %p637 = pneg %p407
        $region54: #{tpu_custom_call.1} parent=11 // pred_check_branch
          %639 = sbr.rel (%p637) target = $region56
        $region55: #{tpu_custom_call.1} parent=11 // pred_region
          _
        $region56: #{tpu_custom_call.1} parent=11 // pred_fallthru
          _
        // Predicated region
        $region57: #{tpu_custom_call.1} parent=11 // pred_check
          %p640 = pneg %p428
        $region58: #{tpu_custom_call.1} parent=11 // pred_check_branch
          %642 = sbr.rel (%p640) target = $region60
        $region59: #{tpu_custom_call.1} parent=11 // pred_region
          _
        $region60: #{tpu_custom_call.1} parent=11 // pred_fallthru
          _
      $region12: #{tpu_custom_call.1} parent=5 // pred_fallthru
        _
      %p643 = scmp.lt.s32.totalorder %s46, 2
      // Predicated region
      $region61: #{tpu_custom_call.1} parent=5 // pred_check
        %p644 = pneg %p643
      $region62: #{tpu_custom_call.1} parent=5 // pred_check_branch
        %646 = sbr.rel (%p644) target = $region64
      $region63: #{tpu_custom_call.1} parent=5 // pred_region
        // Predicated region
        $region65: #{tpu_custom_call.1} parent=63 // pred_check
          %p647 = pneg %p108
        $region66: #{tpu_custom_call.1} parent=63 // pred_check_branch
          %649 = sbr.rel (%p647) target = $region68
        $region67: #{tpu_custom_call.1} parent=63 // pred_region
          %p650 = scmp.lt.s32.totalorder %s46, 1
          %s651 = scalar_select %p650, %s46, 1
          %s652 = smul.addr %s651, 16
          %s653 = smul.addr %s652, 8
          %s654 = scalar_lea.vmem %s2, %s653
        $region68: #{tpu_custom_call.1} parent=63 // pred_fallthru
          _
        // Predicated region
        $region69: #{tpu_custom_call.1} parent=63 // pred_check
          %p655 = pneg %p134
        $region70: #{tpu_custom_call.1} parent=63 // pred_check_branch
          %657 = sbr.rel (%p655) target = $region72
        $region71: #{tpu_custom_call.1} parent=63 // pred_region
          %s658 = sand.u32 %s124, 1
          %s659 = scalar_lea.sflag [#allocation4], %s658
          %s660 = sand.u32 %s124, 1
          %s661 = smul.addr %s660, 32
          %s662 = scalar_lea.vmem [#allocation9], %s661
          %s664 = ssub.s32 512, 512
          %665 = vsyncadd %s659, %s664
          %s666 = smul.addr %s46, 4
          %s667 = smul.addr %s666, 128
          %s668 = scalar_lea.hbm %s3, %s667
          %s669 = sshll.u32 %s662, 4
          %s670 = int_to_ptr.vmem [resolvable:$true] %s669
          %675 = dma.hbm_to_vmem [thread:$0]  %s668, 512, %s670, %s659, 256, 256, 16
        $region72: #{tpu_custom_call.1} parent=63 // pred_fallthru
          _
        // Predicated region
        $region73: #{tpu_custom_call.1} parent=63 // pred_check
          %p676 = pneg %p160
        $region74: #{tpu_custom_call.1} parent=63 // pred_check_branch
          %678 = sbr.rel (%p676) target = $region76
        $region75: #{tpu_custom_call.1} parent=63 // pred_region
          %s679 = sand.u32 %s46, 1
          %s680 = scalar_lea.sflag [#allocation11], %s679
          %s681 = sand.u32 %s150, 1
          %s682 = smul.addr %s681, 16
          %s683 = scalar_lea.vmem [#allocation10], %s682
          %s685 = ssub.s32 256, 256
          %686 = vsyncadd %s680, %s685
          %s687 = smul.addr %s46, 2
          %s688 = smul.addr %s687, 128
          %s689 = scalar_lea.hbm %s4, %s688
          %s690 = sshll.u32 %s683, 4
          %s691 = int_to_ptr.vmem [resolvable:$true] %s690
          %696 = dma.hbm_to_vmem [thread:$0]  %s689, 256, %s691, %s680, 128, 128, 8
        $region76: #{tpu_custom_call.1} parent=63 // pred_fallthru
          _
        // Predicated region
        $region77: #{tpu_custom_call.1} parent=63 // pred_check
          %p697 = pneg %p186
        $region78: #{tpu_custom_call.1} parent=63 // pred_check_branch
          %699 = sbr.rel (%p697) target = $region80
        $region79: #{tpu_custom_call.1} parent=63 // pred_region
          %s700 = sand.u32 %s46, 1
          %s701 = scalar_lea.sflag [#allocation11], %s700
          %s702 = sand.u32 %s176, 1
          %s703 = smul.addr %s702, 16
          %s704 = scalar_lea.vmem [#allocation12], %s703
          %s706 = ssub.s32 256, 256
          %707 = vsyncadd %s701, %s706
          %s708 = smul.addr %s46, 2
          %s709 = smul.addr %s708, 128
          %s710 = scalar_lea.hbm %s5, %s709
          %s711 = sshll.u32 %s704, 4
          %s712 = int_to_ptr.vmem [resolvable:$true] %s711
          %717 = dma.hbm_to_vmem [thread:$0]  %s710, 256, %s712, %s701, 128, 128, 8
        $region80: #{tpu_custom_call.1} parent=63 // pred_fallthru
          _
        // Predicated region
        $region81: #{tpu_custom_call.1} parent=63 // pred_check
          %p718 = pneg %p212
        $region82: #{tpu_custom_call.1} parent=63 // pred_check_branch
          %720 = sbr.rel (%p718) target = $region84
        $region83: #{tpu_custom_call.1} parent=63 // pred_region
          %p721 = scmp.lt.s32.totalorder %s46, 1
          %s722 = scalar_select %p721, %s46, 1
          %s723 = smul.addr %s722, 2
          %s724 = smul.addr %s723, 8
          %s725 = scalar_lea.vmem %s6, %s724
        $region84: #{tpu_custom_call.1} parent=63 // pred_fallthru
          _
      $region64: #{tpu_custom_call.1} parent=5 // pred_fallthru
        _
      %p726 = scmp.le.s32.totalorder 1, %s46
      %p727 = scmp.lt.s32.totalorder %s46, 3
      %p728 = pnand %p726, %p727
      %p729 = pneg %p728
      // Predicated region
      $region85: #{tpu_custom_call.1} parent=5 // pred_check
        _
      $region86: #{tpu_custom_call.1} parent=5 // pred_check_branch
        %731 = sbr.rel (%p728) target = $region88
      $region87: #{tpu_custom_call.1} parent=5 // pred_region
        %s732 = ssub.s32 %s46, 1
        // Predicated region
        $region89: #{tpu_custom_call.1} parent=87 // pred_check
          %p733 = pneg %p67
        $region90: #{tpu_custom_call.1} parent=87 // pred_check_branch
          %735 = sbr.rel (%p733) target = $region92
        $region91: #{tpu_custom_call.1} parent=87 // pred_region
          %736 = dma.done [#allocation7], 32
        $region92: #{tpu_custom_call.1} parent=87 // pred_fallthru
          _
        // Predicated region
        $region93: #{tpu_custom_call.1} parent=87 // pred_check
          %p737 = pneg %p88
        $region94: #{tpu_custom_call.1} parent=87 // pred_check_branch
          %739 = sbr.rel (%p737) target = $region96
        $region95: #{tpu_custom_call.1} parent=87 // pred_region
          %740 = dma.done [#allocation6], 64
        $region96: #{tpu_custom_call.1} parent=87 // pred_fallthru
          _
        %s741 = sand.u32 %s127, 1
        %s742 = scalar_lea.sflag [#allocation4], %s741
        %s743 = sand.u32 %s127, 1
        %s744 = smul.addr %s743, 32
        %s745 = scalar_lea.vmem [#allocation9], %s744
        // Predicated region
        $region97: #{tpu_custom_call.1} parent=87 // pred_check
          %p746 = pneg %p140
        $region98: #{tpu_custom_call.1} parent=87 // pred_check_branch
          %748 = sbr.rel (%p746) target = $region100
        $region99: #{tpu_custom_call.1} parent=87 // pred_region
          %749 = dma.done %s742, 512
        $region100: #{tpu_custom_call.1} parent=87 // pred_fallthru
          _
        %s750 = sand.u32 %s51, 1
        %s751 = scalar_lea.sflag [#allocation11], %s750
        %s752 = sand.u32 %s153, 1
        %s753 = smul.addr %s752, 16
        %s754 = scalar_lea.vmem [#allocation10], %s753
        // Predicated region
        $region101: #{tpu_custom_call.1} parent=87 // pred_check
          %p755 = pneg %p166
        $region102: #{tpu_custom_call.1} parent=87 // pred_check_branch
          %757 = sbr.rel (%p755) target = $region104
        $region103: #{tpu_custom_call.1} parent=87 // pred_region
          %758 = dma.done %s751, 256
        $region104: #{tpu_custom_call.1} parent=87 // pred_fallthru
          _
        %s759 = sand.u32 %s51, 1
        %s760 = scalar_lea.sflag [#allocation11], %s759
        %s761 = sand.u32 %s179, 1
        %s762 = smul.addr %s761, 16
        %s763 = scalar_lea.vmem [#allocation12], %s762
        // Predicated region
        $region105: #{tpu_custom_call.1} parent=87 // pred_check
          %p764 = pneg %p192
        $region106: #{tpu_custom_call.1} parent=87 // pred_check_branch
          %766 = sbr.rel (%p764) target = $region108
        $region107: #{tpu_custom_call.1} parent=87 // pred_region
          %767 = dma.done %s760, 256
        $region108: #{tpu_custom_call.1} parent=87 // pred_fallthru
          _
        // Predicated region
        $region109: #{tpu_custom_call.1} parent=87 // pred_check
          %p768 = pneg %p344
        $region110: #{tpu_custom_call.1} parent=87 // pred_check_branch
          %770 = sbr.rel (%p768) target = $region112
        $region111: #{tpu_custom_call.1} parent=87 // pred_region
          %771 = dma.done [#allocation14], 32768
        $region112: #{tpu_custom_call.1} parent=87 // pred_fallthru
          _
        // Predicated region
        $region113: #{tpu_custom_call.1} parent=87 // pred_check
          %p772 = pneg %p365
        $region114: #{tpu_custom_call.1} parent=87 // pred_check_branch
          %774 = sbr.rel (%p772) target = $region116
        $region115: #{tpu_custom_call.1} parent=87 // pred_region
          %775 = dma.done [#allocation14], 32768
        $region116: #{tpu_custom_call.1} parent=87 // pred_fallthru
          _
        %776 = sfence
        %p777 = pneg %p67
        %p778 = pneg %p64
        %p779 = pneg %p88
        %p780 = pneg %p85
        %p781 = scmp.lt.s32.totalorder %s51, 1
        %s782 = scalar_select %p781, %s51, 1
        %s783 = smul.addr %s782, 16
        %s784 = smul.addr %s783, 8
        %s785 = scalar_lea.vmem %s2, %s784
        %p786 = pneg %p114
        %p787 = pneg %p111
        %s788 = sand.u32 %s127, 1
        %s789 = scalar_lea.sflag [#allocation4], %s788
        %s790 = sand.u32 %s127, 1
        %s791 = smul.addr %s790, 32
        %s792 = scalar_lea.vmem [#allocation9], %s791
        %p793 = pneg %p140
        %p794 = pneg %p137
        %s795 = sand.u32 %s51, 1
        %s796 = scalar_lea.sflag [#allocation11], %s795
        %s797 = sand.u32 %s153, 1
        %s798 = smul.addr %s797, 16
        %s799 = scalar_lea.vmem [#allocation10], %s798
        %p800 = pneg %p166
        %p801 = pneg %p163
        %s802 = sand.u32 %s51, 1
        %s803 = scalar_lea.sflag [#allocation11], %s802
        %s804 = sand.u32 %s179, 1
        %s805 = smul.addr %s804, 16
        %s806 = scalar_lea.vmem [#allocation12], %s805
        %p807 = pneg %p192
        %p808 = pneg %p189
        %p809 = scmp.lt.s32.totalorder %s51, 1
        %s810 = scalar_select %p809, %s51, 1
        %s811 = smul.addr %s810, 2
        %s812 = smul.addr %s811, 8
        %s813 = scalar_lea.vmem %s6, %s812
        %p814 = pneg %p218
        %p815 = pneg %p215
        %p816 = pneg %p239
        %p817 = pneg %p236
        %p818 = pneg %p260
        %p819 = pneg %p257
        %p820 = pneg %p281
        %p821 = pneg %p278
        %p822 = pneg %p302
        %p823 = pneg %p299
        %p824 = pneg %p323
        %p825 = pneg %p320
        %p826 = pneg %p344
        %p827 = pneg %p341
        %p828 = pneg %p365
        %p829 = pneg %p362
        %p830 = pneg %p386
        %p831 = pneg %p383
        %p832 = pneg %p407
        %p833 = pneg %p404
        %p834 = pneg %p428
        %p835 = pneg %p425
        %p836 = pneg %p454
        %p837 = pneg %p451
        %s838 = sand.u32 %s441, 1
        %s839 = scalar_lea.sflag [#allocation5], %s838
        %s840 = sand.u32 %s441, 1
        %s841 = smul.addr %s840, 128
        %s842 = scalar_lea.vmem [#allocation16], %s841
        %p843 = pneg %p480
        %p844 = pneg %p477
        %s845 = sand.u32 %s51, 1
        %s846 = scalar_lea.sflag [#allocation18], %s845
        %s847 = sand.u32 %s467, 1
        %s848 = smul.addr %s847, 32
        %s849 = scalar_lea.vmem [#allocation17], %s848
        %p850 = pneg %p506
        %p851 = pneg %p503
        %s852 = sand.u32 %s51, 1
        %s853 = scalar_lea.sflag [#allocation18], %s852
        %s854 = sand.u32 %s493, 1
        %s855 = smul.addr %s854, 16
        %s856 = scalar_lea.vmem [#allocation19], %s855
        %p857 = pneg %p532
        %p858 = pneg %p529
        %s859 = sand.u32 %s519, 1
        %s860 = scalar_lea.sflag [#allocation21], %s859
        %s861 = sand.u32 %s519, 1
        %s862 = smul.addr %s861, 16
        %s863 = scalar_lea.vmem [#allocation20], %s862
        %p864 = pneg %p558
        %p865 = pneg %p555
        %p866 = scmp.lt.s32.totalorder %s51, 1
        %s867 = scalar_select %p866, %s51, 1
        %s868 = smul.addr %s867, 2
        %s869 = smul.addr %s868, 8
        %s870 = scalar_lea.vmem %s21, %s869
        %p871 = scmp.lt.s32.totalorder %s51, 1
        %s872 = scalar_select %p871, %s51, 1
        %s873 = smul.addr %s872, 16
        %s874 = smul.addr %s873, 8
        %s875 = scalar_lea.vmem %s2, %s874
        %p876 = scmp.lt.s32.totalorder %s51, 1
        %s877 = scalar_select %p876, %s51, 1
        %s878 = smul.addr %s877, 2
        %s879 = smul.addr %s878, 8
        %s880 = scalar_lea.vmem %s6, %s879
        %p881 = scmp.lt.s32.totalorder %s51, 1
        %s882 = scalar_select %p881, %s51, 1
        %s883 = smul.addr %s882, 2
        %s884 = smul.addr %s883, 8
        %s885 = scalar_lea.vmem %s21, %s884
        %v886 = vld [vmem:[%s875] sm:$0xff]
        %v887 = vld [vmem:[%s875 + $0x8] sm:$0xff]
        %v888 = vld [vmem:[%s875 + $0x10] sm:$0xff]
        %v889 = vld [vmem:[%s875 + $0x18] sm:$0xff]
        %v890 = vld [vmem:[%s875 + $0x20] sm:$0xff]
        %v891 = vld [vmem:[%s875 + $0x28] sm:$0xff]
        %v892 = vld [vmem:[%s875 + $0x30] sm:$0xff]
        %v893 = vld [vmem:[%s875 + $0x38] sm:$0xff]
        %v894 = vld [vmem:[%s875 + $0x40] sm:$0xff]
        %v895 = vld [vmem:[%s875 + $0x48] sm:$0xff]
        %v896 = vld [vmem:[%s875 + $0x50] sm:$0xff]
        %v897 = vld [vmem:[%s875 + $0x58] sm:$0xff]
        %v898 = vld [vmem:[%s875 + $0x60] sm:$0xff]
        %v899 = vld [vmem:[%s875 + $0x68] sm:$0xff]
        %v900 = vld [vmem:[%s875 + $0x70] sm:$0xff]
        %v901 = vld [vmem:[%s875 + $0x78] sm:$0xff]
        %v902 = vld [vmem:[%s745] sm:$0xff]
        %v903 = vld [vmem:[%s745 + $0x8] sm:$0xff]
        %v904 = vld [vmem:[%s745 + $0x10] sm:$0xff]
        %v905 = vld [vmem:[%s745 + $0x18] sm:$0xff]
        %v906 = vld [vmem:[%s754] sm:$0xff]
        %v907 = vld [vmem:[%s754 + $0x8] sm:$0xff]
        %v908 = vld [vmem:[%s763] sm:$0xff]
        %v909 = vld [vmem:[%s763 + $0x8] sm:$0xff]
        %v910 = vld [vmem:[%s880] sm:$0xff]
        %v911 = vld [vmem:[%s880 + $0x8] sm:$0xff]
        %s912 = sld [smem:[#allocation3]]
        %v913 = vstv %s912
        %v914 = vmul.f32 %v913, %v908
        %v915 = vmul.f32 %v913, %v909
        %s916 = sld [smem:[#allocation3 + $0x80]]
        %v917 = vld [vmem:[%s9] sm:$0xf]
        %vm918 = vcmask 31744
        %v920 = vsel %vm918, %v910, 0
        %v923 = vsel %vm918, %v911, 0
        %vm925 = vcmask 1043456
        %v927 = vsel %vm925, %v917, 0
        %929 = vmatprep.subr.mxu0 0.0
        %930 = vmatpush1.msra.mxu0 %v927
        %931 = vmatprep.subr.mxu0 0.0
        %932 = vmatpush1.msra.mxu0 0.0
        %933 = vmatprep.subr.mxu0 0.0
        %934 = vmatpush1.msra.mxu0 0.0
        %935 = vmatprep.subr.mxu0 0.0
        %936 = vmatpush1.msra.mxu0 0.0
        %937 = vmatprep.subr.mxu0 0.0
        %938 = vmatpush1.msra.mxu0 0.0
        %939 = vmatprep.subr.mxu0 0.0
        %940 = vmatpush1.msra.mxu0 0.0
        %941 = vmatprep.subr.mxu0 0.0
        %942 = vmatpush1.msra.mxu0 0.0
        %943 = vmatprep.subr.mxu0 0.0
        %944 = vmatpush1.msra.mxu0 0.0
        %945 = vmatprep.subr.mxu0 0.0
        %946 = vmatpush1.msra.mxu0 0.0
        %947 = vmatprep.subr.mxu0 0.0
        %948 = vmatpush1.msra.mxu0 0.0
        %949 = vmatprep.subr.mxu0 0.0
        %950 = vmatpush1.msra.mxu0 0.0
        %951 = vmatprep.subr.mxu0 0.0
        %952 = vmatpush1.msra.mxu0 0.0
        %953 = vmatprep.subr.mxu0 0.0
        %954 = vmatpush1.msra.mxu0 0.0
        %955 = vmatprep.subr.mxu0 0.0
        %956 = vmatpush1.msra.mxu0 0.0
        %957 = vmatprep.subr.mxu0 0.0
        %958 = vmatpush1.msra.mxu0 0.0
        %959 = vmatprep.subr.mxu0 0.0
        %960 = vmatpush1.msra.mxu0 0.0
        %961 = vmatprep.subr.mxu0 0.0
        %962 = vmatpush1.msra.mxu0 0.0
        %963 = vmatprep.subr.mxu0 0.0
        %964 = vmatpush1.msra.mxu0 0.0
        %965 = vmatprep.subr.mxu0 0.0
        %966 = vmatpush1.msra.mxu0 0.0
        %967 = vmatprep.subr.mxu0 0.0
        %968 = vmatpush1.msra.mxu0 0.0
        %969 = vmatprep.subr.mxu0 0.0
        %970 = vmatpush1.msra.mxu0 0.0
        %971 = vmatprep.subr.mxu0 0.0
        %972 = vmatpush1.msra.mxu0 0.0
        %973 = vmatprep.subr.mxu0 0.0
        %974 = vmatpush1.msra.mxu0 0.0
        %975 = vmatprep.subr.mxu0 0.0
        %976 = vmatpush1.msra.mxu0 0.0
        %977 = vmatprep.subr.mxu0 0.0
        %978 = vmatpush1.msra.mxu0 0.0
        %979 = vmatprep.subr.mxu0 0.0
        %980 = vmatpush1.msra.mxu0 0.0
        %981 = vmatprep.subr.mxu0 0.0
        %982 = vmatpush1.msra.mxu0 0.0
        %983 = vmatprep.subr.mxu0 0.0
        %984 = vmatpush1.msra.mxu0 0.0
        %985 = vmatprep.subr.mxu0 0.0
        %986 = vmatpush1.msra.mxu0 0.0
        %987 = vmatprep.subr.mxu0 0.0
        %988 = vmatpush1.msra.mxu0 0.0
        %989 = vmatprep.subr.mxu0 0.0
        %990 = vmatpush1.msra.mxu0 0.0
        %991 = vmatprep.subr.mxu0 0.0
        %992 = vmatpush1.msra.mxu0 0.0
        %993 = vmatprep.mubr.f32.mxu0 0.0
        %994 = vmatmul.mubr.f32.gmra.mrb[0].mxu0 %v920
        %v995 = vpop.f32.mrb[0].mxu0
        %v996 = vadd.f32 0.0, %v995
        %v997 = vpop.f32.mrb[0].mxu0
        %998 = vmatprep.mubr.f32.mxu0 0.0
        %999 = vmatmul.mubr.f32.gmra.mrb[0].mxu0 %v923
        %v1000 = vpop.f32.mrb[0].mxu0
        %v1001 = vadd.f32 0.0, %v1000
        %v1002 = vpop.f32.mrb[0].mxu0
        %1003 = vdwg.mxu0
        %v1004 = vstv %s916
        %v1005 = vmul.f32 %v1004, %v996
        %v1006 = vmul.f32 %v1004, %v1001
        %v1007 = vadd.f32 %v914, %v1005
        %v1008 = vadd.f32 %v915, %v1006
        %vm1009 = vcmask 39936
        %1010 = vst.msk [vmem:[#allocation2] sm:$0xff] %vm1009, 0.0
        %1011 = vst.msk [vmem:[#allocation2 + $0x48] sm:$0xff] %vm1009, 0.0
        %1014 = vrot.lane.b32.xlu0 %v1007, 5
        %v1015 = vpop.permute.xlu0 %1014
        %1016 = vrot.lane.b32.xlu0 %v1008, 5
        %v1017 = vpop.permute.xlu0 %1016
        %vm1020 = vcmask 171048
        %1021 = vst.msk [vmem:[#allocation2] sm:$0xff] %vm1020, %v1015
        %1022 = vst.msk [vmem:[#allocation2 + $0x48] sm:$0xff] %vm1020, %v1017
        %vm1023 = vcmask 212136
        %1024 = vst.msk [vmem:[#allocation2] sm:$0xff] %vm1023, 0.0
        %1025 = vst.msk [vmem:[#allocation2 + $0x48] sm:$0xff] %vm1023, 0.0
        %v1026 = vld [vmem:[%s7] sm:$0xff]
        %v1027 = vld [vmem:[%s7 + $0x8] sm:$0xff]
        %v1028 = vld [vmem:[#allocation2] sm:$0xff]
        %v1029 = vld [vmem:[#allocation2 + $0x48] sm:$0xff]
        %1031 = vset.pattern.permute.xlu0 0
        %1032 = vperm.xlu0 %1031, %v1026
        %v1033 = vpop.permute.xlu0 %1032
        %1036 = vset.pattern.permute.xlu0 0
        %1037 = vperm.xlu0 %1036, %v1027
        %v1038 = vpop.permute.xlu0 %1037
        %v1040 = vmul.f32 %v1028, %v1033
        %v1041 = vmul.f32 %v1029, %v1038
        %v1042 = vadd.f32 %v1040, 0.0
        %v1043 = vadd.f32 %v1041, 0.0
        %1044 = vset.pattern.permute.xlu0 1
        %1045 = vperm.xlu0 %1044, %v1026
        %v1046 = vpop.permute.xlu0 %1045
        %1048 = vset.pattern.permute.xlu0 1
        %1049 = vperm.xlu0 %1048, %v1027
        %v1050 = vpop.permute.xlu0 %1049
        %v1052 = vmul.f32 %v1028, %v1046
        %v1053 = vmul.f32 %v1029, %v1050
        %v1054 = vadd.f32 %v1052, 0.0
        %v1055 = vadd.f32 %v1053, 0.0
        %1056 = vset.pattern.permute.xlu0 2
        %1057 = vperm.xlu0 %1056, %v1026
        %v1058 = vpop.permute.xlu0 %1057
        %1060 = vset.pattern.permute.xlu0 2
        %1061 = vperm.xlu0 %1060, %v1027
        %v1062 = vpop.permute.xlu0 %1061
        %v1064 = vmul.f32 %v1028, %v1058
        %v1065 = vmul.f32 %v1029, %v1062
        %v1066 = vadd.f32 %v1064, 0.0
        %v1067 = vadd.f32 %v1065, 0.0
        %1068 = vset.pattern.permute.xlu0 3
        %1069 = vperm.xlu0 %1068, %v1026
        %v1070 = vpop.permute.xlu0 %1069
        %1072 = vset.pattern.permute.xlu0 3
        %1073 = vperm.xlu0 %1072, %v1027
        %v1074 = vpop.permute.xlu0 %1073
        %v1076 = vmul.f32 %v1028, %v1070
        %v1077 = vmul.f32 %v1029, %v1074
        %1080 = vrot.lane.b32.xlu0 %v1076, 124
        %v1081 = vpop.permute.xlu0 %1080
        %1082 = vrot.lane.b32.xlu0 %v1077, 124
        %v1083 = vpop.permute.xlu0 %1082
        %v1086 = vadd.f32 %v1042, %v1081
        %v1087 = vadd.f32 %v1043, %v1083
        %1088 = vset.pattern.permute.xlu0 4
        %1089 = vperm.xlu0 %1088, %v1026
        %v1090 = vpop.permute.xlu0 %1089
        %1092 = vset.pattern.permute.xlu0 4
        %1093 = vperm.xlu0 %1092, %v1027
        %v1094 = vpop.permute.xlu0 %1093
        %v1096 = vmul.f32 %v1028, %v1090
        %v1097 = vmul.f32 %v1029, %v1094
        %1100 = vrot.lane.b32.xlu0 %v1096, 124
        %v1101 = vpop.permute.xlu0 %1100
        %1102 = vrot.lane.b32.xlu0 %v1097, 124
        %v1103 = vpop.permute.xlu0 %1102
        %v1106 = vadd.f32 %v1054, %v1101
        %v1107 = vadd.f32 %v1055, %v1103
        %1108 = vset.pattern.permute.xlu0 5
        %1109 = vperm.xlu0 %1108, %v1026
        %v1110 = vpop.permute.xlu0 %1109
        %1112 = vset.pattern.permute.xlu0 5
        %1113 = vperm.xlu0 %1112, %v1027
        %v1114 = vpop.permute.xlu0 %1113
        %v1116 = vmul.f32 %v1028, %v1110
        %v1117 = vmul.f32 %v1029, %v1114
        %1120 = vrot.lane.b32.xlu0 %v1116, 124
        %v1121 = vpop.permute.xlu0 %1120
        %1122 = vrot.lane.b32.xlu0 %v1117, 124
        %v1123 = vpop.permute.xlu0 %1122
        %v1126 = vadd.f32 %v1066, %v1121
        %v1127 = vadd.f32 %v1067, %v1123
        %1128 = vset.pattern.permute.xlu0 6
        %1129 = vperm.xlu0 %1128, %v1026
        %v1130 = vpop.permute.xlu0 %1129
        %1132 = vset.pattern.permute.xlu0 6
        %1133 = vperm.xlu0 %1132, %v1027
        %v1134 = vpop.permute.xlu0 %1133
        %v1136 = vmul.f32 %v1028, %v1130
        %v1137 = vmul.f32 %v1029, %v1134
        %1140 = vrot.lane.b32.xlu0 %v1136, 120
        %v1141 = vpop.permute.xlu0 %1140
        %1142 = vrot.lane.b32.xlu0 %v1137, 120
        %v1143 = vpop.permute.xlu0 %1142
        %v1146 = vadd.f32 %v1086, %v1141
        %v1147 = vadd.f32 %v1087, %v1143
        %1148 = vset.pattern.permute.xlu0 7
        %1149 = vperm.xlu0 %1148, %v1026
        %v1150 = vpop.permute.xlu0 %1149
        %1152 = vset.pattern.permute.xlu0 7
        %1153 = vperm.xlu0 %1152, %v1027
        %v1154 = vpop.permute.xlu0 %1153
        %v1156 = vmul.f32 %v1028, %v1150
        %v1157 = vmul.f32 %v1029, %v1154
        %1160 = vrot.lane.b32.xlu0 %v1156, 120
        %v1161 = vpop.permute.xlu0 %1160
        %1162 = vrot.lane.b32.xlu0 %v1157, 120
        %v1163 = vpop.permute.xlu0 %1162
        %v1166 = vadd.f32 %v1106, %v1161
        %v1167 = vadd.f32 %v1107, %v1163
        %1168 = vset.pattern.permute.xlu0 8
        %1169 = vperm.xlu0 %1168, %v1026
        %v1170 = vpop.permute.xlu0 %1169
        %1172 = vset.pattern.permute.xlu0 8
        %1173 = vperm.xlu0 %1172, %v1027
        %v1174 = vpop.permute.xlu0 %1173
        %v1176 = vmul.f32 %v1028, %v1170
        %v1177 = vmul.f32 %v1029, %v1174
        %1180 = vrot.lane.b32.xlu0 %v1176, 120
        %v1181 = vpop.permute.xlu0 %1180
        %1182 = vrot.lane.b32.xlu0 %v1177, 120
        %v1183 = vpop.permute.xlu0 %1182
        %v1186 = vadd.f32 %v1126, %v1181
        %v1187 = vadd.f32 %v1127, %v1183
        %v1188 = vlaneseq
        %v1189 = vand.u32 %v1188, 127
        %v1190 = vand.u32 %v1189, 3
        %vm1191 = vcmp.ne.s32.totalorder %v1190, 0
        %v1192 = vsel %vm1191, 1.0, 0.0
        %vm1193 = vcmp.ne.s32.totalorder %v1190, 3
        %v1194 = vsel %vm1193, 1.0, 0.0
        %v1195 = vmul.f32 %v1146, %v1192
        %v1196 = vmul.f32 %v1147, %v1192
        %1199 = vrot.lane.b32.xlu0 %v1166, 127
        %v1200 = vpop.permute.xlu0 %1199
        %1201 = vrot.lane.b32.xlu0 %v1167, 127
        %v1202 = vpop.permute.xlu0 %1201
        %v1205 = vadd.f32 %v1195, %v1200
        %v1206 = vadd.f32 %v1196, %v1202
        %1208 = vrot.lane.b32.xlu0 %v1194, 2
        %v1209 = vpop.permute.xlu0 %1208
        %v1211 = vmul.f32 %v1186, %v1209
        %v1212 = vmul.f32 %v1187, %v1209
        %1215 = vrot.lane.b32.xlu0 %v1211, 126
        %v1216 = vpop.permute.xlu0 %1215
        %1217 = vrot.lane.b32.xlu0 %v1212, 126
        %v1218 = vpop.permute.xlu0 %1217
        %v1221 = vadd.f32 %v1205, %v1216
        %v1222 = vadd.f32 %v1206, %v1218
        %v1223 = vld [vmem:[%s8] sm:$0xff]
        %v1224 = vld [vmem:[%s8 + $0x8] sm:$0xff]
        %1225 = vset.pattern.permute.xlu0 9
        %1226 = vperm.xlu0 %1225, %v1026
        %v1227 = vpop.permute.xlu0 %1226
        %1229 = vset.pattern.permute.xlu0 9
        %1230 = vperm.xlu0 %1229, %v1027
        %v1231 = vpop.permute.xlu0 %1230
        %vm1233 = vcmask 130048
        %v1235 = vsel %vm1233, %v1223, 0
        %v1238 = vsel %vm1233, %v1224, 0
        %1240 = vmatprep.subr.mxu0 0.0
        %1241 = vmatpush1.msra.mxu0 %v1221
        %1242 = vmatprep.subr.mxu0 0.0
        %1243 = vmatpush1.msra.mxu0 %v1222
        %1244 = vmatprep.subr.mxu0 0.0
        %1245 = vmatpush1.msra.mxu0 0.0
        %1246 = vmatprep.subr.mxu0 0.0
        %1247 = vmatpush1.msra.mxu0 0.0
        %1248 = vmatprep.subr.mxu0 0.0
        %1249 = vmatpush1.msra.mxu0 0.0
        %1250 = vmatprep.subr.mxu0 0.0
        %1251 = vmatpush1.msra.mxu0 0.0
        %1252 = vmatprep.subr.mxu0 0.0
        %1253 = vmatpush1.msra.mxu0 0.0
        %1254 = vmatprep.subr.mxu0 0.0
        %1255 = vmatpush1.msra.mxu0 0.0
        %1256 = vmatprep.subr.mxu0 0.0
        %1257 = vmatpush1.msra.mxu0 0.0
        %1258 = vmatprep.subr.mxu0 0.0
        %1259 = vmatpush1.msra.mxu0 0.0
        %1260 = vmatprep.subr.mxu0 0.0
        %1261 = vmatpush1.msra.mxu0 0.0
        %1262 = vmatprep.subr.mxu0 0.0
        %1263 = vmatpush1.msra.mxu0 0.0
        %1264 = vmatprep.subr.mxu0 0.0
        %1265 = vmatpush1.msra.mxu0 0.0
        %1266 = vmatprep.subr.mxu0 0.0
        %1267 = vmatpush1.msra.mxu0 0.0
        %1268 = vmatprep.subr.mxu0 0.0
        %1269 = vmatpush1.msra.mxu0 0.0
        %1270 = vmatprep.subr.mxu0 0.0
        %1271 = vmatpush1.msra.mxu0 0.0
        %1272 = vmatprep.subr.mxu0 0.0
        %1273 = vmatpush1.msra.mxu0 0.0
        %1274 = vmatprep.subr.mxu0 0.0
        %1275 = vmatpush1.msra.mxu0 0.0
        %1276 = vmatprep.subr.mxu0 0.0
        %1277 = vmatpush1.msra.mxu0 0.0
        %1278 = vmatprep.subr.mxu0 0.0
        %1279 = vmatpush1.msra.mxu0 0.0
        %1280 = vmatprep.subr.mxu0 0.0
        %1281 = vmatpush1.msra.mxu0 0.0
        %1282 = vmatprep.subr.mxu0 0.0
        %1283 = vmatpush1.msra.mxu0 0.0
        %1284 = vmatprep.subr.mxu0 0.0
        %1285 = vmatpush1.msra.mxu0 0.0
        %1286 = vmatprep.subr.mxu0 0.0
        %1287 = vmatpush1.msra.mxu0 0.0
        %1288 = vmatprep.subr.mxu0 0.0
        %1289 = vmatpush1.msra.mxu0 0.0
        %1290 = vmatprep.subr.mxu0 0.0
        %1291 = vmatpush1.msra.mxu0 0.0
        %1292 = vmatprep.subr.mxu0 0.0
        %1293 = vmatpush1.msra.mxu0 0.0
        %1294 = vmatprep.subr.mxu0 0.0
        %1295 = vmatpush1.msra.mxu0 0.0
        %1296 = vmatprep.subr.mxu0 0.0
        %1297 = vmatpush1.msra.mxu0 0.0
        %1298 = vmatprep.subr.mxu0 0.0
        %1299 = vmatpush1.msra.mxu0 0.0
        %1300 = vmatprep.subr.mxu0 0.0
        %1301 = vmatpush1.msra.mxu0 0.0
        %1302 = vmatprep.subr.mxu0 0.0
        %1303 = vmatpush1.msra.mxu0 0.0
        %1304 = vmatprep.mubr.f32.mxu0 0.0
        %1305 = vmatmul.mubr.f32.gmra.mrb[0].mxu0 %v1235
        %v1306 = vpop.f32.mrb[0].mxu0
        %v1307 = vadd.f32 %v1227, %v1306
        %v1308 = vpop.f32.mrb[0].mxu0
        %1309 = vmatprep.mubr.f32.mxu0 0.0
        %1310 = vmatmul.mubr.f32.gmra.mrb[0].mxu0 %v1238
        %v1311 = vpop.f32.mrb[0].mxu0
        %v1312 = vadd.f32 %v1231, %v1311
        %v1313 = vpop.f32.mrb[0].mxu0
        %1314 = vdwg.mxu0
        %v1315 = vmul.f32 %v1307, 0.01
        %v1316 = vmul.f32 %v1312, 0.01
        %v1317 = vmax.f32 %v1307, %v1315
        %v1318 = vmax.f32 %v1312, %v1316
        %s1319 = sld [smem:[#allocation3 + $0x1]]
        %v1320 = vstv %s1319
        %v1321 = vmul.f32 %v1320, %v906
        %v1322 = vmul.f32 %v1320, %v907
        %s1323 = sld [smem:[#allocation3 + $0x81]]
        %v1324 = vld [vmem:[%s10] sm:$0xff]
        %v1325 = vld [vmem:[%s10 + $0x8] sm:$0xff]
        %v1327 = vsel %vm1233, %v1317, 0
        %v1330 = vsel %vm1233, %v1318, 0
        %1332 = vmatprep.subr.mxu0 0.0
        %1333 = vmatpush1.msra.mxu0 %v1324
        %1334 = vmatprep.subr.mxu0 0.0
        %1335 = vmatpush1.msra.mxu0 %v1325
        %1336 = vmatprep.subr.mxu0 0.0
        %1337 = vmatpush1.msra.mxu0 0.0
        %1338 = vmatprep.subr.mxu0 0.0
        %1339 = vmatpush1.msra.mxu0 0.0
        %1340 = vmatprep.subr.mxu0 0.0
        %1341 = vmatpush1.msra.mxu0 0.0
        %1342 = vmatprep.subr.mxu0 0.0
        %1343 = vmatpush1.msra.mxu0 0.0
        %1344 = vmatprep.subr.mxu0 0.0
        %1345 = vmatpush1.msra.mxu0 0.0
        %1346 = vmatprep.subr.mxu0 0.0
        %1347 = vmatpush1.msra.mxu0 0.0
        %1348 = vmatprep.subr.mxu0 0.0
        %1349 = vmatpush1.msra.mxu0 0.0
        %1350 = vmatprep.subr.mxu0 0.0
        %1351 = vmatpush1.msra.mxu0 0.0
        %1352 = vmatprep.subr.mxu0 0.0
        %1353 = vmatpush1.msra.mxu0 0.0
        %1354 = vmatprep.subr.mxu0 0.0
        %1355 = vmatpush1.msra.mxu0 0.0
        %1356 = vmatprep.subr.mxu0 0.0
        %1357 = vmatpush1.msra.mxu0 0.0
        %1358 = vmatprep.subr.mxu0 0.0
        %1359 = vmatpush1.msra.mxu0 0.0
        %1360 = vmatprep.subr.mxu0 0.0
        %1361 = vmatpush1.msra.mxu0 0.0
        %1362 = vmatprep.subr.mxu0 0.0
        %1363 = vmatpush1.msra.mxu0 0.0
        %1364 = vmatprep.subr.mxu0 0.0
        %1365 = vmatpush1.msra.mxu0 0.0
        %1366 = vmatprep.subr.mxu0 0.0
        %1367 = vmatpush1.msra.mxu0 0.0
        %1368 = vmatprep.subr.mxu0 0.0
        %1369 = vmatpush1.msra.mxu0 0.0
        %1370 = vmatprep.subr.mxu0 0.0
        %1371 = vmatpush1.msra.mxu0 0.0
        %1372 = vmatprep.subr.mxu0 0.0
        %1373 = vmatpush1.msra.mxu0 0.0
        %1374 = vmatprep.subr.mxu0 0.0
        %1375 = vmatpush1.msra.mxu0 0.0
        %1376 = vmatprep.subr.mxu0 0.0
        %1377 = vmatpush1.msra.mxu0 0.0
        %1378 = vmatprep.subr.mxu0 0.0
        %1379 = vmatpush1.msra.mxu0 0.0
        %1380 = vmatprep.subr.mxu0 0.0
        %1381 = vmatpush1.msra.mxu0 0.0
        %1382 = vmatprep.subr.mxu0 0.0
        %1383 = vmatpush1.msra.mxu0 0.0
        %1384 = vmatprep.subr.mxu0 0.0
        %1385 = vmatpush1.msra.mxu0 0.0
        %1386 = vmatprep.subr.mxu0 0.0
        %1387 = vmatpush1.msra.mxu0 0.0
        %1388 = vmatprep.subr.mxu0 0.0
        %1389 = vmatpush1.msra.mxu0 0.0
        %1390 = vmatprep.subr.mxu0 0.0
        %1391 = vmatpush1.msra.mxu0 0.0
        %1392 = vmatprep.subr.mxu0 0.0
        %1393 = vmatpush1.msra.mxu0 0.0
        %1394 = vmatprep.subr.mxu0 0.0
        %1395 = vmatpush1.msra.mxu0 0.0
        %1396 = vmatprep.mubr.f32.mxu0 0.0
        %1397 = vmatmul.mubr.f32.gmra.mrb[0].mxu0 %v1327
        %v1398 = vpop.f32.mrb[0].mxu0
        %v1399 = vadd.f32 0.0, %v1398
        %v1400 = vpop.f32.mrb[0].mxu0
        %1401 = vmatprep.mubr.f32.mxu0 0.0
        %1402 = vmatmul.mubr.f32.gmra.mrb[0].mxu0 %v1330
        %v1403 = vpop.f32.mrb[0].mxu0
        %v1404 = vadd.f32 0.0, %v1403
        %v1405 = vpop.f32.mrb[0].mxu0
        %1406 = vdwg.mxu0
        %v1407 = vstv %s1323
        %v1408 = vmul.f32 %v1407, %v1399
        %v1409 = vmul.f32 %v1407, %v1404
        %v1410 = vadd.f32 %v1321, %v1408
        %v1411 = vadd.f32 %v1322, %v1409
        %vm1412 = vcmask 72704
        %1413 = vst.msk [vmem:[#allocation2] sm:$0xff] %vm1412, 0.0
        %1414 = vst.msk [vmem:[#allocation2 + $0x48] sm:$0xff] %vm1412, 0.0
        %1417 = vrot.lane.b32.xlu0 %v1410, 9
        %v1418 = vpop.permute.xlu0 %1417
        %1419 = vrot.lane.b32.xlu0 %v1411, 9
        %v1420 = vpop.permute.xlu0 %1419
        %vm1423 = vcmask 597064
        %1424 = vst.msk [vmem:[#allocation2] sm:$0xff] %vm1423, %v1418
        %1425 = vst.msk [vmem:[#allocation2 + $0x48] sm:$0xff] %vm1423, %v1420
        %vm1426 = vcmask 671304
        %1427 = vst.msk [vmem:[#allocation2] sm:$0xff] %vm1426, 0.0
        %1428 = vst.msk [vmem:[#allocation2 + $0x48] sm:$0xff] %vm1426, 0.0
        %s1429 = scalar_lea.vmem %s7, 16
        %v1430 = vld [vmem:[%s1429] sm:$0xff]
        %v1431 = vld [vmem:[%s1429 + $0x8] sm:$0xff]
        %v1432 = vld [vmem:[#allocation2] sm:$0xff]
        %v1433 = vld [vmem:[#allocation2 + $0x48] sm:$0xff]
        %1435 = vset.pattern.permute.xlu0 0
        %1436 = vperm.xlu0 %1435, %v1430
        %v1437 = vpop.permute.xlu0 %1436
        %1440 = vset.pattern.permute.xlu0 0
        %1441 = vperm.xlu0 %1440, %v1431
        %v1442 = vpop.permute.xlu0 %1441
        %v1444 = vmul.f32 %v1432, %v1437
        %v1445 = vmul.f32 %v1433, %v1442
        %v1446 = vadd.f32 %v1444, 0.0
        %v1447 = vadd.f32 %v1445, 0.0
        %1448 = vset.pattern.permute.xlu0 1
        %1449 = vperm.xlu0 %1448, %v1430
        %v1450 = vpop.permute.xlu0 %1449
        %1452 = vset.pattern.permute.xlu0 1
        %1453 = vperm.xlu0 %1452, %v1431
        %v1454 = vpop.permute.xlu0 %1453
        %v1456 = vmul.f32 %v1432, %v1450
        %v1457 = vmul.f32 %v1433, %v1454
        %v1458 = vadd.f32 %v1456, 0.0
        %v1459 = vadd.f32 %v1457, 0.0
        %1460 = vset.pattern.permute.xlu0 2
        %1461 = vperm.xlu0 %1460, %v1430
        %v1462 = vpop.permute.xlu0 %1461
        %1464 = vset.pattern.permute.xlu0 2
        %1465 = vperm.xlu0 %1464, %v1431
        %v1466 = vpop.permute.xlu0 %1465
        %v1468 = vmul.f32 %v1432, %v1462
        %v1469 = vmul.f32 %v1433, %v1466
        %v1470 = vadd.f32 %v1468, 0.0
        %v1471 = vadd.f32 %v1469, 0.0
        %1472 = vset.pattern.permute.xlu0 3
        %1473 = vperm.xlu0 %1472, %v1430
        %v1474 = vpop.permute.xlu0 %1473
        %1476 = vset.pattern.permute.xlu0 3
        %1477 = vperm.xlu0 %1476, %v1431
        %v1478 = vpop.permute.xlu0 %1477
        %v1480 = vmul.f32 %v1432, %v1474
        %v1481 = vmul.f32 %v1433, %v1478
        %1484 = vrot.lane.b32.xlu0 %v1480, 120
        %v1485 = vpop.permute.xlu0 %1484
        %1486 = vrot.lane.b32.xlu0 %v1481, 120
        %v1487 = vpop.permute.xlu0 %1486
        %v1490 = vadd.f32 %v1446, %v1485
        %v1491 = vadd.f32 %v1447, %v1487
        %1492 = vset.pattern.permute.xlu0 4
        %1493 = vperm.xlu0 %1492, %v1430
        %v1494 = vpop.permute.xlu0 %1493
        %1496 = vset.pattern.permute.xlu0 4
        %1497 = vperm.xlu0 %1496, %v1431
        %v1498 = vpop.permute.xlu0 %1497
        %v1500 = vmul.f32 %v1432, %v1494
        %v1501 = vmul.f32 %v1433, %v1498
        %1504 = vrot.lane.b32.xlu0 %v1500, 120
        %v1505 = vpop.permute.xlu0 %1504
        %1506 = vrot.lane.b32.xlu0 %v1501, 120
        %v1507 = vpop.permute.xlu0 %1506
        %v1510 = vadd.f32 %v1458, %v1505
        %v1511 = vadd.f32 %v1459, %v1507
        %1512 = vset.pattern.permute.xlu0 5
        %1513 = vperm.xlu0 %1512, %v1430
        %v1514 = vpop.permute.xlu0 %1513
        %1516 = vset.pattern.permute.xlu0 5
        %1517 = vperm.xlu0 %1516, %v1431
        %v1518 = vpop.permute.xlu0 %1517
        %v1520 = vmul.f32 %v1432, %v1514
        %v1521 = vmul.f32 %v1433, %v1518
        %1524 = vrot.lane.b32.xlu0 %v1520, 120
        %v1525 = vpop.permute.xlu0 %1524
        %1526 = vrot.lane.b32.xlu0 %v1521, 120
        %v1527 = vpop.permute.xlu0 %1526
        %v1530 = vadd.f32 %v1470, %v1525
        %v1531 = vadd.f32 %v1471, %v1527
        %1532 = vset.pattern.permute.xlu0 6
        %1533 = vperm.xlu0 %1532, %v1430
        %v1534 = vpop.permute.xlu0 %1533
        %1536 = vset.pattern.permute.xlu0 6
        %1537 = vperm.xlu0 %1536, %v1431
        %v1538 = vpop.permute.xlu0 %1537
        %v1540 = vmul.f32 %v1432, %v1534
        %v1541 = vmul.f32 %v1433, %v1538
        %1544 = vrot.lane.b32.xlu0 %v1540, 112
        %v1545 = vpop.permute.xlu0 %1544
        %1546 = vrot.lane.b32.xlu0 %v1541, 112
        %v1547 = vpop.permute.xlu0 %1546
        %v1550 = vadd.f32 %v1490, %v1545
        %v1551 = vadd.f32 %v1491, %v1547
        %1552 = vset.pattern.permute.xlu0 7
        %1553 = vperm.xlu0 %1552, %v1430
        %v1554 = vpop.permute.xlu0 %1553
        %1556 = vset.pattern.permute.xlu0 7
        %1557 = vperm.xlu0 %1556, %v1431
        %v1558 = vpop.permute.xlu0 %1557
        %v1560 = vmul.f32 %v1432, %v1554
        %v1561 = vmul.f32 %v1433, %v1558
        %1564 = vrot.lane.b32.xlu0 %v1560, 112
        %v1565 = vpop.permute.xlu0 %1564
        %1566 = vrot.lane.b32.xlu0 %v1561, 112
        %v1567 = vpop.permute.xlu0 %1566
        %v1570 = vadd.f32 %v1510, %v1565
        %v1571 = vadd.f32 %v1511, %v1567
        %1572 = vset.pattern.permute.xlu0 8
        %1573 = vperm.xlu0 %1572, %v1430
        %v1574 = vpop.permute.xlu0 %1573
        %1576 = vset.pattern.permute.xlu0 8
        %1577 = vperm.xlu0 %1576, %v1431
        %v1578 = vpop.permute.xlu0 %1577
        %v1580 = vmul.f32 %v1432, %v1574
        %v1581 = vmul.f32 %v1433, %v1578
        %1584 = vrot.lane.b32.xlu0 %v1580, 112
        %v1585 = vpop.permute.xlu0 %1584
        %1586 = vrot.lane.b32.xlu0 %v1581, 112
        %v1587 = vpop.permute.xlu0 %1586
        %v1590 = vadd.f32 %v1530, %v1585
        %v1591 = vadd.f32 %v1531, %v1587
        %v1592 = vand.u32 %v1189, 7
        %vm1593 = vcmp.ne.s32.totalorder %v1592, 0
        %v1594 = vsel %vm1593, 1.0, 0.0
        %vm1595 = vcmp.ne.s32.totalorder %v1592, 7
        %v1596 = vsel %vm1595, 1.0, 0.0
        %v1597 = vmul.f32 %v1550, %v1594
        %v1598 = vmul.f32 %v1551, %v1594
        %1601 = vrot.lane.b32.xlu0 %v1570, 127
        %v1602 = vpop.permute.xlu0 %1601
        %1603 = vrot.lane.b32.xlu0 %v1571, 127
        %v1604 = vpop.permute.xlu0 %1603
        %v1607 = vadd.f32 %v1597, %v1602
        %v1608 = vadd.f32 %v1598, %v1604
        %1610 = vrot.lane.b32.xlu0 %v1596, 2
        %v1611 = vpop.permute.xlu0 %1610
        %v1613 = vmul.f32 %v1590, %v1611
        %v1614 = vmul.f32 %v1591, %v1611
        %1617 = vrot.lane.b32.xlu0 %v1613, 126
        %v1618 = vpop.permute.xlu0 %1617
        %1619 = vrot.lane.b32.xlu0 %v1614, 126
        %v1620 = vpop.permute.xlu0 %1619
        %v1623 = vadd.f32 %v1607, %v1618
        %v1624 = vadd.f32 %v1608, %v1620
        %s1625 = scalar_lea.vmem %s8, 16
        %v1626 = vld [vmem:[%s1625] sm:$0xff]
        %v1627 = vld [vmem:[%s1625 + $0x8] sm:$0xff]
        %1628 = vset.pattern.permute.xlu0 9
        %1629 = vperm.xlu0 %1628, %v1430
        %v1630 = vpop.permute.xlu0 %1629
        %1632 = vset.pattern.permute.xlu0 9
        %1633 = vperm.xlu0 %1632, %v1431
        %v1634 = vpop.permute.xlu0 %1633
        %v1637 = vsel %vm1233, %v1626, 0
        %v1640 = vsel %vm1233, %v1627, 0
        %1642 = vmatprep.subr.mxu0 0.0
        %1643 = vmatpush1.msra.mxu0 %v1623
        %1644 = vmatprep.subr.mxu0 0.0
        %1645 = vmatpush1.msra.mxu0 %v1624
        %1646 = vmatprep.subr.mxu0 0.0
        %1647 = vmatpush1.msra.mxu0 0.0
        %1648 = vmatprep.subr.mxu0 0.0
        %1649 = vmatpush1.msra.mxu0 0.0
        %1650 = vmatprep.subr.mxu0 0.0
        %1651 = vmatpush1.msra.mxu0 0.0
        %1652 = vmatprep.subr.mxu0 0.0
        %1653 = vmatpush1.msra.mxu0 0.0
        %1654 = vmatprep.subr.mxu0 0.0
        %1655 = vmatpush1.msra.mxu0 0.0
        %1656 = vmatprep.subr.mxu0 0.0
        %1657 = vmatpush1.msra.mxu0 0.0
        %1658 = vmatprep.subr.mxu0 0.0
        %1659 = vmatpush1.msra.mxu0 0.0
        %1660 = vmatprep.subr.mxu0 0.0
        %1661 = vmatpush1.msra.mxu0 0.0
        %1662 = vmatprep.subr.mxu0 0.0
        %1663 = vmatpush1.msra.mxu0 0.0
        %1664 = vmatprep.subr.mxu0 0.0
        %1665 = vmatpush1.msra.mxu0 0.0
        %1666 = vmatprep.subr.mxu0 0.0
        %1667 = vmatpush1.msra.mxu0 0.0
        %1668 = vmatprep.subr.mxu0 0.0
        %1669 = vmatpush1.msra.mxu0 0.0
        %1670 = vmatprep.subr.mxu0 0.0
        %1671 = vmatpush1.msra.mxu0 0.0
        %1672 = vmatprep.subr.mxu0 0.0
        %1673 = vmatpush1.msra.mxu0 0.0
        %1674 = vmatprep.subr.mxu0 0.0
        %1675 = vmatpush1.msra.mxu0 0.0
        %1676 = vmatprep.subr.mxu0 0.0
        %1677 = vmatpush1.msra.mxu0 0.0
        %1678 = vmatprep.subr.mxu0 0.0
        %1679 = vmatpush1.msra.mxu0 0.0
        %1680 = vmatprep.subr.mxu0 0.0
        %1681 = vmatpush1.msra.mxu0 0.0
        %1682 = vmatprep.subr.mxu0 0.0
        %1683 = vmatpush1.msra.mxu0 0.0
        %1684 = vmatprep.subr.mxu0 0.0
        %1685 = vmatpush1.msra.mxu0 0.0
        %1686 = vmatprep.subr.mxu0 0.0
        %1687 = vmatpush1.msra.mxu0 0.0
        %1688 = vmatprep.subr.mxu0 0.0
        %1689 = vmatpush1.msra.mxu0 0.0
        %1690 = vmatprep.subr.mxu0 0.0
        %1691 = vmatpush1.msra.mxu0 0.0
        %1692 = vmatprep.subr.mxu0 0.0
        %1693 = vmatpush1.msra.mxu0 0.0
        %1694 = vmatprep.subr.mxu0 0.0
        %1695 = vmatpush1.msra.mxu0 0.0
        %1696 = vmatprep.subr.mxu0 0.0
        %1697 = vmatpush1.msra.mxu0 0.0
        %1698 = vmatprep.subr.mxu0 0.0
        %1699 = vmatpush1.msra.mxu0 0.0
        %1700 = vmatprep.subr.mxu0 0.0
        %1701 = vmatpush1.msra.mxu0 0.0
        %1702 = vmatprep.subr.mxu0 0.0
        %1703 = vmatpush1.msra.mxu0 0.0
        %1704 = vmatprep.subr.mxu0 0.0
        %1705 = vmatpush1.msra.mxu0 0.0
        %1706 = vmatprep.mubr.f32.mxu0 0.0
        %1707 = vmatmul.mubr.f32.gmra.mrb[0].mxu0 %v1637
        %v1708 = vpop.f32.mrb[0].mxu0
        %v1709 = vadd.f32 %v1630, %v1708
        %v1710 = vpop.f32.mrb[0].mxu0
        %1711 = vmatprep.mubr.f32.mxu0 0.0
        %1712 = vmatmul.mubr.f32.gmra.mrb[0].mxu0 %v1640
        %v1713 = vpop.f32.mrb[0].mxu0
        %v1714 = vadd.f32 %v1634, %v1713
        %v1715 = vpop.f32.mrb[0].mxu0
        %1716 = vdwg.mxu0
        %v1717 = vmul.f32 %v1709, 0.01
        %v1718 = vmul.f32 %v1714, 0.01
        %v1719 = vmax.f32 %v1709, %v1717
        %v1720 = vmax.f32 %v1714, %v1718
        %s1721 = sld [smem:[#allocation3 + $0x2]]
        %v1722 = vstv %s1721
        %v1723 = vmul.f32 %v1722, %v902
        %v1724 = vmul.f32 %v1722, %v903
        %v1725 = vmul.f32 %v1722, %v904
        %v1726 = vmul.f32 %v1722, %v905
        %s1727 = sld [smem:[#allocation3 + $0x82]]
        %v1728 = vld [vmem:[%s11] sm:$0xff]
        %v1729 = vld [vmem:[%s11 + $0x8] sm:$0xff]
        %v1730 = vld [vmem:[%s11 + $0x10] sm:$0xff]
        %v1731 = vld [vmem:[%s11 + $0x18] sm:$0xff]
        %v1732 = vld [vmem:[%s11 + $0x20] sm:$0xff]
        %v1733 = vld [vmem:[%s11 + $0x28] sm:$0xff]
        %v1734 = vld [vmem:[%s11 + $0x30] sm:$0xff]
        %v1735 = vld [vmem:[%s11 + $0x38] sm:$0xff]
        %v1736 = vld [vmem:[%s11 + $0x40] sm:$0xff]
        %v1737 = vld [vmem:[%s11 + $0x48] sm:$0xff]
        %v1738 = vld [vmem:[%s11 + $0x50] sm:$0xff]
        %v1739 = vld [vmem:[%s11 + $0x58] sm:$0xff]
        %v1740 = vld [vmem:[%s11 + $0x60] sm:$0xff]
        %v1741 = vld [vmem:[%s11 + $0x68] sm:$0xff]
        %v1742 = vld [vmem:[%s11 + $0x70] sm:$0xff]
        %v1743 = vld [vmem:[%s11 + $0x78] sm:$0xff]
        %vm1744 = vcmask 523264
        %v1746 = vsel %vm1744, %v1719, 0
        %v1749 = vsel %vm1744, %v1720, 0
        %1751 = vmatprep.subr.mxu0 %v1729
        %1752 = vmatpush1.msra.mxu0 %v1728
        %1753 = vmatprep.subr.mxu0 %v1731
        %1754 = vmatpush1.msra.mxu0 %v1730
        %1755 = vmatprep.subr.mxu0 %v1733
        %1756 = vmatpush1.msra.mxu0 %v1732
        %1757 = vmatprep.subr.mxu0 %v1735
        %1758 = vmatpush1.msra.mxu0 %v1734
        %1759 = vmatprep.subr.mxu0 %v1737
        %1760 = vmatpush1.msra.mxu0 %v1736
        %1761 = vmatprep.subr.mxu0 %v1739
        %1762 = vmatpush1.msra.mxu0 %v1738
        %1763 = vmatprep.subr.mxu0 %v1741
        %1764 = vmatpush1.msra.mxu0 %v1740
        %1765 = vmatprep.subr.mxu0 %v1743
        %1766 = vmatpush1.msra.mxu0 %v1742
        %1767 = vmatprep.subr.mxu0 0.0
        %1768 = vmatpush1.msra.mxu0 0.0
        %1769 = vmatprep.subr.mxu0 0.0
        %1770 = vmatpush1.msra.mxu0 0.0
        %1771 = vmatprep.subr.mxu0 0.0
        %1772 = vmatpush1.msra.mxu0 0.0
        %1773 = vmatprep.subr.mxu0 0.0
        %1774 = vmatpush1.msra.mxu0 0.0
        %1775 = vmatprep.subr.mxu0 0.0
        %1776 = vmatpush1.msra.mxu0 0.0
        %1777 = vmatprep.subr.mxu0 0.0
        %1778 = vmatpush1.msra.mxu0 0.0
        %1779 = vmatprep.subr.mxu0 0.0
        %1780 = vmatpush1.msra.mxu0 0.0
        %1781 = vmatprep.subr.mxu0 0.0
        %1782 = vmatpush1.msra.mxu0 0.0
        %1783 = vmatprep.subr.mxu0 0.0
        %1784 = vmatpush1.msra.mxu0 0.0
        %1785 = vmatprep.subr.mxu0 0.0
        %1786 = vmatpush1.msra.mxu0 0.0
        %1787 = vmatprep.subr.mxu0 0.0
        %1788 = vmatpush1.msra.mxu0 0.0
        %1789 = vmatprep.subr.mxu0 0.0
        %1790 = vmatpush1.msra.mxu0 0.0
        %1791 = vmatprep.subr.mxu0 0.0
        %1792 = vmatpush1.msra.mxu0 0.0
        %1793 = vmatprep.subr.mxu0 0.0
        %1794 = vmatpush1.msra.mxu0 0.0
        %1795 = vmatprep.subr.mxu0 0.0
        %1796 = vmatpush1.msra.mxu0 0.0
        %1797 = vmatprep.subr.mxu0 0.0
        %1798 = vmatpush1.msra.mxu0 0.0
        %1799 = vmatprep.subr.mxu0 0.0
        %1800 = vmatpush1.msra.mxu0 0.0
        %1801 = vmatprep.subr.mxu0 0.0
        %1802 = vmatpush1.msra.mxu0 0.0
        %1803 = vmatprep.subr.mxu0 0.0
        %1804 = vmatpush1.msra.mxu0 0.0
        %1805 = vmatprep.subr.mxu0 0.0
        %1806 = vmatpush1.msra.mxu0 0.0
        %1807 = vmatprep.subr.mxu0 0.0
        %1808 = vmatpush1.msra.mxu0 0.0
        %1809 = vmatprep.subr.mxu0 0.0
        %1810 = vmatpush1.msra.mxu0 0.0
        %1811 = vmatprep.subr.mxu0 0.0
        %1812 = vmatpush1.msra.mxu0 0.0
        %1813 = vmatprep.subr.mxu0 0.0
        %1814 = vmatpush1.msra.mxu0 0.0
        %1815 = vmatprep.mubr.f32.mxu0 0.0
        %1816 = vmatmul.mubr.f32.gmra.mrb[0].mxu0 %v1746
        %v1817 = vpop.f32.mrb[0].mxu0
        %v1818 = vadd.f32 0.0, %v1817
        %v1819 = vpop.f32.mrb[0].mxu0
        %v1820 = vadd.f32 0.0, %v1819
        %1821 = vmatprep.mubr.f32.mxu0 0.0
        %1822 = vmatmul.mubr.f32.gmra.mrb[0].mxu0 %v1749
        %v1823 = vpop.f32.mrb[0].mxu0
        %v1824 = vadd.f32 0.0, %v1823
        %v1825 = vpop.f32.mrb[0].mxu0
        %v1826 = vadd.f32 0.0, %v1825
        %1827 = vdwg.mxu0
        %v1828 = vstv %s1727
        %v1829 = vmul.f32 %v1828, %v1818
        %v1830 = vmul.f32 %v1828, %v1820
        %v1831 = vmul.f32 %v1828, %v1824
        %v1832 = vmul.f32 %v1828, %v1826
        %v1833 = vadd.f32 %v1723, %v1829
        %v1834 = vadd.f32 %v1724, %v1830
        %v1835 = vadd.f32 %v1725, %v1831
        %v1836 = vadd.f32 %v1726, %v1832
        %vm1837 = vcmask 138240
        %1838 = vst.msk [vmem:[#allocation2] sm:$0xff] %vm1837, 0.0
        %1839 = vst.msk [vmem:[#allocation2 + $0x48] sm:$0xff] %vm1837, 0.0
        %1844 = vrot.lane.b32.xlu0 %v1833, 17
        %v1845 = vpop.permute.xlu0 %1844
        %1846 = vrot.lane.b32.xlu0 %v1834, 17
        %v1847 = vpop.permute.xlu0 %1846
        %1848 = vrot.lane.b32.xlu0 %v1835, 17
        %v1849 = vpop.permute.xlu0 %1848
        %1850 = vrot.lane.b32.xlu0 %v1836, 17
        %v1851 = vpop.permute.xlu0 %1850
        %v1852 = vsel %vm1837, %v1845, %v1847
        %v1853 = vsel %vm1837, %v1849, %v1851
        %vm1860 = vcmask 1047688
        %1861 = vst.msk [vmem:[#allocation2] sm:$0xff] %vm1860, %v1845
        %1862 = vst [vmem:[#allocation2 + $0x8] sm:$0xff] %v1852
        %1863 = vst.msk [vmem:[#allocation2 + $0x10] sm:$0xff] %vm1837, %v1847
        %1864 = vst.msk [vmem:[#allocation2 + $0x48] sm:$0xff] %vm1860, %v1849
        %1865 = vst [vmem:[#allocation2 + $0x50] sm:$0xff] %v1853
        %1866 = vst.msk [vmem:[#allocation2 + $0x58] sm:$0xff] %vm1837, %v1851
        %vm1867 = vcmask 277640
        %1868 = vst.msk [vmem:[#allocation2 + $0x10] sm:$0xff] %vm1867, 0.0
        %1869 = vst.msk [vmem:[#allocation2 + $0x58] sm:$0xff] %vm1867, 0.0
        %s1870 = scalar_lea.vmem %s7, 32
        %v1871 = vld [vmem:[%s1870] sm:$0xff]
        %v1872 = vld [vmem:[%s1870 + $0x8] sm:$0xff]
        %v1873 = vld [vmem:[#allocation2] sm:$0xff]
        %v1874 = vld [vmem:[#allocation2 + $0x8] sm:$0xff]
        %v1875 = vld [vmem:[#allocation2 + $0x48] sm:$0xff]
        %v1876 = vld [vmem:[#allocation2 + $0x50] sm:$0xff]
        %1878 = vset.pattern.permute.xlu0 0
        %1879 = vperm.xlu0 %1878, %v1871
        %v1880 = vpop.permute.xlu0 %1879
        %1883 = vset.pattern.permute.xlu0 0
        %1884 = vperm.xlu0 %1883, %v1872
        %v1885 = vpop.permute.xlu0 %1884
        %v1887 = vmul.f32 %v1873, %v1880
        %v1888 = vmul.f32 %v1874, %v1880
        %v1889 = vmul.f32 %v1875, %v1885
        %v1890 = vmul.f32 %v1876, %v1885
        %v1891 = vadd.f32 %v1887, 0.0
        %v1892 = vadd.f32 %v1888, 0.0
        %v1893 = vadd.f32 %v1889, 0.0
        %v1894 = vadd.f32 %v1890, 0.0
        %v1895 = vld [vmem:[#allocation2] sm:$0xff]
        %v1896 = vld [vmem:[#allocation2 + $0x8] sm:$0xff]
        %v1897 = vld [vmem:[#allocation2 + $0x10] sm:$0xff]
        %v1898 = vld [vmem:[#allocation2 + $0x48] sm:$0xff]
        %v1899 = vld [vmem:[#allocation2 + $0x50] sm:$0xff]
        %v1900 = vld [vmem:[#allocation2 + $0x58] sm:$0xff]
        %1901 = vset.pattern.permute.xlu0 1
        %1902 = vperm.xlu0 %1901, %v1871
        %v1903 = vpop.permute.xlu0 %1902
        %1905 = vset.pattern.permute.xlu0 1
        %1906 = vperm.xlu0 %1905, %v1872
        %v1907 = vpop.permute.xlu0 %1906
        %v1909 = vmul.f32 %v1895, %v1903
        %v1910 = vmul.f32 %v1896, %v1903
        %v1911 = vmul.f32 %v1897, %v1903
        %v1912 = vmul.f32 %v1898, %v1907
        %v1913 = vmul.f32 %v1899, %v1907
        %v1914 = vmul.f32 %v1900, %v1907
        %v1915 = vadd.f32 %v1909, 0.0
        %v1916 = vadd.f32 %v1910, 0.0
        %v1917 = vadd.f32 %v1911, 0.0
        %v1918 = vadd.f32 %v1912, 0.0
        %v1919 = vadd.f32 %v1913, 0.0
        %v1920 = vadd.f32 %v1914, 0.0
        %1921 = vset.pattern.permute.xlu0 2
        %1922 = vperm.xlu0 %1921, %v1871
        %v1923 = vpop.permute.xlu0 %1922
        %1925 = vset.pattern.permute.xlu0 2
        %1926 = vperm.xlu0 %1925, %v1872
        %v1927 = vpop.permute.xlu0 %1926
        %v1929 = vmul.f32 %v1895, %v1923
        %v1930 = vmul.f32 %v1896, %v1923
        %v1931 = vmul.f32 %v1897, %v1923
        %v1932 = vmul.f32 %v1898, %v1927
        %v1933 = vmul.f32 %v1899, %v1927
        %v1934 = vmul.f32 %v1900, %v1927
        %v1935 = vadd.f32 %v1929, 0.0
        %v1936 = vadd.f32 %v1930, 0.0
        %v1937 = vadd.f32 %v1931, 0.0
        %v1938 = vadd.f32 %v1932, 0.0
        %v1939 = vadd.f32 %v1933, 0.0
        %v1940 = vadd.f32 %v1934, 0.0
        %1941 = vset.pattern.permute.xlu0 3
        %1942 = vperm.xlu0 %1941, %v1871
        %v1943 = vpop.permute.xlu0 %1942
        %1945 = vset.pattern.permute.xlu0 3
        %1946 = vperm.xlu0 %1945, %v1872
        %v1947 = vpop.permute.xlu0 %1946
        %v1949 = vmul.f32 %v1895, %v1943
        %v1950 = vmul.f32 %v1896, %v1943
        %v1951 = vmul.f32 %v1897, %v1943
        %v1952 = vmul.f32 %v1898, %v1947
        %v1953 = vmul.f32 %v1899, %v1947
        %v1954 = vmul.f32 %v1900, %v1947
        %1961 = vrot.lane.b32.xlu0 %v1949, 112
        %v1962 = vpop.permute.xlu0 %1961
        %1963 = vrot.lane.b32.xlu0 %v1950, 112
        %v1964 = vpop.permute.xlu0 %1963
        %1965 = vrot.lane.b32.xlu0 %v1951, 112
        %v1966 = vpop.permute.xlu0 %1965
        %1967 = vrot.lane.b32.xlu0 %v1952, 112
        %v1968 = vpop.permute.xlu0 %1967
        %1969 = vrot.lane.b32.xlu0 %v1953, 112
        %v1970 = vpop.permute.xlu0 %1969
        %1971 = vrot.lane.b32.xlu0 %v1954, 112
        %v1972 = vpop.permute.xlu0 %1971
        %vm1973 = vcmask 916480
        %v1974 = vsel %vm1973, %v1962, %v1964
        %v1975 = vsel %vm1973, %v1964, %v1966
        %v1976 = vsel %vm1973, %v1968, %v1970
        %v1977 = vsel %vm1973, %v1970, %v1972
        %v1982 = vadd.f32 %v1891, %v1974
        %v1983 = vadd.f32 %v1892, %v1975
        %v1984 = vadd.f32 %v1893, %v1976
        %v1985 = vadd.f32 %v1894, %v1977
        %1986 = vset.pattern.permute.xlu0 4
        %1987 = vperm.xlu0 %1986, %v1871
        %v1988 = vpop.permute.xlu0 %1987
        %1990 = vset.pattern.permute.xlu0 4
        %1991 = vperm.xlu0 %1990, %v1872
        %v1992 = vpop.permute.xlu0 %1991
        %v1994 = vmul.f32 %v1895, %v1988
        %v1995 = vmul.f32 %v1896, %v1988
        %v1996 = vmul.f32 %v1897, %v1988
        %v1997 = vmul.f32 %v1898, %v1992
        %v1998 = vmul.f32 %v1899, %v1992
        %v1999 = vmul.f32 %v1900, %v1992
        %2006 = vrot.lane.b32.xlu0 %v1994, 112
        %v2007 = vpop.permute.xlu0 %2006
        %2008 = vrot.lane.b32.xlu0 %v1995, 112
        %v2009 = vpop.permute.xlu0 %2008
        %2010 = vrot.lane.b32.xlu0 %v1996, 112
        %v2011 = vpop.permute.xlu0 %2010
        %2012 = vrot.lane.b32.xlu0 %v1997, 112
        %v2013 = vpop.permute.xlu0 %2012
        %2014 = vrot.lane.b32.xlu0 %v1998, 112
        %v2015 = vpop.permute.xlu0 %2014
        %2016 = vrot.lane.b32.xlu0 %v1999, 112
        %v2017 = vpop.permute.xlu0 %2016
        %v2018 = vsel %vm1973, %v2007, %v2009
        %v2019 = vsel %vm1973, %v2009, %v2011
        %v2020 = vsel %vm1973, %v2013, %v2015
        %v2021 = vsel %vm1973, %v2015, %v2017
        %v2028 = vadd.f32 %v1915, %v2018
        %v2029 = vadd.f32 %v1916, %v2019
        %v2030 = vadd.f32 %v1917, %v2011
        %v2031 = vadd.f32 %v1918, %v2020
        %v2032 = vadd.f32 %v1919, %v2021
        %v2033 = vadd.f32 %v1920, %v2017
        %2034 = vset.pattern.permute.xlu0 5
        %2035 = vperm.xlu0 %2034, %v1871
        %v2036 = vpop.permute.xlu0 %2035
        %2038 = vset.pattern.permute.xlu0 5
        %2039 = vperm.xlu0 %2038, %v1872
        %v2040 = vpop.permute.xlu0 %2039
        %v2042 = vmul.f32 %v1895, %v2036
        %v2043 = vmul.f32 %v1896, %v2036
        %v2044 = vmul.f32 %v1897, %v2036
        %v2045 = vmul.f32 %v1898, %v2040
        %v2046 = vmul.f32 %v1899, %v2040
        %v2047 = vmul.f32 %v1900, %v2040
        %2054 = vrot.lane.b32.xlu0 %v2042, 112
        %v2055 = vpop.permute.xlu0 %2054
        %2056 = vrot.lane.b32.xlu0 %v2043, 112
        %v2057 = vpop.permute.xlu0 %2056
        %2058 = vrot.lane.b32.xlu0 %v2044, 112
        %v2059 = vpop.permute.xlu0 %2058
        %2060 = vrot.lane.b32.xlu0 %v2045, 112
        %v2061 = vpop.permute.xlu0 %2060
        %2062 = vrot.lane.b32.xlu0 %v2046, 112
        %v2063 = vpop.permute.xlu0 %2062
        %2064 = vrot.lane.b32.xlu0 %v2047, 112
        %v2065 = vpop.permute.xlu0 %2064
        %v2066 = vsel %vm1973, %v2055, %v2057
        %v2067 = vsel %vm1973, %v2057, %v2059
        %v2068 = vsel %vm1973, %v2061, %v2063
        %v2069 = vsel %vm1973, %v2063, %v2065
        %v2076 = vadd.f32 %v1935, %v2066
        %v2077 = vadd.f32 %v1936, %v2067
        %v2078 = vadd.f32 %v1937, %v2059
        %v2079 = vadd.f32 %v1938, %v2068
        %v2080 = vadd.f32 %v1939, %v2069
        %v2081 = vadd.f32 %v1940, %v2065
        %2082 = vset.pattern.permute.xlu0 6
        %2083 = vperm.xlu0 %2082, %v1871
        %v2084 = vpop.permute.xlu0 %2083
        %2086 = vset.pattern.permute.xlu0 6
        %2087 = vperm.xlu0 %2086, %v1872
        %v2088 = vpop.permute.xlu0 %2087
        %v2090 = vmul.f32 %v1895, %v2084
        %v2091 = vmul.f32 %v1896, %v2084
        %v2092 = vmul.f32 %v1897, %v2084
        %v2093 = vmul.f32 %v1898, %v2088
        %v2094 = vmul.f32 %v1899, %v2088
        %v2095 = vmul.f32 %v1900, %v2088
        %2102 = vrot.lane.b32.xlu0 %v2090, 96
        %v2103 = vpop.permute.xlu0 %2102
        %2104 = vrot.lane.b32.xlu0 %v2091, 96
        %v2105 = vpop.permute.xlu0 %2104
        %2106 = vrot.lane.b32.xlu0 %v2092, 96
        %v2107 = vpop.permute.xlu0 %2106
        %2108 = vrot.lane.b32.xlu0 %v2093, 96
        %v2109 = vpop.permute.xlu0 %2108
        %2110 = vrot.lane.b32.xlu0 %v2094, 96
        %v2111 = vpop.permute.xlu0 %2110
        %2112 = vrot.lane.b32.xlu0 %v2095, 96
        %v2113 = vpop.permute.xlu0 %2112
        %vm2114 = vcmask 785408
        %v2115 = vsel %vm2114, %v2103, %v2105
        %v2116 = vsel %vm2114, %v2105, %v2107
        %v2117 = vsel %vm2114, %v2109, %v2111
        %v2118 = vsel %vm2114, %v2111, %v2113
        %v2123 = vadd.f32 %v1982, %v2115
        %v2124 = vadd.f32 %v1983, %v2116
        %v2125 = vadd.f32 %v1984, %v2117
        %v2126 = vadd.f32 %v1985, %v2118
        %2127 = vset.pattern.permute.xlu0 7
        %2128 = vperm.xlu0 %2127, %v1871
        %v2129 = vpop.permute.xlu0 %2128
        %2131 = vset.pattern.permute.xlu0 7
        %2132 = vperm.xlu0 %2131, %v1872
        %v2133 = vpop.permute.xlu0 %2132
        %v2135 = vmul.f32 %v1895, %v2129
        %v2136 = vmul.f32 %v1896, %v2129
        %v2137 = vmul.f32 %v1897, %v2129
        %v2138 = vmul.f32 %v1898, %v2133
        %v2139 = vmul.f32 %v1899, %v2133
        %v2140 = vmul.f32 %v1900, %v2133
        %2147 = vrot.lane.b32.xlu0 %v2135, 96
        %v2148 = vpop.permute.xlu0 %2147
        %2149 = vrot.lane.b32.xlu0 %v2136, 96
        %v2150 = vpop.permute.xlu0 %2149
        %2151 = vrot.lane.b32.xlu0 %v2137, 96
        %v2152 = vpop.permute.xlu0 %2151
        %2153 = vrot.lane.b32.xlu0 %v2138, 96
        %v2154 = vpop.permute.xlu0 %2153
        %2155 = vrot.lane.b32.xlu0 %v2139, 96
        %v2156 = vpop.permute.xlu0 %2155
        %2157 = vrot.lane.b32.xlu0 %v2140, 96
        %v2158 = vpop.permute.xlu0 %2157
        %v2159 = vsel %vm2114, %v2148, %v2150
        %v2160 = vsel %vm2114, %v2150, %v2152
        %v2161 = vsel %vm2114, %v2154, %v2156
        %v2162 = vsel %vm2114, %v2156, %v2158
        %v2169 = vadd.f32 %v2028, %v2159
        %v2170 = vadd.f32 %v2029, %v2160
        %v2171 = vadd.f32 %v2030, %v2152
        %v2172 = vadd.f32 %v2031, %v2161
        %v2173 = vadd.f32 %v2032, %v2162
        %v2174 = vadd.f32 %v2033, %v2158
        %2175 = vset.pattern.permute.xlu0 8
        %2176 = vperm.xlu0 %2175, %v1871
        %v2177 = vpop.permute.xlu0 %2176
        %2179 = vset.pattern.permute.xlu0 8
        %2180 = vperm.xlu0 %2179, %v1872
        %v2181 = vpop.permute.xlu0 %2180
        %v2183 = vmul.f32 %v1895, %v2177
        %v2184 = vmul.f32 %v1896, %v2177
        %v2185 = vmul.f32 %v1897, %v2177
        %v2186 = vmul.f32 %v1898, %v2181
        %v2187 = vmul.f32 %v1899, %v2181
        %v2188 = vmul.f32 %v1900, %v2181
        %2195 = vrot.lane.b32.xlu0 %v2183, 96
        %v2196 = vpop.permute.xlu0 %2195
        %2197 = vrot.lane.b32.xlu0 %v2184, 96
        %v2198 = vpop.permute.xlu0 %2197
        %2199 = vrot.lane.b32.xlu0 %v2185, 96
        %v2200 = vpop.permute.xlu0 %2199
        %2201 = vrot.lane.b32.xlu0 %v2186, 96
        %v2202 = vpop.permute.xlu0 %2201
        %2203 = vrot.lane.b32.xlu0 %v2187, 96
        %v2204 = vpop.permute.xlu0 %2203
        %2205 = vrot.lane.b32.xlu0 %v2188, 96
        %v2206 = vpop.permute.xlu0 %2205
        %v2207 = vsel %vm2114, %v2196, %v2198
        %v2208 = vsel %vm2114, %v2198, %v2200
        %v2209 = vsel %vm2114, %v2202, %v2204
        %v2210 = vsel %vm2114, %v2204, %v2206
        %v2217 = vadd.f32 %v2076, %v2207
        %v2218 = vadd.f32 %v2077, %v2208
        %v2219 = vadd.f32 %v2078, %v2200
        %v2220 = vadd.f32 %v2079, %v2209
        %v2221 = vadd.f32 %v2080, %v2210
        %v2222 = vadd.f32 %v2081, %v2206
        %v2223 = vadd.s32 %v1189, 128
        %v2224 = vand.u32 %v1189, 15
        %v2225 = vand.u32 %v2223, 15
        %vm2226 = vcmp.ne.s32.totalorder %v2224, 0
        %vm2227 = vcmp.ne.s32.totalorder %v2225, 0
        %v2228 = vsel %vm2226, 1.0, 0.0
        %v2229 = vsel %vm2227, 1.0, 0.0
        %vm2230 = vcmp.ne.s32.totalorder %v2224, 15
        %vm2231 = vcmp.ne.s32.totalorder %v2225, 15
        %v2232 = vsel %vm2230, 1.0, 0.0
        %v2233 = vsel %vm2231, 1.0, 0.0
        %v2234 = vmul.f32 %v2123, %v2228
        %v2235 = vmul.f32 %v2124, %v2229
        %v2236 = vmul.f32 %v2125, %v2228
        %v2237 = vmul.f32 %v2126, %v2229
        %2244 = vrot.lane.b32.xlu0 %v2169, 127
        %v2245 = vpop.permute.xlu0 %2244
        %2246 = vrot.lane.b32.xlu0 %v2170, 127
        %v2247 = vpop.permute.xlu0 %2246
        %2248 = vrot.lane.b32.xlu0 %v2171, 127
        %v2249 = vpop.permute.xlu0 %2248
        %2250 = vrot.lane.b32.xlu0 %v2172, 127
        %v2251 = vpop.permute.xlu0 %2250
        %2252 = vrot.lane.b32.xlu0 %v2173, 127
        %v2253 = vpop.permute.xlu0 %2252
        %2254 = vrot.lane.b32.xlu0 %v2174, 127
        %v2255 = vpop.permute.xlu0 %2254
        %vm2256 = vcmask 1039360
        %v2257 = vsel %vm2256, %v2245, %v2247
        %v2258 = vsel %vm2256, %v2247, %v2249
        %v2259 = vsel %vm2256, %v2251, %v2253
        %v2260 = vsel %vm2256, %v2253, %v2255
        %v2265 = vadd.f32 %v2234, %v2257
        %v2266 = vadd.f32 %v2235, %v2258
        %v2267 = vadd.f32 %v2236, %v2259
        %v2268 = vadd.f32 %v2237, %v2260
        %2271 = vrot.lane.b32.xlu0 %v2232, 2
        %v2272 = vpop.permute.xlu0 %2271
        %2273 = vrot.lane.b32.xlu0 %v2233, 2
        %v2274 = vpop.permute.xlu0 %2273
        %vm2275 = vcmask 15360
        %v2276 = vsel %vm2275, %v2272, %v2274
        %v2280 = vmul.f32 %v2217, %v2272
        %v2281 = vmul.f32 %v2218, %v2276
        %v2282 = vmul.f32 %v2219, %v2274
        %v2283 = vmul.f32 %v2220, %v2272
        %v2284 = vmul.f32 %v2221, %v2276
        %v2285 = vmul.f32 %v2222, %v2274
        %2292 = vrot.lane.b32.xlu0 %v2280, 126
        %v2293 = vpop.permute.xlu0 %2292
        %2294 = vrot.lane.b32.xlu0 %v2281, 126
        %v2295 = vpop.permute.xlu0 %2294
        %2296 = vrot.lane.b32.xlu0 %v2282, 126
        %v2297 = vpop.permute.xlu0 %2296
        %2298 = vrot.lane.b32.xlu0 %v2283, 126
        %v2299 = vpop.permute.xlu0 %2298
        %2300 = vrot.lane.b32.xlu0 %v2284, 126
        %v2301 = vpop.permute.xlu0 %2300
        %2302 = vrot.lane.b32.xlu0 %v2285, 126
        %v2303 = vpop.permute.xlu0 %2302
        %vm2304 = vcmask 1031168
        %v2305 = vsel %vm2304, %v2293, %v2295
        %v2306 = vsel %vm2304, %v2295, %v2297
        %v2307 = vsel %vm2304, %v2299, %v2301
        %v2308 = vsel %vm2304, %v2301, %v2303
        %v2313 = vadd.f32 %v2265, %v2305
        %v2314 = vadd.f32 %v2266, %v2306
        %v2315 = vadd.f32 %v2267, %v2307
        %v2316 = vadd.f32 %v2268, %v2308
        %s2317 = scalar_lea.vmem %s8, 32
        %v2318 = vld [vmem:[%s2317] sm:$0xff]
        %v2319 = vld [vmem:[%s2317 + $0x8] sm:$0xff]
        %2320 = vset.pattern.permute.xlu0 9
        %2321 = vperm.xlu0 %2320, %v1871
        %v2322 = vpop.permute.xlu0 %2321
        %2324 = vset.pattern.permute.xlu0 9
        %2325 = vperm.xlu0 %2324, %v1872
        %v2326 = vpop.permute.xlu0 %2325
        %v2329 = vsel %vm1233, %v2318, 0
        %v2332 = vsel %vm1233, %v2319, 0
        %2334 = vmatprep.subr.mxu0 %v2314
        %2335 = vmatpush1.msra.mxu0 %v2313
        %2336 = vmatprep.subr.mxu0 %v2316
        %2337 = vmatpush1.msra.mxu0 %v2315
        %2338 = vmatprep.subr.mxu0 0.0
        %2339 = vmatpush1.msra.mxu0 0.0
        %2340 = vmatprep.subr.mxu0 0.0
        %2341 = vmatpush1.msra.mxu0 0.0
        %2342 = vmatprep.subr.mxu0 0.0
        %2343 = vmatpush1.msra.mxu0 0.0
        %2344 = vmatprep.subr.mxu0 0.0
        %2345 = vmatpush1.msra.mxu0 0.0
        %2346 = vmatprep.subr.mxu0 0.0
        %2347 = vmatpush1.msra.mxu0 0.0
        %2348 = vmatprep.subr.mxu0 0.0
        %2349 = vmatpush1.msra.mxu0 0.0
        %2350 = vmatprep.subr.mxu0 0.0
        %2351 = vmatpush1.msra.mxu0 0.0
        %2352 = vmatprep.subr.mxu0 0.0
        %2353 = vmatpush1.msra.mxu0 0.0
        %2354 = vmatprep.subr.mxu0 0.0
        %2355 = vmatpush1.msra.mxu0 0.0
        %2356 = vmatprep.subr.mxu0 0.0
        %2357 = vmatpush1.msra.mxu0 0.0
        %2358 = vmatprep.subr.mxu0 0.0
        %2359 = vmatpush1.msra.mxu0 0.0
        %2360 = vmatprep.subr.mxu0 0.0
        %2361 = vmatpush1.msra.mxu0 0.0
        %2362 = vmatprep.subr.mxu0 0.0
        %2363 = vmatpush1.msra.mxu0 0.0
        %2364 = vmatprep.subr.mxu0 0.0
        %2365 = vmatpush1.msra.mxu0 0.0
        %2366 = vmatprep.subr.mxu0 0.0
        %2367 = vmatpush1.msra.mxu0 0.0
        %2368 = vmatprep.subr.mxu0 0.0
        %2369 = vmatpush1.msra.mxu0 0.0
        %2370 = vmatprep.subr.mxu0 0.0
        %2371 = vmatpush1.msra.mxu0 0.0
        %2372 = vmatprep.subr.mxu0 0.0
        %2373 = vmatpush1.msra.mxu0 0.0
        %2374 = vmatprep.subr.mxu0 0.0
        %2375 = vmatpush1.msra.mxu0 0.0
        %2376 = vmatprep.subr.mxu0 0.0
        %2377 = vmatpush1.msra.mxu0 0.0
        %2378 = vmatprep.subr.mxu0 0.0
        %2379 = vmatpush1.msra.mxu0 0.0
        %2380 = vmatprep.subr.mxu0 0.0
        %2381 = vmatpush1.msra.mxu0 0.0
        %2382 = vmatprep.subr.mxu0 0.0
        %2383 = vmatpush1.msra.mxu0 0.0
        %2384 = vmatprep.subr.mxu0 0.0
        %2385 = vmatpush1.msra.mxu0 0.0
        %2386 = vmatprep.subr.mxu0 0.0
        %2387 = vmatpush1.msra.mxu0 0.0
        %2388 = vmatprep.subr.mxu0 0.0
        %2389 = vmatpush1.msra.mxu0 0.0
        %2390 = vmatprep.subr.mxu0 0.0
        %2391 = vmatpush1.msra.mxu0 0.0
        %2392 = vmatprep.subr.mxu0 0.0
        %2393 = vmatpush1.msra.mxu0 0.0
        %2394 = vmatprep.subr.mxu0 0.0
        %2395 = vmatpush1.msra.mxu0 0.0
        %2396 = vmatprep.subr.mxu0 0.0
        %2397 = vmatpush1.msra.mxu0 0.0
        %2398 = vmatprep.mubr.f32.mxu0 0.0
        %2399 = vmatmul.mubr.f32.gmra.mrb[0].mxu0 %v2329
        %v2400 = vpop.f32.mrb[0].mxu0
        %v2401 = vadd.f32 %v2322, %v2400
        %v2402 = vpop.f32.mrb[0].mxu0
        %v2403 = vadd.f32 %v2322, %v2402
        %2404 = vmatprep.mubr.f32.mxu0 0.0
        %2405 = vmatmul.mubr.f32.gmra.mrb[0].mxu0 %v2332
        %v2406 = vpop.f32.mrb[0].mxu0
        %v2407 = vadd.f32 %v2326, %v2406
        %v2408 = vpop.f32.mrb[0].mxu0
        %v2409 = vadd.f32 %v2326, %v2408
        %2410 = vdwg.mxu0
        %v2411 = vmul.f32 %v2401, 0.01
        %v2412 = vmul.f32 %v2403, 0.01
        %v2413 = vmul.f32 %v2407, 0.01
        %v2414 = vmul.f32 %v2409, 0.01
        %v2415 = vmax.f32 %v2401, %v2411
        %v2416 = vmax.f32 %v2403, %v2412
        %v2417 = vmax.f32 %v2407, %v2413
        %v2418 = vmax.f32 %v2409, %v2414
        %s2419 = sld [smem:[#allocation3 + $0x3]]
        %v2420 = vstv %s2419
        %v2421 = vmul.f32 %v2420, %v886
        %v2422 = vmul.f32 %v2420, %v887
        %v2423 = vmul.f32 %v2420, %v888
        %v2424 = vmul.f32 %v2420, %v889
        %v2425 = vmul.f32 %v2420, %v890
        %v2426 = vmul.f32 %v2420, %v891
        %v2427 = vmul.f32 %v2420, %v892
        %v2428 = vmul.f32 %v2420, %v893
        %v2429 = vmul.f32 %v2420, %v894
        %v2430 = vmul.f32 %v2420, %v895
        %v2431 = vmul.f32 %v2420, %v896
        %v2432 = vmul.f32 %v2420, %v897
        %v2433 = vmul.f32 %v2420, %v898
        %v2434 = vmul.f32 %v2420, %v899
        %v2435 = vmul.f32 %v2420, %v900
        %v2436 = vmul.f32 %v2420, %v901
        %s2437 = sld [smem:[#allocation3 + $0x83]]
        %v2438 = vld [vmem:[#allocation13] sm:$0xff]
        %v2439 = vld [vmem:[#allocation13 + $0x8] sm:$0xff]
        %v2440 = vld [vmem:[#allocation13 + $0x10] sm:$0xff]
        %v2441 = vld [vmem:[#allocation13 + $0x18] sm:$0xff]
        %v2442 = vld [vmem:[#allocation13 + $0x20] sm:$0xff]
        %v2443 = vld [vmem:[#allocation13 + $0x28] sm:$0xff]
        %v2444 = vld [vmem:[#allocation13 + $0x30] sm:$0xff]
        %v2445 = vld [vmem:[#allocation13 + $0x38] sm:$0xff]
        %v2446 = vld [vmem:[#allocation13 + $0x40] sm:$0xff]
        %v2447 = vld [vmem:[#allocation13 + $0x48] sm:$0xff]
        %v2448 = vld [vmem:[#allocation13 + $0x50] sm:$0xff]
        %v2449 = vld [vmem:[#allocation13 + $0x58] sm:$0xff]
        %v2450 = vld [vmem:[#allocation13 + $0x60] sm:$0xff]
        %v2451 = vld [vmem:[#allocation13 + $0x68] sm:$0xff]
        %v2452 = vld [vmem:[#allocation13 + $0x70] sm:$0xff]
        %v2453 = vld [vmem:[#allocation13 + $0x78] sm:$0xff]
        %v2454 = vld [vmem:[#allocation13 + $0x80] sm:$0xff]
        %v2455 = vld [vmem:[#allocation13 + $0x88] sm:$0xff]
        %v2456 = vld [vmem:[#allocation13 + $0x90] sm:$0xff]
        %v2457 = vld [vmem:[#allocation13 + $0x98] sm:$0xff]
        %v2458 = vld [vmem:[#allocation13 + $0xa0] sm:$0xff]
        %v2459 = vld [vmem:[#allocation13 + $0xa8] sm:$0xff]
        %v2460 = vld [vmem:[#allocation13 + $0xb0] sm:$0xff]
        %v2461 = vld [vmem:[#allocation13 + $0xb8] sm:$0xff]
        %v2462 = vld [vmem:[#allocation13 + $0xc0] sm:$0xff]
        %v2463 = vld [vmem:[#allocation13 + $0xc8] sm:$0xff]
        %v2464 = vld [vmem:[#allocation13 + $0xd0] sm:$0xff]
        %v2465 = vld [vmem:[#allocation13 + $0xd8] sm:$0xff]
        %v2466 = vld [vmem:[#allocation13 + $0xe0] sm:$0xff]
        %v2467 = vld [vmem:[#allocation13 + $0xe8] sm:$0xff]
        %v2468 = vld [vmem:[#allocation13 + $0xf0] sm:$0xff]
        %v2469 = vld [vmem:[#allocation13 + $0xf8] sm:$0xff]
        %v2470 = vld [vmem:[#allocation13 + $0x100] sm:$0xff]
        %v2471 = vld [vmem:[#allocation13 + $0x108] sm:$0xff]
        %v2472 = vld [vmem:[#allocation13 + $0x110] sm:$0xff]
        %v2473 = vld [vmem:[#allocation13 + $0x118] sm:$0xff]
        %v2474 = vld [vmem:[#allocation13 + $0x120] sm:$0xff]
        %v2475 = vld [vmem:[#allocation13 + $0x128] sm:$0xff]
        %v2476 = vld [vmem:[#allocation13 + $0x130] sm:$0xff]
        %v2477 = vld [vmem:[#allocation13 + $0x138] sm:$0xff]
        %v2478 = vld [vmem:[#allocation13 + $0x140] sm:$0xff]
        %v2479 = vld [vmem:[#allocation13 + $0x148] sm:$0xff]
        %v2480 = vld [vmem:[#allocation13 + $0x150] sm:$0xff]
        %v2481 = vld [vmem:[#allocation13 + $0x158] sm:$0xff]
        %v2482 = vld [vmem:[#allocation13 + $0x160] sm:$0xff]
        %v2483 = vld [vmem:[#allocation13 + $0x168] sm:$0xff]
        %v2484 = vld [vmem:[#allocation13 + $0x170] sm:$0xff]
        %v2485 = vld [vmem:[#allocation13 + $0x178] sm:$0xff]
        %v2486 = vld [vmem:[#allocation13 + $0x180] sm:$0xff]
        %v2487 = vld [vmem:[#allocation13 + $0x188] sm:$0xff]
        %v2488 = vld [vmem:[#allocation13 + $0x190] sm:$0xff]
        %v2489 = vld [vmem:[#allocation13 + $0x198] sm:$0xff]
        %v2490 = vld [vmem:[#allocation13 + $0x1a0] sm:$0xff]
        %v2491 = vld [vmem:[#allocation13 + $0x1a8] sm:$0xff]
        %v2492 = vld [vmem:[#allocation13 + $0x1b0] sm:$0xff]
        %v2493 = vld [vmem:[#allocation13 + $0x1b8] sm:$0xff]
        %v2494 = vld [vmem:[#allocation13 + $0x1c0] sm:$0xff]
        %v2495 = vld [vmem:[#allocation13 + $0x1c8] sm:$0xff]
        %v2496 = vld [vmem:[#allocation13 + $0x1d0] sm:$0xff]
        %v2497 = vld [vmem:[#allocation13 + $0x1d8] sm:$0xff]
        %v2498 = vld [vmem:[#allocation13 + $0x1e0] sm:$0xff]
        %v2499 = vld [vmem:[#allocation13 + $0x1e8] sm:$0xff]
        %v2500 = vld [vmem:[#allocation13 + $0x1f0] sm:$0xff]
        %v2501 = vld [vmem:[#allocation13 + $0x1f8] sm:$0xff]
        %v2502 = vld [vmem:[#allocation13 + $0x200] sm:$0xff]
        %v2503 = vld [vmem:[#allocation13 + $0x208] sm:$0xff]
        %v2504 = vld [vmem:[#allocation13 + $0x210] sm:$0xff]
        %v2505 = vld [vmem:[#allocation13 + $0x218] sm:$0xff]
        %v2506 = vld [vmem:[#allocation13 + $0x220] sm:$0xff]
        %v2507 = vld [vmem:[#allocation13 + $0x228] sm:$0xff]
        %v2508 = vld [vmem:[#allocation13 + $0x230] sm:$0xff]
        %v2509 = vld [vmem:[#allocation13 + $0x238] sm:$0xff]
        %v2510 = vld [vmem:[#allocation13 + $0x240] sm:$0xff]
        %v2511 = vld [vmem:[#allocation13 + $0x248] sm:$0xff]
        %v2512 = vld [vmem:[#allocation13 + $0x250] sm:$0xff]
        %v2513 = vld [vmem:[#allocation13 + $0x258] sm:$0xff]
        %v2514 = vld [vmem:[#allocation13 + $0x260] sm:$0xff]
        %v2515 = vld [vmem:[#allocation13 + $0x268] sm:$0xff]
        %v2516 = vld [vmem:[#allocation13 + $0x270] sm:$0xff]
        %v2517 = vld [vmem:[#allocation13 + $0x278] sm:$0xff]
        %v2518 = vld [vmem:[#allocation13 + $0x280] sm:$0xff]
        %v2519 = vld [vmem:[#allocation13 + $0x288] sm:$0xff]
        %v2520 = vld [vmem:[#allocation13 + $0x290] sm:$0xff]
        %v2521 = vld [vmem:[#allocation13 + $0x298] sm:$0xff]
        %v2522 = vld [vmem:[#allocation13 + $0x2a0] sm:$0xff]
        %v2523 = vld [vmem:[#allocation13 + $0x2a8] sm:$0xff]
        %v2524 = vld [vmem:[#allocation13 + $0x2b0] sm:$0xff]
        %v2525 = vld [vmem:[#allocation13 + $0x2b8] sm:$0xff]
        %v2526 = vld [vmem:[#allocation13 + $0x2c0] sm:$0xff]
        %v2527 = vld [vmem:[#allocation13 + $0x2c8] sm:$0xff]
        %v2528 = vld [vmem:[#allocation13 + $0x2d0] sm:$0xff]
        %v2529 = vld [vmem:[#allocation13 + $0x2d8] sm:$0xff]
        %v2530 = vld [vmem:[#allocation13 + $0x2e0] sm:$0xff]
        %v2531 = vld [vmem:[#allocation13 + $0x2e8] sm:$0xff]
        %v2532 = vld [vmem:[#allocation13 + $0x2f0] sm:$0xff]
        %v2533 = vld [vmem:[#allocation13 + $0x2f8] sm:$0xff]
        %v2534 = vld [vmem:[#allocation13 + $0x300] sm:$0xff]
        %v2535 = vld [vmem:[#allocation13 + $0x308] sm:$0xff]
        %v2536 = vld [vmem:[#allocation13 + $0x310] sm:$0xff]
        %v2537 = vld [vmem:[#allocation13 + $0x318] sm:$0xff]
        %v2538 = vld [vmem:[#allocation13 + $0x320] sm:$0xff]
        %v2539 = vld [vmem:[#allocation13 + $0x328] sm:$0xff]
        %v2540 = vld [vmem:[#allocation13 + $0x330] sm:$0xff]
        %v2541 = vld [vmem:[#allocation13 + $0x338] sm:$0xff]
        %v2542 = vld [vmem:[#allocation13 + $0x340] sm:$0xff]
        %v2543 = vld [vmem:[#allocation13 + $0x348] sm:$0xff]
        %v2544 = vld [vmem:[#allocation13 + $0x350] sm:$0xff]
        %v2545 = vld [vmem:[#allocation13 + $0x358] sm:$0xff]
        %v2546 = vld [vmem:[#allocation13 + $0x360] sm:$0xff]
        %v2547 = vld [vmem:[#allocation13 + $0x368] sm:$0xff]
        %v2548 = vld [vmem:[#allocation13 + $0x370] sm:$0xff]
        %v2549 = vld [vmem:[#allocation13 + $0x378] sm:$0xff]
        %v2550 = vld [vmem:[#allocation13 + $0x380] sm:$0xff]
        %v2551 = vld [vmem:[#allocation13 + $0x388] sm:$0xff]
        %v2552 = vld [vmem:[#allocation13 + $0x390] sm:$0xff]
        %v2553 = vld [vmem:[#allocation13 + $0x398] sm:$0xff]
        %v2554 = vld [vmem:[#allocation13 + $0x3a0] sm:$0xff]
        %v2555 = vld [vmem:[#allocation13 + $0x3a8] sm:$0xff]
        %v2556 = vld [vmem:[#allocation13 + $0x3b0] sm:$0xff]
        %v2557 = vld [vmem:[#allocation13 + $0x3b8] sm:$0xff]
        %v2558 = vld [vmem:[#allocation13 + $0x3c0] sm:$0xff]
        %v2559 = vld [vmem:[#allocation13 + $0x3c8] sm:$0xff]
        %v2560 = vld [vmem:[#allocation13 + $0x3d0] sm:$0xff]
        %v2561 = vld [vmem:[#allocation13 + $0x3d8] sm:$0xff]
        %v2562 = vld [vmem:[#allocation13 + $0x3e0] sm:$0xff]
        %v2563 = vld [vmem:[#allocation13 + $0x3e8] sm:$0xff]
        %v2564 = vld [vmem:[#allocation13 + $0x3f0] sm:$0xff]
        %v2565 = vld [vmem:[#allocation13 + $0x3f8] sm:$0xff]
        %v2566 = vld [vmem:[#allocation13 + $0x400] sm:$0xff]
        %v2567 = vld [vmem:[#allocation13 + $0x408] sm:$0xff]
        %v2568 = vld [vmem:[#allocation13 + $0x410] sm:$0xff]
        %v2569 = vld [vmem:[#allocation13 + $0x418] sm:$0xff]
        %v2570 = vld [vmem:[#allocation13 + $0x420] sm:$0xff]
        %v2571 = vld [vmem:[#allocation13 + $0x428] sm:$0xff]
        %v2572 = vld [vmem:[#allocation13 + $0x430] sm:$0xff]
        %v2573 = vld [vmem:[#allocation13 + $0x438] sm:$0xff]
        %v2574 = vld [vmem:[#allocation13 + $0x440] sm:$0xff]
        %v2575 = vld [vmem:[#allocation13 + $0x448] sm:$0xff]
        %v2576 = vld [vmem:[#allocation13 + $0x450] sm:$0xff]
        %v2577 = vld [vmem:[#allocation13 + $0x458] sm:$0xff]
        %v2578 = vld [vmem:[#allocation13 + $0x460] sm:$0xff]
        %v2579 = vld [vmem:[#allocation13 + $0x468] sm:$0xff]
        %v2580 = vld [vmem:[#allocation13 + $0x470] sm:$0xff]
        %v2581 = vld [vmem:[#allocation13 + $0x478] sm:$0xff]
        %v2582 = vld [vmem:[#allocation13 + $0x480] sm:$0xff]
        %v2583 = vld [vmem:[#allocation13 + $0x488] sm:$0xff]
        %v2584 = vld [vmem:[#allocation13 + $0x490] sm:$0xff]
        %v2585 = vld [vmem:[#allocation13 + $0x498] sm:$0xff]
        %v2586 = vld [vmem:[#allocation13 + $0x4a0] sm:$0xff]
        %v2587 = vld [vmem:[#allocation13 + $0x4a8] sm:$0xff]
        %v2588 = vld [vmem:[#allocation13 + $0x4b0] sm:$0xff]
        %v2589 = vld [vmem:[#allocation13 + $0x4b8] sm:$0xff]
        %v2590 = vld [vmem:[#allocation13 + $0x4c0] sm:$0xff]
        %v2591 = vld [vmem:[#allocation13 + $0x4c8] sm:$0xff]
        %v2592 = vld [vmem:[#allocation13 + $0x4d0] sm:$0xff]
        %v2593 = vld [vmem:[#allocation13 + $0x4d8] sm:$0xff]
        %v2594 = vld [vmem:[#allocation13 + $0x4e0] sm:$0xff]
        %v2595 = vld [vmem:[#allocation13 + $0x4e8] sm:$0xff]
        %v2596 = vld [vmem:[#allocation13 + $0x4f0] sm:$0xff]
        %v2597 = vld [vmem:[#allocation13 + $0x4f8] sm:$0xff]
        %v2598 = vld [vmem:[#allocation13 + $0x500] sm:$0xff]
        %v2599 = vld [vmem:[#allocation13 + $0x508] sm:$0xff]
        %v2600 = vld [vmem:[#allocation13 + $0x510] sm:$0xff]
        %v2601 = vld [vmem:[#allocation13 + $0x518] sm:$0xff]
        %v2602 = vld [vmem:[#allocation13 + $0x520] sm:$0xff]
        %v2603 = vld [vmem:[#allocation13 + $0x528] sm:$0xff]
        %v2604 = vld [vmem:[#allocation13 + $0x530] sm:$0xff]
        %v2605 = vld [vmem:[#allocation13 + $0x538] sm:$0xff]
        %v2606 = vld [vmem:[#allocation13 + $0x540] sm:$0xff]
        %v2607 = vld [vmem:[#allocation13 + $0x548] sm:$0xff]
        %v2608 = vld [vmem:[#allocation13 + $0x550] sm:$0xff]
        %v2609 = vld [vmem:[#allocation13 + $0x558] sm:$0xff]
        %v2610 = vld [vmem:[#allocation13 + $0x560] sm:$0xff]
        %v2611 = vld [vmem:[#allocation13 + $0x568] sm:$0xff]
        %v2612 = vld [vmem:[#allocation13 + $0x570] sm:$0xff]
        %v2613 = vld [vmem:[#allocation13 + $0x578] sm:$0xff]
        %v2614 = vld [vmem:[#allocation13 + $0x580] sm:$0xff]
        %v2615 = vld [vmem:[#allocation13 + $0x588] sm:$0xff]
        %v2616 = vld [vmem:[#allocation13 + $0x590] sm:$0xff]
        %v2617 = vld [vmem:[#allocation13 + $0x598] sm:$0xff]
        %v2618 = vld [vmem:[#allocation13 + $0x5a0] sm:$0xff]
        %v2619 = vld [vmem:[#allocation13 + $0x5a8] sm:$0xff]
        %v2620 = vld [vmem:[#allocation13 + $0x5b0] sm:$0xff]
        %v2621 = vld [vmem:[#allocation13 + $0x5b8] sm:$0xff]
        %v2622 = vld [vmem:[#allocation13 + $0x5c0] sm:$0xff]
        %v2623 = vld [vmem:[#allocation13 + $0x5c8] sm:$0xff]
        %v2624 = vld [vmem:[#allocation13 + $0x5d0] sm:$0xff]
        %v2625 = vld [vmem:[#allocation13 + $0x5d8] sm:$0xff]
        %v2626 = vld [vmem:[#allocation13 + $0x5e0] sm:$0xff]
        %v2627 = vld [vmem:[#allocation13 + $0x5e8] sm:$0xff]
        %v2628 = vld [vmem:[#allocation13 + $0x5f0] sm:$0xff]
        %v2629 = vld [vmem:[#allocation13 + $0x5f8] sm:$0xff]
        %v2630 = vld [vmem:[#allocation13 + $0x600] sm:$0xff]
        %v2631 = vld [vmem:[#allocation13 + $0x608] sm:$0xff]
        %v2632 = vld [vmem:[#allocation13 + $0x610] sm:$0xff]
        %v2633 = vld [vmem:[#allocation13 + $0x618] sm:$0xff]
        %v2634 = vld [vmem:[#allocation13 + $0x620] sm:$0xff]
        %v2635 = vld [vmem:[#allocation13 + $0x628] sm:$0xff]
        %v2636 = vld [vmem:[#allocation13 + $0x630] sm:$0xff]
        %v2637 = vld [vmem:[#allocation13 + $0x638] sm:$0xff]
        %v2638 = vld [vmem:[#allocation13 + $0x640] sm:$0xff]
        %v2639 = vld [vmem:[#allocation13 + $0x648] sm:$0xff]
        %v2640 = vld [vmem:[#allocation13 + $0x650] sm:$0xff]
        %v2641 = vld [vmem:[#allocation13 + $0x658] sm:$0xff]
        %v2642 = vld [vmem:[#allocation13 + $0x660] sm:$0xff]
        %v2643 = vld [vmem:[#allocation13 + $0x668] sm:$0xff]
        %v2644 = vld [vmem:[#allocation13 + $0x670] sm:$0xff]
        %v2645 = vld [vmem:[#allocation13 + $0x678] sm:$0xff]
        %v2646 = vld [vmem:[#allocation13 + $0x680] sm:$0xff]
        %v2647 = vld [vmem:[#allocation13 + $0x688] sm:$0xff]
        %v2648 = vld [vmem:[#allocation13 + $0x690] sm:$0xff]
        %v2649 = vld [vmem:[#allocation13 + $0x698] sm:$0xff]
        %v2650 = vld [vmem:[#allocation13 + $0x6a0] sm:$0xff]
        %v2651 = vld [vmem:[#allocation13 + $0x6a8] sm:$0xff]
        %v2652 = vld [vmem:[#allocation13 + $0x6b0] sm:$0xff]
        %v2653 = vld [vmem:[#allocation13 + $0x6b8] sm:$0xff]
        %v2654 = vld [vmem:[#allocation13 + $0x6c0] sm:$0xff]
        %v2655 = vld [vmem:[#allocation13 + $0x6c8] sm:$0xff]
        %v2656 = vld [vmem:[#allocation13 + $0x6d0] sm:$0xff]
        %v2657 = vld [vmem:[#allocation13 + $0x6d8] sm:$0xff]
        %v2658 = vld [vmem:[#allocation13 + $0x6e0] sm:$0xff]
        %v2659 = vld [vmem:[#allocation13 + $0x6e8] sm:$0xff]
        %v2660 = vld [vmem:[#allocation13 + $0x6f0] sm:$0xff]
        %v2661 = vld [vmem:[#allocation13 + $0x6f8] sm:$0xff]
        %v2662 = vld [vmem:[#allocation13 + $0x700] sm:$0xff]
        %v2663 = vld [vmem:[#allocation13 + $0x708] sm:$0xff]
        %v2664 = vld [vmem:[#allocation13 + $0x710] sm:$0xff]
        %v2665 = vld [vmem:[#allocation13 + $0x718] sm:$0xff]
        %v2666 = vld [vmem:[#allocation13 + $0x720] sm:$0xff]
        %v2667 = vld [vmem:[#allocation13 + $0x728] sm:$0xff]
        %v2668 = vld [vmem:[#allocation13 + $0x730] sm:$0xff]
        %v2669 = vld [vmem:[#allocation13 + $0x738] sm:$0xff]
        %v2670 = vld [vmem:[#allocation13 + $0x740] sm:$0xff]
        %v2671 = vld [vmem:[#allocation13 + $0x748] sm:$0xff]
        %v2672 = vld [vmem:[#allocation13 + $0x750] sm:$0xff]
        %v2673 = vld [vmem:[#allocation13 + $0x758] sm:$0xff]
        %v2674 = vld [vmem:[#allocation13 + $0x760] sm:$0xff]
        %v2675 = vld [vmem:[#allocation13 + $0x768] sm:$0xff]
        %v2676 = vld [vmem:[#allocation13 + $0x770] sm:$0xff]
        %v2677 = vld [vmem:[#allocation13 + $0x778] sm:$0xff]
        %v2678 = vld [vmem:[#allocation13 + $0x780] sm:$0xff]
        %v2679 = vld [vmem:[#allocation13 + $0x788] sm:$0xff]
        %v2680 = vld [vmem:[#allocation13 + $0x790] sm:$0xff]
        %v2681 = vld [vmem:[#allocation13 + $0x798] sm:$0xff]
        %v2682 = vld [vmem:[#allocation13 + $0x7a0] sm:$0xff]
        %v2683 = vld [vmem:[#allocation13 + $0x7a8] sm:$0xff]
        %v2684 = vld [vmem:[#allocation13 + $0x7b0] sm:$0xff]
        %v2685 = vld [vmem:[#allocation13 + $0x7b8] sm:$0xff]
        %v2686 = vld [vmem:[#allocation13 + $0x7c0] sm:$0xff]
        %v2687 = vld [vmem:[#allocation13 + $0x7c8] sm:$0xff]
        %v2688 = vld [vmem:[#allocation13 + $0x7d0] sm:$0xff]
        %v2689 = vld [vmem:[#allocation13 + $0x7d8] sm:$0xff]
        %v2690 = vld [vmem:[#allocation13 + $0x7e0] sm:$0xff]
        %v2691 = vld [vmem:[#allocation13 + $0x7e8] sm:$0xff]
        %v2692 = vld [vmem:[#allocation13 + $0x7f0] sm:$0xff]
        %v2693 = vld [vmem:[#allocation13 + $0x7f8] sm:$0xff]
        %2694 = vmatprep.subr.mxu0 %v2439
        %2695 = vmatpush1.msra.mxu0 %v2438
        %2696 = vmatprep.subr.mxu0 %v2447
        %2697 = vmatpush1.msra.mxu0 %v2446
        %2698 = vmatprep.subr.mxu0 %v2455
        %2699 = vmatpush1.msra.mxu0 %v2454
        %2700 = vmatprep.subr.mxu0 %v2463
        %2701 = vmatpush1.msra.mxu0 %v2462
        %2702 = vmatprep.subr.mxu0 %v2471
        %2703 = vmatpush1.msra.mxu0 %v2470
        %2704 = vmatprep.subr.mxu0 %v2479
        %2705 = vmatpush1.msra.mxu0 %v2478
        %2706 = vmatprep.subr.mxu0 %v2487
        %2707 = vmatpush1.msra.mxu0 %v2486
        %2708 = vmatprep.subr.mxu0 %v2495
        %2709 = vmatpush1.msra.mxu0 %v2494
        %2710 = vmatprep.subr.mxu0 %v2503
        %2711 = vmatpush1.msra.mxu0 %v2502
        %2712 = vmatprep.subr.mxu0 %v2511
        %2713 = vmatpush1.msra.mxu0 %v2510
        %2714 = vmatprep.subr.mxu0 %v2519
        %2715 = vmatpush1.msra.mxu0 %v2518
        %2716 = vmatprep.subr.mxu0 %v2527
        %2717 = vmatpush1.msra.mxu0 %v2526
        %2718 = vmatprep.subr.mxu0 %v2535
        %2719 = vmatpush1.msra.mxu0 %v2534
        %2720 = vmatprep.subr.mxu0 %v2543
        %2721 = vmatpush1.msra.mxu0 %v2542
        %2722 = vmatprep.subr.mxu0 %v2551
        %2723 = vmatpush1.msra.mxu0 %v2550
        %2724 = vmatprep.subr.mxu0 %v2559
        %2725 = vmatpush1.msra.mxu0 %v2558
        %2726 = vmatprep.subr.mxu0 %v2567
        %2727 = vmatpush1.msra.mxu0 %v2566
        %2728 = vmatprep.subr.mxu0 %v2575
        %2729 = vmatpush1.msra.mxu0 %v2574
        %2730 = vmatprep.subr.mxu0 %v2583
        %2731 = vmatpush1.msra.mxu0 %v2582
        %2732 = vmatprep.subr.mxu0 %v2591
        %2733 = vmatpush1.msra.mxu0 %v2590
        %2734 = vmatprep.subr.mxu0 %v2599
        %2735 = vmatpush1.msra.mxu0 %v2598
        %2736 = vmatprep.subr.mxu0 %v2607
        %2737 = vmatpush1.msra.mxu0 %v2606
        %2738 = vmatprep.subr.mxu0 %v2615
        %2739 = vmatpush1.msra.mxu0 %v2614
        %2740 = vmatprep.subr.mxu0 %v2623
        %2741 = vmatpush1.msra.mxu0 %v2622
        %2742 = vmatprep.subr.mxu0 %v2631
        %2743 = vmatpush1.msra.mxu0 %v2630
        %2744 = vmatprep.subr.mxu0 %v2639
        %2745 = vmatpush1.msra.mxu0 %v2638
        %2746 = vmatprep.subr.mxu0 %v2647
        %2747 = vmatpush1.msra.mxu0 %v2646
        %2748 = vmatprep.subr.mxu0 %v2655
        %2749 = vmatpush1.msra.mxu0 %v2654
        %2750 = vmatprep.subr.mxu0 %v2663
        %2751 = vmatpush1.msra.mxu0 %v2662
        %2752 = vmatprep.subr.mxu0 %v2671
        %2753 = vmatpush1.msra.mxu0 %v2670
        %2754 = vmatprep.subr.mxu0 %v2679
        %2755 = vmatpush1.msra.mxu0 %v2678
        %2756 = vmatprep.subr.mxu0 %v2687
        %2757 = vmatpush1.msra.mxu0 %v2686
        %2758 = vmatprep.mubr.f32.mxu0 %v2416
        %2759 = vmatmul.mubr.f32.gmra.mrb[0].mxu0 %v2415
        %v2760 = vpop.f32.mrb[0].mxu0
        %v2761 = vadd.f32 0.0, %v2760
        %v2762 = vpop.f32.mrb[0].mxu0
        %v2763 = vadd.f32 0.0, %v2762
        %2764 = vmatprep.mubr.f32.mxu0 %v2418
        %2765 = vmatmul.mubr.f32.gmra.mrb[0].mxu0 %v2417
        %v2766 = vpop.f32.mrb[0].mxu0
        %v2767 = vadd.f32 0.0, %v2766
        %v2768 = vpop.f32.mrb[0].mxu0
        %v2769 = vadd.f32 0.0, %v2768
        %2770 = vdwg.mxu0
        %2771 = vmatprep.subr.mxu0 %v2441
        %2772 = vmatpush1.msra.mxu0 %v2440
        %2773 = vmatprep.subr.mxu0 %v2449
        %2774 = vmatpush1.msra.mxu0 %v2448
        %2775 = vmatprep.subr.mxu0 %v2457
        %2776 = vmatpush1.msra.mxu0 %v2456
        %2777 = vmatprep.subr.mxu0 %v2465
        %2778 = vmatpush1.msra.mxu0 %v2464
        %2779 = vmatprep.subr.mxu0 %v2473
        %2780 = vmatpush1.msra.mxu0 %v2472
        %2781 = vmatprep.subr.mxu0 %v2481
        %2782 = vmatpush1.msra.mxu0 %v2480
        %2783 = vmatprep.subr.mxu0 %v2489
        %2784 = vmatpush1.msra.mxu0 %v2488
        %2785 = vmatprep.subr.mxu0 %v2497
        %2786 = vmatpush1.msra.mxu0 %v2496
        %2787 = vmatprep.subr.mxu0 %v2505
        %2788 = vmatpush1.msra.mxu0 %v2504
        %2789 = vmatprep.subr.mxu0 %v2513
        %2790 = vmatpush1.msra.mxu0 %v2512
        %2791 = vmatprep.subr.mxu0 %v2521
        %2792 = vmatpush1.msra.mxu0 %v2520
        %2793 = vmatprep.subr.mxu0 %v2529
        %2794 = vmatpush1.msra.mxu0 %v2528
        %2795 = vmatprep.subr.mxu0 %v2537
        %2796 = vmatpush1.msra.mxu0 %v2536
        %2797 = vmatprep.subr.mxu0 %v2545
        %2798 = vmatpush1.msra.mxu0 %v2544
        %2799 = vmatprep.subr.mxu0 %v2553
        %2800 = vmatpush1.msra.mxu0 %v2552
        %2801 = vmatprep.subr.mxu0 %v2561
        %2802 = vmatpush1.msra.mxu0 %v2560
        %2803 = vmatprep.subr.mxu0 %v2569
        %2804 = vmatpush1.msra.mxu0 %v2568
        %2805 = vmatprep.subr.mxu0 %v2577
        %2806 = vmatpush1.msra.mxu0 %v2576
        %2807 = vmatprep.subr.mxu0 %v2585
        %2808 = vmatpush1.msra.mxu0 %v2584
        %2809 = vmatprep.subr.mxu0 %v2593
        %2810 = vmatpush1.msra.mxu0 %v2592
        %2811 = vmatprep.subr.mxu0 %v2601
        %2812 = vmatpush1.msra.mxu0 %v2600
        %2813 = vmatprep.subr.mxu0 %v2609
        %2814 = vmatpush1.msra.mxu0 %v2608
        %2815 = vmatprep.subr.mxu0 %v2617
        %2816 = vmatpush1.msra.mxu0 %v2616
        %2817 = vmatprep.subr.mxu0 %v2625
        %2818 = vmatpush1.msra.mxu0 %v2624
        %2819 = vmatprep.subr.mxu0 %v2633
        %2820 = vmatpush1.msra.mxu0 %v2632
        %2821 = vmatprep.subr.mxu0 %v2641
        %2822 = vmatpush1.msra.mxu0 %v2640
        %2823 = vmatprep.subr.mxu0 %v2649
        %2824 = vmatpush1.msra.mxu0 %v2648
        %2825 = vmatprep.subr.mxu0 %v2657
        %2826 = vmatpush1.msra.mxu0 %v2656
        %2827 = vmatprep.subr.mxu0 %v2665
        %2828 = vmatpush1.msra.mxu0 %v2664
        %2829 = vmatprep.subr.mxu0 %v2673
        %2830 = vmatpush1.msra.mxu0 %v2672
        %2831 = vmatprep.subr.mxu0 %v2681
        %2832 = vmatpush1.msra.mxu0 %v2680
        %2833 = vmatprep.subr.mxu0 %v2689
        %2834 = vmatpush1.msra.mxu0 %v2688
        %2835 = vmatprep.mubr.f32.mxu0 %v2416
        %2836 = vmatmul.mubr.f32.gmra.mrb[0].mxu0 %v2415
        %v2837 = vpop.f32.mrb[0].mxu0
        %v2838 = vadd.f32 0.0, %v2837
        %v2839 = vpop.f32.mrb[0].mxu0
        %v2840 = vadd.f32 0.0, %v2839
        %2841 = vmatprep.mubr.f32.mxu0 %v2418
        %2842 = vmatmul.mubr.f32.gmra.mrb[0].mxu0 %v2417
        %v2843 = vpop.f32.mrb[0].mxu0
        %v2844 = vadd.f32 0.0, %v2843
        %v2845 = vpop.f32.mrb[0].mxu0
        %v2846 = vadd.f32 0.0, %v2845
        %2847 = vdwg.mxu0
        %2848 = vmatprep.subr.mxu0 %v2443
        %2849 = vmatpush1.msra.mxu0 %v2442
        %2850 = vmatprep.subr.mxu0 %v2451
        %2851 = vmatpush1.msra.mxu0 %v2450
        %2852 = vmatprep.subr.mxu0 %v2459
        %2853 = vmatpush1.msra.mxu0 %v2458
        %2854 = vmatprep.subr.mxu0 %v2467
        %2855 = vmatpush1.msra.mxu0 %v2466
        %2856 = vmatprep.subr.mxu0 %v2475
        %2857 = vmatpush1.msra.mxu0 %v2474
        %2858 = vmatprep.subr.mxu0 %v2483
        %2859 = vmatpush1.msra.mxu0 %v2482
        %2860 = vmatprep.subr.mxu0 %v2491
        %2861 = vmatpush1.msra.mxu0 %v2490
        %2862 = vmatprep.subr.mxu0 %v2499
        %2863 = vmatpush1.msra.mxu0 %v2498
        %2864 = vmatprep.subr.mxu0 %v2507
        %2865 = vmatpush1.msra.mxu0 %v2506
        %2866 = vmatprep.subr.mxu0 %v2515
        %2867 = vmatpush1.msra.mxu0 %v2514
        %2868 = vmatprep.subr.mxu0 %v2523
        %2869 = vmatpush1.msra.mxu0 %v2522
        %2870 = vmatprep.subr.mxu0 %v2531
        %2871 = vmatpush1.msra.mxu0 %v2530
        %2872 = vmatprep.subr.mxu0 %v2539
        %2873 = vmatpush1.msra.mxu0 %v2538
        %2874 = vmatprep.subr.mxu0 %v2547
        %2875 = vmatpush1.msra.mxu0 %v2546
        %2876 = vmatprep.subr.mxu0 %v2555
        %2877 = vmatpush1.msra.mxu0 %v2554
        %2878 = vmatprep.subr.mxu0 %v2563
        %2879 = vmatpush1.msra.mxu0 %v2562
        %2880 = vmatprep.subr.mxu0 %v2571
        %2881 = vmatpush1.msra.mxu0 %v2570
        %2882 = vmatprep.subr.mxu0 %v2579
        %2883 = vmatpush1.msra.mxu0 %v2578
        %2884 = vmatprep.subr.mxu0 %v2587
        %2885 = vmatpush1.msra.mxu0 %v2586
        %2886 = vmatprep.subr.mxu0 %v2595
        %2887 = vmatpush1.msra.mxu0 %v2594
        %2888 = vmatprep.subr.mxu0 %v2603
        %2889 = vmatpush1.msra.mxu0 %v2602
        %2890 = vmatprep.subr.mxu0 %v2611
        %2891 = vmatpush1.msra.mxu0 %v2610
        %2892 = vmatprep.subr.mxu0 %v2619
        %2893 = vmatpush1.msra.mxu0 %v2618
        %2894 = vmatprep.subr.mxu0 %v2627
        %2895 = vmatpush1.msra.mxu0 %v2626
        %2896 = vmatprep.subr.mxu0 %v2635
        %2897 = vmatpush1.msra.mxu0 %v2634
        %2898 = vmatprep.subr.mxu0 %v2643
        %2899 = vmatpush1.msra.mxu0 %v2642
        %2900 = vmatprep.subr.mxu0 %v2651
        %2901 = vmatpush1.msra.mxu0 %v2650
        %2902 = vmatprep.subr.mxu0 %v2659
        %2903 = vmatpush1.msra.mxu0 %v2658
        %2904 = vmatprep.subr.mxu0 %v2667
        %2905 = vmatpush1.msra.mxu0 %v2666
        %2906 = vmatprep.subr.mxu0 %v2675
        %2907 = vmatpush1.msra.mxu0 %v2674
        %2908 = vmatprep.subr.mxu0 %v2683
        %2909 = vmatpush1.msra.mxu0 %v2682
        %2910 = vmatprep.subr.mxu0 %v2691
        %2911 = vmatpush1.msra.mxu0 %v2690
        %2912 = vmatprep.mubr.f32.mxu0 %v2416
        %2913 = vmatmul.mubr.f32.gmra.mrb[0].mxu0 %v2415
        %v2914 = vpop.f32.mrb[0].mxu0
        %v2915 = vadd.f32 0.0, %v2914
        %v2916 = vpop.f32.mrb[0].mxu0
        %v2917 = vadd.f32 0.0, %v2916
        %2918 = vmatprep.mubr.f32.mxu0 %v2418
        %2919 = vmatmul.mubr.f32.gmra.mrb[0].mxu0 %v2417
        %v2920 = vpop.f32.mrb[0].mxu0
        %v2921 = vadd.f32 0.0, %v2920
        %v2922 = vpop.f32.mrb[0].mxu0
        %v2923 = vadd.f32 0.0, %v2922
        %2924 = vdwg.mxu0
        %2925 = vmatprep.subr.mxu0 %v2445
        %2926 = vmatpush1.msra.mxu0 %v2444
        %2927 = vmatprep.subr.mxu0 %v2453
        %2928 = vmatpush1.msra.mxu0 %v2452
        %2929 = vmatprep.subr.mxu0 %v2461
        %2930 = vmatpush1.msra.mxu0 %v2460
        %2931 = vmatprep.subr.mxu0 %v2469
        %2932 = vmatpush1.msra.mxu0 %v2468
        %2933 = vmatprep.subr.mxu0 %v2477
        %2934 = vmatpush1.msra.mxu0 %v2476
        %2935 = vmatprep.subr.mxu0 %v2485
        %2936 = vmatpush1.msra.mxu0 %v2484
        %2937 = vmatprep.subr.mxu0 %v2493
        %2938 = vmatpush1.msra.mxu0 %v2492
        %2939 = vmatprep.subr.mxu0 %v2501
        %2940 = vmatpush1.msra.mxu0 %v2500
        %2941 = vmatprep.subr.mxu0 %v2509
        %2942 = vmatpush1.msra.mxu0 %v2508
        %2943 = vmatprep.subr.mxu0 %v2517
        %2944 = vmatpush1.msra.mxu0 %v2516
        %2945 = vmatprep.subr.mxu0 %v2525
        %2946 = vmatpush1.msra.mxu0 %v2524
        %2947 = vmatprep.subr.mxu0 %v2533
        %2948 = vmatpush1.msra.mxu0 %v2532
        %2949 = vmatprep.subr.mxu0 %v2541
        %2950 = vmatpush1.msra.mxu0 %v2540
        %2951 = vmatprep.subr.mxu0 %v2549
        %2952 = vmatpush1.msra.mxu0 %v2548
        %2953 = vmatprep.subr.mxu0 %v2557
        %2954 = vmatpush1.msra.mxu0 %v2556
        %2955 = vmatprep.subr.mxu0 %v2565
        %2956 = vmatpush1.msra.mxu0 %v2564
        %2957 = vmatprep.subr.mxu0 %v2573
        %2958 = vmatpush1.msra.mxu0 %v2572
        %2959 = vmatprep.subr.mxu0 %v2581
        %2960 = vmatpush1.msra.mxu0 %v2580
        %2961 = vmatprep.subr.mxu0 %v2589
        %2962 = vmatpush1.msra.mxu0 %v2588
        %2963 = vmatprep.subr.mxu0 %v2597
        %2964 = vmatpush1.msra.mxu0 %v2596
        %2965 = vmatprep.subr.mxu0 %v2605
        %2966 = vmatpush1.msra.mxu0 %v2604
        %2967 = vmatprep.subr.mxu0 %v2613
        %2968 = vmatpush1.msra.mxu0 %v2612
        %2969 = vmatprep.subr.mxu0 %v2621
        %2970 = vmatpush1.msra.mxu0 %v2620
        %2971 = vmatprep.subr.mxu0 %v2629
        %2972 = vmatpush1.msra.mxu0 %v2628
        %2973 = vmatprep.subr.mxu0 %v2637
        %2974 = vmatpush1.msra.mxu0 %v2636
        %2975 = vmatprep.subr.mxu0 %v2645
        %2976 = vmatpush1.msra.mxu0 %v2644
        %2977 = vmatprep.subr.mxu0 %v2653
        %2978 = vmatpush1.msra.mxu0 %v2652
        %2979 = vmatprep.subr.mxu0 %v2661
        %2980 = vmatpush1.msra.mxu0 %v2660
        %2981 = vmatprep.subr.mxu0 %v2669
        %2982 = vmatpush1.msra.mxu0 %v2668
        %2983 = vmatprep.subr.mxu0 %v2677
        %2984 = vmatpush1.msra.mxu0 %v2676
        %2985 = vmatprep.subr.mxu0 %v2685
        %2986 = vmatpush1.msra.mxu0 %v2684
        %2987 = vmatprep.subr.mxu0 %v2693
        %2988 = vmatpush1.msra.mxu0 %v2692
        %2989 = vmatprep.mubr.f32.mxu0 %v2416
        %2990 = vmatmul.mubr.f32.gmra.mrb[0].mxu0 %v2415
        %v2991 = vpop.f32.mrb[0].mxu0
        %v2992 = vadd.f32 0.0, %v2991
        %v2993 = vpop.f32.mrb[0].mxu0
        %v2994 = vadd.f32 0.0, %v2993
        %2995 = vmatprep.mubr.f32.mxu0 %v2418
        %2996 = vmatmul.mubr.f32.gmra.mrb[0].mxu0 %v2417
        %v2997 = vpop.f32.mrb[0].mxu0
        %v2998 = vadd.f32 0.0, %v2997
        %v2999 = vpop.f32.mrb[0].mxu0
        %v3000 = vadd.f32 0.0, %v2999
        %3001 = vdwg.mxu0
        %v3002 = vstv %s2437
        %v3003 = vmul.f32 %v3002, %v2761
        %v3004 = vmul.f32 %v3002, %v2763
        %v3005 = vmul.f32 %v3002, %v2838
        %v3006 = vmul.f32 %v3002, %v2840
        %v3007 = vmul.f32 %v3002, %v2915
        %v3008 = vmul.f32 %v3002, %v2917
        %v3009 = vmul.f32 %v3002, %v2992
        %v3010 = vmul.f32 %v3002, %v2994
        %v3011 = vmul.f32 %v3002, %v2767
        %v3012 = vmul.f32 %v3002, %v2769
        %v3013 = vmul.f32 %v3002, %v2844
        %v3014 = vmul.f32 %v3002, %v2846
        %v3015 = vmul.f32 %v3002, %v2921
        %v3016 = vmul.f32 %v3002, %v2923
        %v3017 = vmul.f32 %v3002, %v2998
        %v3018 = vmul.f32 %v3002, %v3000
        %v3019 = vadd.f32 %v2421, %v3003
        %v3020 = vadd.f32 %v2422, %v3004
        %v3021 = vadd.f32 %v2423, %v3005
        %v3022 = vadd.f32 %v2424, %v3006
        %v3023 = vadd.f32 %v2425, %v3007
        %v3024 = vadd.f32 %v2426, %v3008
        %v3025 = vadd.f32 %v2427, %v3009
        %v3026 = vadd.f32 %v2428, %v3010
        %v3027 = vadd.f32 %v2429, %v3011
        %v3028 = vadd.f32 %v2430, %v3012
        %v3029 = vadd.f32 %v2431, %v3013
        %v3030 = vadd.f32 %v2432, %v3014
        %v3031 = vadd.f32 %v2433, %v3015
        %v3032 = vadd.f32 %v2434, %v3016
        %v3033 = vadd.f32 %v2435, %v3017
        %v3034 = vadd.f32 %v2436, %v3018
        %vm3035 = vcmask 269312
        %3036 = vst.msk [vmem:[#allocation2] sm:$0xff] %vm3035, 0.0
        %3037 = vst.msk [vmem:[#allocation2 + $0x48] sm:$0xff] %vm3035, 0.0
        %3054 = vrot.lane.b32.xlu0 %v3019, 33
        %v3055 = vpop.permute.xlu0 %3054
        %3056 = vrot.lane.b32.xlu0 %v3020, 33
        %v3057 = vpop.permute.xlu0 %3056
        %3058 = vrot.lane.b32.xlu0 %v3021, 33
        %v3059 = vpop.permute.xlu0 %3058
        %3060 = vrot.lane.b32.xlu0 %v3022, 33
        %v3061 = vpop.permute.xlu0 %3060
        %3062 = vrot.lane.b32.xlu0 %v3023, 33
        %v3063 = vpop.permute.xlu0 %3062
        %3064 = vrot.lane.b32.xlu0 %v3024, 33
        %v3065 = vpop.permute.xlu0 %3064
        %3066 = vrot.lane.b32.xlu0 %v3025, 33
        %v3067 = vpop.permute.xlu0 %3066
        %3068 = vrot.lane.b32.xlu0 %v3026, 33
        %v3069 = vpop.permute.xlu0 %3068
        %3070 = vrot.lane.b32.xlu0 %v3027, 33
        %v3071 = vpop.permute.xlu0 %3070
        %3072 = vrot.lane.b32.xlu0 %v3028, 33
        %v3073 = vpop.permute.xlu0 %3072
        %3074 = vrot.lane.b32.xlu0 %v3029, 33
        %v3075 = vpop.permute.xlu0 %3074
        %3076 = vrot.lane.b32.xlu0 %v3030, 33
        %v3077 = vpop.permute.xlu0 %3076
        %3078 = vrot.lane.b32.xlu0 %v3031, 33
        %v3079 = vpop.permute.xlu0 %3078
        %3080 = vrot.lane.b32.xlu0 %v3032, 33
        %v3081 = vpop.permute.xlu0 %3080
        %3082 = vrot.lane.b32.xlu0 %v3033, 33
        %v3083 = vpop.permute.xlu0 %3082
        %3084 = vrot.lane.b32.xlu0 %v3034, 33
        %v3085 = vpop.permute.xlu0 %3084
        %v3086 = vsel %vm3035, %v3055, %v3057
        %v3087 = vsel %vm3035, %v3057, %v3059
        %v3088 = vsel %vm3035, %v3059, %v3061
        %v3089 = vsel %vm3035, %v3061, %v3063
        %v3090 = vsel %vm3035, %v3063, %v3065
        %v3091 = vsel %vm3035, %v3065, %v3067
        %v3092 = vsel %vm3035, %v3067, %v3069
        %v3093 = vsel %vm3035, %v3071, %v3073
        %v3094 = vsel %vm3035, %v3073, %v3075
        %v3095 = vsel %vm3035, %v3075, %v3077
        %v3096 = vsel %vm3035, %v3077, %v3079
        %v3097 = vsel %vm3035, %v3079, %v3081
        %v3098 = vsel %vm3035, %v3081, %v3083
        %v3099 = vsel %vm3035, %v3083, %v3085
        %vm3118 = vcmask 1047816
        %3119 = vst.msk [vmem:[#allocation2] sm:$0xff] %vm3118, %v3055
        %3120 = vst [vmem:[#allocation2 + $0x8] sm:$0xff] %v3086
        %3121 = vst [vmem:[#allocation2 + $0x10] sm:$0xff] %v3087
        %3122 = vst [vmem:[#allocation2 + $0x18] sm:$0xff] %v3088
        %3123 = vst [vmem:[#allocation2 + $0x20] sm:$0xff] %v3089
        %3124 = vst [vmem:[#allocation2 + $0x28] sm:$0xff] %v3090
        %3125 = vst [vmem:[#allocation2 + $0x30] sm:$0xff] %v3091
        %3126 = vst [vmem:[#allocation2 + $0x38] sm:$0xff] %v3092
        %3127 = vst.msk [vmem:[#allocation2 + $0x40] sm:$0xff] %vm3035, %v3069
        %3128 = vst.msk [vmem:[#allocation2 + $0x48] sm:$0xff] %vm3118, %v3071
        %3129 = vst [vmem:[#allocation2 + $0x50] sm:$0xff] %v3093
        %3130 = vst [vmem:[#allocation2 + $0x58] sm:$0xff] %v3094
        %3131 = vst [vmem:[#allocation2 + $0x60] sm:$0xff] %v3095
        %3132 = vst [vmem:[#allocation2 + $0x68] sm:$0xff] %v3096
        %3133 = vst [vmem:[#allocation2 + $0x70] sm:$0xff] %v3097
        %3134 = vst [vmem:[#allocation2 + $0x78] sm:$0xff] %v3098
        %3135 = vst [vmem:[#allocation2 + $0x80] sm:$0xff] %v3099
        %3136 = vst.msk [vmem:[#allocation2 + $0x88] sm:$0xff] %vm3035, %v3085
        %vm3137 = vcmask 539912
        %3138 = vst.msk [vmem:[#allocation2 + $0x40] sm:$0xff] %vm3137, 0.0
        %3139 = vst.msk [vmem:[#allocation2 + $0x88] sm:$0xff] %vm3137, 0.0
        %s3140 = scalar_lea.vmem %s7, 48
        %v3141 = vld [vmem:[%s3140] sm:$0xff]
        %v3142 = vld [vmem:[%s3140 + $0x8] sm:$0xff]
        %v3143 = vld [vmem:[#allocation2] sm:$0xff]
        %v3144 = vld [vmem:[#allocation2 + $0x8] sm:$0xff]
        %v3145 = vld [vmem:[#allocation2 + $0x10] sm:$0xff]
        %v3146 = vld [vmem:[#allocation2 + $0x18] sm:$0xff]
        %v3147 = vld [vmem:[#allocation2 + $0x20] sm:$0xff]
        %v3148 = vld [vmem:[#allocation2 + $0x28] sm:$0xff]
        %v3149 = vld [vmem:[#allocation2 + $0x30] sm:$0xff]
        %v3150 = vld [vmem:[#allocation2 + $0x38] sm:$0xff]
        %v3151 = vld [vmem:[#allocation2 + $0x48] sm:$0xff]
        %v3152 = vld [vmem:[#allocation2 + $0x50] sm:$0xff]
        %v3153 = vld [vmem:[#allocation2 + $0x58] sm:$0xff]
        %v3154 = vld [vmem:[#allocation2 + $0x60] sm:$0xff]
        %v3155 = vld [vmem:[#allocation2 + $0x68] sm:$0xff]
        %v3156 = vld [vmem:[#allocation2 + $0x70] sm:$0xff]
        %v3157 = vld [vmem:[#allocation2 + $0x78] sm:$0xff]
        %v3158 = vld [vmem:[#allocation2 + $0x80] sm:$0xff]
        %3160 = vset.pattern.permute.xlu0 0
        %3161 = vperm.xlu0 %3160, %v3141
        %v3162 = vpop.permute.xlu0 %3161
        %3165 = vset.pattern.permute.xlu0 0
        %3166 = vperm.xlu0 %3165, %v3142
        %v3167 = vpop.permute.xlu0 %3166
        %v3169 = vmul.f32 %v3143, %v3162
        %v3170 = vmul.f32 %v3144, %v3162
        %v3171 = vmul.f32 %v3145, %v3162
        %v3172 = vmul.f32 %v3146, %v3162
        %v3173 = vmul.f32 %v3147, %v3162
        %v3174 = vmul.f32 %v3148, %v3162
        %v3175 = vmul.f32 %v3149, %v3162
        %v3176 = vmul.f32 %v3150, %v3162
        %v3177 = vmul.f32 %v3151, %v3167
        %v3178 = vmul.f32 %v3152, %v3167
        %v3179 = vmul.f32 %v3153, %v3167
        %v3180 = vmul.f32 %v3154, %v3167
        %v3181 = vmul.f32 %v3155, %v3167
        %v3182 = vmul.f32 %v3156, %v3167
        %v3183 = vmul.f32 %v3157, %v3167
        %v3184 = vmul.f32 %v3158, %v3167
        %v3185 = vadd.f32 %v3169, 0.0
        %v3186 = vadd.f32 %v3170, 0.0
        %v3187 = vadd.f32 %v3171, 0.0
        %v3188 = vadd.f32 %v3172, 0.0
        %v3189 = vadd.f32 %v3173, 0.0
        %v3190 = vadd.f32 %v3174, 0.0
        %v3191 = vadd.f32 %v3175, 0.0
        %v3192 = vadd.f32 %v3176, 0.0
        %v3193 = vadd.f32 %v3177, 0.0
        %v3194 = vadd.f32 %v3178, 0.0
        %v3195 = vadd.f32 %v3179, 0.0
        %v3196 = vadd.f32 %v3180, 0.0
        %v3197 = vadd.f32 %v3181, 0.0
        %v3198 = vadd.f32 %v3182, 0.0
        %v3199 = vadd.f32 %v3183, 0.0
        %v3200 = vadd.f32 %v3184, 0.0
        %v3201 = vld [vmem:[#allocation2] sm:$0xff]
        %v3202 = vld [vmem:[#allocation2 + $0x8] sm:$0xff]
        %v3203 = vld [vmem:[#allocation2 + $0x10] sm:$0xff]
        %v3204 = vld [vmem:[#allocation2 + $0x18] sm:$0xff]
        %v3205 = vld [vmem:[#allocation2 + $0x20] sm:$0xff]
        %v3206 = vld [vmem:[#allocation2 + $0x28] sm:$0xff]
        %v3207 = vld [vmem:[#allocation2 + $0x30] sm:$0xff]
        %v3208 = vld [vmem:[#allocation2 + $0x38] sm:$0xff]
        %v3209 = vld [vmem:[#allocation2 + $0x40] sm:$0xff]
        %v3210 = vld [vmem:[#allocation2 + $0x48] sm:$0xff]
        %v3211 = vld [vmem:[#allocation2 + $0x50] sm:$0xff]
        %v3212 = vld [vmem:[#allocation2 + $0x58] sm:$0xff]
        %v3213 = vld [vmem:[#allocation2 + $0x60] sm:$0xff]
        %v3214 = vld [vmem:[#allocation2 + $0x68] sm:$0xff]
        %v3215 = vld [vmem:[#allocation2 + $0x70] sm:$0xff]
        %v3216 = vld [vmem:[#allocation2 + $0x78] sm:$0xff]
        %v3217 = vld [vmem:[#allocation2 + $0x80] sm:$0xff]
        %v3218 = vld [vmem:[#allocation2 + $0x88] sm:$0xff]
        %3219 = vset.pattern.permute.xlu0 1
        %3220 = vperm.xlu0 %3219, %v3141
        %v3221 = vpop.permute.xlu0 %3220
        %3223 = vset.pattern.permute.xlu0 1
        %3224 = vperm.xlu0 %3223, %v3142
        %v3225 = vpop.permute.xlu0 %3224
        %v3227 = vmul.f32 %v3201, %v3221
        %v3228 = vmul.f32 %v3202, %v3221
        %v3229 = vmul.f32 %v3203, %v3221
        %v3230 = vmul.f32 %v3204, %v3221
        %v3231 = vmul.f32 %v3205, %v3221
        %v3232 = vmul.f32 %v3206, %v3221
        %v3233 = vmul.f32 %v3207, %v3221
        %v3234 = vmul.f32 %v3208, %v3221
        %v3235 = vmul.f32 %v3209, %v3221
        %v3236 = vmul.f32 %v3210, %v3225
        %v3237 = vmul.f32 %v3211, %v3225
        %v3238 = vmul.f32 %v3212, %v3225
        %v3239 = vmul.f32 %v3213, %v3225
        %v3240 = vmul.f32 %v3214, %v3225
        %v3241 = vmul.f32 %v3215, %v3225
        %v3242 = vmul.f32 %v3216, %v3225
        %v3243 = vmul.f32 %v3217, %v3225
        %v3244 = vmul.f32 %v3218, %v3225
        %v3245 = vadd.f32 %v3227, 0.0
        %v3246 = vadd.f32 %v3228, 0.0
        %v3247 = vadd.f32 %v3229, 0.0
        %v3248 = vadd.f32 %v3230, 0.0
        %v3249 = vadd.f32 %v3231, 0.0
        %v3250 = vadd.f32 %v3232, 0.0
        %v3251 = vadd.f32 %v3233, 0.0
        %v3252 = vadd.f32 %v3234, 0.0
        %v3253 = vadd.f32 %v3235, 0.0
        %v3254 = vadd.f32 %v3236, 0.0
        %v3255 = vadd.f32 %v3237, 0.0
        %v3256 = vadd.f32 %v3238, 0.0
        %v3257 = vadd.f32 %v3239, 0.0
        %v3258 = vadd.f32 %v3240, 0.0
        %v3259 = vadd.f32 %v3241, 0.0
        %v3260 = vadd.f32 %v3242, 0.0
        %v3261 = vadd.f32 %v3243, 0.0
        %v3262 = vadd.f32 %v3244, 0.0
        %3263 = vset.pattern.permute.xlu0 2
        %3264 = vperm.xlu0 %3263, %v3141
        %v3265 = vpop.permute.xlu0 %3264
        %3267 = vset.pattern.permute.xlu0 2
        %3268 = vperm.xlu0 %3267, %v3142
        %v3269 = vpop.permute.xlu0 %3268
        %v3271 = vmul.f32 %v3201, %v3265
        %v3272 = vmul.f32 %v3202, %v3265
        %v3273 = vmul.f32 %v3203, %v3265
        %v3274 = vmul.f32 %v3204, %v3265
        %v3275 = vmul.f32 %v3205, %v3265
        %v3276 = vmul.f32 %v3206, %v3265
        %v3277 = vmul.f32 %v3207, %v3265
        %v3278 = vmul.f32 %v3208, %v3265
        %v3279 = vmul.f32 %v3209, %v3265
        %v3280 = vmul.f32 %v3210, %v3269
        %v3281 = vmul.f32 %v3211, %v3269
        %v3282 = vmul.f32 %v3212, %v3269
        %v3283 = vmul.f32 %v3213, %v3269
        %v3284 = vmul.f32 %v3214, %v3269
        %v3285 = vmul.f32 %v3215, %v3269
        %v3286 = vmul.f32 %v3216, %v3269
        %v3287 = vmul.f32 %v3217, %v3269
        %v3288 = vmul.f32 %v3218, %v3269
        %v3289 = vadd.f32 %v3271, 0.0
        %v3290 = vadd.f32 %v3272, 0.0
        %v3291 = vadd.f32 %v3273, 0.0
        %v3292 = vadd.f32 %v3274, 0.0
        %v3293 = vadd.f32 %v3275, 0.0
        %v3294 = vadd.f32 %v3276, 0.0
        %v3295 = vadd.f32 %v3277, 0.0
        %v3296 = vadd.f32 %v3278, 0.0
        %v3297 = vadd.f32 %v3279, 0.0
        %v3298 = vadd.f32 %v3280, 0.0
        %v3299 = vadd.f32 %v3281, 0.0
        %v3300 = vadd.f32 %v3282, 0.0
        %v3301 = vadd.f32 %v3283, 0.0
        %v3302 = vadd.f32 %v3284, 0.0
        %v3303 = vadd.f32 %v3285, 0.0
        %v3304 = vadd.f32 %v3286, 0.0
        %v3305 = vadd.f32 %v3287, 0.0
        %v3306 = vadd.f32 %v3288, 0.0
        %3307 = vset.pattern.permute.xlu0 3
        %3308 = vperm.xlu0 %3307, %v3141
        %v3309 = vpop.permute.xlu0 %3308
        %3311 = vset.pattern.permute.xlu0 3
        %3312 = vperm.xlu0 %3311, %v3142
        %v3313 = vpop.permute.xlu0 %3312
        %v3315 = vmul.f32 %v3201, %v3309
        %v3316 = vmul.f32 %v3202, %v3309
        %v3317 = vmul.f32 %v3203, %v3309
        %v3318 = vmul.f32 %v3204, %v3309
        %v3319 = vmul.f32 %v3205, %v3309
        %v3320 = vmul.f32 %v3206, %v3309
        %v3321 = vmul.f32 %v3207, %v3309
        %v3322 = vmul.f32 %v3208, %v3309
        %v3323 = vmul.f32 %v3209, %v3309
        %v3324 = vmul.f32 %v3210, %v3313
        %v3325 = vmul.f32 %v3211, %v3313
        %v3326 = vmul.f32 %v3212, %v3313
        %v3327 = vmul.f32 %v3213, %v3313
        %v3328 = vmul.f32 %v3214, %v3313
        %v3329 = vmul.f32 %v3215, %v3313
        %v3330 = vmul.f32 %v3216, %v3313
        %v3331 = vmul.f32 %v3217, %v3313
        %v3332 = vmul.f32 %v3218, %v3313
        %3351 = vrot.lane.b32.xlu0 %v3315, 96
        %v3352 = vpop.permute.xlu0 %3351
        %3353 = vrot.lane.b32.xlu0 %v3316, 96
        %v3354 = vpop.permute.xlu0 %3353
        %3355 = vrot.lane.b32.xlu0 %v3317, 96
        %v3356 = vpop.permute.xlu0 %3355
        %3357 = vrot.lane.b32.xlu0 %v3318, 96
        %v3358 = vpop.permute.xlu0 %3357
        %3359 = vrot.lane.b32.xlu0 %v3319, 96
        %v3360 = vpop.permute.xlu0 %3359
        %3361 = vrot.lane.b32.xlu0 %v3320, 96
        %v3362 = vpop.permute.xlu0 %3361
        %3363 = vrot.lane.b32.xlu0 %v3321, 96
        %v3364 = vpop.permute.xlu0 %3363
        %3365 = vrot.lane.b32.xlu0 %v3322, 96
        %v3366 = vpop.permute.xlu0 %3365
        %3367 = vrot.lane.b32.xlu0 %v3323, 96
        %v3368 = vpop.permute.xlu0 %3367
        %3369 = vrot.lane.b32.xlu0 %v3324, 96
        %v3370 = vpop.permute.xlu0 %3369
        %3371 = vrot.lane.b32.xlu0 %v3325, 96
        %v3372 = vpop.permute.xlu0 %3371
        %3373 = vrot.lane.b32.xlu0 %v3326, 96
        %v3374 = vpop.permute.xlu0 %3373
        %3375 = vrot.lane.b32.xlu0 %v3327, 96
        %v3376 = vpop.permute.xlu0 %3375
        %3377 = vrot.lane.b32.xlu0 %v3328, 96
        %v3378 = vpop.permute.xlu0 %3377
        %3379 = vrot.lane.b32.xlu0 %v3329, 96
        %v3380 = vpop.permute.xlu0 %3379
        %3381 = vrot.lane.b32.xlu0 %v3330, 96
        %v3382 = vpop.permute.xlu0 %3381
        %3383 = vrot.lane.b32.xlu0 %v3331, 96
        %v3384 = vpop.permute.xlu0 %3383
        %3385 = vrot.lane.b32.xlu0 %v3332, 96
        %v3386 = vpop.permute.xlu0 %3385
        %v3387 = vsel %vm2114, %v3352, %v3354
        %v3388 = vsel %vm2114, %v3354, %v3356
        %v3389 = vsel %vm2114, %v3356, %v3358
        %v3390 = vsel %vm2114, %v3358, %v3360
        %v3391 = vsel %vm2114, %v3360, %v3362
        %v3392 = vsel %vm2114, %v3362, %v3364
        %v3393 = vsel %vm2114, %v3364, %v3366
        %v3394 = vsel %vm2114, %v3366, %v3368
        %v3395 = vsel %vm2114, %v3370, %v3372
        %v3396 = vsel %vm2114, %v3372, %v3374
        %v3397 = vsel %vm2114, %v3374, %v3376
        %v3398 = vsel %vm2114, %v3376, %v3378
        %v3399 = vsel %vm2114, %v3378, %v3380
        %v3400 = vsel %vm2114, %v3380, %v3382
        %v3401 = vsel %vm2114, %v3382, %v3384
        %v3402 = vsel %vm2114, %v3384, %v3386
        %v3419 = vadd.f32 %v3185, %v3387
        %v3420 = vadd.f32 %v3186, %v3388
        %v3421 = vadd.f32 %v3187, %v3389
        %v3422 = vadd.f32 %v3188, %v3390
        %v3423 = vadd.f32 %v3189, %v3391
        %v3424 = vadd.f32 %v3190, %v3392
        %v3425 = vadd.f32 %v3191, %v3393
        %v3426 = vadd.f32 %v3192, %v3394
        %v3427 = vadd.f32 %v3193, %v3395
        %v3428 = vadd.f32 %v3194, %v3396
        %v3429 = vadd.f32 %v3195, %v3397
        %v3430 = vadd.f32 %v3196, %v3398
        %v3431 = vadd.f32 %v3197, %v3399
        %v3432 = vadd.f32 %v3198, %v3400
        %v3433 = vadd.f32 %v3199, %v3401
        %v3434 = vadd.f32 %v3200, %v3402
        %3435 = vset.pattern.permute.xlu0 4
        %3436 = vperm.xlu0 %3435, %v3141
        %v3437 = vpop.permute.xlu0 %3436
        %3439 = vset.pattern.permute.xlu0 4
        %3440 = vperm.xlu0 %3439, %v3142
        %v3441 = vpop.permute.xlu0 %3440
        %v3443 = vmul.f32 %v3201, %v3437
        %v3444 = vmul.f32 %v3202, %v3437
        %v3445 = vmul.f32 %v3203, %v3437
        %v3446 = vmul.f32 %v3204, %v3437
        %v3447 = vmul.f32 %v3205, %v3437
        %v3448 = vmul.f32 %v3206, %v3437
        %v3449 = vmul.f32 %v3207, %v3437
        %v3450 = vmul.f32 %v3208, %v3437
        %v3451 = vmul.f32 %v3209, %v3437
        %v3452 = vmul.f32 %v3210, %v3441
        %v3453 = vmul.f32 %v3211, %v3441
        %v3454 = vmul.f32 %v3212, %v3441
        %v3455 = vmul.f32 %v3213, %v3441
        %v3456 = vmul.f32 %v3214, %v3441
        %v3457 = vmul.f32 %v3215, %v3441
        %v3458 = vmul.f32 %v3216, %v3441
        %v3459 = vmul.f32 %v3217, %v3441
        %v3460 = vmul.f32 %v3218, %v3441
        %3479 = vrot.lane.b32.xlu0 %v3443, 96
        %v3480 = vpop.permute.xlu0 %3479
        %3481 = vrot.lane.b32.xlu0 %v3444, 96
        %v3482 = vpop.permute.xlu0 %3481
        %3483 = vrot.lane.b32.xlu0 %v3445, 96
        %v3484 = vpop.permute.xlu0 %3483
        %3485 = vrot.lane.b32.xlu0 %v3446, 96
        %v3486 = vpop.permute.xlu0 %3485
        %3487 = vrot.lane.b32.xlu0 %v3447, 96
        %v3488 = vpop.permute.xlu0 %3487
        %3489 = vrot.lane.b32.xlu0 %v3448, 96
        %v3490 = vpop.permute.xlu0 %3489
        %3491 = vrot.lane.b32.xlu0 %v3449, 96
        %v3492 = vpop.permute.xlu0 %3491
        %3493 = vrot.lane.b32.xlu0 %v3450, 96
        %v3494 = vpop.permute.xlu0 %3493
        %3495 = vrot.lane.b32.xlu0 %v3451, 96
        %v3496 = vpop.permute.xlu0 %3495
        %3497 = vrot.lane.b32.xlu0 %v3452, 96
        %v3498 = vpop.permute.xlu0 %3497
        %3499 = vrot.lane.b32.xlu0 %v3453, 96
        %v3500 = vpop.permute.xlu0 %3499
        %3501 = vrot.lane.b32.xlu0 %v3454, 96
        %v3502 = vpop.permute.xlu0 %3501
        %3503 = vrot.lane.b32.xlu0 %v3455, 96
        %v3504 = vpop.permute.xlu0 %3503
        %3505 = vrot.lane.b32.xlu0 %v3456, 96
        %v3506 = vpop.permute.xlu0 %3505
        %3507 = vrot.lane.b32.xlu0 %v3457, 96
        %v3508 = vpop.permute.xlu0 %3507
        %3509 = vrot.lane.b32.xlu0 %v3458, 96
        %v3510 = vpop.permute.xlu0 %3509
        %3511 = vrot.lane.b32.xlu0 %v3459, 96
        %v3512 = vpop.permute.xlu0 %3511
        %3513 = vrot.lane.b32.xlu0 %v3460, 96
        %v3514 = vpop.permute.xlu0 %3513
        %v3515 = vsel %vm2114, %v3480, %v3482
        %v3516 = vsel %vm2114, %v3482, %v3484
        %v3517 = vsel %vm2114, %v3484, %v3486
        %v3518 = vsel %vm2114, %v3486, %v3488
        %v3519 = vsel %vm2114, %v3488, %v3490
        %v3520 = vsel %vm2114, %v3490, %v3492
        %v3521 = vsel %vm2114, %v3492, %v3494
        %v3522 = vsel %vm2114, %v3494, %v3496
        %v3523 = vsel %vm2114, %v3498, %v3500
        %v3524 = vsel %vm2114, %v3500, %v3502
        %v3525 = vsel %vm2114, %v3502, %v3504
        %v3526 = vsel %vm2114, %v3504, %v3506
        %v3527 = vsel %vm2114, %v3506, %v3508
        %v3528 = vsel %vm2114, %v3508, %v3510
        %v3529 = vsel %vm2114, %v3510, %v3512
        %v3530 = vsel %vm2114, %v3512, %v3514
        %v3549 = vadd.f32 %v3245, %v3515
        %v3550 = vadd.f32 %v3246, %v3516
        %v3551 = vadd.f32 %v3247, %v3517
        %v3552 = vadd.f32 %v3248, %v3518
        %v3553 = vadd.f32 %v3249, %v3519
        %v3554 = vadd.f32 %v3250, %v3520
        %v3555 = vadd.f32 %v3251, %v3521
        %v3556 = vadd.f32 %v3252, %v3522
        %v3557 = vadd.f32 %v3253, %v3496
        %v3558 = vadd.f32 %v3254, %v3523
        %v3559 = vadd.f32 %v3255, %v3524
        %v3560 = vadd.f32 %v3256, %v3525
        %v3561 = vadd.f32 %v3257, %v3526
        %v3562 = vadd.f32 %v3258, %v3527
        %v3563 = vadd.f32 %v3259, %v3528
        %v3564 = vadd.f32 %v3260, %v3529
        %v3565 = vadd.f32 %v3261, %v3530
        %v3566 = vadd.f32 %v3262, %v3514
        %3567 = vset.pattern.permute.xlu0 5
        %3568 = vperm.xlu0 %3567, %v3141
        %v3569 = vpop.permute.xlu0 %3568
        %3571 = vset.pattern.permute.xlu0 5
        %3572 = vperm.xlu0 %3571, %v3142
        %v3573 = vpop.permute.xlu0 %3572
        %v3575 = vmul.f32 %v3201, %v3569
        %v3576 = vmul.f32 %v3202, %v3569
        %v3577 = vmul.f32 %v3203, %v3569
        %v3578 = vmul.f32 %v3204, %v3569
        %v3579 = vmul.f32 %v3205, %v3569
        %v3580 = vmul.f32 %v3206, %v3569
        %v3581 = vmul.f32 %v3207, %v3569
        %v3582 = vmul.f32 %v3208, %v3569
        %v3583 = vmul.f32 %v3209, %v3569
        %v3584 = vmul.f32 %v3210, %v3573
        %v3585 = vmul.f32 %v3211, %v3573
        %v3586 = vmul.f32 %v3212, %v3573
        %v3587 = vmul.f32 %v3213, %v3573
        %v3588 = vmul.f32 %v3214, %v3573
        %v3589 = vmul.f32 %v3215, %v3573
        %v3590 = vmul.f32 %v3216, %v3573
        %v3591 = vmul.f32 %v3217, %v3573
        %v3592 = vmul.f32 %v3218, %v3573
        %3611 = vrot.lane.b32.xlu0 %v3575, 96
        %v3612 = vpop.permute.xlu0 %3611
        %3613 = vrot.lane.b32.xlu0 %v3576, 96
        %v3614 = vpop.permute.xlu0 %3613
        %3615 = vrot.lane.b32.xlu0 %v3577, 96
        %v3616 = vpop.permute.xlu0 %3615
        %3617 = vrot.lane.b32.xlu0 %v3578, 96
        %v3618 = vpop.permute.xlu0 %3617
        %3619 = vrot.lane.b32.xlu0 %v3579, 96
        %v3620 = vpop.permute.xlu0 %3619
        %3621 = vrot.lane.b32.xlu0 %v3580, 96
        %v3622 = vpop.permute.xlu0 %3621
        %3623 = vrot.lane.b32.xlu0 %v3581, 96
        %v3624 = vpop.permute.xlu0 %3623
        %3625 = vrot.lane.b32.xlu0 %v3582, 96
        %v3626 = vpop.permute.xlu0 %3625
        %3627 = vrot.lane.b32.xlu0 %v3583, 96
        %v3628 = vpop.permute.xlu0 %3627
        %3629 = vrot.lane.b32.xlu0 %v3584, 96
        %v3630 = vpop.permute.xlu0 %3629
        %3631 = vrot.lane.b32.xlu0 %v3585, 96
        %v3632 = vpop.permute.xlu0 %3631
        %3633 = vrot.lane.b32.xlu0 %v3586, 96
        %v3634 = vpop.permute.xlu0 %3633
        %3635 = vrot.lane.b32.xlu0 %v3587, 96
        %v3636 = vpop.permute.xlu0 %3635
        %3637 = vrot.lane.b32.xlu0 %v3588, 96
        %v3638 = vpop.permute.xlu0 %3637
        %3639 = vrot.lane.b32.xlu0 %v3589, 96
        %v3640 = vpop.permute.xlu0 %3639
        %3641 = vrot.lane.b32.xlu0 %v3590, 96
        %v3642 = vpop.permute.xlu0 %3641
        %3643 = vrot.lane.b32.xlu0 %v3591, 96
        %v3644 = vpop.permute.xlu0 %3643
        %3645 = vrot.lane.b32.xlu0 %v3592, 96
        %v3646 = vpop.permute.xlu0 %3645
        %v3647 = vsel %vm2114, %v3612, %v3614
        %v3648 = vsel %vm2114, %v3614, %v3616
        %v3649 = vsel %vm2114, %v3616, %v3618
        %v3650 = vsel %vm2114, %v3618, %v3620
        %v3651 = vsel %vm2114, %v3620, %v3622
        %v3652 = vsel %vm2114, %v3622, %v3624
        %v3653 = vsel %vm2114, %v3624, %v3626
        %v3654 = vsel %vm2114, %v3626, %v3628
        %v3655 = vsel %vm2114, %v3630, %v3632
        %v3656 = vsel %vm2114, %v3632, %v3634
        %v3657 = vsel %vm2114, %v3634, %v3636
        %v3658 = vsel %vm2114, %v3636, %v3638
        %v3659 = vsel %vm2114, %v3638, %v3640
        %v3660 = vsel %vm2114, %v3640, %v3642
        %v3661 = vsel %vm2114, %v3642, %v3644
        %v3662 = vsel %vm2114, %v3644, %v3646
        %v3681 = vadd.f32 %v3289, %v3647
        %v3682 = vadd.f32 %v3290, %v3648
        %v3683 = vadd.f32 %v3291, %v3649
        %v3684 = vadd.f32 %v3292, %v3650
        %v3685 = vadd.f32 %v3293, %v3651
        %v3686 = vadd.f32 %v3294, %v3652
        %v3687 = vadd.f32 %v3295, %v3653
        %v3688 = vadd.f32 %v3296, %v3654
        %v3689 = vadd.f32 %v3297, %v3628
        %v3690 = vadd.f32 %v3298, %v3655
        %v3691 = vadd.f32 %v3299, %v3656
        %v3692 = vadd.f32 %v3300, %v3657
        %v3693 = vadd.f32 %v3301, %v3658
        %v3694 = vadd.f32 %v3302, %v3659
        %v3695 = vadd.f32 %v3303, %v3660
        %v3696 = vadd.f32 %v3304, %v3661
        %v3697 = vadd.f32 %v3305, %v3662
        %v3698 = vadd.f32 %v3306, %v3646
        %3699 = vset.pattern.permute.xlu0 6
        %3700 = vperm.xlu0 %3699, %v3141
        %v3701 = vpop.permute.xlu0 %3700
        %3703 = vset.pattern.permute.xlu0 6
        %3704 = vperm.xlu0 %3703, %v3142
        %v3705 = vpop.permute.xlu0 %3704
        %v3707 = vmul.f32 %v3201, %v3701
        %v3708 = vmul.f32 %v3202, %v3701
        %v3709 = vmul.f32 %v3203, %v3701
        %v3710 = vmul.f32 %v3204, %v3701
        %v3711 = vmul.f32 %v3205, %v3701
        %v3712 = vmul.f32 %v3206, %v3701
        %v3713 = vmul.f32 %v3207, %v3701
        %v3714 = vmul.f32 %v3208, %v3701
        %v3715 = vmul.f32 %v3209, %v3701
        %v3716 = vmul.f32 %v3210, %v3705
        %v3717 = vmul.f32 %v3211, %v3705
        %v3718 = vmul.f32 %v3212, %v3705
        %v3719 = vmul.f32 %v3213, %v3705
        %v3720 = vmul.f32 %v3214, %v3705
        %v3721 = vmul.f32 %v3215, %v3705
        %v3722 = vmul.f32 %v3216, %v3705
        %v3723 = vmul.f32 %v3217, %v3705
        %v3724 = vmul.f32 %v3218, %v3705
        %3743 = vrot.lane.b32.xlu0 %v3707, 64
        %v3744 = vpop.permute.xlu0 %3743
        %3745 = vrot.lane.b32.xlu0 %v3708, 64
        %v3746 = vpop.permute.xlu0 %3745
        %3747 = vrot.lane.b32.xlu0 %v3709, 64
        %v3748 = vpop.permute.xlu0 %3747
        %3749 = vrot.lane.b32.xlu0 %v3710, 64
        %v3750 = vpop.permute.xlu0 %3749
        %3751 = vrot.lane.b32.xlu0 %v3711, 64
        %v3752 = vpop.permute.xlu0 %3751
        %3753 = vrot.lane.b32.xlu0 %v3712, 64
        %v3754 = vpop.permute.xlu0 %3753
        %3755 = vrot.lane.b32.xlu0 %v3713, 64
        %v3756 = vpop.permute.xlu0 %3755
        %3757 = vrot.lane.b32.xlu0 %v3714, 64
        %v3758 = vpop.permute.xlu0 %3757
        %3759 = vrot.lane.b32.xlu0 %v3715, 64
        %v3760 = vpop.permute.xlu0 %3759
        %3761 = vrot.lane.b32.xlu0 %v3716, 64
        %v3762 = vpop.permute.xlu0 %3761
        %3763 = vrot.lane.b32.xlu0 %v3717, 64
        %v3764 = vpop.permute.xlu0 %3763
        %3765 = vrot.lane.b32.xlu0 %v3718, 64
        %v3766 = vpop.permute.xlu0 %3765
        %3767 = vrot.lane.b32.xlu0 %v3719, 64
        %v3768 = vpop.permute.xlu0 %3767
        %3769 = vrot.lane.b32.xlu0 %v3720, 64
        %v3770 = vpop.permute.xlu0 %3769
        %3771 = vrot.lane.b32.xlu0 %v3721, 64
        %v3772 = vpop.permute.xlu0 %3771
        %3773 = vrot.lane.b32.xlu0 %v3722, 64
        %v3774 = vpop.permute.xlu0 %3773
        %3775 = vrot.lane.b32.xlu0 %v3723, 64
        %v3776 = vpop.permute.xlu0 %3775
        %3777 = vrot.lane.b32.xlu0 %v3724, 64
        %v3778 = vpop.permute.xlu0 %3777
        %v3779 = vsel %vm1744, %v3744, %v3746
        %v3780 = vsel %vm1744, %v3746, %v3748
        %v3781 = vsel %vm1744, %v3748, %v3750
        %v3782 = vsel %vm1744, %v3750, %v3752
        %v3783 = vsel %vm1744, %v3752, %v3754
        %v3784 = vsel %vm1744, %v3754, %v3756
        %v3785 = vsel %vm1744, %v3756, %v3758
        %v3786 = vsel %vm1744, %v3758, %v3760
        %v3787 = vsel %vm1744, %v3762, %v3764
        %v3788 = vsel %vm1744, %v3764, %v3766
        %v3789 = vsel %vm1744, %v3766, %v3768
        %v3790 = vsel %vm1744, %v3768, %v3770
        %v3791 = vsel %vm1744, %v3770, %v3772
        %v3792 = vsel %vm1744, %v3772, %v3774
        %v3793 = vsel %vm1744, %v3774, %v3776
        %v3794 = vsel %vm1744, %v3776, %v3778
        %v3811 = vadd.f32 %v3419, %v3779
        %v3812 = vadd.f32 %v3420, %v3780
        %v3813 = vadd.f32 %v3421, %v3781
        %v3814 = vadd.f32 %v3422, %v3782
        %v3815 = vadd.f32 %v3423, %v3783
        %v3816 = vadd.f32 %v3424, %v3784
        %v3817 = vadd.f32 %v3425, %v3785
        %v3818 = vadd.f32 %v3426, %v3786
        %v3819 = vadd.f32 %v3427, %v3787
        %v3820 = vadd.f32 %v3428, %v3788
        %v3821 = vadd.f32 %v3429, %v3789
        %v3822 = vadd.f32 %v3430, %v3790
        %v3823 = vadd.f32 %v3431, %v3791
        %v3824 = vadd.f32 %v3432, %v3792
        %v3825 = vadd.f32 %v3433, %v3793
        %v3826 = vadd.f32 %v3434, %v3794
        %3827 = vset.pattern.permute.xlu0 7
        %3828 = vperm.xlu0 %3827, %v3141
        %v3829 = vpop.permute.xlu0 %3828
        %3831 = vset.pattern.permute.xlu0 7
        %3832 = vperm.xlu0 %3831, %v3142
        %v3833 = vpop.permute.xlu0 %3832
        %v3835 = vmul.f32 %v3201, %v3829
        %v3836 = vmul.f32 %v3202, %v3829
        %v3837 = vmul.f32 %v3203, %v3829
        %v3838 = vmul.f32 %v3204, %v3829
        %v3839 = vmul.f32 %v3205, %v3829
        %v3840 = vmul.f32 %v3206, %v3829
        %v3841 = vmul.f32 %v3207, %v3829
        %v3842 = vmul.f32 %v3208, %v3829
        %v3843 = vmul.f32 %v3209, %v3829
        %v3844 = vmul.f32 %v3210, %v3833
        %v3845 = vmul.f32 %v3211, %v3833
        %v3846 = vmul.f32 %v3212, %v3833
        %v3847 = vmul.f32 %v3213, %v3833
        %v3848 = vmul.f32 %v3214, %v3833
        %v3849 = vmul.f32 %v3215, %v3833
        %v3850 = vmul.f32 %v3216, %v3833
        %v3851 = vmul.f32 %v3217, %v3833
        %v3852 = vmul.f32 %v3218, %v3833
        %3871 = vrot.lane.b32.xlu0 %v3835, 64
        %v3872 = vpop.permute.xlu0 %3871
        %3873 = vrot.lane.b32.xlu0 %v3836, 64
        %v3874 = vpop.permute.xlu0 %3873
        %3875 = vrot.lane.b32.xlu0 %v3837, 64
        %v3876 = vpop.permute.xlu0 %3875
        %3877 = vrot.lane.b32.xlu0 %v3838, 64
        %v3878 = vpop.permute.xlu0 %3877
        %3879 = vrot.lane.b32.xlu0 %v3839, 64
        %v3880 = vpop.permute.xlu0 %3879
        %3881 = vrot.lane.b32.xlu0 %v3840, 64
        %v3882 = vpop.permute.xlu0 %3881
        %3883 = vrot.lane.b32.xlu0 %v3841, 64
        %v3884 = vpop.permute.xlu0 %3883
        %3885 = vrot.lane.b32.xlu0 %v3842, 64
        %v3886 = vpop.permute.xlu0 %3885
        %3887 = vrot.lane.b32.xlu0 %v3843, 64
        %v3888 = vpop.permute.xlu0 %3887
        %3889 = vrot.lane.b32.xlu0 %v3844, 64
        %v3890 = vpop.permute.xlu0 %3889
        %3891 = vrot.lane.b32.xlu0 %v3845, 64
        %v3892 = vpop.permute.xlu0 %3891
        %3893 = vrot.lane.b32.xlu0 %v3846, 64
        %v3894 = vpop.permute.xlu0 %3893
        %3895 = vrot.lane.b32.xlu0 %v3847, 64
        %v3896 = vpop.permute.xlu0 %3895
        %3897 = vrot.lane.b32.xlu0 %v3848, 64
        %v3898 = vpop.permute.xlu0 %3897
        %3899 = vrot.lane.b32.xlu0 %v3849, 64
        %v3900 = vpop.permute.xlu0 %3899
        %3901 = vrot.lane.b32.xlu0 %v3850, 64
        %v3902 = vpop.permute.xlu0 %3901
        %3903 = vrot.lane.b32.xlu0 %v3851, 64
        %v3904 = vpop.permute.xlu0 %3903
        %3905 = vrot.lane.b32.xlu0 %v3852, 64
        %v3906 = vpop.permute.xlu0 %3905
        %v3907 = vsel %vm1744, %v3872, %v3874
        %v3908 = vsel %vm1744, %v3874, %v3876
        %v3909 = vsel %vm1744, %v3876, %v3878
        %v3910 = vsel %vm1744, %v3878, %v3880
        %v3911 = vsel %vm1744, %v3880, %v3882
        %v3912 = vsel %vm1744, %v3882, %v3884
        %v3913 = vsel %vm1744, %v3884, %v3886
        %v3914 = vsel %vm1744, %v3886, %v3888
        %v3915 = vsel %vm1744, %v3890, %v3892
        %v3916 = vsel %vm1744, %v3892, %v3894
        %v3917 = vsel %vm1744, %v3894, %v3896
        %v3918 = vsel %vm1744, %v3896, %v3898
        %v3919 = vsel %vm1744, %v3898, %v3900
        %v3920 = vsel %vm1744, %v3900, %v3902
        %v3921 = vsel %vm1744, %v3902, %v3904
        %v3922 = vsel %vm1744, %v3904, %v3906
        %v3941 = vadd.f32 %v3549, %v3907
        %v3942 = vadd.f32 %v3550, %v3908
        %v3943 = vadd.f32 %v3551, %v3909
        %v3944 = vadd.f32 %v3552, %v3910
        %v3945 = vadd.f32 %v3553, %v3911
        %v3946 = vadd.f32 %v3554, %v3912
        %v3947 = vadd.f32 %v3555, %v3913
        %v3948 = vadd.f32 %v3556, %v3914
        %v3949 = vadd.f32 %v3557, %v3888
        %v3950 = vadd.f32 %v3558, %v3915
        %v3951 = vadd.f32 %v3559, %v3916
        %v3952 = vadd.f32 %v3560, %v3917
        %v3953 = vadd.f32 %v3561, %v3918
        %v3954 = vadd.f32 %v3562, %v3919
        %v3955 = vadd.f32 %v3563, %v3920
        %v3956 = vadd.f32 %v3564, %v3921
        %v3957 = vadd.f32 %v3565, %v3922
        %v3958 = vadd.f32 %v3566, %v3906
        %3959 = vset.pattern.permute.xlu0 8
        %3960 = vperm.xlu0 %3959, %v3141
        %v3961 = vpop.permute.xlu0 %3960
        %3963 = vset.pattern.permute.xlu0 8
        %3964 = vperm.xlu0 %3963, %v3142
        %v3965 = vpop.permute.xlu0 %3964
        %v3967 = vmul.f32 %v3201, %v3961
        %v3968 = vmul.f32 %v3202, %v3961
        %v3969 = vmul.f32 %v3203, %v3961
        %v3970 = vmul.f32 %v3204, %v3961
        %v3971 = vmul.f32 %v3205, %v3961
        %v3972 = vmul.f32 %v3206, %v3961
        %v3973 = vmul.f32 %v3207, %v3961
        %v3974 = vmul.f32 %v3208, %v3961
        %v3975 = vmul.f32 %v3209, %v3961
        %v3976 = vmul.f32 %v3210, %v3965
        %v3977 = vmul.f32 %v3211, %v3965
        %v3978 = vmul.f32 %v3212, %v3965
        %v3979 = vmul.f32 %v3213, %v3965
        %v3980 = vmul.f32 %v3214, %v3965
        %v3981 = vmul.f32 %v3215, %v3965
        %v3982 = vmul.f32 %v3216, %v3965
        %v3983 = vmul.f32 %v3217, %v3965
        %v3984 = vmul.f32 %v3218, %v3965
        %4003 = vrot.lane.b32.xlu0 %v3967, 64
        %v4004 = vpop.permute.xlu0 %4003
        %4005 = vrot.lane.b32.xlu0 %v3968, 64
        %v4006 = vpop.permute.xlu0 %4005
        %4007 = vrot.lane.b32.xlu0 %v3969, 64
        %v4008 = vpop.permute.xlu0 %4007
        %4009 = vrot.lane.b32.xlu0 %v3970, 64
        %v4010 = vpop.permute.xlu0 %4009
        %4011 = vrot.lane.b32.xlu0 %v3971, 64
        %v4012 = vpop.permute.xlu0 %4011
        %4013 = vrot.lane.b32.xlu0 %v3972, 64
        %v4014 = vpop.permute.xlu0 %4013
        %4015 = vrot.lane.b32.xlu0 %v3973, 64
        %v4016 = vpop.permute.xlu0 %4015
        %4017 = vrot.lane.b32.xlu0 %v3974, 64
        %v4018 = vpop.permute.xlu0 %4017
        %4019 = vrot.lane.b32.xlu0 %v3975, 64
        %v4020 = vpop.permute.xlu0 %4019
        %4021 = vrot.lane.b32.xlu0 %v3976, 64
        %v4022 = vpop.permute.xlu0 %4021
        %4023 = vrot.lane.b32.xlu0 %v3977, 64
        %v4024 = vpop.permute.xlu0 %4023
        %4025 = vrot.lane.b32.xlu0 %v3978, 64
        %v4026 = vpop.permute.xlu0 %4025
        %4027 = vrot.lane.b32.xlu0 %v3979, 64
        %v4028 = vpop.permute.xlu0 %4027
        %4029 = vrot.lane.b32.xlu0 %v3980, 64
        %v4030 = vpop.permute.xlu0 %4029
        %4031 = vrot.lane.b32.xlu0 %v3981, 64
        %v4032 = vpop.permute.xlu0 %4031
        %4033 = vrot.lane.b32.xlu0 %v3982, 64
        %v4034 = vpop.permute.xlu0 %4033
        %4035 = vrot.lane.b32.xlu0 %v3983, 64
        %v4036 = vpop.permute.xlu0 %4035
        %4037 = vrot.lane.b32.xlu0 %v3984, 64
        %v4038 = vpop.permute.xlu0 %4037
        %v4039 = vsel %vm1744, %v4004, %v4006
        %v4040 = vsel %vm1744, %v4006, %v4008
        %v4041 = vsel %vm1744, %v4008, %v4010
        %v4042 = vsel %vm1744, %v4010, %v4012
        %v4043 = vsel %vm1744, %v4012, %v4014
        %v4044 = vsel %vm1744, %v4014, %v4016
        %v4045 = vsel %vm1744, %v4016, %v4018
        %v4046 = vsel %vm1744, %v4018, %v4020
        %v4047 = vsel %vm1744, %v4022, %v4024
        %v4048 = vsel %vm1744, %v4024, %v4026
        %v4049 = vsel %vm1744, %v4026, %v4028
        %v4050 = vsel %vm1744, %v4028, %v4030
        %v4051 = vsel %vm1744, %v4030, %v4032
        %v4052 = vsel %vm1744, %v4032, %v4034
        %v4053 = vsel %vm1744, %v4034, %v4036
        %v4054 = vsel %vm1744, %v4036, %v4038
        %v4073 = vadd.f32 %v3681, %v4039
        %v4074 = vadd.f32 %v3682, %v4040
        %v4075 = vadd.f32 %v3683, %v4041
        %v4076 = vadd.f32 %v3684, %v4042
        %v4077 = vadd.f32 %v3685, %v4043
        %v4078 = vadd.f32 %v3686, %v4044
        %v4079 = vadd.f32 %v3687, %v4045
        %v4080 = vadd.f32 %v3688, %v4046
        %v4081 = vadd.f32 %v3689, %v4020
        %v4082 = vadd.f32 %v3690, %v4047
        %v4083 = vadd.f32 %v3691, %v4048
        %v4084 = vadd.f32 %v3692, %v4049
        %v4085 = vadd.f32 %v3693, %v4050
        %v4086 = vadd.f32 %v3694, %v4051
        %v4087 = vadd.f32 %v3695, %v4052
        %v4088 = vadd.f32 %v3696, %v4053
        %v4089 = vadd.f32 %v3697, %v4054
        %v4090 = vadd.f32 %v3698, %v4038
        %v4091 = vadd.s32 %v1189, 256
        %v4092 = vadd.s32 %v1189, 384
        %v4093 = vadd.s32 %v1189, 512
        %v4094 = vadd.s32 %v1189, 640
        %v4095 = vadd.s32 %v1189, 768
        %v4096 = vadd.s32 %v1189, 896
        %v4097 = vand.u32 %v1189, 31
        %v4098 = vand.u32 %v2223, 31
        %v4099 = vand.u32 %v4091, 31
        %v4100 = vand.u32 %v4092, 31
        %v4101 = vand.u32 %v4093, 31
        %v4102 = vand.u32 %v4094, 31
        %v4103 = vand.u32 %v4095, 31
        %v4104 = vand.u32 %v4096, 31
        %vm4105 = vcmp.ne.s32.totalorder %v4097, 0
        %vm4106 = vcmp.ne.s32.totalorder %v4098, 0
        %vm4107 = vcmp.ne.s32.totalorder %v4099, 0
        %vm4108 = vcmp.ne.s32.totalorder %v4100, 0
        %vm4109 = vcmp.ne.s32.totalorder %v4101, 0
        %vm4110 = vcmp.ne.s32.totalorder %v4102, 0
        %vm4111 = vcmp.ne.s32.totalorder %v4103, 0
        %vm4112 = vcmp.ne.s32.totalorder %v4104, 0
        %v4113 = vsel %vm4105, 1.0, 0.0
        %v4114 = vsel %vm4106, 1.0, 0.0
        %v4115 = vsel %vm4107, 1.0, 0.0
        %v4116 = vsel %vm4108, 1.0, 0.0
        %v4117 = vsel %vm4109, 1.0, 0.0
        %v4118 = vsel %vm4110, 1.0, 0.0
        %v4119 = vsel %vm4111, 1.0, 0.0
        %v4120 = vsel %vm4112, 1.0, 0.0
        %vm4121 = vcmp.ne.s32.totalorder %v4097, 31
        %vm4122 = vcmp.ne.s32.totalorder %v4098, 31
        %vm4123 = vcmp.ne.s32.totalorder %v4099, 31
        %vm4124 = vcmp.ne.s32.totalorder %v4100, 31
        %vm4125 = vcmp.ne.s32.totalorder %v4101, 31
        %vm4126 = vcmp.ne.s32.totalorder %v4102, 31
        %vm4127 = vcmp.ne.s32.totalorder %v4103, 31
        %vm4128 = vcmp.ne.s32.totalorder %v4104, 31
        %v4129 = vsel %vm4121, 1.0, 0.0
        %v4130 = vsel %vm4122, 1.0, 0.0
        %v4131 = vsel %vm4123, 1.0, 0.0
        %v4132 = vsel %vm4124, 1.0, 0.0
        %v4133 = vsel %vm4125, 1.0, 0.0
        %v4134 = vsel %vm4126, 1.0, 0.0
        %v4135 = vsel %vm4127, 1.0, 0.0
        %v4136 = vsel %vm4128, 1.0, 0.0
        %v4137 = vmul.f32 %v3811, %v4113
        %v4138 = vmul.f32 %v3812, %v4114
        %v4139 = vmul.f32 %v3813, %v4115
        %v4140 = vmul.f32 %v3814, %v4116
        %v4141 = vmul.f32 %v3815, %v4117
        %v4142 = vmul.f32 %v3816, %v4118
        %v4143 = vmul.f32 %v3817, %v4119
        %v4144 = vmul.f32 %v3818, %v4120
        %v4145 = vmul.f32 %v3819, %v4113
        %v4146 = vmul.f32 %v3820, %v4114
        %v4147 = vmul.f32 %v3821, %v4115
        %v4148 = vmul.f32 %v3822, %v4116
        %v4149 = vmul.f32 %v3823, %v4117
        %v4150 = vmul.f32 %v3824, %v4118
        %v4151 = vmul.f32 %v3825, %v4119
        %v4152 = vmul.f32 %v3826, %v4120
        %4171 = vrot.lane.b32.xlu0 %v3941, 127
        %v4172 = vpop.permute.xlu0 %4171
        %4173 = vrot.lane.b32.xlu0 %v3942, 127
        %v4174 = vpop.permute.xlu0 %4173
        %4175 = vrot.lane.b32.xlu0 %v3943, 127
        %v4176 = vpop.permute.xlu0 %4175
        %4177 = vrot.lane.b32.xlu0 %v3944, 127
        %v4178 = vpop.permute.xlu0 %4177
        %4179 = vrot.lane.b32.xlu0 %v3945, 127
        %v4180 = vpop.permute.xlu0 %4179
        %4181 = vrot.lane.b32.xlu0 %v3946, 127
        %v4182 = vpop.permute.xlu0 %4181
        %4183 = vrot.lane.b32.xlu0 %v3947, 127
        %v4184 = vpop.permute.xlu0 %4183
        %4185 = vrot.lane.b32.xlu0 %v3948, 127
        %v4186 = vpop.permute.xlu0 %4185
        %4187 = vrot.lane.b32.xlu0 %v3949, 127
        %v4188 = vpop.permute.xlu0 %4187
        %4189 = vrot.lane.b32.xlu0 %v3950, 127
        %v4190 = vpop.permute.xlu0 %4189
        %4191 = vrot.lane.b32.xlu0 %v3951, 127
        %v4192 = vpop.permute.xlu0 %4191
        %4193 = vrot.lane.b32.xlu0 %v3952, 127
        %v4194 = vpop.permute.xlu0 %4193
        %4195 = vrot.lane.b32.xlu0 %v3953, 127
        %v4196 = vpop.permute.xlu0 %4195
        %4197 = vrot.lane.b32.xlu0 %v3954, 127
        %v4198 = vpop.permute.xlu0 %4197
        %4199 = vrot.lane.b32.xlu0 %v3955, 127
        %v4200 = vpop.permute.xlu0 %4199
        %4201 = vrot.lane.b32.xlu0 %v3956, 127
        %v4202 = vpop.permute.xlu0 %4201
        %4203 = vrot.lane.b32.xlu0 %v3957, 127
        %v4204 = vpop.permute.xlu0 %4203
        %4205 = vrot.lane.b32.xlu0 %v3958, 127
        %v4206 = vpop.permute.xlu0 %4205
        %v4207 = vsel %vm2256, %v4172, %v4174
        %v4208 = vsel %vm2256, %v4174, %v4176
        %v4209 = vsel %vm2256, %v4176, %v4178
        %v4210 = vsel %vm2256, %v4178, %v4180
        %v4211 = vsel %vm2256, %v4180, %v4182
        %v4212 = vsel %vm2256, %v4182, %v4184
        %v4213 = vsel %vm2256, %v4184, %v4186
        %v4214 = vsel %vm2256, %v4186, %v4188
        %v4215 = vsel %vm2256, %v4190, %v4192
        %v4216 = vsel %vm2256, %v4192, %v4194
        %v4217 = vsel %vm2256, %v4194, %v4196
        %v4218 = vsel %vm2256, %v4196, %v4198
        %v4219 = vsel %vm2256, %v4198, %v4200
        %v4220 = vsel %vm2256, %v4200, %v4202
        %v4221 = vsel %vm2256, %v4202, %v4204
        %v4222 = vsel %vm2256, %v4204, %v4206
        %v4239 = vadd.f32 %v4137, %v4207
        %v4240 = vadd.f32 %v4138, %v4208
        %v4241 = vadd.f32 %v4139, %v4209
        %v4242 = vadd.f32 %v4140, %v4210
        %v4243 = vadd.f32 %v4141, %v4211
        %v4244 = vadd.f32 %v4142, %v4212
        %v4245 = vadd.f32 %v4143, %v4213
        %v4246 = vadd.f32 %v4144, %v4214
        %v4247 = vadd.f32 %v4145, %v4215
        %v4248 = vadd.f32 %v4146, %v4216
        %v4249 = vadd.f32 %v4147, %v4217
        %v4250 = vadd.f32 %v4148, %v4218
        %v4251 = vadd.f32 %v4149, %v4219
        %v4252 = vadd.f32 %v4150, %v4220
        %v4253 = vadd.f32 %v4151, %v4221
        %v4254 = vadd.f32 %v4152, %v4222
        %4263 = vrot.lane.b32.xlu0 %v4129, 2
        %v4264 = vpop.permute.xlu0 %4263
        %4265 = vrot.lane.b32.xlu0 %v4130, 2
        %v4266 = vpop.permute.xlu0 %4265
        %4267 = vrot.lane.b32.xlu0 %v4131, 2
        %v4268 = vpop.permute.xlu0 %4267
        %4269 = vrot.lane.b32.xlu0 %v4132, 2
        %v4270 = vpop.permute.xlu0 %4269
        %4271 = vrot.lane.b32.xlu0 %v4133, 2
        %v4272 = vpop.permute.xlu0 %4271
        %4273 = vrot.lane.b32.xlu0 %v4134, 2
        %v4274 = vpop.permute.xlu0 %4273
        %4275 = vrot.lane.b32.xlu0 %v4135, 2
        %v4276 = vpop.permute.xlu0 %4275
        %4277 = vrot.lane.b32.xlu0 %v4136, 2
        %v4278 = vpop.permute.xlu0 %4277
        %v4279 = vsel %vm2275, %v4264, %v4266
        %v4280 = vsel %vm2275, %v4266, %v4268
        %v4281 = vsel %vm2275, %v4268, %v4270
        %v4282 = vsel %vm2275, %v4270, %v4272
        %v4283 = vsel %vm2275, %v4272, %v4274
        %v4284 = vsel %vm2275, %v4274, %v4276
        %v4285 = vsel %vm2275, %v4276, %v4278
        %v4295 = vmul.f32 %v4073, %v4264
        %v4296 = vmul.f32 %v4074, %v4279
        %v4297 = vmul.f32 %v4075, %v4280
        %v4298 = vmul.f32 %v4076, %v4281
        %v4299 = vmul.f32 %v4077, %v4282
        %v4300 = vmul.f32 %v4078, %v4283
        %v4301 = vmul.f32 %v4079, %v4284
        %v4302 = vmul.f32 %v4080, %v4285
        %v4303 = vmul.f32 %v4081, %v4278
        %v4304 = vmul.f32 %v4082, %v4264
        %v4305 = vmul.f32 %v4083, %v4279
        %v4306 = vmul.f32 %v4084, %v4280
        %v4307 = vmul.f32 %v4085, %v4281
        %v4308 = vmul.f32 %v4086, %v4282
        %v4309 = vmul.f32 %v4087, %v4283
        %v4310 = vmul.f32 %v4088, %v4284
        %v4311 = vmul.f32 %v4089, %v4285
        %v4312 = vmul.f32 %v4090, %v4278
        %4331 = vrot.lane.b32.xlu0 %v4295, 126
        %v4332 = vpop.permute.xlu0 %4331
        %4333 = vrot.lane.b32.xlu0 %v4296, 126
        %v4334 = vpop.permute.xlu0 %4333
        %4335 = vrot.lane.b32.xlu0 %v4297, 126
        %v4336 = vpop.permute.xlu0 %4335
        %4337 = vrot.lane.b32.xlu0 %v4298, 126
        %v4338 = vpop.permute.xlu0 %4337
        %4339 = vrot.lane.b32.xlu0 %v4299, 126
        %v4340 = vpop.permute.xlu0 %4339
        %4341 = vrot.lane.b32.xlu0 %v4300, 126
        %v4342 = vpop.permute.xlu0 %4341
        %4343 = vrot.lane.b32.xlu0 %v4301, 126
        %v4344 = vpop.permute.xlu0 %4343
        %4345 = vrot.lane.b32.xlu0 %v4302, 126
        %v4346 = vpop.permute.xlu0 %4345
        %4347 = vrot.lane.b32.xlu0 %v4303, 126
        %v4348 = vpop.permute.xlu0 %4347
        %4349 = vrot.lane.b32.xlu0 %v4304, 126
        %v4350 = vpop.permute.xlu0 %4349
        %4351 = vrot.lane.b32.xlu0 %v4305, 126
        %v4352 = vpop.permute.xlu0 %4351
        %4353 = vrot.lane.b32.xlu0 %v4306, 126
        %v4354 = vpop.permute.xlu0 %4353
        %4355 = vrot.lane.b32.xlu0 %v4307, 126
        %v4356 = vpop.permute.xlu0 %4355
        %4357 = vrot.lane.b32.xlu0 %v4308, 126
        %v4358 = vpop.permute.xlu0 %4357
        %4359 = vrot.lane.b32.xlu0 %v4309, 126
        %v4360 = vpop.permute.xlu0 %4359
        %4361 = vrot.lane.b32.xlu0 %v4310, 126
        %v4362 = vpop.permute.xlu0 %4361
        %4363 = vrot.lane.b32.xlu0 %v4311, 126
        %v4364 = vpop.permute.xlu0 %4363
        %4365 = vrot.lane.b32.xlu0 %v4312, 126
        %v4366 = vpop.permute.xlu0 %4365
        %v4367 = vsel %vm2304, %v4332, %v4334
        %v4368 = vsel %vm2304, %v4334, %v4336
        %v4369 = vsel %vm2304, %v4336, %v4338
        %v4370 = vsel %vm2304, %v4338, %v4340
        %v4371 = vsel %vm2304, %v4340, %v4342
        %v4372 = vsel %vm2304, %v4342, %v4344
        %v4373 = vsel %vm2304, %v4344, %v4346
        %v4374 = vsel %vm2304, %v4346, %v4348
        %v4375 = vsel %vm2304, %v4350, %v4352
        %v4376 = vsel %vm2304, %v4352, %v4354
        %v4377 = vsel %vm2304, %v4354, %v4356
        %v4378 = vsel %vm2304, %v4356, %v4358
        %v4379 = vsel %vm2304, %v4358, %v4360
        %v4380 = vsel %vm2304, %v4360, %v4362
        %v4381 = vsel %vm2304, %v4362, %v4364
        %v4382 = vsel %vm2304, %v4364, %v4366
        %v4399 = vadd.f32 %v4239, %v4367
        %v4400 = vadd.f32 %v4240, %v4368
        %v4401 = vadd.f32 %v4241, %v4369
        %v4402 = vadd.f32 %v4242, %v4370
        %v4403 = vadd.f32 %v4243, %v4371
        %v4404 = vadd.f32 %v4244, %v4372
        %v4405 = vadd.f32 %v4245, %v4373
        %v4406 = vadd.f32 %v4246, %v4374
        %v4407 = vadd.f32 %v4247, %v4375
        %v4408 = vadd.f32 %v4248, %v4376
        %v4409 = vadd.f32 %v4249, %v4377
        %v4410 = vadd.f32 %v4250, %v4378
        %v4411 = vadd.f32 %v4251, %v4379
        %v4412 = vadd.f32 %v4252, %v4380
        %v4413 = vadd.f32 %v4253, %v4381
        %v4414 = vadd.f32 %v4254, %v4382
        %s4415 = scalar_lea.vmem %s8, 48
        %v4416 = vld [vmem:[%s4415] sm:$0xff]
        %v4417 = vld [vmem:[%s4415 + $0x8] sm:$0xff]
        %4418 = vset.pattern.permute.xlu0 9
        %4419 = vperm.xlu0 %4418, %v3141
        %v4420 = vpop.permute.xlu0 %4419
        %4422 = vset.pattern.permute.xlu0 9
        %4423 = vperm.xlu0 %4422, %v3142
        %v4424 = vpop.permute.xlu0 %4423
        %v4427 = vsel %vm1233, %v4416, 0
        %v4430 = vsel %vm1233, %v4417, 0
        %4432 = vmatprep.subr.mxu0 %v4400
        %4433 = vmatpush1.msra.mxu0 %v4399
        %4434 = vmatprep.subr.mxu0 %v4408
        %4435 = vmatpush1.msra.mxu0 %v4407
        %4436 = vmatprep.subr.mxu0 0.0
        %4437 = vmatpush1.msra.mxu0 0.0
        %4438 = vmatprep.subr.mxu0 0.0
        %4439 = vmatpush1.msra.mxu0 0.0
        %4440 = vmatprep.subr.mxu0 0.0
        %4441 = vmatpush1.msra.mxu0 0.0
        %4442 = vmatprep.subr.mxu0 0.0
        %4443 = vmatpush1.msra.mxu0 0.0
        %4444 = vmatprep.subr.mxu0 0.0
        %4445 = vmatpush1.msra.mxu0 0.0
        %4446 = vmatprep.subr.mxu0 0.0
        %4447 = vmatpush1.msra.mxu0 0.0
        %4448 = vmatprep.subr.mxu0 0.0
        %4449 = vmatpush1.msra.mxu0 0.0
        %4450 = vmatprep.subr.mxu0 0.0
        %4451 = vmatpush1.msra.mxu0 0.0
        %4452 = vmatprep.subr.mxu0 0.0
        %4453 = vmatpush1.msra.mxu0 0.0
        %4454 = vmatprep.subr.mxu0 0.0
        %4455 = vmatpush1.msra.mxu0 0.0
        %4456 = vmatprep.subr.mxu0 0.0
        %4457 = vmatpush1.msra.mxu0 0.0
        %4458 = vmatprep.subr.mxu0 0.0
        %4459 = vmatpush1.msra.mxu0 0.0
        %4460 = vmatprep.subr.mxu0 0.0
        %4461 = vmatpush1.msra.mxu0 0.0
        %4462 = vmatprep.subr.mxu0 0.0
        %4463 = vmatpush1.msra.mxu0 0.0
        %4464 = vmatprep.subr.mxu0 0.0
        %4465 = vmatpush1.msra.mxu0 0.0
        %4466 = vmatprep.subr.mxu0 0.0
        %4467 = vmatpush1.msra.mxu0 0.0
        %4468 = vmatprep.subr.mxu0 0.0
        %4469 = vmatpush1.msra.mxu0 0.0
        %4470 = vmatprep.subr.mxu0 0.0
        %4471 = vmatpush1.msra.mxu0 0.0
        %4472 = vmatprep.subr.mxu0 0.0
        %4473 = vmatpush1.msra.mxu0 0.0
        %4474 = vmatprep.subr.mxu0 0.0
        %4475 = vmatpush1.msra.mxu0 0.0
        %4476 = vmatprep.subr.mxu0 0.0
        %4477 = vmatpush1.msra.mxu0 0.0
        %4478 = vmatprep.subr.mxu0 0.0
        %4479 = vmatpush1.msra.mxu0 0.0
        %4480 = vmatprep.subr.mxu0 0.0
        %4481 = vmatpush1.msra.mxu0 0.0
        %4482 = vmatprep.subr.mxu0 0.0
        %4483 = vmatpush1.msra.mxu0 0.0
        %4484 = vmatprep.subr.mxu0 0.0
        %4485 = vmatpush1.msra.mxu0 0.0
        %4486 = vmatprep.subr.mxu0 0.0
        %4487 = vmatpush1.msra.mxu0 0.0
        %4488 = vmatprep.subr.mxu0 0.0
        %4489 = vmatpush1.msra.mxu0 0.0
        %4490 = vmatprep.subr.mxu0 0.0
        %4491 = vmatpush1.msra.mxu0 0.0
        %4492 = vmatprep.subr.mxu0 0.0
        %4493 = vmatpush1.msra.mxu0 0.0
        %4494 = vmatprep.subr.mxu0 0.0
        %4495 = vmatpush1.msra.mxu0 0.0
        %4496 = vmatprep.mubr.f32.mxu0 0.0
        %4497 = vmatmul.mubr.f32.gmra.mrb[0].mxu0 %v4427
        %v4498 = vpop.f32.mrb[0].mxu0
        %v4499 = vadd.f32 %v4420, %v4498
        %v4500 = vpop.f32.mrb[0].mxu0
        %v4501 = vadd.f32 %v4420, %v4500
        %4502 = vmatprep.mubr.f32.mxu0 0.0
        %4503 = vmatmul.mubr.f32.gmra.mrb[0].mxu0 %v4430
        %v4504 = vpop.f32.mrb[0].mxu0
        %v4505 = vadd.f32 %v4424, %v4504
        %v4506 = vpop.f32.mrb[0].mxu0
        %v4507 = vadd.f32 %v4424, %v4506
        %4508 = vdwg.mxu0
        %4509 = vmatprep.subr.mxu0 %v4402
        %4510 = vmatpush1.msra.mxu0 %v4401
        %4511 = vmatprep.subr.mxu0 %v4410
        %4512 = vmatpush1.msra.mxu0 %v4409
        %4513 = vmatprep.subr.mxu0 0.0
        %4514 = vmatpush1.msra.mxu0 0.0
        %4515 = vmatprep.subr.mxu0 0.0
        %4516 = vmatpush1.msra.mxu0 0.0
        %4517 = vmatprep.subr.mxu0 0.0
        %4518 = vmatpush1.msra.mxu0 0.0
        %4519 = vmatprep.subr.mxu0 0.0
        %4520 = vmatpush1.msra.mxu0 0.0
        %4521 = vmatprep.subr.mxu0 0.0
        %4522 = vmatpush1.msra.mxu0 0.0
        %4523 = vmatprep.subr.mxu0 0.0
        %4524 = vmatpush1.msra.mxu0 0.0
        %4525 = vmatprep.subr.mxu0 0.0
        %4526 = vmatpush1.msra.mxu0 0.0
        %4527 = vmatprep.subr.mxu0 0.0
        %4528 = vmatpush1.msra.mxu0 0.0
        %4529 = vmatprep.subr.mxu0 0.0
        %4530 = vmatpush1.msra.mxu0 0.0
        %4531 = vmatprep.subr.mxu0 0.0
        %4532 = vmatpush1.msra.mxu0 0.0
        %4533 = vmatprep.subr.mxu0 0.0
        %4534 = vmatpush1.msra.mxu0 0.0
        %4535 = vmatprep.subr.mxu0 0.0
        %4536 = vmatpush1.msra.mxu0 0.0
        %4537 = vmatprep.subr.mxu0 0.0
        %4538 = vmatpush1.msra.mxu0 0.0
        %4539 = vmatprep.subr.mxu0 0.0
        %4540 = vmatpush1.msra.mxu0 0.0
        %4541 = vmatprep.subr.mxu0 0.0
        %4542 = vmatpush1.msra.mxu0 0.0
        %4543 = vmatprep.subr.mxu0 0.0
        %4544 = vmatpush1.msra.mxu0 0.0
        %4545 = vmatprep.subr.mxu0 0.0
        %4546 = vmatpush1.msra.mxu0 0.0
        %4547 = vmatprep.subr.mxu0 0.0
        %4548 = vmatpush1.msra.mxu0 0.0
        %4549 = vmatprep.subr.mxu0 0.0
        %4550 = vmatpush1.msra.mxu0 0.0
        %4551 = vmatprep.subr.mxu0 0.0
        %4552 = vmatpush1.msra.mxu0 0.0
        %4553 = vmatprep.subr.mxu0 0.0
        %4554 = vmatpush1.msra.mxu0 0.0
        %4555 = vmatprep.subr.mxu0 0.0
        %4556 = vmatpush1.msra.mxu0 0.0
        %4557 = vmatprep.subr.mxu0 0.0
        %4558 = vmatpush1.msra.mxu0 0.0
        %4559 = vmatprep.subr.mxu0 0.0
        %4560 = vmatpush1.msra.mxu0 0.0
        %4561 = vmatprep.subr.mxu0 0.0
        %4562 = vmatpush1.msra.mxu0 0.0
        %4563 = vmatprep.subr.mxu0 0.0
        %4564 = vmatpush1.msra.mxu0 0.0
        %4565 = vmatprep.subr.mxu0 0.0
        %4566 = vmatpush1.msra.mxu0 0.0
        %4567 = vmatprep.subr.mxu0 0.0
        %4568 = vmatpush1.msra.mxu0 0.0
        %4569 = vmatprep.subr.mxu0 0.0
        %4570 = vmatpush1.msra.mxu0 0.0
        %4571 = vmatprep.subr.mxu0 0.0
        %4572 = vmatpush1.msra.mxu0 0.0
        %4573 = vmatprep.mubr.f32.mxu0 0.0
        %4574 = vmatmul.mubr.f32.gmra.mrb[0].mxu0 %v4427
        %v4575 = vpop.f32.mrb[0].mxu0
        %v4576 = vadd.f32 %v4420, %v4575
        %v4577 = vpop.f32.mrb[0].mxu0
        %v4578 = vadd.f32 %v4420, %v4577
        %4579 = vmatprep.mubr.f32.mxu0 0.0
        %4580 = vmatmul.mubr.f32.gmra.mrb[0].mxu0 %v4430
        %v4581 = vpop.f32.mrb[0].mxu0
        %v4582 = vadd.f32 %v4424, %v4581
        %v4583 = vpop.f32.mrb[0].mxu0
        %v4584 = vadd.f32 %v4424, %v4583
        %4585 = vdwg.mxu0
        %4586 = vmatprep.subr.mxu0 %v4404
        %4587 = vmatpush1.msra.mxu0 %v4403
        %4588 = vmatprep.subr.mxu0 %v4412
        %4589 = vmatpush1.msra.mxu0 %v4411
        %4590 = vmatprep.subr.mxu0 0.0
        %4591 = vmatpush1.msra.mxu0 0.0
        %4592 = vmatprep.subr.mxu0 0.0
        %4593 = vmatpush1.msra.mxu0 0.0
        %4594 = vmatprep.subr.mxu0 0.0
        %4595 = vmatpush1.msra.mxu0 0.0
        %4596 = vmatprep.subr.mxu0 0.0
        %4597 = vmatpush1.msra.mxu0 0.0
        %4598 = vmatprep.subr.mxu0 0.0
        %4599 = vmatpush1.msra.mxu0 0.0
        %4600 = vmatprep.subr.mxu0 0.0
        %4601 = vmatpush1.msra.mxu0 0.0
        %4602 = vmatprep.subr.mxu0 0.0
        %4603 = vmatpush1.msra.mxu0 0.0
        %4604 = vmatprep.subr.mxu0 0.0
        %4605 = vmatpush1.msra.mxu0 0.0
        %4606 = vmatprep.subr.mxu0 0.0
        %4607 = vmatpush1.msra.mxu0 0.0
        %4608 = vmatprep.subr.mxu0 0.0
        %4609 = vmatpush1.msra.mxu0 0.0
        %4610 = vmatprep.subr.mxu0 0.0
        %4611 = vmatpush1.msra.mxu0 0.0
        %4612 = vmatprep.subr.mxu0 0.0
        %4613 = vmatpush1.msra.mxu0 0.0
        %4614 = vmatprep.subr.mxu0 0.0
        %4615 = vmatpush1.msra.mxu0 0.0
        %4616 = vmatprep.subr.mxu0 0.0
        %4617 = vmatpush1.msra.mxu0 0.0
        %4618 = vmatprep.subr.mxu0 0.0
        %4619 = vmatpush1.msra.mxu0 0.0
        %4620 = vmatprep.subr.mxu0 0.0
        %4621 = vmatpush1.msra.mxu0 0.0
        %4622 = vmatprep.subr.mxu0 0.0
        %4623 = vmatpush1.msra.mxu0 0.0
        %4624 = vmatprep.subr.mxu0 0.0
        %4625 = vmatpush1.msra.mxu0 0.0
        %4626 = vmatprep.subr.mxu0 0.0
        %4627 = vmatpush1.msra.mxu0 0.0
        %4628 = vmatprep.subr.mxu0 0.0
        %4629 = vmatpush1.msra.mxu0 0.0
        %4630 = vmatprep.subr.mxu0 0.0
        %4631 = vmatpush1.msra.mxu0 0.0
        %4632 = vmatprep.subr.mxu0 0.0
        %4633 = vmatpush1.msra.mxu0 0.0
        %4634 = vmatprep.subr.mxu0 0.0
        %4635 = vmatpush1.msra.mxu0 0.0
        %4636 = vmatprep.subr.mxu0 0.0
        %4637 = vmatpush1.msra.mxu0 0.0
        %4638 = vmatprep.subr.mxu0 0.0
        %4639 = vmatpush1.msra.mxu0 0.0
        %4640 = vmatprep.subr.mxu0 0.0
        %4641 = vmatpush1.msra.mxu0 0.0
        %4642 = vmatprep.subr.mxu0 0.0
        %4643 = vmatpush1.msra.mxu0 0.0
        %4644 = vmatprep.subr.mxu0 0.0
        %4645 = vmatpush1.msra.mxu0 0.0
        %4646 = vmatprep.subr.mxu0 0.0
        %4647 = vmatpush1.msra.mxu0 0.0
        %4648 = vmatprep.subr.mxu0 0.0
        %4649 = vmatpush1.msra.mxu0 0.0
        %4650 = vmatprep.mubr.f32.mxu0 0.0
        %4651 = vmatmul.mubr.f32.gmra.mrb[0].mxu0 %v4427
        %v4652 = vpop.f32.mrb[0].mxu0
        %v4653 = vadd.f32 %v4420, %v4652
        %v4654 = vpop.f32.mrb[0].mxu0
        %v4655 = vadd.f32 %v4420, %v4654
        %4656 = vmatprep.mubr.f32.mxu0 0.0
        %4657 = vmatmul.mubr.f32.gmra.mrb[0].mxu0 %v4430
        %v4658 = vpop.f32.mrb[0].mxu0
        %v4659 = vadd.f32 %v4424, %v4658
        %v4660 = vpop.f32.mrb[0].mxu0
        %v4661 = vadd.f32 %v4424, %v4660
        %4662 = vdwg.mxu0
        %4663 = vmatprep.subr.mxu0 %v4406
        %4664 = vmatpush1.msra.mxu0 %v4405
        %4665 = vmatprep.subr.mxu0 %v4414
        %4666 = vmatpush1.msra.mxu0 %v4413
        %4667 = vmatprep.subr.mxu0 0.0
        %4668 = vmatpush1.msra.mxu0 0.0
        %4669 = vmatprep.subr.mxu0 0.0
        %4670 = vmatpush1.msra.mxu0 0.0
        %4671 = vmatprep.subr.mxu0 0.0
        %4672 = vmatpush1.msra.mxu0 0.0
        %4673 = vmatprep.subr.mxu0 0.0
        %4674 = vmatpush1.msra.mxu0 0.0
        %4675 = vmatprep.subr.mxu0 0.0
        %4676 = vmatpush1.msra.mxu0 0.0
        %4677 = vmatprep.subr.mxu0 0.0
        %4678 = vmatpush1.msra.mxu0 0.0
        %4679 = vmatprep.subr.mxu0 0.0
        %4680 = vmatpush1.msra.mxu0 0.0
        %4681 = vmatprep.subr.mxu0 0.0
        %4682 = vmatpush1.msra.mxu0 0.0
        %4683 = vmatprep.subr.mxu0 0.0
        %4684 = vmatpush1.msra.mxu0 0.0
        %4685 = vmatprep.subr.mxu0 0.0
        %4686 = vmatpush1.msra.mxu0 0.0
        %4687 = vmatprep.subr.mxu0 0.0
        %4688 = vmatpush1.msra.mxu0 0.0
        %4689 = vmatprep.subr.mxu0 0.0
        %4690 = vmatpush1.msra.mxu0 0.0
        %4691 = vmatprep.subr.mxu0 0.0
        %4692 = vmatpush1.msra.mxu0 0.0
        %4693 = vmatprep.subr.mxu0 0.0
        %4694 = vmatpush1.msra.mxu0 0.0
        %4695 = vmatprep.subr.mxu0 0.0
        %4696 = vmatpush1.msra.mxu0 0.0
        %4697 = vmatprep.subr.mxu0 0.0
        %4698 = vmatpush1.msra.mxu0 0.0
        %4699 = vmatprep.subr.mxu0 0.0
        %4700 = vmatpush1.msra.mxu0 0.0
        %4701 = vmatprep.subr.mxu0 0.0
        %4702 = vmatpush1.msra.mxu0 0.0
        %4703 = vmatprep.subr.mxu0 0.0
        %4704 = vmatpush1.msra.mxu0 0.0
        %4705 = vmatprep.subr.mxu0 0.0
        %4706 = vmatpush1.msra.mxu0 0.0
        %4707 = vmatprep.subr.mxu0 0.0
        %4708 = vmatpush1.msra.mxu0 0.0
        %4709 = vmatprep.subr.mxu0 0.0
        %4710 = vmatpush1.msra.mxu0 0.0
        %4711 = vmatprep.subr.mxu0 0.0
        %4712 = vmatpush1.msra.mxu0 0.0
        %4713 = vmatprep.subr.mxu0 0.0
        %4714 = vmatpush1.msra.mxu0 0.0
        %4715 = vmatprep.subr.mxu0 0.0
        %4716 = vmatpush1.msra.mxu0 0.0
        %4717 = vmatprep.subr.mxu0 0.0
        %4718 = vmatpush1.msra.mxu0 0.0
        %4719 = vmatprep.subr.mxu0 0.0
        %4720 = vmatpush1.msra.mxu0 0.0
        %4721 = vmatprep.subr.mxu0 0.0
        %4722 = vmatpush1.msra.mxu0 0.0
        %4723 = vmatprep.subr.mxu0 0.0
        %4724 = vmatpush1.msra.mxu0 0.0
        %4725 = vmatprep.subr.mxu0 0.0
        %4726 = vmatpush1.msra.mxu0 0.0
        %4727 = vmatprep.mubr.f32.mxu0 0.0
        %4728 = vmatmul.mubr.f32.gmra.mrb[0].mxu0 %v4427
        %v4729 = vpop.f32.mrb[0].mxu0
        %v4730 = vadd.f32 %v4420, %v4729
        %v4731 = vpop.f32.mrb[0].mxu0
        %v4732 = vadd.f32 %v4420, %v4731
        %4733 = vmatprep.mubr.f32.mxu0 0.0
        %4734 = vmatmul.mubr.f32.gmra.mrb[0].mxu0 %v4430
        %v4735 = vpop.f32.mrb[0].mxu0
        %v4736 = vadd.f32 %v4424, %v4735
        %v4737 = vpop.f32.mrb[0].mxu0
        %v4738 = vadd.f32 %v4424, %v4737
        %4739 = vdwg.mxu0
        %v4740 = vmul.f32 %v4499, 0.01
        %v4741 = vmul.f32 %v4501, 0.01
        %v4742 = vmul.f32 %v4576, 0.01
        %v4743 = vmul.f32 %v4578, 0.01
        %v4744 = vmul.f32 %v4653, 0.01
        %v4745 = vmul.f32 %v4655, 0.01
        %v4746 = vmul.f32 %v4730, 0.01
        %v4747 = vmul.f32 %v4732, 0.01
        %v4748 = vmul.f32 %v4505, 0.01
        %v4749 = vmul.f32 %v4507, 0.01
        %v4750 = vmul.f32 %v4582, 0.01
        %v4751 = vmul.f32 %v4584, 0.01
        %v4752 = vmul.f32 %v4659, 0.01
        %v4753 = vmul.f32 %v4661, 0.01
        %v4754 = vmul.f32 %v4736, 0.01
        %v4755 = vmul.f32 %v4738, 0.01
        %v4756 = vmax.f32 %v4499, %v4740
        %v4757 = vmax.f32 %v4501, %v4741
        %v4758 = vmax.f32 %v4576, %v4742
        %v4759 = vmax.f32 %v4578, %v4743
        %v4760 = vmax.f32 %v4653, %v4744
        %v4761 = vmax.f32 %v4655, %v4745
        %v4762 = vmax.f32 %v4730, %v4746
        %v4763 = vmax.f32 %v4732, %v4747
        %v4764 = vmax.f32 %v4505, %v4748
        %v4765 = vmax.f32 %v4507, %v4749
        %v4766 = vmax.f32 %v4582, %v4750
        %v4767 = vmax.f32 %v4584, %v4751
        %v4768 = vmax.f32 %v4659, %v4752
        %v4769 = vmax.f32 %v4661, %v4753
        %v4770 = vmax.f32 %v4736, %v4754
        %v4771 = vmax.f32 %v4738, %v4755
        %s4772 = sld [smem:[#allocation8]]
        %v4773 = vstv %s4772
        %v4774 = vmul.f32 %v4773, %v902
        %v4775 = vmul.f32 %v4773, %v903
        %v4776 = vmul.f32 %v4773, %v904
        %v4777 = vmul.f32 %v4773, %v905
        %s4778 = sld [smem:[#allocation8 + $0x80]]
        %v4779 = vstv %s4778
        %v4780 = vmul.f32 %v4779, %v2415
        %v4781 = vmul.f32 %v4779, %v2416
        %v4782 = vmul.f32 %v4779, %v2417
        %v4783 = vmul.f32 %v4779, %v2418
        %v4784 = vadd.f32 %v4774, %v4780
        %v4785 = vadd.f32 %v4775, %v4781
        %v4786 = vadd.f32 %v4776, %v4782
        %v4787 = vadd.f32 %v4777, %v4783
        %s4788 = sld [smem:[#allocation8 + $0x100]]
        %v4789 = vld [vmem:[#allocation15] sm:$0xff]
        %v4790 = vld [vmem:[#allocation15 + $0x8] sm:$0xff]
        %v4791 = vld [vmem:[#allocation15 + $0x10] sm:$0xff]
        %v4792 = vld [vmem:[#allocation15 + $0x18] sm:$0xff]
        %v4793 = vld [vmem:[#allocation15 + $0x20] sm:$0xff]
        %v4794 = vld [vmem:[#allocation15 + $0x28] sm:$0xff]
        %v4795 = vld [vmem:[#allocation15 + $0x30] sm:$0xff]
        %v4796 = vld [vmem:[#allocation15 + $0x38] sm:$0xff]
        %v4797 = vld [vmem:[#allocation15 + $0x40] sm:$0xff]
        %v4798 = vld [vmem:[#allocation15 + $0x48] sm:$0xff]
        %v4799 = vld [vmem:[#allocation15 + $0x50] sm:$0xff]
        %v4800 = vld [vmem:[#allocation15 + $0x58] sm:$0xff]
        %v4801 = vld [vmem:[#allocation15 + $0x60] sm:$0xff]
        %v4802 = vld [vmem:[#allocation15 + $0x68] sm:$0xff]
        %v4803 = vld [vmem:[#allocation15 + $0x70] sm:$0xff]
        %v4804 = vld [vmem:[#allocation15 + $0x78] sm:$0xff]
        %v4805 = vld [vmem:[#allocation15 + $0x80] sm:$0xff]
        %v4806 = vld [vmem:[#allocation15 + $0x88] sm:$0xff]
        %v4807 = vld [vmem:[#allocation15 + $0x90] sm:$0xff]
        %v4808 = vld [vmem:[#allocation15 + $0x98] sm:$0xff]
        %v4809 = vld [vmem:[#allocation15 + $0xa0] sm:$0xff]
        %v4810 = vld [vmem:[#allocation15 + $0xa8] sm:$0xff]
        %v4811 = vld [vmem:[#allocation15 + $0xb0] sm:$0xff]
        %v4812 = vld [vmem:[#allocation15 + $0xb8] sm:$0xff]
        %v4813 = vld [vmem:[#allocation15 + $0xc0] sm:$0xff]
        %v4814 = vld [vmem:[#allocation15 + $0xc8] sm:$0xff]
        %v4815 = vld [vmem:[#allocation15 + $0xd0] sm:$0xff]
        %v4816 = vld [vmem:[#allocation15 + $0xd8] sm:$0xff]
        %v4817 = vld [vmem:[#allocation15 + $0xe0] sm:$0xff]
        %v4818 = vld [vmem:[#allocation15 + $0xe8] sm:$0xff]
        %v4819 = vld [vmem:[#allocation15 + $0xf0] sm:$0xff]
        %v4820 = vld [vmem:[#allocation15 + $0xf8] sm:$0xff]
        %v4821 = vld [vmem:[#allocation15 + $0x100] sm:$0xff]
        %v4822 = vld [vmem:[#allocation15 + $0x108] sm:$0xff]
        %v4823 = vld [vmem:[#allocation15 + $0x110] sm:$0xff]
        %v4824 = vld [vmem:[#allocation15 + $0x118] sm:$0xff]
        %v4825 = vld [vmem:[#allocation15 + $0x120] sm:$0xff]
        %v4826 = vld [vmem:[#allocation15 + $0x128] sm:$0xff]
        %v4827 = vld [vmem:[#allocation15 + $0x130] sm:$0xff]
        %v4828 = vld [vmem:[#allocation15 + $0x138] sm:$0xff]
        %v4829 = vld [vmem:[#allocation15 + $0x140] sm:$0xff]
        %v4830 = vld [vmem:[#allocation15 + $0x148] sm:$0xff]
        %v4831 = vld [vmem:[#allocation15 + $0x150] sm:$0xff]
        %v4832 = vld [vmem:[#allocation15 + $0x158] sm:$0xff]
        %v4833 = vld [vmem:[#allocation15 + $0x160] sm:$0xff]
        %v4834 = vld [vmem:[#allocation15 + $0x168] sm:$0xff]
        %v4835 = vld [vmem:[#allocation15 + $0x170] sm:$0xff]
        %v4836 = vld [vmem:[#allocation15 + $0x178] sm:$0xff]
        %v4837 = vld [vmem:[#allocation15 + $0x180] sm:$0xff]
        %v4838 = vld [vmem:[#allocation15 + $0x188] sm:$0xff]
        %v4839 = vld [vmem:[#allocation15 + $0x190] sm:$0xff]
        %v4840 = vld [vmem:[#allocation15 + $0x198] sm:$0xff]
        %v4841 = vld [vmem:[#allocation15 + $0x1a0] sm:$0xff]
        %v4842 = vld [vmem:[#allocation15 + $0x1a8] sm:$0xff]
        %v4843 = vld [vmem:[#allocation15 + $0x1b0] sm:$0xff]
        %v4844 = vld [vmem:[#allocation15 + $0x1b8] sm:$0xff]
        %v4845 = vld [vmem:[#allocation15 + $0x1c0] sm:$0xff]
        %v4846 = vld [vmem:[#allocation15 + $0x1c8] sm:$0xff]
        %v4847 = vld [vmem:[#allocation15 + $0x1d0] sm:$0xff]
        %v4848 = vld [vmem:[#allocation15 + $0x1d8] sm:$0xff]
        %v4849 = vld [vmem:[#allocation15 + $0x1e0] sm:$0xff]
        %v4850 = vld [vmem:[#allocation15 + $0x1e8] sm:$0xff]
        %v4851 = vld [vmem:[#allocation15 + $0x1f0] sm:$0xff]
        %v4852 = vld [vmem:[#allocation15 + $0x1f8] sm:$0xff]
        %v4853 = vld [vmem:[#allocation15 + $0x200] sm:$0xff]
        %v4854 = vld [vmem:[#allocation15 + $0x208] sm:$0xff]
        %v4855 = vld [vmem:[#allocation15 + $0x210] sm:$0xff]
        %v4856 = vld [vmem:[#allocation15 + $0x218] sm:$0xff]
        %v4857 = vld [vmem:[#allocation15 + $0x220] sm:$0xff]
        %v4858 = vld [vmem:[#allocation15 + $0x228] sm:$0xff]
        %v4859 = vld [vmem:[#allocation15 + $0x230] sm:$0xff]
        %v4860 = vld [vmem:[#allocation15 + $0x238] sm:$0xff]
        %v4861 = vld [vmem:[#allocation15 + $0x240] sm:$0xff]
        %v4862 = vld [vmem:[#allocation15 + $0x248] sm:$0xff]
        %v4863 = vld [vmem:[#allocation15 + $0x250] sm:$0xff]
        %v4864 = vld [vmem:[#allocation15 + $0x258] sm:$0xff]
        %v4865 = vld [vmem:[#allocation15 + $0x260] sm:$0xff]
        %v4866 = vld [vmem:[#allocation15 + $0x268] sm:$0xff]
        %v4867 = vld [vmem:[#allocation15 + $0x270] sm:$0xff]
        %v4868 = vld [vmem:[#allocation15 + $0x278] sm:$0xff]
        %v4869 = vld [vmem:[#allocation15 + $0x280] sm:$0xff]
        %v4870 = vld [vmem:[#allocation15 + $0x288] sm:$0xff]
        %v4871 = vld [vmem:[#allocation15 + $0x290] sm:$0xff]
        %v4872 = vld [vmem:[#allocation15 + $0x298] sm:$0xff]
        %v4873 = vld [vmem:[#allocation15 + $0x2a0] sm:$0xff]
        %v4874 = vld [vmem:[#allocation15 + $0x2a8] sm:$0xff]
        %v4875 = vld [vmem:[#allocation15 + $0x2b0] sm:$0xff]
        %v4876 = vld [vmem:[#allocation15 + $0x2b8] sm:$0xff]
        %v4877 = vld [vmem:[#allocation15 + $0x2c0] sm:$0xff]
        %v4878 = vld [vmem:[#allocation15 + $0x2c8] sm:$0xff]
        %v4879 = vld [vmem:[#allocation15 + $0x2d0] sm:$0xff]
        %v4880 = vld [vmem:[#allocation15 + $0x2d8] sm:$0xff]
        %v4881 = vld [vmem:[#allocation15 + $0x2e0] sm:$0xff]
        %v4882 = vld [vmem:[#allocation15 + $0x2e8] sm:$0xff]
        %v4883 = vld [vmem:[#allocation15 + $0x2f0] sm:$0xff]
        %v4884 = vld [vmem:[#allocation15 + $0x2f8] sm:$0xff]
        %v4885 = vld [vmem:[#allocation15 + $0x300] sm:$0xff]
        %v4886 = vld [vmem:[#allocation15 + $0x308] sm:$0xff]
        %v4887 = vld [vmem:[#allocation15 + $0x310] sm:$0xff]
        %v4888 = vld [vmem:[#allocation15 + $0x318] sm:$0xff]
        %v4889 = vld [vmem:[#allocation15 + $0x320] sm:$0xff]
        %v4890 = vld [vmem:[#allocation15 + $0x328] sm:$0xff]
        %v4891 = vld [vmem:[#allocation15 + $0x330] sm:$0xff]
        %v4892 = vld [vmem:[#allocation15 + $0x338] sm:$0xff]
        %v4893 = vld [vmem:[#allocation15 + $0x340] sm:$0xff]
        %v4894 = vld [vmem:[#allocation15 + $0x348] sm:$0xff]
        %v4895 = vld [vmem:[#allocation15 + $0x350] sm:$0xff]
        %v4896 = vld [vmem:[#allocation15 + $0x358] sm:$0xff]
        %v4897 = vld [vmem:[#allocation15 + $0x360] sm:$0xff]
        %v4898 = vld [vmem:[#allocation15 + $0x368] sm:$0xff]
        %v4899 = vld [vmem:[#allocation15 + $0x370] sm:$0xff]
        %v4900 = vld [vmem:[#allocation15 + $0x378] sm:$0xff]
        %v4901 = vld [vmem:[#allocation15 + $0x380] sm:$0xff]
        %v4902 = vld [vmem:[#allocation15 + $0x388] sm:$0xff]
        %v4903 = vld [vmem:[#allocation15 + $0x390] sm:$0xff]
        %v4904 = vld [vmem:[#allocation15 + $0x398] sm:$0xff]
        %v4905 = vld [vmem:[#allocation15 + $0x3a0] sm:$0xff]
        %v4906 = vld [vmem:[#allocation15 + $0x3a8] sm:$0xff]
        %v4907 = vld [vmem:[#allocation15 + $0x3b0] sm:$0xff]
        %v4908 = vld [vmem:[#allocation15 + $0x3b8] sm:$0xff]
        %v4909 = vld [vmem:[#allocation15 + $0x3c0] sm:$0xff]
        %v4910 = vld [vmem:[#allocation15 + $0x3c8] sm:$0xff]
        %v4911 = vld [vmem:[#allocation15 + $0x3d0] sm:$0xff]
        %v4912 = vld [vmem:[#allocation15 + $0x3d8] sm:$0xff]
        %v4913 = vld [vmem:[#allocation15 + $0x3e0] sm:$0xff]
        %v4914 = vld [vmem:[#allocation15 + $0x3e8] sm:$0xff]
        %v4915 = vld [vmem:[#allocation15 + $0x3f0] sm:$0xff]
        %v4916 = vld [vmem:[#allocation15 + $0x3f8] sm:$0xff]
        %v4917 = vld [vmem:[#allocation15 + $0x400] sm:$0xff]
        %v4918 = vld [vmem:[#allocation15 + $0x408] sm:$0xff]
        %v4919 = vld [vmem:[#allocation15 + $0x410] sm:$0xff]
        %v4920 = vld [vmem:[#allocation15 + $0x418] sm:$0xff]
        %v4921 = vld [vmem:[#allocation15 + $0x420] sm:$0xff]
        %v4922 = vld [vmem:[#allocation15 + $0x428] sm:$0xff]
        %v4923 = vld [vmem:[#allocation15 + $0x430] sm:$0xff]
        %v4924 = vld [vmem:[#allocation15 + $0x438] sm:$0xff]
        %v4925 = vld [vmem:[#allocation15 + $0x440] sm:$0xff]
        %v4926 = vld [vmem:[#allocation15 + $0x448] sm:$0xff]
        %v4927 = vld [vmem:[#allocation15 + $0x450] sm:$0xff]
        %v4928 = vld [vmem:[#allocation15 + $0x458] sm:$0xff]
        %v4929 = vld [vmem:[#allocation15 + $0x460] sm:$0xff]
        %v4930 = vld [vmem:[#allocation15 + $0x468] sm:$0xff]
        %v4931 = vld [vmem:[#allocation15 + $0x470] sm:$0xff]
        %v4932 = vld [vmem:[#allocation15 + $0x478] sm:$0xff]
        %v4933 = vld [vmem:[#allocation15 + $0x480] sm:$0xff]
        %v4934 = vld [vmem:[#allocation15 + $0x488] sm:$0xff]
        %v4935 = vld [vmem:[#allocation15 + $0x490] sm:$0xff]
        %v4936 = vld [vmem:[#allocation15 + $0x498] sm:$0xff]
        %v4937 = vld [vmem:[#allocation15 + $0x4a0] sm:$0xff]
        %v4938 = vld [vmem:[#allocation15 + $0x4a8] sm:$0xff]
        %v4939 = vld [vmem:[#allocation15 + $0x4b0] sm:$0xff]
        %v4940 = vld [vmem:[#allocation15 + $0x4b8] sm:$0xff]
        %v4941 = vld [vmem:[#allocation15 + $0x4c0] sm:$0xff]
        %v4942 = vld [vmem:[#allocation15 + $0x4c8] sm:$0xff]
        %v4943 = vld [vmem:[#allocation15 + $0x4d0] sm:$0xff]
        %v4944 = vld [vmem:[#allocation15 + $0x4d8] sm:$0xff]
        %v4945 = vld [vmem:[#allocation15 + $0x4e0] sm:$0xff]
        %v4946 = vld [vmem:[#allocation15 + $0x4e8] sm:$0xff]
        %v4947 = vld [vmem:[#allocation15 + $0x4f0] sm:$0xff]
        %v4948 = vld [vmem:[#allocation15 + $0x4f8] sm:$0xff]
        %v4949 = vld [vmem:[#allocation15 + $0x500] sm:$0xff]
        %v4950 = vld [vmem:[#allocation15 + $0x508] sm:$0xff]
        %v4951 = vld [vmem:[#allocation15 + $0x510] sm:$0xff]
        %v4952 = vld [vmem:[#allocation15 + $0x518] sm:$0xff]
        %v4953 = vld [vmem:[#allocation15 + $0x520] sm:$0xff]
        %v4954 = vld [vmem:[#allocation15 + $0x528] sm:$0xff]
        %v4955 = vld [vmem:[#allocation15 + $0x530] sm:$0xff]
        %v4956 = vld [vmem:[#allocation15 + $0x538] sm:$0xff]
        %v4957 = vld [vmem:[#allocation15 + $0x540] sm:$0xff]
        %v4958 = vld [vmem:[#allocation15 + $0x548] sm:$0xff]
        %v4959 = vld [vmem:[#allocation15 + $0x550] sm:$0xff]
        %v4960 = vld [vmem:[#allocation15 + $0x558] sm:$0xff]
        %v4961 = vld [vmem:[#allocation15 + $0x560] sm:$0xff]
        %v4962 = vld [vmem:[#allocation15 + $0x568] sm:$0xff]
        %v4963 = vld [vmem:[#allocation15 + $0x570] sm:$0xff]
        %v4964 = vld [vmem:[#allocation15 + $0x578] sm:$0xff]
        %v4965 = vld [vmem:[#allocation15 + $0x580] sm:$0xff]
        %v4966 = vld [vmem:[#allocation15 + $0x588] sm:$0xff]
        %v4967 = vld [vmem:[#allocation15 + $0x590] sm:$0xff]
        %v4968 = vld [vmem:[#allocation15 + $0x598] sm:$0xff]
        %v4969 = vld [vmem:[#allocation15 + $0x5a0] sm:$0xff]
        %v4970 = vld [vmem:[#allocation15 + $0x5a8] sm:$0xff]
        %v4971 = vld [vmem:[#allocation15 + $0x5b0] sm:$0xff]
        %v4972 = vld [vmem:[#allocation15 + $0x5b8] sm:$0xff]
        %v4973 = vld [vmem:[#allocation15 + $0x5c0] sm:$0xff]
        %v4974 = vld [vmem:[#allocation15 + $0x5c8] sm:$0xff]
        %v4975 = vld [vmem:[#allocation15 + $0x5d0] sm:$0xff]
        %v4976 = vld [vmem:[#allocation15 + $0x5d8] sm:$0xff]
        %v4977 = vld [vmem:[#allocation15 + $0x5e0] sm:$0xff]
        %v4978 = vld [vmem:[#allocation15 + $0x5e8] sm:$0xff]
        %v4979 = vld [vmem:[#allocation15 + $0x5f0] sm:$0xff]
        %v4980 = vld [vmem:[#allocation15 + $0x5f8] sm:$0xff]
        %v4981 = vld [vmem:[#allocation15 + $0x600] sm:$0xff]
        %v4982 = vld [vmem:[#allocation15 + $0x608] sm:$0xff]
        %v4983 = vld [vmem:[#allocation15 + $0x610] sm:$0xff]
        %v4984 = vld [vmem:[#allocation15 + $0x618] sm:$0xff]
        %v4985 = vld [vmem:[#allocation15 + $0x620] sm:$0xff]
        %v4986 = vld [vmem:[#allocation15 + $0x628] sm:$0xff]
        %v4987 = vld [vmem:[#allocation15 + $0x630] sm:$0xff]
        %v4988 = vld [vmem:[#allocation15 + $0x638] sm:$0xff]
        %v4989 = vld [vmem:[#allocation15 + $0x640] sm:$0xff]
        %v4990 = vld [vmem:[#allocation15 + $0x648] sm:$0xff]
        %v4991 = vld [vmem:[#allocation15 + $0x650] sm:$0xff]
        %v4992 = vld [vmem:[#allocation15 + $0x658] sm:$0xff]
        %v4993 = vld [vmem:[#allocation15 + $0x660] sm:$0xff]
        %v4994 = vld [vmem:[#allocation15 + $0x668] sm:$0xff]
        %v4995 = vld [vmem:[#allocation15 + $0x670] sm:$0xff]
        %v4996 = vld [vmem:[#allocation15 + $0x678] sm:$0xff]
        %v4997 = vld [vmem:[#allocation15 + $0x680] sm:$0xff]
        %v4998 = vld [vmem:[#allocation15 + $0x688] sm:$0xff]
        %v4999 = vld [vmem:[#allocation15 + $0x690] sm:$0xff]
        %v5000 = vld [vmem:[#allocation15 + $0x698] sm:$0xff]
        %v5001 = vld [vmem:[#allocation15 + $0x6a0] sm:$0xff]
        %v5002 = vld [vmem:[#allocation15 + $0x6a8] sm:$0xff]
        %v5003 = vld [vmem:[#allocation15 + $0x6b0] sm:$0xff]
        %v5004 = vld [vmem:[#allocation15 + $0x6b8] sm:$0xff]
        %v5005 = vld [vmem:[#allocation15 + $0x6c0] sm:$0xff]
        %v5006 = vld [vmem:[#allocation15 + $0x6c8] sm:$0xff]
        %v5007 = vld [vmem:[#allocation15 + $0x6d0] sm:$0xff]
        %v5008 = vld [vmem:[#allocation15 + $0x6d8] sm:$0xff]
        %v5009 = vld [vmem:[#allocation15 + $0x6e0] sm:$0xff]
        %v5010 = vld [vmem:[#allocation15 + $0x6e8] sm:$0xff]
        %v5011 = vld [vmem:[#allocation15 + $0x6f0] sm:$0xff]
        %v5012 = vld [vmem:[#allocation15 + $0x6f8] sm:$0xff]
        %v5013 = vld [vmem:[#allocation15 + $0x700] sm:$0xff]
        %v5014 = vld [vmem:[#allocation15 + $0x708] sm:$0xff]
        %v5015 = vld [vmem:[#allocation15 + $0x710] sm:$0xff]
        %v5016 = vld [vmem:[#allocation15 + $0x718] sm:$0xff]
        %v5017 = vld [vmem:[#allocation15 + $0x720] sm:$0xff]
        %v5018 = vld [vmem:[#allocation15 + $0x728] sm:$0xff]
        %v5019 = vld [vmem:[#allocation15 + $0x730] sm:$0xff]
        %v5020 = vld [vmem:[#allocation15 + $0x738] sm:$0xff]
        %v5021 = vld [vmem:[#allocation15 + $0x740] sm:$0xff]
        %v5022 = vld [vmem:[#allocation15 + $0x748] sm:$0xff]
        %v5023 = vld [vmem:[#allocation15 + $0x750] sm:$0xff]
        %v5024 = vld [vmem:[#allocation15 + $0x758] sm:$0xff]
        %v5025 = vld [vmem:[#allocation15 + $0x760] sm:$0xff]
        %v5026 = vld [vmem:[#allocation15 + $0x768] sm:$0xff]
        %v5027 = vld [vmem:[#allocation15 + $0x770] sm:$0xff]
        %v5028 = vld [vmem:[#allocation15 + $0x778] sm:$0xff]
        %v5029 = vld [vmem:[#allocation15 + $0x780] sm:$0xff]
        %v5030 = vld [vmem:[#allocation15 + $0x788] sm:$0xff]
        %v5031 = vld [vmem:[#allocation15 + $0x790] sm:$0xff]
        %v5032 = vld [vmem:[#allocation15 + $0x798] sm:$0xff]
        %v5033 = vld [vmem:[#allocation15 + $0x7a0] sm:$0xff]
        %v5034 = vld [vmem:[#allocation15 + $0x7a8] sm:$0xff]
        %v5035 = vld [vmem:[#allocation15 + $0x7b0] sm:$0xff]
        %v5036 = vld [vmem:[#allocation15 + $0x7b8] sm:$0xff]
        %v5037 = vld [vmem:[#allocation15 + $0x7c0] sm:$0xff]
        %v5038 = vld [vmem:[#allocation15 + $0x7c8] sm:$0xff]
        %v5039 = vld [vmem:[#allocation15 + $0x7d0] sm:$0xff]
        %v5040 = vld [vmem:[#allocation15 + $0x7d8] sm:$0xff]
        %v5041 = vld [vmem:[#allocation15 + $0x7e0] sm:$0xff]
        %v5042 = vld [vmem:[#allocation15 + $0x7e8] sm:$0xff]
        %v5043 = vld [vmem:[#allocation15 + $0x7f0] sm:$0xff]
        %v5044 = vld [vmem:[#allocation15 + $0x7f8] sm:$0xff]
        %5045 = vmatprep.subr.mxu0 %v4790
        %5046 = vmatpush1.msra.mxu0 %v4789
        %5047 = vmatprep.subr.mxu0 %v4792
        %5048 = vmatpush1.msra.mxu0 %v4791
        %5049 = vmatprep.subr.mxu0 %v4794
        %5050 = vmatpush1.msra.mxu0 %v4793
        %5051 = vmatprep.subr.mxu0 %v4796
        %5052 = vmatpush1.msra.mxu0 %v4795
        %5053 = vmatprep.subr.mxu0 %v4798
        %5054 = vmatpush1.msra.mxu0 %v4797
        %5055 = vmatprep.subr.mxu0 %v4800
        %5056 = vmatpush1.msra.mxu0 %v4799
        %5057 = vmatprep.subr.mxu0 %v4802
        %5058 = vmatpush1.msra.mxu0 %v4801
        %5059 = vmatprep.subr.mxu0 %v4804
        %5060 = vmatpush1.msra.mxu0 %v4803
        %5061 = vmatprep.subr.mxu0 %v4806
        %5062 = vmatpush1.msra.mxu0 %v4805
        %5063 = vmatprep.subr.mxu0 %v4808
        %5064 = vmatpush1.msra.mxu0 %v4807
        %5065 = vmatprep.subr.mxu0 %v4810
        %5066 = vmatpush1.msra.mxu0 %v4809
        %5067 = vmatprep.subr.mxu0 %v4812
        %5068 = vmatpush1.msra.mxu0 %v4811
        %5069 = vmatprep.subr.mxu0 %v4814
        %5070 = vmatpush1.msra.mxu0 %v4813
        %5071 = vmatprep.subr.mxu0 %v4816
        %5072 = vmatpush1.msra.mxu0 %v4815
        %5073 = vmatprep.subr.mxu0 %v4818
        %5074 = vmatpush1.msra.mxu0 %v4817
        %5075 = vmatprep.subr.mxu0 %v4820
        %5076 = vmatpush1.msra.mxu0 %v4819
        %5077 = vmatprep.subr.mxu0 %v4822
        %5078 = vmatpush1.msra.mxu0 %v4821
        %5079 = vmatprep.subr.mxu0 %v4824
        %5080 = vmatpush1.msra.mxu0 %v4823
        %5081 = vmatprep.subr.mxu0 %v4826
        %5082 = vmatpush1.msra.mxu0 %v4825
        %5083 = vmatprep.subr.mxu0 %v4828
        %5084 = vmatpush1.msra.mxu0 %v4827
        %5085 = vmatprep.subr.mxu0 %v4830
        %5086 = vmatpush1.msra.mxu0 %v4829
        %5087 = vmatprep.subr.mxu0 %v4832
        %5088 = vmatpush1.msra.mxu0 %v4831
        %5089 = vmatprep.subr.mxu0 %v4834
        %5090 = vmatpush1.msra.mxu0 %v4833
        %5091 = vmatprep.subr.mxu0 %v4836
        %5092 = vmatpush1.msra.mxu0 %v4835
        %5093 = vmatprep.subr.mxu0 %v4838
        %5094 = vmatpush1.msra.mxu0 %v4837
        %5095 = vmatprep.subr.mxu0 %v4840
        %5096 = vmatpush1.msra.mxu0 %v4839
        %5097 = vmatprep.subr.mxu0 %v4842
        %5098 = vmatpush1.msra.mxu0 %v4841
        %5099 = vmatprep.subr.mxu0 %v4844
        %5100 = vmatpush1.msra.mxu0 %v4843
        %5101 = vmatprep.subr.mxu0 %v4846
        %5102 = vmatpush1.msra.mxu0 %v4845
        %5103 = vmatprep.subr.mxu0 %v4848
        %5104 = vmatpush1.msra.mxu0 %v4847
        %5105 = vmatprep.subr.mxu0 %v4850
        %5106 = vmatpush1.msra.mxu0 %v4849
        %5107 = vmatprep.subr.mxu0 %v4852
        %5108 = vmatpush1.msra.mxu0 %v4851
        %5109 = vmatprep.mubr.f32.mxu0 %v4757
        %5110 = vmatmul.mubr.f32.gmra.mrb[0].mxu0 %v4756
        %v5111 = vpop.f32.mrb[0].mxu0
        %v5112 = vadd.f32 0.0, %v5111
        %v5113 = vpop.f32.mrb[0].mxu0
        %v5114 = vadd.f32 0.0, %v5113
        %5115 = vmatprep.mubr.f32.mxu0 %v4765
        %5116 = vmatmul.mubr.f32.gmra.mrb[0].mxu0 %v4764
        %v5117 = vpop.f32.mrb[0].mxu0
        %v5118 = vadd.f32 0.0, %v5117
        %v5119 = vpop.f32.mrb[0].mxu0
        %v5120 = vadd.f32 0.0, %v5119
        %5121 = vdwg.mxu0
        %5122 = vmatprep.subr.mxu0 %v4854
        %5123 = vmatpush1.msra.mxu0 %v4853
        %5124 = vmatprep.subr.mxu0 %v4856
        %5125 = vmatpush1.msra.mxu0 %v4855
        %5126 = vmatprep.subr.mxu0 %v4858
        %5127 = vmatpush1.msra.mxu0 %v4857
        %5128 = vmatprep.subr.mxu0 %v4860
        %5129 = vmatpush1.msra.mxu0 %v4859
        %5130 = vmatprep.subr.mxu0 %v4862
        %5131 = vmatpush1.msra.mxu0 %v4861
        %5132 = vmatprep.subr.mxu0 %v4864
        %5133 = vmatpush1.msra.mxu0 %v4863
        %5134 = vmatprep.subr.mxu0 %v4866
        %5135 = vmatpush1.msra.mxu0 %v4865
        %5136 = vmatprep.subr.mxu0 %v4868
        %5137 = vmatpush1.msra.mxu0 %v4867
        %5138 = vmatprep.subr.mxu0 %v4870
        %5139 = vmatpush1.msra.mxu0 %v4869
        %5140 = vmatprep.subr.mxu0 %v4872
        %5141 = vmatpush1.msra.mxu0 %v4871
        %5142 = vmatprep.subr.mxu0 %v4874
        %5143 = vmatpush1.msra.mxu0 %v4873
        %5144 = vmatprep.subr.mxu0 %v4876
        %5145 = vmatpush1.msra.mxu0 %v4875
        %5146 = vmatprep.subr.mxu0 %v4878
        %5147 = vmatpush1.msra.mxu0 %v4877
        %5148 = vmatprep.subr.mxu0 %v4880
        %5149 = vmatpush1.msra.mxu0 %v4879
        %5150 = vmatprep.subr.mxu0 %v4882
        %5151 = vmatpush1.msra.mxu0 %v4881
        %5152 = vmatprep.subr.mxu0 %v4884
        %5153 = vmatpush1.msra.mxu0 %v4883
        %5154 = vmatprep.subr.mxu0 %v4886
        %5155 = vmatpush1.msra.mxu0 %v4885
        %5156 = vmatprep.subr.mxu0 %v4888
        %5157 = vmatpush1.msra.mxu0 %v4887
        %5158 = vmatprep.subr.mxu0 %v4890
        %5159 = vmatpush1.msra.mxu0 %v4889
        %5160 = vmatprep.subr.mxu0 %v4892
        %5161 = vmatpush1.msra.mxu0 %v4891
        %5162 = vmatprep.subr.mxu0 %v4894
        %5163 = vmatpush1.msra.mxu0 %v4893
        %5164 = vmatprep.subr.mxu0 %v4896
        %5165 = vmatpush1.msra.mxu0 %v4895
        %5166 = vmatprep.subr.mxu0 %v4898
        %5167 = vmatpush1.msra.mxu0 %v4897
        %5168 = vmatprep.subr.mxu0 %v4900
        %5169 = vmatpush1.msra.mxu0 %v4899
        %5170 = vmatprep.subr.mxu0 %v4902
        %5171 = vmatpush1.msra.mxu0 %v4901
        %5172 = vmatprep.subr.mxu0 %v4904
        %5173 = vmatpush1.msra.mxu0 %v4903
        %5174 = vmatprep.subr.mxu0 %v4906
        %5175 = vmatpush1.msra.mxu0 %v4905
        %5176 = vmatprep.subr.mxu0 %v4908
        %5177 = vmatpush1.msra.mxu0 %v4907
        %5178 = vmatprep.subr.mxu0 %v4910
        %5179 = vmatpush1.msra.mxu0 %v4909
        %5180 = vmatprep.subr.mxu0 %v4912
        %5181 = vmatpush1.msra.mxu0 %v4911
        %5182 = vmatprep.subr.mxu0 %v4914
        %5183 = vmatpush1.msra.mxu0 %v4913
        %5184 = vmatprep.subr.mxu0 %v4916
        %5185 = vmatpush1.msra.mxu0 %v4915
        %5186 = vmatprep.mubr.f32.mxu0 %v4759
        %5187 = vmatmul.mubr.f32.gmra.mrb[0].mxu0 %v4758
        %v5188 = vpop.f32.mrb[0].mxu0
        %v5189 = vadd.f32 %v5112, %v5188
        %v5190 = vpop.f32.mrb[0].mxu0
        %v5191 = vadd.f32 %v5114, %v5190
        %5192 = vmatprep.mubr.f32.mxu0 %v4767
        %5193 = vmatmul.mubr.f32.gmra.mrb[0].mxu0 %v4766
        %v5194 = vpop.f32.mrb[0].mxu0
        %v5195 = vadd.f32 %v5118, %v5194
        %v5196 = vpop.f32.mrb[0].mxu0
        %v5197 = vadd.f32 %v5120, %v5196
        %5198 = vdwg.mxu0
        %5199 = vmatprep.subr.mxu0 %v4918
        %5200 = vmatpush1.msra.mxu0 %v4917
        %5201 = vmatprep.subr.mxu0 %v4920
        %5202 = vmatpush1.msra.mxu0 %v4919
        %5203 = vmatprep.subr.mxu0 %v4922
        %5204 = vmatpush1.msra.mxu0 %v4921
        %5205 = vmatprep.subr.mxu0 %v4924
        %5206 = vmatpush1.msra.mxu0 %v4923
        %5207 = vmatprep.subr.mxu0 %v4926
        %5208 = vmatpush1.msra.mxu0 %v4925
        %5209 = vmatprep.subr.mxu0 %v4928
        %5210 = vmatpush1.msra.mxu0 %v4927
        %5211 = vmatprep.subr.mxu0 %v4930
        %5212 = vmatpush1.msra.mxu0 %v4929
        %5213 = vmatprep.subr.mxu0 %v4932
        %5214 = vmatpush1.msra.mxu0 %v4931
        %5215 = vmatprep.subr.mxu0 %v4934
        %5216 = vmatpush1.msra.mxu0 %v4933
        %5217 = vmatprep.subr.mxu0 %v4936
        %5218 = vmatpush1.msra.mxu0 %v4935
        %5219 = vmatprep.subr.mxu0 %v4938
        %5220 = vmatpush1.msra.mxu0 %v4937
        %5221 = vmatprep.subr.mxu0 %v4940
        %5222 = vmatpush1.msra.mxu0 %v4939
        %5223 = vmatprep.subr.mxu0 %v4942
        %5224 = vmatpush1.msra.mxu0 %v4941
        %5225 = vmatprep.subr.mxu0 %v4944
        %5226 = vmatpush1.msra.mxu0 %v4943
        %5227 = vmatprep.subr.mxu0 %v4946
        %5228 = vmatpush1.msra.mxu0 %v4945
        %5229 = vmatprep.subr.mxu0 %v4948
        %5230 = vmatpush1.msra.mxu0 %v4947
        %5231 = vmatprep.subr.mxu0 %v4950
        %5232 = vmatpush1.msra.mxu0 %v4949
        %5233 = vmatprep.subr.mxu0 %v4952
        %5234 = vmatpush1.msra.mxu0 %v4951
        %5235 = vmatprep.subr.mxu0 %v4954
        %5236 = vmatpush1.msra.mxu0 %v4953
        %5237 = vmatprep.subr.mxu0 %v4956
        %5238 = vmatpush1.msra.mxu0 %v4955
        %5239 = vmatprep.subr.mxu0 %v4958
        %5240 = vmatpush1.msra.mxu0 %v4957
        %5241 = vmatprep.subr.mxu0 %v4960
        %5242 = vmatpush1.msra.mxu0 %v4959
        %5243 = vmatprep.subr.mxu0 %v4962
        %5244 = vmatpush1.msra.mxu0 %v4961
        %5245 = vmatprep.subr.mxu0 %v4964
        %5246 = vmatpush1.msra.mxu0 %v4963
        %5247 = vmatprep.subr.mxu0 %v4966
        %5248 = vmatpush1.msra.mxu0 %v4965
        %5249 = vmatprep.subr.mxu0 %v4968
        %5250 = vmatpush1.msra.mxu0 %v4967
        %5251 = vmatprep.subr.mxu0 %v4970
        %5252 = vmatpush1.msra.mxu0 %v4969
        %5253 = vmatprep.subr.mxu0 %v4972
        %5254 = vmatpush1.msra.mxu0 %v4971
        %5255 = vmatprep.subr.mxu0 %v4974
        %5256 = vmatpush1.msra.mxu0 %v4973
        %5257 = vmatprep.subr.mxu0 %v4976
        %5258 = vmatpush1.msra.mxu0 %v4975
        %5259 = vmatprep.subr.mxu0 %v4978
        %5260 = vmatpush1.msra.mxu0 %v4977
        %5261 = vmatprep.subr.mxu0 %v4980
        %5262 = vmatpush1.msra.mxu0 %v4979
        %5263 = vmatprep.mubr.f32.mxu0 %v4761
        %5264 = vmatmul.mubr.f32.gmra.mrb[0].mxu0 %v4760
        %v5265 = vpop.f32.mrb[0].mxu0
        %v5266 = vadd.f32 %v5189, %v5265
        %v5267 = vpop.f32.mrb[0].mxu0
        %v5268 = vadd.f32 %v5191, %v5267
        %5269 = vmatprep.mubr.f32.mxu0 %v4769
        %5270 = vmatmul.mubr.f32.gmra.mrb[0].mxu0 %v4768
        %v5271 = vpop.f32.mrb[0].mxu0
        %v5272 = vadd.f32 %v5195, %v5271
        %v5273 = vpop.f32.mrb[0].mxu0
        %v5274 = vadd.f32 %v5197, %v5273
        %5275 = vdwg.mxu0
        %5276 = vmatprep.subr.mxu0 %v4982
        %5277 = vmatpush1.msra.mxu0 %v4981
        %5278 = vmatprep.subr.mxu0 %v4984
        %5279 = vmatpush1.msra.mxu0 %v4983
        %5280 = vmatprep.subr.mxu0 %v4986
        %5281 = vmatpush1.msra.mxu0 %v4985
        %5282 = vmatprep.subr.mxu0 %v4988
        %5283 = vmatpush1.msra.mxu0 %v4987
        %5284 = vmatprep.subr.mxu0 %v4990
        %5285 = vmatpush1.msra.mxu0 %v4989
        %5286 = vmatprep.subr.mxu0 %v4992
        %5287 = vmatpush1.msra.mxu0 %v4991
        %5288 = vmatprep.subr.mxu0 %v4994
        %5289 = vmatpush1.msra.mxu0 %v4993
        %5290 = vmatprep.subr.mxu0 %v4996
        %5291 = vmatpush1.msra.mxu0 %v4995
        %5292 = vmatprep.subr.mxu0 %v4998
        %5293 = vmatpush1.msra.mxu0 %v4997
        %5294 = vmatprep.subr.mxu0 %v5000
        %5295 = vmatpush1.msra.mxu0 %v4999
        %5296 = vmatprep.subr.mxu0 %v5002
        %5297 = vmatpush1.msra.mxu0 %v5001
        %5298 = vmatprep.subr.mxu0 %v5004
        %5299 = vmatpush1.msra.mxu0 %v5003
        %5300 = vmatprep.subr.mxu0 %v5006
        %5301 = vmatpush1.msra.mxu0 %v5005
        %5302 = vmatprep.subr.mxu0 %v5008
        %5303 = vmatpush1.msra.mxu0 %v5007
        %5304 = vmatprep.subr.mxu0 %v5010
        %5305 = vmatpush1.msra.mxu0 %v5009
        %5306 = vmatprep.subr.mxu0 %v5012
        %5307 = vmatpush1.msra.mxu0 %v5011
        %5308 = vmatprep.subr.mxu0 %v5014
        %5309 = vmatpush1.msra.mxu0 %v5013
        %5310 = vmatprep.subr.mxu0 %v5016
        %5311 = vmatpush1.msra.mxu0 %v5015
        %5312 = vmatprep.subr.mxu0 %v5018
        %5313 = vmatpush1.msra.mxu0 %v5017
        %5314 = vmatprep.subr.mxu0 %v5020
        %5315 = vmatpush1.msra.mxu0 %v5019
        %5316 = vmatprep.subr.mxu0 %v5022
        %5317 = vmatpush1.msra.mxu0 %v5021
        %5318 = vmatprep.subr.mxu0 %v5024
        %5319 = vmatpush1.msra.mxu0 %v5023
        %5320 = vmatprep.subr.mxu0 %v5026
        %5321 = vmatpush1.msra.mxu0 %v5025
        %5322 = vmatprep.subr.mxu0 %v5028
        %5323 = vmatpush1.msra.mxu0 %v5027
        %5324 = vmatprep.subr.mxu0 %v5030
        %5325 = vmatpush1.msra.mxu0 %v5029
        %5326 = vmatprep.subr.mxu0 %v5032
        %5327 = vmatpush1.msra.mxu0 %v5031
        %5328 = vmatprep.subr.mxu0 %v5034
        %5329 = vmatpush1.msra.mxu0 %v5033
        %5330 = vmatprep.subr.mxu0 %v5036
        %5331 = vmatpush1.msra.mxu0 %v5035
        %5332 = vmatprep.subr.mxu0 %v5038
        %5333 = vmatpush1.msra.mxu0 %v5037
        %5334 = vmatprep.subr.mxu0 %v5040
        %5335 = vmatpush1.msra.mxu0 %v5039
        %5336 = vmatprep.subr.mxu0 %v5042
        %5337 = vmatpush1.msra.mxu0 %v5041
        %5338 = vmatprep.subr.mxu0 %v5044
        %5339 = vmatpush1.msra.mxu0 %v5043
        %5340 = vmatprep.mubr.f32.mxu0 %v4763
        %5341 = vmatmul.mubr.f32.gmra.mrb[0].mxu0 %v4762
        %v5342 = vpop.f32.mrb[0].mxu0
        %v5343 = vadd.f32 %v5266, %v5342
        %v5344 = vpop.f32.mrb[0].mxu0
        %v5345 = vadd.f32 %v5268, %v5344
        %5346 = vmatprep.mubr.f32.mxu0 %v4771
        %5347 = vmatmul.mubr.f32.gmra.mrb[0].mxu0 %v4770
        %v5348 = vpop.f32.mrb[0].mxu0
        %v5349 = vadd.f32 %v5272, %v5348
        %v5350 = vpop.f32.mrb[0].mxu0
        %v5351 = vadd.f32 %v5274, %v5350
        %5352 = vdwg.mxu0
        %v5353 = vstv %s4788
        %v5354 = vmul.f32 %v5353, %v5343
        %v5355 = vmul.f32 %v5353, %v5345
        %v5356 = vmul.f32 %v5353, %v5349
        %v5357 = vmul.f32 %v5353, %v5351
        %v5358 = vadd.f32 %v4784, %v5354
        %v5359 = vadd.f32 %v4785, %v5355
        %v5360 = vadd.f32 %v4786, %v5356
        %v5361 = vadd.f32 %v4787, %v5357
        %5362 = vst.msk [vmem:[#allocation2] sm:$0xff] %vm1837, 0.0
        %5363 = vst.msk [vmem:[#allocation2 + $0x48] sm:$0xff] %vm1837, 0.0
        %5368 = vrot.lane.b32.xlu0 %v5358, 17
        %v5369 = vpop.permute.xlu0 %5368
        %5370 = vrot.lane.b32.xlu0 %v5359, 17
        %v5371 = vpop.permute.xlu0 %5370
        %5372 = vrot.lane.b32.xlu0 %v5360, 17
        %v5373 = vpop.permute.xlu0 %5372
        %5374 = vrot.lane.b32.xlu0 %v5361, 17
        %v5375 = vpop.permute.xlu0 %5374
        %v5376 = vsel %vm1837, %v5369, %v5371
        %v5377 = vsel %vm1837, %v5373, %v5375
        %5384 = vst.msk [vmem:[#allocation2] sm:$0xff] %vm1860, %v5369
        %5385 = vst [vmem:[#allocation2 + $0x8] sm:$0xff] %v5376
        %5386 = vst.msk [vmem:[#allocation2 + $0x10] sm:$0xff] %vm1837, %v5371
        %5387 = vst.msk [vmem:[#allocation2 + $0x48] sm:$0xff] %vm1860, %v5373
        %5388 = vst [vmem:[#allocation2 + $0x50] sm:$0xff] %v5377
        %5389 = vst.msk [vmem:[#allocation2 + $0x58] sm:$0xff] %vm1837, %v5375
        %5390 = vst.msk [vmem:[#allocation2 + $0x10] sm:$0xff] %vm1867, 0.0
        %5391 = vst.msk [vmem:[#allocation2 + $0x58] sm:$0xff] %vm1867, 0.0
        %s5392 = scalar_lea.vmem %s7, 64
        %v5393 = vld [vmem:[%s5392] sm:$0xff]
        %v5394 = vld [vmem:[%s5392 + $0x8] sm:$0xff]
        %v5395 = vld [vmem:[#allocation2] sm:$0xff]
        %v5396 = vld [vmem:[#allocation2 + $0x8] sm:$0xff]
        %v5397 = vld [vmem:[#allocation2 + $0x48] sm:$0xff]
        %v5398 = vld [vmem:[#allocation2 + $0x50] sm:$0xff]
        %5400 = vset.pattern.permute.xlu0 0
        %5401 = vperm.xlu0 %5400, %v5393
        %v5402 = vpop.permute.xlu0 %5401
        %5405 = vset.pattern.permute.xlu0 0
        %5406 = vperm.xlu0 %5405, %v5394
        %v5407 = vpop.permute.xlu0 %5406
        %v5409 = vmul.f32 %v5395, %v5402
        %v5410 = vmul.f32 %v5396, %v5402
        %v5411 = vmul.f32 %v5397, %v5407
        %v5412 = vmul.f32 %v5398, %v5407
        %v5413 = vadd.f32 %v5409, 0.0
        %v5414 = vadd.f32 %v5410, 0.0
        %v5415 = vadd.f32 %v5411, 0.0
        %v5416 = vadd.f32 %v5412, 0.0
        %v5417 = vld [vmem:[#allocation2] sm:$0xff]
        %v5418 = vld [vmem:[#allocation2 + $0x8] sm:$0xff]
        %v5419 = vld [vmem:[#allocation2 + $0x10] sm:$0xff]
        %v5420 = vld [vmem:[#allocation2 + $0x48] sm:$0xff]
        %v5421 = vld [vmem:[#allocation2 + $0x50] sm:$0xff]
        %v5422 = vld [vmem:[#allocation2 + $0x58] sm:$0xff]
        %5423 = vset.pattern.permute.xlu0 1
        %5424 = vperm.xlu0 %5423, %v5393
        %v5425 = vpop.permute.xlu0 %5424
        %5427 = vset.pattern.permute.xlu0 1
        %5428 = vperm.xlu0 %5427, %v5394
        %v5429 = vpop.permute.xlu0 %5428
        %v5431 = vmul.f32 %v5417, %v5425
        %v5432 = vmul.f32 %v5418, %v5425
        %v5433 = vmul.f32 %v5419, %v5425
        %v5434 = vmul.f32 %v5420, %v5429
        %v5435 = vmul.f32 %v5421, %v5429
        %v5436 = vmul.f32 %v5422, %v5429
        %v5437 = vadd.f32 %v5431, 0.0
        %v5438 = vadd.f32 %v5432, 0.0
        %v5439 = vadd.f32 %v5433, 0.0
        %v5440 = vadd.f32 %v5434, 0.0
        %v5441 = vadd.f32 %v5435, 0.0
        %v5442 = vadd.f32 %v5436, 0.0
        %5443 = vset.pattern.permute.xlu0 2
        %5444 = vperm.xlu0 %5443, %v5393
        %v5445 = vpop.permute.xlu0 %5444
        %5447 = vset.pattern.permute.xlu0 2
        %5448 = vperm.xlu0 %5447, %v5394
        %v5449 = vpop.permute.xlu0 %5448
        %v5451 = vmul.f32 %v5417, %v5445
        %v5452 = vmul.f32 %v5418, %v5445
        %v5453 = vmul.f32 %v5419, %v5445
        %v5454 = vmul.f32 %v5420, %v5449
        %v5455 = vmul.f32 %v5421, %v5449
        %v5456 = vmul.f32 %v5422, %v5449
        %v5457 = vadd.f32 %v5451, 0.0
        %v5458 = vadd.f32 %v5452, 0.0
        %v5459 = vadd.f32 %v5453, 0.0
        %v5460 = vadd.f32 %v5454, 0.0
        %v5461 = vadd.f32 %v5455, 0.0
        %v5462 = vadd.f32 %v5456, 0.0
        %5463 = vset.pattern.permute.xlu0 3
        %5464 = vperm.xlu0 %5463, %v5393
        %v5465 = vpop.permute.xlu0 %5464
        %5467 = vset.pattern.permute.xlu0 3
        %5468 = vperm.xlu0 %5467, %v5394
        %v5469 = vpop.permute.xlu0 %5468
        %v5471 = vmul.f32 %v5417, %v5465
        %v5472 = vmul.f32 %v5418, %v5465
        %v5473 = vmul.f32 %v5419, %v5465
        %v5474 = vmul.f32 %v5420, %v5469
        %v5475 = vmul.f32 %v5421, %v5469
        %v5476 = vmul.f32 %v5422, %v5469
        %5483 = vrot.lane.b32.xlu0 %v5471, 112
        %v5484 = vpop.permute.xlu0 %5483
        %5485 = vrot.lane.b32.xlu0 %v5472, 112
        %v5486 = vpop.permute.xlu0 %5485
        %5487 = vrot.lane.b32.xlu0 %v5473, 112
        %v5488 = vpop.permute.xlu0 %5487
        %5489 = vrot.lane.b32.xlu0 %v5474, 112
        %v5490 = vpop.permute.xlu0 %5489
        %5491 = vrot.lane.b32.xlu0 %v5475, 112
        %v5492 = vpop.permute.xlu0 %5491
        %5493 = vrot.lane.b32.xlu0 %v5476, 112
        %v5494 = vpop.permute.xlu0 %5493
        %v5495 = vsel %vm1973, %v5484, %v5486
        %v5496 = vsel %vm1973, %v5486, %v5488
        %v5497 = vsel %vm1973, %v5490, %v5492
        %v5498 = vsel %vm1973, %v5492, %v5494
        %v5503 = vadd.f32 %v5413, %v5495
        %v5504 = vadd.f32 %v5414, %v5496
        %v5505 = vadd.f32 %v5415, %v5497
        %v5506 = vadd.f32 %v5416, %v5498
        %5507 = vset.pattern.permute.xlu0 4
        %5508 = vperm.xlu0 %5507, %v5393
        %v5509 = vpop.permute.xlu0 %5508
        %5511 = vset.pattern.permute.xlu0 4
        %5512 = vperm.xlu0 %5511, %v5394
        %v5513 = vpop.permute.xlu0 %5512
        %v5515 = vmul.f32 %v5417, %v5509
        %v5516 = vmul.f32 %v5418, %v5509
        %v5517 = vmul.f32 %v5419, %v5509
        %v5518 = vmul.f32 %v5420, %v5513
        %v5519 = vmul.f32 %v5421, %v5513
        %v5520 = vmul.f32 %v5422, %v5513
        %5527 = vrot.lane.b32.xlu0 %v5515, 112
        %v5528 = vpop.permute.xlu0 %5527
        %5529 = vrot.lane.b32.xlu0 %v5516, 112
        %v5530 = vpop.permute.xlu0 %5529
        %5531 = vrot.lane.b32.xlu0 %v5517, 112
        %v5532 = vpop.permute.xlu0 %5531
        %5533 = vrot.lane.b32.xlu0 %v5518, 112
        %v5534 = vpop.permute.xlu0 %5533
        %5535 = vrot.lane.b32.xlu0 %v5519, 112
        %v5536 = vpop.permute.xlu0 %5535
        %5537 = vrot.lane.b32.xlu0 %v5520, 112
        %v5538 = vpop.permute.xlu0 %5537
        %v5539 = vsel %vm1973, %v5528, %v5530
        %v5540 = vsel %vm1973, %v5530, %v5532
        %v5541 = vsel %vm1973, %v5534, %v5536
        %v5542 = vsel %vm1973, %v5536, %v5538
        %v5549 = vadd.f32 %v5437, %v5539
        %v5550 = vadd.f32 %v5438, %v5540
        %v5551 = vadd.f32 %v5439, %v5532
        %v5552 = vadd.f32 %v5440, %v5541
        %v5553 = vadd.f32 %v5441, %v5542
        %v5554 = vadd.f32 %v5442, %v5538
        %5555 = vset.pattern.permute.xlu0 5
        %5556 = vperm.xlu0 %5555, %v5393
        %v5557 = vpop.permute.xlu0 %5556
        %5559 = vset.pattern.permute.xlu0 5
        %5560 = vperm.xlu0 %5559, %v5394
        %v5561 = vpop.permute.xlu0 %5560
        %v5563 = vmul.f32 %v5417, %v5557
        %v5564 = vmul.f32 %v5418, %v5557
        %v5565 = vmul.f32 %v5419, %v5557
        %v5566 = vmul.f32 %v5420, %v5561
        %v5567 = vmul.f32 %v5421, %v5561
        %v5568 = vmul.f32 %v5422, %v5561
        %5575 = vrot.lane.b32.xlu0 %v5563, 112
        %v5576 = vpop.permute.xlu0 %5575
        %5577 = vrot.lane.b32.xlu0 %v5564, 112
        %v5578 = vpop.permute.xlu0 %5577
        %5579 = vrot.lane.b32.xlu0 %v5565, 112
        %v5580 = vpop.permute.xlu0 %5579
        %5581 = vrot.lane.b32.xlu0 %v5566, 112
        %v5582 = vpop.permute.xlu0 %5581
        %5583 = vrot.lane.b32.xlu0 %v5567, 112
        %v5584 = vpop.permute.xlu0 %5583
        %5585 = vrot.lane.b32.xlu0 %v5568, 112
        %v5586 = vpop.permute.xlu0 %5585
        %v5587 = vsel %vm1973, %v5576, %v5578
        %v5588 = vsel %vm1973, %v5578, %v5580
        %v5589 = vsel %vm1973, %v5582, %v5584
        %v5590 = vsel %vm1973, %v5584, %v5586
        %v5597 = vadd.f32 %v5457, %v5587
        %v5598 = vadd.f32 %v5458, %v5588
        %v5599 = vadd.f32 %v5459, %v5580
        %v5600 = vadd.f32 %v5460, %v5589
        %v5601 = vadd.f32 %v5461, %v5590
        %v5602 = vadd.f32 %v5462, %v5586
        %5603 = vset.pattern.permute.xlu0 6
        %5604 = vperm.xlu0 %5603, %v5393
        %v5605 = vpop.permute.xlu0 %5604
        %5607 = vset.pattern.permute.xlu0 6
        %5608 = vperm.xlu0 %5607, %v5394
        %v5609 = vpop.permute.xlu0 %5608
        %v5611 = vmul.f32 %v5417, %v5605
        %v5612 = vmul.f32 %v5418, %v5605
        %v5613 = vmul.f32 %v5419, %v5605
        %v5614 = vmul.f32 %v5420, %v5609
        %v5615 = vmul.f32 %v5421, %v5609
        %v5616 = vmul.f32 %v5422, %v5609
        %5623 = vrot.lane.b32.xlu0 %v5611, 96
        %v5624 = vpop.permute.xlu0 %5623
        %5625 = vrot.lane.b32.xlu0 %v5612, 96
        %v5626 = vpop.permute.xlu0 %5625
        %5627 = vrot.lane.b32.xlu0 %v5613, 96
        %v5628 = vpop.permute.xlu0 %5627
        %5629 = vrot.lane.b32.xlu0 %v5614, 96
        %v5630 = vpop.permute.xlu0 %5629
        %5631 = vrot.lane.b32.xlu0 %v5615, 96
        %v5632 = vpop.permute.xlu0 %5631
        %5633 = vrot.lane.b32.xlu0 %v5616, 96
        %v5634 = vpop.permute.xlu0 %5633
        %v5635 = vsel %vm2114, %v5624, %v5626
        %v5636 = vsel %vm2114, %v5626, %v5628
        %v5637 = vsel %vm2114, %v5630, %v5632
        %v5638 = vsel %vm2114, %v5632, %v5634
        %v5643 = vadd.f32 %v5503, %v5635
        %v5644 = vadd.f32 %v5504, %v5636
        %v5645 = vadd.f32 %v5505, %v5637
        %v5646 = vadd.f32 %v5506, %v5638
        %5647 = vset.pattern.permute.xlu0 7
        %5648 = vperm.xlu0 %5647, %v5393
        %v5649 = vpop.permute.xlu0 %5648
        %5651 = vset.pattern.permute.xlu0 7
        %5652 = vperm.xlu0 %5651, %v5394
        %v5653 = vpop.permute.xlu0 %5652
        %v5655 = vmul.f32 %v5417, %v5649
        %v5656 = vmul.f32 %v5418, %v5649
        %v5657 = vmul.f32 %v5419, %v5649
        %v5658 = vmul.f32 %v5420, %v5653
        %v5659 = vmul.f32 %v5421, %v5653
        %v5660 = vmul.f32 %v5422, %v5653
        %5667 = vrot.lane.b32.xlu0 %v5655, 96
        %v5668 = vpop.permute.xlu0 %5667
        %5669 = vrot.lane.b32.xlu0 %v5656, 96
        %v5670 = vpop.permute.xlu0 %5669
        %5671 = vrot.lane.b32.xlu0 %v5657, 96
        %v5672 = vpop.permute.xlu0 %5671
        %5673 = vrot.lane.b32.xlu0 %v5658, 96
        %v5674 = vpop.permute.xlu0 %5673
        %5675 = vrot.lane.b32.xlu0 %v5659, 96
        %v5676 = vpop.permute.xlu0 %5675
        %5677 = vrot.lane.b32.xlu0 %v5660, 96
        %v5678 = vpop.permute.xlu0 %5677
        %v5679 = vsel %vm2114, %v5668, %v5670
        %v5680 = vsel %vm2114, %v5670, %v5672
        %v5681 = vsel %vm2114, %v5674, %v5676
        %v5682 = vsel %vm2114, %v5676, %v5678
        %v5689 = vadd.f32 %v5549, %v5679
        %v5690 = vadd.f32 %v5550, %v5680
        %v5691 = vadd.f32 %v5551, %v5672
        %v5692 = vadd.f32 %v5552, %v5681
        %v5693 = vadd.f32 %v5553, %v5682
        %v5694 = vadd.f32 %v5554, %v5678
        %5695 = vset.pattern.permute.xlu0 8
        %5696 = vperm.xlu0 %5695, %v5393
        %v5697 = vpop.permute.xlu0 %5696
        %5699 = vset.pattern.permute.xlu0 8
        %5700 = vperm.xlu0 %5699, %v5394
        %v5701 = vpop.permute.xlu0 %5700
        %v5703 = vmul.f32 %v5417, %v5697
        %v5704 = vmul.f32 %v5418, %v5697
        %v5705 = vmul.f32 %v5419, %v5697
        %v5706 = vmul.f32 %v5420, %v5701
        %v5707 = vmul.f32 %v5421, %v5701
        %v5708 = vmul.f32 %v5422, %v5701
        %5715 = vrot.lane.b32.xlu0 %v5703, 96
        %v5716 = vpop.permute.xlu0 %5715
        %5717 = vrot.lane.b32.xlu0 %v5704, 96
        %v5718 = vpop.permute.xlu0 %5717
        %5719 = vrot.lane.b32.xlu0 %v5705, 96
        %v5720 = vpop.permute.xlu0 %5719
        %5721 = vrot.lane.b32.xlu0 %v5706, 96
        %v5722 = vpop.permute.xlu0 %5721
        %5723 = vrot.lane.b32.xlu0 %v5707, 96
        %v5724 = vpop.permute.xlu0 %5723
        %5725 = vrot.lane.b32.xlu0 %v5708, 96
        %v5726 = vpop.permute.xlu0 %5725
        %v5727 = vsel %vm2114, %v5716, %v5718
        %v5728 = vsel %vm2114, %v5718, %v5720
        %v5729 = vsel %vm2114, %v5722, %v5724
        %v5730 = vsel %vm2114, %v5724, %v5726
        %v5737 = vadd.f32 %v5597, %v5727
        %v5738 = vadd.f32 %v5598, %v5728
        %v5739 = vadd.f32 %v5599, %v5720
        %v5740 = vadd.f32 %v5600, %v5729
        %v5741 = vadd.f32 %v5601, %v5730
        %v5742 = vadd.f32 %v5602, %v5726
        %v5743 = vmul.f32 %v5643, %v2228
        %v5744 = vmul.f32 %v5644, %v2229
        %v5745 = vmul.f32 %v5645, %v2228
        %v5746 = vmul.f32 %v5646, %v2229
        %5753 = vrot.lane.b32.xlu0 %v5689, 127
        %v5754 = vpop.permute.xlu0 %5753
        %5755 = vrot.lane.b32.xlu0 %v5690, 127
        %v5756 = vpop.permute.xlu0 %5755
        %5757 = vrot.lane.b32.xlu0 %v5691, 127
        %v5758 = vpop.permute.xlu0 %5757
        %5759 = vrot.lane.b32.xlu0 %v5692, 127
        %v5760 = vpop.permute.xlu0 %5759
        %5761 = vrot.lane.b32.xlu0 %v5693, 127
        %v5762 = vpop.permute.xlu0 %5761
        %5763 = vrot.lane.b32.xlu0 %v5694, 127
        %v5764 = vpop.permute.xlu0 %5763
        %v5765 = vsel %vm2256, %v5754, %v5756
        %v5766 = vsel %vm2256, %v5756, %v5758
        %v5767 = vsel %vm2256, %v5760, %v5762
        %v5768 = vsel %vm2256, %v5762, %v5764
        %v5773 = vadd.f32 %v5743, %v5765
        %v5774 = vadd.f32 %v5744, %v5766
        %v5775 = vadd.f32 %v5745, %v5767
        %v5776 = vadd.f32 %v5746, %v5768
        %v5777 = vmul.f32 %v5737, %v2272
        %v5778 = vmul.f32 %v5738, %v2276
        %v5779 = vmul.f32 %v5739, %v2274
        %v5780 = vmul.f32 %v5740, %v2272
        %v5781 = vmul.f32 %v5741, %v2276
        %v5782 = vmul.f32 %v5742, %v2274
        %5789 = vrot.lane.b32.xlu0 %v5777, 126
        %v5790 = vpop.permute.xlu0 %5789
        %5791 = vrot.lane.b32.xlu0 %v5778, 126
        %v5792 = vpop.permute.xlu0 %5791
        %5793 = vrot.lane.b32.xlu0 %v5779, 126
        %v5794 = vpop.permute.xlu0 %5793
        %5795 = vrot.lane.b32.xlu0 %v5780, 126
        %v5796 = vpop.permute.xlu0 %5795
        %5797 = vrot.lane.b32.xlu0 %v5781, 126
        %v5798 = vpop.permute.xlu0 %5797
        %5799 = vrot.lane.b32.xlu0 %v5782, 126
        %v5800 = vpop.permute.xlu0 %5799
        %v5801 = vsel %vm2304, %v5790, %v5792
        %v5802 = vsel %vm2304, %v5792, %v5794
        %v5803 = vsel %vm2304, %v5796, %v5798
        %v5804 = vsel %vm2304, %v5798, %v5800
        %v5809 = vadd.f32 %v5773, %v5801
        %v5810 = vadd.f32 %v5774, %v5802
        %v5811 = vadd.f32 %v5775, %v5803
        %v5812 = vadd.f32 %v5776, %v5804
        %s5813 = scalar_lea.vmem %s8, 64
        %v5814 = vld [vmem:[%s5813] sm:$0xff]
        %v5815 = vld [vmem:[%s5813 + $0x8] sm:$0xff]
        %5816 = vset.pattern.permute.xlu0 9
        %5817 = vperm.xlu0 %5816, %v5393
        %v5818 = vpop.permute.xlu0 %5817
        %5820 = vset.pattern.permute.xlu0 9
        %5821 = vperm.xlu0 %5820, %v5394
        %v5822 = vpop.permute.xlu0 %5821
        %v5825 = vsel %vm1233, %v5814, 0
        %v5828 = vsel %vm1233, %v5815, 0
        %5830 = vmatprep.subr.mxu0 %v5810
        %5831 = vmatpush1.msra.mxu0 %v5809
        %5832 = vmatprep.subr.mxu0 %v5812
        %5833 = vmatpush1.msra.mxu0 %v5811
        %5834 = vmatprep.subr.mxu0 0.0
        %5835 = vmatpush1.msra.mxu0 0.0
        %5836 = vmatprep.subr.mxu0 0.0
        %5837 = vmatpush1.msra.mxu0 0.0
        %5838 = vmatprep.subr.mxu0 0.0
        %5839 = vmatpush1.msra.mxu0 0.0
        %5840 = vmatprep.subr.mxu0 0.0
        %5841 = vmatpush1.msra.mxu0 0.0
        %5842 = vmatprep.subr.mxu0 0.0
        %5843 = vmatpush1.msra.mxu0 0.0
        %5844 = vmatprep.subr.mxu0 0.0
        %5845 = vmatpush1.msra.mxu0 0.0
        %5846 = vmatprep.subr.mxu0 0.0
        %5847 = vmatpush1.msra.mxu0 0.0
        %5848 = vmatprep.subr.mxu0 0.0
        %5849 = vmatpush1.msra.mxu0 0.0
        %5850 = vmatprep.subr.mxu0 0.0
        %5851 = vmatpush1.msra.mxu0 0.0
        %5852 = vmatprep.subr.mxu0 0.0
        %5853 = vmatpush1.msra.mxu0 0.0
        %5854 = vmatprep.subr.mxu0 0.0
        %5855 = vmatpush1.msra.mxu0 0.0
        %5856 = vmatprep.subr.mxu0 0.0
        %5857 = vmatpush1.msra.mxu0 0.0
        %5858 = vmatprep.subr.mxu0 0.0
        %5859 = vmatpush1.msra.mxu0 0.0
        %5860 = vmatprep.subr.mxu0 0.0
        %5861 = vmatpush1.msra.mxu0 0.0
        %5862 = vmatprep.subr.mxu0 0.0
        %5863 = vmatpush1.msra.mxu0 0.0
        %5864 = vmatprep.subr.mxu0 0.0
        %5865 = vmatpush1.msra.mxu0 0.0
        %5866 = vmatprep.subr.mxu0 0.0
        %5867 = vmatpush1.msra.mxu0 0.0
        %5868 = vmatprep.subr.mxu0 0.0
        %5869 = vmatpush1.msra.mxu0 0.0
        %5870 = vmatprep.subr.mxu0 0.0
        %5871 = vmatpush1.msra.mxu0 0.0
        %5872 = vmatprep.subr.mxu0 0.0
        %5873 = vmatpush1.msra.mxu0 0.0
        %5874 = vmatprep.subr.mxu0 0.0
        %5875 = vmatpush1.msra.mxu0 0.0
        %5876 = vmatprep.subr.mxu0 0.0
        %5877 = vmatpush1.msra.mxu0 0.0
        %5878 = vmatprep.subr.mxu0 0.0
        %5879 = vmatpush1.msra.mxu0 0.0
        %5880 = vmatprep.subr.mxu0 0.0
        %5881 = vmatpush1.msra.mxu0 0.0
        %5882 = vmatprep.subr.mxu0 0.0
        %5883 = vmatpush1.msra.mxu0 0.0
        %5884 = vmatprep.subr.mxu0 0.0
        %5885 = vmatpush1.msra.mxu0 0.0
        %5886 = vmatprep.subr.mxu0 0.0
        %5887 = vmatpush1.msra.mxu0 0.0
        %5888 = vmatprep.subr.mxu0 0.0
        %5889 = vmatpush1.msra.mxu0 0.0
        %5890 = vmatprep.subr.mxu0 0.0
        %5891 = vmatpush1.msra.mxu0 0.0
        %5892 = vmatprep.subr.mxu0 0.0
        %5893 = vmatpush1.msra.mxu0 0.0
        %5894 = vmatprep.mubr.f32.mxu0 0.0
        %5895 = vmatmul.mubr.f32.gmra.mrb[0].mxu0 %v5825
        %v5896 = vpop.f32.mrb[0].mxu0
        %v5897 = vadd.f32 %v5818, %v5896
        %v5898 = vpop.f32.mrb[0].mxu0
        %v5899 = vadd.f32 %v5818, %v5898
        %5900 = vmatprep.mubr.f32.mxu0 0.0
        %5901 = vmatmul.mubr.f32.gmra.mrb[0].mxu0 %v5828
        %v5902 = vpop.f32.mrb[0].mxu0
        %v5903 = vadd.f32 %v5822, %v5902
        %v5904 = vpop.f32.mrb[0].mxu0
        %v5905 = vadd.f32 %v5822, %v5904
        %5906 = vdwg.mxu0
        %v5907 = vmul.f32 %v5897, 0.01
        %v5908 = vmul.f32 %v5899, 0.01
        %v5909 = vmul.f32 %v5903, 0.01
        %v5910 = vmul.f32 %v5905, 0.01
        %v5911 = vmax.f32 %v5897, %v5907
        %v5912 = vmax.f32 %v5899, %v5908
        %v5913 = vmax.f32 %v5903, %v5909
        %v5914 = vmax.f32 %v5905, %v5910
        %s5915 = sld [smem:[#allocation8 + $0x1]]
        %v5916 = vstv %s5915
        %v5917 = vmul.f32 %v5916, %v906
        %v5918 = vmul.f32 %v5916, %v907
        %s5919 = sld [smem:[#allocation8 + $0x81]]
        %v5920 = vstv %s5919
        %v5921 = vmul.f32 %v5920, %v1719
        %v5922 = vmul.f32 %v5920, %v1720
        %v5923 = vadd.f32 %v5917, %v5921
        %v5924 = vadd.f32 %v5918, %v5922
        %s5925 = sld [smem:[#allocation8 + $0x101]]
        %v5926 = vld [vmem:[%s14] sm:$0xff]
        %v5927 = vld [vmem:[%s14 + $0x8] sm:$0xff]
        %v5928 = vld [vmem:[%s14 + $0x10] sm:$0xff]
        %v5929 = vld [vmem:[%s14 + $0x18] sm:$0xff]
        %v5930 = vld [vmem:[%s14 + $0x20] sm:$0xff]
        %v5931 = vld [vmem:[%s14 + $0x28] sm:$0xff]
        %v5932 = vld [vmem:[%s14 + $0x30] sm:$0xff]
        %v5933 = vld [vmem:[%s14 + $0x38] sm:$0xff]
        %v5934 = vld [vmem:[%s14 + $0x40] sm:$0xff]
        %v5935 = vld [vmem:[%s14 + $0x48] sm:$0xff]
        %v5936 = vld [vmem:[%s14 + $0x50] sm:$0xff]
        %v5937 = vld [vmem:[%s14 + $0x58] sm:$0xff]
        %v5938 = vld [vmem:[%s14 + $0x60] sm:$0xff]
        %v5939 = vld [vmem:[%s14 + $0x68] sm:$0xff]
        %v5940 = vld [vmem:[%s14 + $0x70] sm:$0xff]
        %v5941 = vld [vmem:[%s14 + $0x78] sm:$0xff]
        %v5942 = vld [vmem:[%s14 + $0x80] sm:$0xff]
        %v5943 = vld [vmem:[%s14 + $0x88] sm:$0xff]
        %v5944 = vld [vmem:[%s14 + $0x90] sm:$0xff]
        %v5945 = vld [vmem:[%s14 + $0x98] sm:$0xff]
        %v5946 = vld [vmem:[%s14 + $0xa0] sm:$0xff]
        %v5947 = vld [vmem:[%s14 + $0xa8] sm:$0xff]
        %v5948 = vld [vmem:[%s14 + $0xb0] sm:$0xff]
        %v5949 = vld [vmem:[%s14 + $0xb8] sm:$0xff]
        %v5950 = vld [vmem:[%s14 + $0xc0] sm:$0xff]
        %v5951 = vld [vmem:[%s14 + $0xc8] sm:$0xff]
        %v5952 = vld [vmem:[%s14 + $0xd0] sm:$0xff]
        %v5953 = vld [vmem:[%s14 + $0xd8] sm:$0xff]
        %v5954 = vld [vmem:[%s14 + $0xe0] sm:$0xff]
        %v5955 = vld [vmem:[%s14 + $0xe8] sm:$0xff]
        %v5956 = vld [vmem:[%s14 + $0xf0] sm:$0xff]
        %v5957 = vld [vmem:[%s14 + $0xf8] sm:$0xff]
        %5958 = vmatprep.subr.mxu0 0.0
        %5959 = vmatpush1.msra.mxu0 %v5926
        %5960 = vmatprep.subr.mxu0 0.0
        %5961 = vmatpush1.msra.mxu0 %v5927
        %5962 = vmatprep.subr.mxu0 0.0
        %5963 = vmatpush1.msra.mxu0 %v5928
        %5964 = vmatprep.subr.mxu0 0.0
        %5965 = vmatpush1.msra.mxu0 %v5929
        %5966 = vmatprep.subr.mxu0 0.0
        %5967 = vmatpush1.msra.mxu0 %v5930
        %5968 = vmatprep.subr.mxu0 0.0
        %5969 = vmatpush1.msra.mxu0 %v5931
        %5970 = vmatprep.subr.mxu0 0.0
        %5971 = vmatpush1.msra.mxu0 %v5932
        %5972 = vmatprep.subr.mxu0 0.0
        %5973 = vmatpush1.msra.mxu0 %v5933
        %5974 = vmatprep.subr.mxu0 0.0
        %5975 = vmatpush1.msra.mxu0 %v5934
        %5976 = vmatprep.subr.mxu0 0.0
        %5977 = vmatpush1.msra.mxu0 %v5935
        %5978 = vmatprep.subr.mxu0 0.0
        %5979 = vmatpush1.msra.mxu0 %v5936
        %5980 = vmatprep.subr.mxu0 0.0
        %5981 = vmatpush1.msra.mxu0 %v5937
        %5982 = vmatprep.subr.mxu0 0.0
        %5983 = vmatpush1.msra.mxu0 %v5938
        %5984 = vmatprep.subr.mxu0 0.0
        %5985 = vmatpush1.msra.mxu0 %v5939
        %5986 = vmatprep.subr.mxu0 0.0
        %5987 = vmatpush1.msra.mxu0 %v5940
        %5988 = vmatprep.subr.mxu0 0.0
        %5989 = vmatpush1.msra.mxu0 %v5941
        %5990 = vmatprep.subr.mxu0 0.0
        %5991 = vmatpush1.msra.mxu0 %v5942
        %5992 = vmatprep.subr.mxu0 0.0
        %5993 = vmatpush1.msra.mxu0 %v5943
        %5994 = vmatprep.subr.mxu0 0.0
        %5995 = vmatpush1.msra.mxu0 %v5944
        %5996 = vmatprep.subr.mxu0 0.0
        %5997 = vmatpush1.msra.mxu0 %v5945
        %5998 = vmatprep.subr.mxu0 0.0
        %5999 = vmatpush1.msra.mxu0 %v5946
        %6000 = vmatprep.subr.mxu0 0.0
        %6001 = vmatpush1.msra.mxu0 %v5947
        %6002 = vmatprep.subr.mxu0 0.0
        %6003 = vmatpush1.msra.mxu0 %v5948
        %6004 = vmatprep.subr.mxu0 0.0
        %6005 = vmatpush1.msra.mxu0 %v5949
        %6006 = vmatprep.subr.mxu0 0.0
        %6007 = vmatpush1.msra.mxu0 %v5950
        %6008 = vmatprep.subr.mxu0 0.0
        %6009 = vmatpush1.msra.mxu0 %v5951
        %6010 = vmatprep.subr.mxu0 0.0
        %6011 = vmatpush1.msra.mxu0 %v5952
        %6012 = vmatprep.subr.mxu0 0.0
        %6013 = vmatpush1.msra.mxu0 %v5953
        %6014 = vmatprep.subr.mxu0 0.0
        %6015 = vmatpush1.msra.mxu0 %v5954
        %6016 = vmatprep.subr.mxu0 0.0
        %6017 = vmatpush1.msra.mxu0 %v5955
        %6018 = vmatprep.subr.mxu0 0.0
        %6019 = vmatpush1.msra.mxu0 %v5956
        %6020 = vmatprep.subr.mxu0 0.0
        %6021 = vmatpush1.msra.mxu0 %v5957
        %6022 = vmatprep.mubr.f32.mxu0 %v5912
        %6023 = vmatmul.mubr.f32.gmra.mrb[0].mxu0 %v5911
        %v6024 = vpop.f32.mrb[0].mxu0
        %v6025 = vadd.f32 0.0, %v6024
        %v6026 = vpop.f32.mrb[0].mxu0
        %6027 = vmatprep.mubr.f32.mxu0 %v5914
        %6028 = vmatmul.mubr.f32.gmra.mrb[0].mxu0 %v5913
        %v6029 = vpop.f32.mrb[0].mxu0
        %v6030 = vadd.f32 0.0, %v6029
        %v6031 = vpop.f32.mrb[0].mxu0
        %6032 = vdwg.mxu0
        %v6033 = vstv %s5925
        %v6034 = vmul.f32 %v6033, %v6025
        %v6035 = vmul.f32 %v6033, %v6030
        %v6036 = vadd.f32 %v5923, %v6034
        %v6037 = vadd.f32 %v5924, %v6035
        %6038 = vst.msk [vmem:[#allocation2] sm:$0xff] %vm1412, 0.0
        %6039 = vst.msk [vmem:[#allocation2 + $0x48] sm:$0xff] %vm1412, 0.0
        %6042 = vrot.lane.b32.xlu0 %v6036, 9
        %v6043 = vpop.permute.xlu0 %6042
        %6044 = vrot.lane.b32.xlu0 %v6037, 9
        %v6045 = vpop.permute.xlu0 %6044
        %6048 = vst.msk [vmem:[#allocation2] sm:$0xff] %vm1423, %v6043
        %6049 = vst.msk [vmem:[#allocation2 + $0x48] sm:$0xff] %vm1423, %v6045
        %6050 = vst.msk [vmem:[#allocation2] sm:$0xff] %vm1426, 0.0
        %6051 = vst.msk [vmem:[#allocation2 + $0x48] sm:$0xff] %vm1426, 0.0
        %s6052 = scalar_lea.vmem %s7, 80
        %v6053 = vld [vmem:[%s6052] sm:$0xff]
        %v6054 = vld [vmem:[%s6052 + $0x8] sm:$0xff]
        %v6055 = vld [vmem:[#allocation2] sm:$0xff]
        %v6056 = vld [vmem:[#allocation2 + $0x48] sm:$0xff]
        %6058 = vset.pattern.permute.xlu0 0
        %6059 = vperm.xlu0 %6058, %v6053
        %v6060 = vpop.permute.xlu0 %6059
        %6063 = vset.pattern.permute.xlu0 0
        %6064 = vperm.xlu0 %6063, %v6054
        %v6065 = vpop.permute.xlu0 %6064
        %v6067 = vmul.f32 %v6055, %v6060
        %v6068 = vmul.f32 %v6056, %v6065
        %v6069 = vadd.f32 %v6067, 0.0
        %v6070 = vadd.f32 %v6068, 0.0
        %6071 = vset.pattern.permute.xlu0 1
        %6072 = vperm.xlu0 %6071, %v6053
        %v6073 = vpop.permute.xlu0 %6072
        %6075 = vset.pattern.permute.xlu0 1
        %6076 = vperm.xlu0 %6075, %v6054
        %v6077 = vpop.permute.xlu0 %6076
        %v6079 = vmul.f32 %v6055, %v6073
        %v6080 = vmul.f32 %v6056, %v6077
        %v6081 = vadd.f32 %v6079, 0.0
        %v6082 = vadd.f32 %v6080, 0.0
        %6083 = vset.pattern.permute.xlu0 2
        %6084 = vperm.xlu0 %6083, %v6053
        %v6085 = vpop.permute.xlu0 %6084
        %6087 = vset.pattern.permute.xlu0 2
        %6088 = vperm.xlu0 %6087, %v6054
        %v6089 = vpop.permute.xlu0 %6088
        %v6091 = vmul.f32 %v6055, %v6085
        %v6092 = vmul.f32 %v6056, %v6089
        %v6093 = vadd.f32 %v6091, 0.0
        %v6094 = vadd.f32 %v6092, 0.0
        %6095 = vset.pattern.permute.xlu0 3
        %6096 = vperm.xlu0 %6095, %v6053
        %v6097 = vpop.permute.xlu0 %6096
        %6099 = vset.pattern.permute.xlu0 3
        %6100 = vperm.xlu0 %6099, %v6054
        %v6101 = vpop.permute.xlu0 %6100
        %v6103 = vmul.f32 %v6055, %v6097
        %v6104 = vmul.f32 %v6056, %v6101
        %6107 = vrot.lane.b32.xlu0 %v6103, 120
        %v6108 = vpop.permute.xlu0 %6107
        %6109 = vrot.lane.b32.xlu0 %v6104, 120
        %v6110 = vpop.permute.xlu0 %6109
        %v6113 = vadd.f32 %v6069, %v6108
        %v6114 = vadd.f32 %v6070, %v6110
        %6115 = vset.pattern.permute.xlu0 4
        %6116 = vperm.xlu0 %6115, %v6053
        %v6117 = vpop.permute.xlu0 %6116
        %6119 = vset.pattern.permute.xlu0 4
        %6120 = vperm.xlu0 %6119, %v6054
        %v6121 = vpop.permute.xlu0 %6120
        %v6123 = vmul.f32 %v6055, %v6117
        %v6124 = vmul.f32 %v6056, %v6121
        %6127 = vrot.lane.b32.xlu0 %v6123, 120
        %v6128 = vpop.permute.xlu0 %6127
        %6129 = vrot.lane.b32.xlu0 %v6124, 120
        %v6130 = vpop.permute.xlu0 %6129
        %v6133 = vadd.f32 %v6081, %v6128
        %v6134 = vadd.f32 %v6082, %v6130
        %6135 = vset.pattern.permute.xlu0 5
        %6136 = vperm.xlu0 %6135, %v6053
        %v6137 = vpop.permute.xlu0 %6136
        %6139 = vset.pattern.permute.xlu0 5
        %6140 = vperm.xlu0 %6139, %v6054
        %v6141 = vpop.permute.xlu0 %6140
        %v6143 = vmul.f32 %v6055, %v6137
        %v6144 = vmul.f32 %v6056, %v6141
        %6147 = vrot.lane.b32.xlu0 %v6143, 120
        %v6148 = vpop.permute.xlu0 %6147
        %6149 = vrot.lane.b32.xlu0 %v6144, 120
        %v6150 = vpop.permute.xlu0 %6149
        %v6153 = vadd.f32 %v6093, %v6148
        %v6154 = vadd.f32 %v6094, %v6150
        %6155 = vset.pattern.permute.xlu0 6
        %6156 = vperm.xlu0 %6155, %v6053
        %v6157 = vpop.permute.xlu0 %6156
        %6159 = vset.pattern.permute.xlu0 6
        %6160 = vperm.xlu0 %6159, %v6054
        %v6161 = vpop.permute.xlu0 %6160
        %v6163 = vmul.f32 %v6055, %v6157
        %v6164 = vmul.f32 %v6056, %v6161
        %6167 = vrot.lane.b32.xlu0 %v6163, 112
        %v6168 = vpop.permute.xlu0 %6167
        %6169 = vrot.lane.b32.xlu0 %v6164, 112
        %v6170 = vpop.permute.xlu0 %6169
        %v6173 = vadd.f32 %v6113, %v6168
        %v6174 = vadd.f32 %v6114, %v6170
        %6175 = vset.pattern.permute.xlu0 7
        %6176 = vperm.xlu0 %6175, %v6053
        %v6177 = vpop.permute.xlu0 %6176
        %6179 = vset.pattern.permute.xlu0 7
        %6180 = vperm.xlu0 %6179, %v6054
        %v6181 = vpop.permute.xlu0 %6180
        %v6183 = vmul.f32 %v6055, %v6177
        %v6184 = vmul.f32 %v6056, %v6181
        %6187 = vrot.lane.b32.xlu0 %v6183, 112
        %v6188 = vpop.permute.xlu0 %6187
        %6189 = vrot.lane.b32.xlu0 %v6184, 112
        %v6190 = vpop.permute.xlu0 %6189
        %v6193 = vadd.f32 %v6133, %v6188
        %v6194 = vadd.f32 %v6134, %v6190
        %6195 = vset.pattern.permute.xlu0 8
        %6196 = vperm.xlu0 %6195, %v6053
        %v6197 = vpop.permute.xlu0 %6196
        %6199 = vset.pattern.permute.xlu0 8
        %6200 = vperm.xlu0 %6199, %v6054
        %v6201 = vpop.permute.xlu0 %6200
        %v6203 = vmul.f32 %v6055, %v6197
        %v6204 = vmul.f32 %v6056, %v6201
        %6207 = vrot.lane.b32.xlu0 %v6203, 112
        %v6208 = vpop.permute.xlu0 %6207
        %6209 = vrot.lane.b32.xlu0 %v6204, 112
        %v6210 = vpop.permute.xlu0 %6209
        %v6213 = vadd.f32 %v6153, %v6208
        %v6214 = vadd.f32 %v6154, %v6210
        %v6215 = vmul.f32 %v6173, %v1594
        %v6216 = vmul.f32 %v6174, %v1594
        %6219 = vrot.lane.b32.xlu0 %v6193, 127
        %v6220 = vpop.permute.xlu0 %6219
        %6221 = vrot.lane.b32.xlu0 %v6194, 127
        %v6222 = vpop.permute.xlu0 %6221
        %v6225 = vadd.f32 %v6215, %v6220
        %v6226 = vadd.f32 %v6216, %v6222
        %v6227 = vmul.f32 %v6213, %v1611
        %v6228 = vmul.f32 %v6214, %v1611
        %6231 = vrot.lane.b32.xlu0 %v6227, 126
        %v6232 = vpop.permute.xlu0 %6231
        %6233 = vrot.lane.b32.xlu0 %v6228, 126
        %v6234 = vpop.permute.xlu0 %6233
        %v6237 = vadd.f32 %v6225, %v6232
        %v6238 = vadd.f32 %v6226, %v6234
        %s6239 = scalar_lea.vmem %s8, 80
        %v6240 = vld [vmem:[%s6239] sm:$0xff]
        %v6241 = vld [vmem:[%s6239 + $0x8] sm:$0xff]
        %6242 = vset.pattern.permute.xlu0 9
        %6243 = vperm.xlu0 %6242, %v6053
        %v6244 = vpop.permute.xlu0 %6243
        %6246 = vset.pattern.permute.xlu0 9
        %6247 = vperm.xlu0 %6246, %v6054
        %v6248 = vpop.permute.xlu0 %6247
        %v6251 = vsel %vm1233, %v6240, 0
        %v6254 = vsel %vm1233, %v6241, 0
        %6256 = vmatprep.subr.mxu0 0.0
        %6257 = vmatpush1.msra.mxu0 %v6237
        %6258 = vmatprep.subr.mxu0 0.0
        %6259 = vmatpush1.msra.mxu0 %v6238
        %6260 = vmatprep.subr.mxu0 0.0
        %6261 = vmatpush1.msra.mxu0 0.0
        %6262 = vmatprep.subr.mxu0 0.0
        %6263 = vmatpush1.msra.mxu0 0.0
        %6264 = vmatprep.subr.mxu0 0.0
        %6265 = vmatpush1.msra.mxu0 0.0
        %6266 = vmatprep.subr.mxu0 0.0
        %6267 = vmatpush1.msra.mxu0 0.0
        %6268 = vmatprep.subr.mxu0 0.0
        %6269 = vmatpush1.msra.mxu0 0.0
        %6270 = vmatprep.subr.mxu0 0.0
        %6271 = vmatpush1.msra.mxu0 0.0
        %6272 = vmatprep.subr.mxu0 0.0
        %6273 = vmatpush1.msra.mxu0 0.0
        %6274 = vmatprep.subr.mxu0 0.0
        %6275 = vmatpush1.msra.mxu0 0.0
        %6276 = vmatprep.subr.mxu0 0.0
        %6277 = vmatpush1.msra.mxu0 0.0
        %6278 = vmatprep.subr.mxu0 0.0
        %6279 = vmatpush1.msra.mxu0 0.0
        %6280 = vmatprep.subr.mxu0 0.0
        %6281 = vmatpush1.msra.mxu0 0.0
        %6282 = vmatprep.subr.mxu0 0.0
        %6283 = vmatpush1.msra.mxu0 0.0
        %6284 = vmatprep.subr.mxu0 0.0
        %6285 = vmatpush1.msra.mxu0 0.0
        %6286 = vmatprep.subr.mxu0 0.0
        %6287 = vmatpush1.msra.mxu0 0.0
        %6288 = vmatprep.subr.mxu0 0.0
        %6289 = vmatpush1.msra.mxu0 0.0
        %6290 = vmatprep.subr.mxu0 0.0
        %6291 = vmatpush1.msra.mxu0 0.0
        %6292 = vmatprep.subr.mxu0 0.0
        %6293 = vmatpush1.msra.mxu0 0.0
        %6294 = vmatprep.subr.mxu0 0.0
        %6295 = vmatpush1.msra.mxu0 0.0
        %6296 = vmatprep.subr.mxu0 0.0
        %6297 = vmatpush1.msra.mxu0 0.0
        %6298 = vmatprep.subr.mxu0 0.0
        %6299 = vmatpush1.msra.mxu0 0.0
        %6300 = vmatprep.subr.mxu0 0.0
        %6301 = vmatpush1.msra.mxu0 0.0
        %6302 = vmatprep.subr.mxu0 0.0
        %6303 = vmatpush1.msra.mxu0 0.0
        %6304 = vmatprep.subr.mxu0 0.0
        %6305 = vmatpush1.msra.mxu0 0.0
        %6306 = vmatprep.subr.mxu0 0.0
        %6307 = vmatpush1.msra.mxu0 0.0
        %6308 = vmatprep.subr.mxu0 0.0
        %6309 = vmatpush1.msra.mxu0 0.0
        %6310 = vmatprep.subr.mxu0 0.0
        %6311 = vmatpush1.msra.mxu0 0.0
        %6312 = vmatprep.subr.mxu0 0.0
        %6313 = vmatpush1.msra.mxu0 0.0
        %6314 = vmatprep.subr.mxu0 0.0
        %6315 = vmatpush1.msra.mxu0 0.0
        %6316 = vmatprep.subr.mxu0 0.0
        %6317 = vmatpush1.msra.mxu0 0.0
        %6318 = vmatprep.subr.mxu0 0.0
        %6319 = vmatpush1.msra.mxu0 0.0
        %6320 = vmatprep.mubr.f32.mxu0 0.0
        %6321 = vmatmul.mubr.f32.gmra.mrb[0].mxu0 %v6251
        %v6322 = vpop.f32.mrb[0].mxu0
        %v6323 = vadd.f32 %v6244, %v6322
        %v6324 = vpop.f32.mrb[0].mxu0
        %6325 = vmatprep.mubr.f32.mxu0 0.0
        %6326 = vmatmul.mubr.f32.gmra.mrb[0].mxu0 %v6254
        %v6327 = vpop.f32.mrb[0].mxu0
        %v6328 = vadd.f32 %v6248, %v6327
        %v6329 = vpop.f32.mrb[0].mxu0
        %6330 = vdwg.mxu0
        %v6331 = vmul.f32 %v6323, 0.01
        %v6332 = vmul.f32 %v6328, 0.01
        %v6333 = vmax.f32 %v6323, %v6331
        %v6334 = vmax.f32 %v6328, %v6332
        %s6335 = sld [smem:[#allocation8 + $0x2]]
        %v6336 = vstv %s6335
        %v6337 = vmul.f32 %v6336, %v908
        %v6338 = vmul.f32 %v6336, %v909
        %s6339 = sld [smem:[#allocation8 + $0x82]]
        %v6340 = vstv %s6339
        %v6341 = vmul.f32 %v6340, %v1317
        %v6342 = vmul.f32 %v6340, %v1318
        %v6343 = vadd.f32 %v6337, %v6341
        %v6344 = vadd.f32 %v6338, %v6342
        %s6345 = sld [smem:[#allocation8 + $0x102]]
        %v6346 = vld [vmem:[%s15] sm:$0xff]
        %v6347 = vld [vmem:[%s15 + $0x8] sm:$0xff]
        %v6348 = vld [vmem:[%s15 + $0x10] sm:$0xff]
        %v6349 = vld [vmem:[%s15 + $0x18] sm:$0xff]
        %v6350 = vld [vmem:[%s15 + $0x20] sm:$0xff]
        %v6351 = vld [vmem:[%s15 + $0x28] sm:$0xff]
        %v6352 = vld [vmem:[%s15 + $0x30] sm:$0xff]
        %v6353 = vld [vmem:[%s15 + $0x38] sm:$0xff]
        %v6355 = vsel %vm1744, %v6333, 0
        %v6358 = vsel %vm1744, %v6334, 0
        %6360 = vmatprep.subr.mxu0 0.0
        %6361 = vmatpush1.msra.mxu0 %v6346
        %6362 = vmatprep.subr.mxu0 0.0
        %6363 = vmatpush1.msra.mxu0 %v6347
        %6364 = vmatprep.subr.mxu0 0.0
        %6365 = vmatpush1.msra.mxu0 %v6348
        %6366 = vmatprep.subr.mxu0 0.0
        %6367 = vmatpush1.msra.mxu0 %v6349
        %6368 = vmatprep.subr.mxu0 0.0
        %6369 = vmatpush1.msra.mxu0 %v6350
        %6370 = vmatprep.subr.mxu0 0.0
        %6371 = vmatpush1.msra.mxu0 %v6351
        %6372 = vmatprep.subr.mxu0 0.0
        %6373 = vmatpush1.msra.mxu0 %v6352
        %6374 = vmatprep.subr.mxu0 0.0
        %6375 = vmatpush1.msra.mxu0 %v6353
        %6376 = vmatprep.subr.mxu0 0.0
        %6377 = vmatpush1.msra.mxu0 0.0
        %6378 = vmatprep.subr.mxu0 0.0
        %6379 = vmatpush1.msra.mxu0 0.0
        %6380 = vmatprep.subr.mxu0 0.0
        %6381 = vmatpush1.msra.mxu0 0.0
        %6382 = vmatprep.subr.mxu0 0.0
        %6383 = vmatpush1.msra.mxu0 0.0
        %6384 = vmatprep.subr.mxu0 0.0
        %6385 = vmatpush1.msra.mxu0 0.0
        %6386 = vmatprep.subr.mxu0 0.0
        %6387 = vmatpush1.msra.mxu0 0.0
        %6388 = vmatprep.subr.mxu0 0.0
        %6389 = vmatpush1.msra.mxu0 0.0
        %6390 = vmatprep.subr.mxu0 0.0
        %6391 = vmatpush1.msra.mxu0 0.0
        %6392 = vmatprep.subr.mxu0 0.0
        %6393 = vmatpush1.msra.mxu0 0.0
        %6394 = vmatprep.subr.mxu0 0.0
        %6395 = vmatpush1.msra.mxu0 0.0
        %6396 = vmatprep.subr.mxu0 0.0
        %6397 = vmatpush1.msra.mxu0 0.0
        %6398 = vmatprep.subr.mxu0 0.0
        %6399 = vmatpush1.msra.mxu0 0.0
        %6400 = vmatprep.subr.mxu0 0.0
        %6401 = vmatpush1.msra.mxu0 0.0
        %6402 = vmatprep.subr.mxu0 0.0
        %6403 = vmatpush1.msra.mxu0 0.0
        %6404 = vmatprep.subr.mxu0 0.0
        %6405 = vmatpush1.msra.mxu0 0.0
        %6406 = vmatprep.subr.mxu0 0.0
        %6407 = vmatpush1.msra.mxu0 0.0
        %6408 = vmatprep.subr.mxu0 0.0
        %6409 = vmatpush1.msra.mxu0 0.0
        %6410 = vmatprep.subr.mxu0 0.0
        %6411 = vmatpush1.msra.mxu0 0.0
        %6412 = vmatprep.subr.mxu0 0.0
        %6413 = vmatpush1.msra.mxu0 0.0
        %6414 = vmatprep.subr.mxu0 0.0
        %6415 = vmatpush1.msra.mxu0 0.0
        %6416 = vmatprep.subr.mxu0 0.0
        %6417 = vmatpush1.msra.mxu0 0.0
        %6418 = vmatprep.subr.mxu0 0.0
        %6419 = vmatpush1.msra.mxu0 0.0
        %6420 = vmatprep.subr.mxu0 0.0
        %6421 = vmatpush1.msra.mxu0 0.0
        %6422 = vmatprep.subr.mxu0 0.0
        %6423 = vmatpush1.msra.mxu0 0.0
        %6424 = vmatprep.mubr.f32.mxu0 0.0
        %6425 = vmatmul.mubr.f32.gmra.mrb[0].mxu0 %v6355
        %v6426 = vpop.f32.mrb[0].mxu0
        %v6427 = vadd.f32 0.0, %v6426
        %v6428 = vpop.f32.mrb[0].mxu0
        %6429 = vmatprep.mubr.f32.mxu0 0.0
        %6430 = vmatmul.mubr.f32.gmra.mrb[0].mxu0 %v6358
        %v6431 = vpop.f32.mrb[0].mxu0
        %v6432 = vadd.f32 0.0, %v6431
        %v6433 = vpop.f32.mrb[0].mxu0
        %6434 = vdwg.mxu0
        %v6435 = vstv %s6345
        %v6436 = vmul.f32 %v6435, %v6427
        %v6437 = vmul.f32 %v6435, %v6432
        %v6438 = vadd.f32 %v6343, %v6436
        %v6439 = vadd.f32 %v6344, %v6437
        %6440 = vst.msk [vmem:[#allocation2] sm:$0xff] %vm1009, 0.0
        %6441 = vst.msk [vmem:[#allocation2 + $0x48] sm:$0xff] %vm1009, 0.0
        %6444 = vrot.lane.b32.xlu0 %v6438, 5
        %v6445 = vpop.permute.xlu0 %6444
        %6446 = vrot.lane.b32.xlu0 %v6439, 5
        %v6447 = vpop.permute.xlu0 %6446
        %6450 = vst.msk [vmem:[#allocation2] sm:$0xff] %vm1020, %v6445
        %6451 = vst.msk [vmem:[#allocation2 + $0x48] sm:$0xff] %vm1020, %v6447
        %6452 = vst.msk [vmem:[#allocation2] sm:$0xff] %vm1023, 0.0
        %6453 = vst.msk [vmem:[#allocation2 + $0x48] sm:$0xff] %vm1023, 0.0
        %s6454 = scalar_lea.vmem %s7, 96
        %v6455 = vld [vmem:[%s6454] sm:$0xff]
        %v6456 = vld [vmem:[%s6454 + $0x8] sm:$0xff]
        %v6457 = vld [vmem:[#allocation2] sm:$0xff]
        %v6458 = vld [vmem:[#allocation2 + $0x48] sm:$0xff]
        %6460 = vset.pattern.permute.xlu0 0
        %6461 = vperm.xlu0 %6460, %v6455
        %v6462 = vpop.permute.xlu0 %6461
        %6465 = vset.pattern.permute.xlu0 0
        %6466 = vperm.xlu0 %6465, %v6456
        %v6467 = vpop.permute.xlu0 %6466
        %v6469 = vmul.f32 %v6457, %v6462
        %v6470 = vmul.f32 %v6458, %v6467
        %v6471 = vadd.f32 %v6469, 0.0
        %v6472 = vadd.f32 %v6470, 0.0
        %6473 = vset.pattern.permute.xlu0 1
        %6474 = vperm.xlu0 %6473, %v6455
        %v6475 = vpop.permute.xlu0 %6474
        %6477 = vset.pattern.permute.xlu0 1
        %6478 = vperm.xlu0 %6477, %v6456
        %v6479 = vpop.permute.xlu0 %6478
        %v6481 = vmul.f32 %v6457, %v6475
        %v6482 = vmul.f32 %v6458, %v6479
        %v6483 = vadd.f32 %v6481, 0.0
        %v6484 = vadd.f32 %v6482, 0.0
        %6485 = vset.pattern.permute.xlu0 2
        %6486 = vperm.xlu0 %6485, %v6455
        %v6487 = vpop.permute.xlu0 %6486
        %6489 = vset.pattern.permute.xlu0 2
        %6490 = vperm.xlu0 %6489, %v6456
        %v6491 = vpop.permute.xlu0 %6490
        %v6493 = vmul.f32 %v6457, %v6487
        %v6494 = vmul.f32 %v6458, %v6491
        %v6495 = vadd.f32 %v6493, 0.0
        %v6496 = vadd.f32 %v6494, 0.0
        %6497 = vset.pattern.permute.xlu0 3
        %6498 = vperm.xlu0 %6497, %v6455
        %v6499 = vpop.permute.xlu0 %6498
        %6501 = vset.pattern.permute.xlu0 3
        %6502 = vperm.xlu0 %6501, %v6456
        %v6503 = vpop.permute.xlu0 %6502
        %v6505 = vmul.f32 %v6457, %v6499
        %v6506 = vmul.f32 %v6458, %v6503
        %6509 = vrot.lane.b32.xlu0 %v6505, 124
        %v6510 = vpop.permute.xlu0 %6509
        %6511 = vrot.lane.b32.xlu0 %v6506, 124
        %v6512 = vpop.permute.xlu0 %6511
        %v6515 = vadd.f32 %v6471, %v6510
        %v6516 = vadd.f32 %v6472, %v6512
        %6517 = vset.pattern.permute.xlu0 4
        %6518 = vperm.xlu0 %6517, %v6455
        %v6519 = vpop.permute.xlu0 %6518
        %6521 = vset.pattern.permute.xlu0 4
        %6522 = vperm.xlu0 %6521, %v6456
        %v6523 = vpop.permute.xlu0 %6522
        %v6525 = vmul.f32 %v6457, %v6519
        %v6526 = vmul.f32 %v6458, %v6523
        %6529 = vrot.lane.b32.xlu0 %v6525, 124
        %v6530 = vpop.permute.xlu0 %6529
        %6531 = vrot.lane.b32.xlu0 %v6526, 124
        %v6532 = vpop.permute.xlu0 %6531
        %v6535 = vadd.f32 %v6483, %v6530
        %v6536 = vadd.f32 %v6484, %v6532
        %6537 = vset.pattern.permute.xlu0 5
        %6538 = vperm.xlu0 %6537, %v6455
        %v6539 = vpop.permute.xlu0 %6538
        %6541 = vset.pattern.permute.xlu0 5
        %6542 = vperm.xlu0 %6541, %v6456
        %v6543 = vpop.permute.xlu0 %6542
        %v6545 = vmul.f32 %v6457, %v6539
        %v6546 = vmul.f32 %v6458, %v6543
        %6549 = vrot.lane.b32.xlu0 %v6545, 124
        %v6550 = vpop.permute.xlu0 %6549
        %6551 = vrot.lane.b32.xlu0 %v6546, 124
        %v6552 = vpop.permute.xlu0 %6551
        %v6555 = vadd.f32 %v6495, %v6550
        %v6556 = vadd.f32 %v6496, %v6552
        %6557 = vset.pattern.permute.xlu0 6
        %6558 = vperm.xlu0 %6557, %v6455
        %v6559 = vpop.permute.xlu0 %6558
        %6561 = vset.pattern.permute.xlu0 6
        %6562 = vperm.xlu0 %6561, %v6456
        %v6563 = vpop.permute.xlu0 %6562
        %v6565 = vmul.f32 %v6457, %v6559
        %v6566 = vmul.f32 %v6458, %v6563
        %6569 = vrot.lane.b32.xlu0 %v6565, 120
        %v6570 = vpop.permute.xlu0 %6569
        %6571 = vrot.lane.b32.xlu0 %v6566, 120
        %v6572 = vpop.permute.xlu0 %6571
        %v6575 = vadd.f32 %v6515, %v6570
        %v6576 = vadd.f32 %v6516, %v6572
        %6577 = vset.pattern.permute.xlu0 7
        %6578 = vperm.xlu0 %6577, %v6455
        %v6579 = vpop.permute.xlu0 %6578
        %6581 = vset.pattern.permute.xlu0 7
        %6582 = vperm.xlu0 %6581, %v6456
        %v6583 = vpop.permute.xlu0 %6582
        %v6585 = vmul.f32 %v6457, %v6579
        %v6586 = vmul.f32 %v6458, %v6583
        %6589 = vrot.lane.b32.xlu0 %v6585, 120
        %v6590 = vpop.permute.xlu0 %6589
        %6591 = vrot.lane.b32.xlu0 %v6586, 120
        %v6592 = vpop.permute.xlu0 %6591
        %v6595 = vadd.f32 %v6535, %v6590
        %v6596 = vadd.f32 %v6536, %v6592
        %6597 = vset.pattern.permute.xlu0 8
        %6598 = vperm.xlu0 %6597, %v6455
        %v6599 = vpop.permute.xlu0 %6598
        %6601 = vset.pattern.permute.xlu0 8
        %6602 = vperm.xlu0 %6601, %v6456
        %v6603 = vpop.permute.xlu0 %6602
        %v6605 = vmul.f32 %v6457, %v6599
        %v6606 = vmul.f32 %v6458, %v6603
        %6609 = vrot.lane.b32.xlu0 %v6605, 120
        %v6610 = vpop.permute.xlu0 %6609
        %6611 = vrot.lane.b32.xlu0 %v6606, 120
        %v6612 = vpop.permute.xlu0 %6611
        %v6615 = vadd.f32 %v6555, %v6610
        %v6616 = vadd.f32 %v6556, %v6612
        %v6617 = vmul.f32 %v6575, %v1192
        %v6618 = vmul.f32 %v6576, %v1192
        %6621 = vrot.lane.b32.xlu0 %v6595, 127
        %v6622 = vpop.permute.xlu0 %6621
        %6623 = vrot.lane.b32.xlu0 %v6596, 127
        %v6624 = vpop.permute.xlu0 %6623
        %v6627 = vadd.f32 %v6617, %v6622
        %v6628 = vadd.f32 %v6618, %v6624
        %v6629 = vmul.f32 %v6615, %v1209
        %v6630 = vmul.f32 %v6616, %v1209
        %6633 = vrot.lane.b32.xlu0 %v6629, 126
        %v6634 = vpop.permute.xlu0 %6633
        %6635 = vrot.lane.b32.xlu0 %v6630, 126
        %v6636 = vpop.permute.xlu0 %6635
        %v6639 = vadd.f32 %v6627, %v6634
        %v6640 = vadd.f32 %v6628, %v6636
        %s6641 = scalar_lea.vmem %s8, 96
        %v6642 = vld [vmem:[%s6641] sm:$0xff]
        %v6643 = vld [vmem:[%s6641 + $0x8] sm:$0xff]
        %6644 = vset.pattern.permute.xlu0 9
        %6645 = vperm.xlu0 %6644, %v6455
        %v6646 = vpop.permute.xlu0 %6645
        %6648 = vset.pattern.permute.xlu0 9
        %6649 = vperm.xlu0 %6648, %v6456
        %v6650 = vpop.permute.xlu0 %6649
        %v6653 = vsel %vm1233, %v6642, 0
        %v6656 = vsel %vm1233, %v6643, 0
        %6658 = vmatprep.subr.mxu0 0.0
        %6659 = vmatpush1.msra.mxu0 %v6639
        %6660 = vmatprep.subr.mxu0 0.0
        %6661 = vmatpush1.msra.mxu0 %v6640
        %6662 = vmatprep.subr.mxu0 0.0
        %6663 = vmatpush1.msra.mxu0 0.0
        %6664 = vmatprep.subr.mxu0 0.0
        %6665 = vmatpush1.msra.mxu0 0.0
        %6666 = vmatprep.subr.mxu0 0.0
        %6667 = vmatpush1.msra.mxu0 0.0
        %6668 = vmatprep.subr.mxu0 0.0
        %6669 = vmatpush1.msra.mxu0 0.0
        %6670 = vmatprep.subr.mxu0 0.0
        %6671 = vmatpush1.msra.mxu0 0.0
        %6672 = vmatprep.subr.mxu0 0.0
        %6673 = vmatpush1.msra.mxu0 0.0
        %6674 = vmatprep.subr.mxu0 0.0
        %6675 = vmatpush1.msra.mxu0 0.0
        %6676 = vmatprep.subr.mxu0 0.0
        %6677 = vmatpush1.msra.mxu0 0.0
        %6678 = vmatprep.subr.mxu0 0.0
        %6679 = vmatpush1.msra.mxu0 0.0
        %6680 = vmatprep.subr.mxu0 0.0
        %6681 = vmatpush1.msra.mxu0 0.0
        %6682 = vmatprep.subr.mxu0 0.0
        %6683 = vmatpush1.msra.mxu0 0.0
        %6684 = vmatprep.subr.mxu0 0.0
        %6685 = vmatpush1.msra.mxu0 0.0
        %6686 = vmatprep.subr.mxu0 0.0
        %6687 = vmatpush1.msra.mxu0 0.0
        %6688 = vmatprep.subr.mxu0 0.0
        %6689 = vmatpush1.msra.mxu0 0.0
        %6690 = vmatprep.subr.mxu0 0.0
        %6691 = vmatpush1.msra.mxu0 0.0
        %6692 = vmatprep.subr.mxu0 0.0
        %6693 = vmatpush1.msra.mxu0 0.0
        %6694 = vmatprep.subr.mxu0 0.0
        %6695 = vmatpush1.msra.mxu0 0.0
        %6696 = vmatprep.subr.mxu0 0.0
        %6697 = vmatpush1.msra.mxu0 0.0
        %6698 = vmatprep.subr.mxu0 0.0
        %6699 = vmatpush1.msra.mxu0 0.0
        %6700 = vmatprep.subr.mxu0 0.0
        %6701 = vmatpush1.msra.mxu0 0.0
        %6702 = vmatprep.subr.mxu0 0.0
        %6703 = vmatpush1.msra.mxu0 0.0
        %6704 = vmatprep.subr.mxu0 0.0
        %6705 = vmatpush1.msra.mxu0 0.0
        %6706 = vmatprep.subr.mxu0 0.0
        %6707 = vmatpush1.msra.mxu0 0.0
        %6708 = vmatprep.subr.mxu0 0.0
        %6709 = vmatpush1.msra.mxu0 0.0
        %6710 = vmatprep.subr.mxu0 0.0
        %6711 = vmatpush1.msra.mxu0 0.0
        %6712 = vmatprep.subr.mxu0 0.0
        %6713 = vmatpush1.msra.mxu0 0.0
        %6714 = vmatprep.subr.mxu0 0.0
        %6715 = vmatpush1.msra.mxu0 0.0
        %6716 = vmatprep.subr.mxu0 0.0
        %6717 = vmatpush1.msra.mxu0 0.0
        %6718 = vmatprep.subr.mxu0 0.0
        %6719 = vmatpush1.msra.mxu0 0.0
        %6720 = vmatprep.subr.mxu0 0.0
        %6721 = vmatpush1.msra.mxu0 0.0
        %6722 = vmatprep.mubr.f32.mxu0 0.0
        %6723 = vmatmul.mubr.f32.gmra.mrb[0].mxu0 %v6653
        %v6724 = vpop.f32.mrb[0].mxu0
        %v6725 = vadd.f32 %v6646, %v6724
        %v6726 = vpop.f32.mrb[0].mxu0
        %6727 = vmatprep.mubr.f32.mxu0 0.0
        %6728 = vmatmul.mubr.f32.gmra.mrb[0].mxu0 %v6656
        %v6729 = vpop.f32.mrb[0].mxu0
        %v6730 = vadd.f32 %v6650, %v6729
        %v6731 = vpop.f32.mrb[0].mxu0
        %6732 = vdwg.mxu0
        %v6733 = vmul.f32 %v6725, 0.01
        %v6734 = vmul.f32 %v6730, 0.01
        %v6735 = vmax.f32 %v6725, %v6733
        %v6736 = vmax.f32 %v6730, %v6734
        %s6737 = sld [smem:[#allocation8 + $0x3]]
        %v6738 = vstv %s6737
        %v6739 = vmul.f32 %v6738, %v910
        %v6740 = vmul.f32 %v6738, %v911
        %s6741 = sld [smem:[#allocation8 + $0x83]]
        %v6742 = vstv %s6741
        %v6743 = vmul.f32 %v6742, %v910
        %v6744 = vmul.f32 %v6742, %v911
        %v6745 = vadd.f32 %v6739, %v6743
        %v6746 = vadd.f32 %v6740, %v6744
        %s6747 = sld [smem:[#allocation8 + $0x103]]
        %v6748 = vld [vmem:[%s16] sm:$0xff]
        %v6749 = vld [vmem:[%s16 + $0x8] sm:$0xff]
        %v6751 = vsel %vm1233, %v6735, 0
        %v6754 = vsel %vm1233, %v6736, 0
        %6756 = vmatprep.subr.mxu0 0.0
        %6757 = vmatpush1.msra.mxu0 %v6748
        %6758 = vmatprep.subr.mxu0 0.0
        %6759 = vmatpush1.msra.mxu0 %v6749
        %6760 = vmatprep.subr.mxu0 0.0
        %6761 = vmatpush1.msra.mxu0 0.0
        %6762 = vmatprep.subr.mxu0 0.0
        %6763 = vmatpush1.msra.mxu0 0.0
        %6764 = vmatprep.subr.mxu0 0.0
        %6765 = vmatpush1.msra.mxu0 0.0
        %6766 = vmatprep.subr.mxu0 0.0
        %6767 = vmatpush1.msra.mxu0 0.0
        %6768 = vmatprep.subr.mxu0 0.0
        %6769 = vmatpush1.msra.mxu0 0.0
        %6770 = vmatprep.subr.mxu0 0.0
        %6771 = vmatpush1.msra.mxu0 0.0
        %6772 = vmatprep.subr.mxu0 0.0
        %6773 = vmatpush1.msra.mxu0 0.0
        %6774 = vmatprep.subr.mxu0 0.0
        %6775 = vmatpush1.msra.mxu0 0.0
        %6776 = vmatprep.subr.mxu0 0.0
        %6777 = vmatpush1.msra.mxu0 0.0
        %6778 = vmatprep.subr.mxu0 0.0
        %6779 = vmatpush1.msra.mxu0 0.0
        %6780 = vmatprep.subr.mxu0 0.0
        %6781 = vmatpush1.msra.mxu0 0.0
        %6782 = vmatprep.subr.mxu0 0.0
        %6783 = vmatpush1.msra.mxu0 0.0
        %6784 = vmatprep.subr.mxu0 0.0
        %6785 = vmatpush1.msra.mxu0 0.0
        %6786 = vmatprep.subr.mxu0 0.0
        %6787 = vmatpush1.msra.mxu0 0.0
        %6788 = vmatprep.subr.mxu0 0.0
        %6789 = vmatpush1.msra.mxu0 0.0
        %6790 = vmatprep.subr.mxu0 0.0
        %6791 = vmatpush1.msra.mxu0 0.0
        %6792 = vmatprep.subr.mxu0 0.0
        %6793 = vmatpush1.msra.mxu0 0.0
        %6794 = vmatprep.subr.mxu0 0.0
        %6795 = vmatpush1.msra.mxu0 0.0
        %6796 = vmatprep.subr.mxu0 0.0
        %6797 = vmatpush1.msra.mxu0 0.0
        %6798 = vmatprep.subr.mxu0 0.0
        %6799 = vmatpush1.msra.mxu0 0.0
        %6800 = vmatprep.subr.mxu0 0.0
        %6801 = vmatpush1.msra.mxu0 0.0
        %6802 = vmatprep.subr.mxu0 0.0
        %6803 = vmatpush1.msra.mxu0 0.0
        %6804 = vmatprep.subr.mxu0 0.0
        %6805 = vmatpush1.msra.mxu0 0.0
        %6806 = vmatprep.subr.mxu0 0.0
        %6807 = vmatpush1.msra.mxu0 0.0
        %6808 = vmatprep.subr.mxu0 0.0
        %6809 = vmatpush1.msra.mxu0 0.0
        %6810 = vmatprep.subr.mxu0 0.0
        %6811 = vmatpush1.msra.mxu0 0.0
        %6812 = vmatprep.subr.mxu0 0.0
        %6813 = vmatpush1.msra.mxu0 0.0
        %6814 = vmatprep.subr.mxu0 0.0
        %6815 = vmatpush1.msra.mxu0 0.0
        %6816 = vmatprep.subr.mxu0 0.0
        %6817 = vmatpush1.msra.mxu0 0.0
        %6818 = vmatprep.subr.mxu0 0.0
        %6819 = vmatpush1.msra.mxu0 0.0
        %6820 = vmatprep.mubr.f32.mxu0 0.0
        %6821 = vmatmul.mubr.f32.gmra.mrb[0].mxu0 %v6751
        %v6822 = vpop.f32.mrb[0].mxu0
        %v6823 = vadd.f32 0.0, %v6822
        %v6824 = vpop.f32.mrb[0].mxu0
        %6825 = vmatprep.mubr.f32.mxu0 0.0
        %6826 = vmatmul.mubr.f32.gmra.mrb[0].mxu0 %v6754
        %v6827 = vpop.f32.mrb[0].mxu0
        %v6828 = vadd.f32 0.0, %v6827
        %v6829 = vpop.f32.mrb[0].mxu0
        %6830 = vdwg.mxu0
        %v6831 = vstv %s6747
        %v6832 = vmul.f32 %v6831, %v6823
        %v6833 = vmul.f32 %v6831, %v6828
        %v6834 = vadd.f32 %v6745, %v6832
        %v6835 = vadd.f32 %v6746, %v6833
        %vm6836 = vcmask 23552
        %6837 = vst.msk [vmem:[#allocation2] sm:$0xff] %vm6836, 0.0
        %6838 = vst.msk [vmem:[#allocation2 + $0x48] sm:$0xff] %vm6836, 0.0
        %6841 = vrot.lane.b32.xlu0 %v6834, 3
        %v6842 = vpop.permute.xlu0 %6841
        %6843 = vrot.lane.b32.xlu0 %v6835, 3
        %v6844 = vpop.permute.xlu0 %6843
        %vm6847 = vcmask 56344
        %6848 = vst.msk [vmem:[#allocation2] sm:$0xff] %vm6847, %v6842
        %6849 = vst.msk [vmem:[#allocation2 + $0x48] sm:$0xff] %vm6847, %v6844
        %vm6850 = vcmask 80952
        %6851 = vst.msk [vmem:[#allocation2] sm:$0xff] %vm6850, 0.0
        %6852 = vst.msk [vmem:[#allocation2 + $0x48] sm:$0xff] %vm6850, 0.0
        %s6853 = scalar_lea.vmem %s7, 112
        %v6854 = vld [vmem:[%s6853] sm:$0xff]
        %v6855 = vld [vmem:[%s6853 + $0x8] sm:$0xff]
        %v6856 = vld [vmem:[#allocation2] sm:$0xff]
        %v6857 = vld [vmem:[#allocation2 + $0x48] sm:$0xff]
        %6859 = vset.pattern.permute.xlu0 0
        %6860 = vperm.xlu0 %6859, %v6854
        %v6861 = vpop.permute.xlu0 %6860
        %6864 = vset.pattern.permute.xlu0 0
        %6865 = vperm.xlu0 %6864, %v6855
        %v6866 = vpop.permute.xlu0 %6865
        %v6868 = vmul.f32 %v6856, %v6861
        %v6869 = vmul.f32 %v6857, %v6866
        %v6870 = vadd.f32 %v6868, 0.0
        %v6871 = vadd.f32 %v6869, 0.0
        %6872 = vset.pattern.permute.xlu0 1
        %6873 = vperm.xlu0 %6872, %v6854
        %v6874 = vpop.permute.xlu0 %6873
        %6876 = vset.pattern.permute.xlu0 1
        %6877 = vperm.xlu0 %6876, %v6855
        %v6878 = vpop.permute.xlu0 %6877
        %v6880 = vmul.f32 %v6856, %v6874
        %v6881 = vmul.f32 %v6857, %v6878
        %v6882 = vadd.f32 %v6880, 0.0
        %v6883 = vadd.f32 %v6881, 0.0
        %6884 = vset.pattern.permute.xlu0 2
        %6885 = vperm.xlu0 %6884, %v6854
        %v6886 = vpop.permute.xlu0 %6885
        %6888 = vset.pattern.permute.xlu0 2
        %6889 = vperm.xlu0 %6888, %v6855
        %v6890 = vpop.permute.xlu0 %6889
        %v6892 = vmul.f32 %v6856, %v6886
        %v6893 = vmul.f32 %v6857, %v6890
        %v6894 = vadd.f32 %v6892, 0.0
        %v6895 = vadd.f32 %v6893, 0.0
        %6896 = vset.pattern.permute.xlu0 3
        %6897 = vperm.xlu0 %6896, %v6854
        %v6898 = vpop.permute.xlu0 %6897
        %6900 = vset.pattern.permute.xlu0 3
        %6901 = vperm.xlu0 %6900, %v6855
        %v6902 = vpop.permute.xlu0 %6901
        %v6904 = vmul.f32 %v6856, %v6898
        %v6905 = vmul.f32 %v6857, %v6902
        %6908 = vrot.lane.b32.xlu0 %v6904, 126
        %v6909 = vpop.permute.xlu0 %6908
        %6910 = vrot.lane.b32.xlu0 %v6905, 126
        %v6911 = vpop.permute.xlu0 %6910
        %v6914 = vadd.f32 %v6870, %v6909
        %v6915 = vadd.f32 %v6871, %v6911
        %6916 = vset.pattern.permute.xlu0 4
        %6917 = vperm.xlu0 %6916, %v6854
        %v6918 = vpop.permute.xlu0 %6917
        %6920 = vset.pattern.permute.xlu0 4
        %6921 = vperm.xlu0 %6920, %v6855
        %v6922 = vpop.permute.xlu0 %6921
        %v6924 = vmul.f32 %v6856, %v6918
        %v6925 = vmul.f32 %v6857, %v6922
        %6928 = vrot.lane.b32.xlu0 %v6924, 126
        %v6929 = vpop.permute.xlu0 %6928
        %6930 = vrot.lane.b32.xlu0 %v6925, 126
        %v6931 = vpop.permute.xlu0 %6930
        %v6934 = vadd.f32 %v6882, %v6929
        %v6935 = vadd.f32 %v6883, %v6931
        %6936 = vset.pattern.permute.xlu0 5
        %6937 = vperm.xlu0 %6936, %v6854
        %v6938 = vpop.permute.xlu0 %6937
        %6940 = vset.pattern.permute.xlu0 5
        %6941 = vperm.xlu0 %6940, %v6855
        %v6942 = vpop.permute.xlu0 %6941
        %v6944 = vmul.f32 %v6856, %v6938
        %v6945 = vmul.f32 %v6857, %v6942
        %6948 = vrot.lane.b32.xlu0 %v6944, 126
        %v6949 = vpop.permute.xlu0 %6948
        %6950 = vrot.lane.b32.xlu0 %v6945, 126
        %v6951 = vpop.permute.xlu0 %6950
        %v6954 = vadd.f32 %v6894, %v6949
        %v6955 = vadd.f32 %v6895, %v6951
        %6956 = vset.pattern.permute.xlu0 6
        %6957 = vperm.xlu0 %6956, %v6854
        %v6958 = vpop.permute.xlu0 %6957
        %6960 = vset.pattern.permute.xlu0 6
        %6961 = vperm.xlu0 %6960, %v6855
        %v6962 = vpop.permute.xlu0 %6961
        %v6964 = vmul.f32 %v6856, %v6958
        %v6965 = vmul.f32 %v6857, %v6962
        %6968 = vrot.lane.b32.xlu0 %v6964, 124
        %v6969 = vpop.permute.xlu0 %6968
        %6970 = vrot.lane.b32.xlu0 %v6965, 124
        %v6971 = vpop.permute.xlu0 %6970
        %v6974 = vadd.f32 %v6914, %v6969
        %v6975 = vadd.f32 %v6915, %v6971
        %6976 = vset.pattern.permute.xlu0 7
        %6977 = vperm.xlu0 %6976, %v6854
        %v6978 = vpop.permute.xlu0 %6977
        %6980 = vset.pattern.permute.xlu0 7
        %6981 = vperm.xlu0 %6980, %v6855
        %v6982 = vpop.permute.xlu0 %6981
        %v6984 = vmul.f32 %v6856, %v6978
        %v6985 = vmul.f32 %v6857, %v6982
        %6988 = vrot.lane.b32.xlu0 %v6984, 124
        %v6989 = vpop.permute.xlu0 %6988
        %6990 = vrot.lane.b32.xlu0 %v6985, 124
        %v6991 = vpop.permute.xlu0 %6990
        %v6994 = vadd.f32 %v6934, %v6989
        %v6995 = vadd.f32 %v6935, %v6991
        %6996 = vset.pattern.permute.xlu0 8
        %6997 = vperm.xlu0 %6996, %v6854
        %v6998 = vpop.permute.xlu0 %6997
        %7000 = vset.pattern.permute.xlu0 8
        %7001 = vperm.xlu0 %7000, %v6855
        %v7002 = vpop.permute.xlu0 %7001
        %v7004 = vmul.f32 %v6856, %v6998
        %v7005 = vmul.f32 %v6857, %v7002
        %7008 = vrot.lane.b32.xlu0 %v7004, 124
        %v7009 = vpop.permute.xlu0 %7008
        %7010 = vrot.lane.b32.xlu0 %v7005, 124
        %v7011 = vpop.permute.xlu0 %7010
        %v7014 = vadd.f32 %v6954, %v7009
        %v7015 = vadd.f32 %v6955, %v7011
        %v7016 = vand.u32 %v1189, 1
        %vm7017 = vcmp.ne.s32.totalorder %v7016, 0
        %v7018 = vsel %vm7017, 1.0, 0.0
        %vm7019 = vcmp.ne.s32.totalorder %v7016, 1
        %v7020 = vsel %vm7019, 1.0, 0.0
        %v7021 = vmul.f32 %v6974, %v7018
        %v7022 = vmul.f32 %v6975, %v7018
        %7025 = vrot.lane.b32.xlu0 %v6994, 127
        %v7026 = vpop.permute.xlu0 %7025
        %7027 = vrot.lane.b32.xlu0 %v6995, 127
        %v7028 = vpop.permute.xlu0 %7027
        %v7031 = vadd.f32 %v7021, %v7026
        %v7032 = vadd.f32 %v7022, %v7028
        %7034 = vrot.lane.b32.xlu0 %v7020, 2
        %v7035 = vpop.permute.xlu0 %7034
        %v7037 = vmul.f32 %v7014, %v7035
        %v7038 = vmul.f32 %v7015, %v7035
        %7041 = vrot.lane.b32.xlu0 %v7037, 126
        %v7042 = vpop.permute.xlu0 %7041
        %7043 = vrot.lane.b32.xlu0 %v7038, 126
        %v7044 = vpop.permute.xlu0 %7043
        %v7047 = vadd.f32 %v7031, %v7042
        %v7048 = vadd.f32 %v7032, %v7044
        %s7049 = scalar_lea.vmem %s8, 112
        %v7050 = vld [vmem:[%s7049] sm:$0xff]
        %v7051 = vld [vmem:[%s7049 + $0x8] sm:$0xff]
        %7052 = vset.pattern.permute.xlu0 9
        %7053 = vperm.xlu0 %7052, %v6854
        %v7054 = vpop.permute.xlu0 %7053
        %7056 = vset.pattern.permute.xlu0 9
        %7057 = vperm.xlu0 %7056, %v6855
        %v7058 = vpop.permute.xlu0 %7057
        %v7061 = vsel %vm1233, %v7050, 0
        %v7064 = vsel %vm1233, %v7051, 0
        %7066 = vmatprep.subr.mxu0 0.0
        %7067 = vmatpush1.msra.mxu0 %v7047
        %7068 = vmatprep.subr.mxu0 0.0
        %7069 = vmatpush1.msra.mxu0 %v7048
        %7070 = vmatprep.subr.mxu0 0.0
        %7071 = vmatpush1.msra.mxu0 0.0
        %7072 = vmatprep.subr.mxu0 0.0
        %7073 = vmatpush1.msra.mxu0 0.0
        %7074 = vmatprep.subr.mxu0 0.0
        %7075 = vmatpush1.msra.mxu0 0.0
        %7076 = vmatprep.subr.mxu0 0.0
        %7077 = vmatpush1.msra.mxu0 0.0
        %7078 = vmatprep.subr.mxu0 0.0
        %7079 = vmatpush1.msra.mxu0 0.0
        %7080 = vmatprep.subr.mxu0 0.0
        %7081 = vmatpush1.msra.mxu0 0.0
        %7082 = vmatprep.subr.mxu0 0.0
        %7083 = vmatpush1.msra.mxu0 0.0
        %7084 = vmatprep.subr.mxu0 0.0
        %7085 = vmatpush1.msra.mxu0 0.0
        %7086 = vmatprep.subr.mxu0 0.0
        %7087 = vmatpush1.msra.mxu0 0.0
        %7088 = vmatprep.subr.mxu0 0.0
        %7089 = vmatpush1.msra.mxu0 0.0
        %7090 = vmatprep.subr.mxu0 0.0
        %7091 = vmatpush1.msra.mxu0 0.0
        %7092 = vmatprep.subr.mxu0 0.0
        %7093 = vmatpush1.msra.mxu0 0.0
        %7094 = vmatprep.subr.mxu0 0.0
        %7095 = vmatpush1.msra.mxu0 0.0
        %7096 = vmatprep.subr.mxu0 0.0
        %7097 = vmatpush1.msra.mxu0 0.0
        %7098 = vmatprep.subr.mxu0 0.0
        %7099 = vmatpush1.msra.mxu0 0.0
        %7100 = vmatprep.subr.mxu0 0.0
        %7101 = vmatpush1.msra.mxu0 0.0
        %7102 = vmatprep.subr.mxu0 0.0
        %7103 = vmatpush1.msra.mxu0 0.0
        %7104 = vmatprep.subr.mxu0 0.0
        %7105 = vmatpush1.msra.mxu0 0.0
        %7106 = vmatprep.subr.mxu0 0.0
        %7107 = vmatpush1.msra.mxu0 0.0
        %7108 = vmatprep.subr.mxu0 0.0
        %7109 = vmatpush1.msra.mxu0 0.0
        %7110 = vmatprep.subr.mxu0 0.0
        %7111 = vmatpush1.msra.mxu0 0.0
        %7112 = vmatprep.subr.mxu0 0.0
        %7113 = vmatpush1.msra.mxu0 0.0
        %7114 = vmatprep.subr.mxu0 0.0
        %7115 = vmatpush1.msra.mxu0 0.0
        %7116 = vmatprep.subr.mxu0 0.0
        %7117 = vmatpush1.msra.mxu0 0.0
        %7118 = vmatprep.subr.mxu0 0.0
        %7119 = vmatpush1.msra.mxu0 0.0
        %7120 = vmatprep.subr.mxu0 0.0
        %7121 = vmatpush1.msra.mxu0 0.0
        %7122 = vmatprep.subr.mxu0 0.0
        %7123 = vmatpush1.msra.mxu0 0.0
        %7124 = vmatprep.subr.mxu0 0.0
        %7125 = vmatpush1.msra.mxu0 0.0
        %7126 = vmatprep.subr.mxu0 0.0
        %7127 = vmatpush1.msra.mxu0 0.0
        %7128 = vmatprep.subr.mxu0 0.0
        %7129 = vmatpush1.msra.mxu0 0.0
        %7130 = vmatprep.mubr.f32.mxu0 0.0
        %7131 = vmatmul.mubr.f32.gmra.mrb[0].mxu0 %v7061
        %v7132 = vpop.f32.mrb[0].mxu0
        %v7133 = vadd.f32 %v7054, %v7132
        %v7134 = vpop.f32.mrb[0].mxu0
        %7135 = vmatprep.mubr.f32.mxu0 0.0
        %7136 = vmatmul.mubr.f32.gmra.mrb[0].mxu0 %v7064
        %v7137 = vpop.f32.mrb[0].mxu0
        %v7138 = vadd.f32 %v7058, %v7137
        %v7139 = vpop.f32.mrb[0].mxu0
        %7140 = vdwg.mxu0
        %v7141 = vmul.f32 %v7133, 0.01
        %v7142 = vmul.f32 %v7138, 0.01
        %v7143 = vmax.f32 %v7133, %v7141
        %v7144 = vmax.f32 %v7138, %v7142
        %7145 = vst [vmem:[%s842] sm:$0xff] %v4756
        %7146 = vst [vmem:[%s842 + $0x8] sm:$0xff] %v4757
        %7147 = vst [vmem:[%s842 + $0x10] sm:$0xff] %v4758
        %7148 = vst [vmem:[%s842 + $0x18] sm:$0xff] %v4759
        %7149 = vst [vmem:[%s842 + $0x20] sm:$0xff] %v4760
        %7150 = vst [vmem:[%s842 + $0x28] sm:$0xff] %v4761
        %7151 = vst [vmem:[%s842 + $0x30] sm:$0xff] %v4762
        %7152 = vst [vmem:[%s842 + $0x38] sm:$0xff] %v4763
        %7153 = vst [vmem:[%s842 + $0x40] sm:$0xff] %v4764
        %7154 = vst [vmem:[%s842 + $0x48] sm:$0xff] %v4765
        %7155 = vst [vmem:[%s842 + $0x50] sm:$0xff] %v4766
        %7156 = vst [vmem:[%s842 + $0x58] sm:$0xff] %v4767
        %7157 = vst [vmem:[%s842 + $0x60] sm:$0xff] %v4768
        %7158 = vst [vmem:[%s842 + $0x68] sm:$0xff] %v4769
        %7159 = vst [vmem:[%s842 + $0x70] sm:$0xff] %v4770
        %7160 = vst [vmem:[%s842 + $0x78] sm:$0xff] %v4771
        %7161 = vst [vmem:[%s849] sm:$0xff] %v5911
        %7162 = vst [vmem:[%s849 + $0x8] sm:$0xff] %v5912
        %7163 = vst [vmem:[%s849 + $0x10] sm:$0xff] %v5913
        %7164 = vst [vmem:[%s849 + $0x18] sm:$0xff] %v5914
        %7165 = vst.msk [vmem:[%s856] sm:$0xff] %vm1744, %v6333
        %7166 = vst.msk [vmem:[%s856 + $0x8] sm:$0xff] %vm1744, %v6334
        %7167 = vst.msk [vmem:[%s863] sm:$0xff] %vm1233, %v6735
        %7168 = vst.msk [vmem:[%s863 + $0x8] sm:$0xff] %vm1233, %v6736
        %7169 = vst.msk [vmem:[%s885] sm:$0xff] %vm918, %v7143
        %7170 = vst.msk [vmem:[%s885 + $0x8] sm:$0xff] %vm918, %v7144
        %s7171 = sand.u32 %s441, 1
        %s7172 = scalar_lea.sflag [#allocation5], %s7171
        %s7173 = sand.u32 %s441, 1
        %s7174 = smul.addr %s7173, 128
        %s7175 = scalar_lea.vmem [#allocation16], %s7174
        %s7176 = sand.u32 %s51, 1
        %s7177 = scalar_lea.sflag [#allocation18], %s7176
        %s7178 = sand.u32 %s467, 1
        %s7179 = smul.addr %s7178, 32
        %s7180 = scalar_lea.vmem [#allocation17], %s7179
        %s7181 = sand.u32 %s51, 1
        %s7182 = scalar_lea.sflag [#allocation18], %s7181
        %s7183 = sand.u32 %s493, 1
        %s7184 = smul.addr %s7183, 16
        %s7185 = scalar_lea.vmem [#allocation19], %s7184
        %s7186 = sand.u32 %s519, 1
        %s7187 = scalar_lea.sflag [#allocation21], %s7186
        %s7188 = sand.u32 %s519, 1
        %s7189 = smul.addr %s7188, 16
        %s7190 = scalar_lea.vmem [#allocation20], %s7189
        %p7191 = scmp.lt.s32.totalorder %s51, 1
        %s7192 = scalar_select %p7191, %s51, 1
        %s7193 = smul.addr %s7192, 2
        %s7194 = smul.addr %s7193, 8
        %s7195 = scalar_lea.vmem %s21, %s7194
        // Predicated region
        $region117: #{tpu_custom_call.1} parent=87 // pred_check
          %p7196 = pneg %p451
        $region118: #{tpu_custom_call.1} parent=87 // pred_check_branch
          %7198 = sbr.rel (%p7196) target = $region120
        $region119: #{tpu_custom_call.1} parent=87 // pred_region
          %s7200 = ssub.s32 2048, 2048
          %7201 = vsyncadd %s7172, %s7200
          %s7202 = smul.addr %s51, 16
          %s7203 = smul.addr %s7202, 128
          %s7204 = scalar_lea.hbm %s17, %s7203
          %s7205 = sshll.u32 %s7175, 4
          %s7206 = int_to_ptr.vmem [resolvable:$true] %s7205
          %7211 = dma.vmem_to_hbm [thread:$0]  %s7206, 2048, %s7204, %s7172, 1024, 1024, 64
        $region120: #{tpu_custom_call.1} parent=87 // pred_fallthru
          _
        // Predicated region
        $region121: #{tpu_custom_call.1} parent=87 // pred_check
          %p7212 = pneg %p477
        $region122: #{tpu_custom_call.1} parent=87 // pred_check_branch
          %7214 = sbr.rel (%p7212) target = $region124
        $region123: #{tpu_custom_call.1} parent=87 // pred_region
          %s7216 = ssub.s32 512, 512
          %7217 = vsyncadd %s7177, %s7216
          %s7218 = smul.addr %s51, 4
          %s7219 = smul.addr %s7218, 128
          %s7220 = scalar_lea.hbm %s18, %s7219
          %s7221 = sshll.u32 %s7180, 4
          %s7222 = int_to_ptr.vmem [resolvable:$true] %s7221
          %7227 = dma.vmem_to_hbm [thread:$0]  %s7222, 512, %s7220, %s7177, 256, 256, 16
        $region124: #{tpu_custom_call.1} parent=87 // pred_fallthru
          _
        // Predicated region
        $region125: #{tpu_custom_call.1} parent=87 // pred_check
          %p7228 = pneg %p503
        $region126: #{tpu_custom_call.1} parent=87 // pred_check_branch
          %7230 = sbr.rel (%p7228) target = $region128
        $region127: #{tpu_custom_call.1} parent=87 // pred_region
          %s7232 = ssub.s32 256, 256
          %7233 = vsyncadd %s7182, %s7232
          %s7234 = smul.addr %s51, 2
          %s7235 = smul.addr %s7234, 128
          %s7236 = scalar_lea.hbm %s19, %s7235
          %s7237 = sshll.u32 %s7185, 4
          %s7238 = int_to_ptr.vmem [resolvable:$true] %s7237
          %7243 = dma.vmem_to_hbm [thread:$0]  %s7238, 256, %s7236, %s7182, 128, 128, 8
        $region128: #{tpu_custom_call.1} parent=87 // pred_fallthru
          _
        // Predicated region
        $region129: #{tpu_custom_call.1} parent=87 // pred_check
          %p7244 = pneg %p529
        $region130: #{tpu_custom_call.1} parent=87 // pred_check_branch
          %7246 = sbr.rel (%p7244) target = $region132
        $region131: #{tpu_custom_call.1} parent=87 // pred_region
          %s7248 = ssub.s32 256, 256
          %7249 = vsyncadd %s7187, %s7248
          %s7250 = smul.addr %s51, 2
          %s7251 = smul.addr %s7250, 128
          %s7252 = scalar_lea.hbm %s20, %s7251
          %s7253 = sshll.u32 %s7190, 4
          %s7254 = int_to_ptr.vmem [resolvable:$true] %s7253
          %7259 = dma.vmem_to_hbm [thread:$0]  %s7254, 256, %s7252, %s7187, 128, 128, 8
        $region132: #{tpu_custom_call.1} parent=87 // pred_fallthru
          _
        // Predicated region
        $region133: #{tpu_custom_call.1} parent=87 // pred_check
          %p7260 = pneg %p555
        $region134: #{tpu_custom_call.1} parent=87 // pred_check_branch
          %7262 = sbr.rel (%p7260) target = $region136
        $region135: #{tpu_custom_call.1} parent=87 // pred_region
          _
        $region136: #{tpu_custom_call.1} parent=87 // pred_fallthru
          _
      $region88: #{tpu_custom_call.1} parent=5 // pred_fallthru
        _
      %p7263 = scmp.le.s32.totalorder 2, %s46
      // Predicated region
      $region137: #{tpu_custom_call.1} parent=5 // pred_check
        %p7264 = pneg %p7263
      $region138: #{tpu_custom_call.1} parent=5 // pred_check_branch
        %7266 = sbr.rel (%p7264) target = $region140
      $region139: #{tpu_custom_call.1} parent=5 // pred_region
        %s7267 = ssub.s32 %s46, 2
        // Predicated region
        $region141: #{tpu_custom_call.1} parent=139 // pred_check
          %p7268 = pneg %p457
        $region142: #{tpu_custom_call.1} parent=139 // pred_check_branch
          %7270 = sbr.rel (%p7268) target = $region144
        $region143: #{tpu_custom_call.1} parent=139 // pred_region
          %s7271 = sand.u32 %s442, 1
          %s7272 = scalar_lea.sflag [#allocation5], %s7271
          %s7273 = sand.u32 %s442, 1
          %s7274 = smul.addr %s7273, 128
          %s7275 = scalar_lea.vmem [#allocation16], %s7274
          %7276 = dma.done %s7272, 2048
        $region144: #{tpu_custom_call.1} parent=139 // pred_fallthru
          _
        // Predicated region
        $region145: #{tpu_custom_call.1} parent=139 // pred_check
          %p7277 = pneg %p483
        $region146: #{tpu_custom_call.1} parent=139 // pred_check_branch
          %7279 = sbr.rel (%p7277) target = $region148
        $region147: #{tpu_custom_call.1} parent=139 // pred_region
          %s7280 = sand.u32 %s52, 1
          %s7281 = scalar_lea.sflag [#allocation18], %s7280
          %s7282 = sand.u32 %s468, 1
          %s7283 = smul.addr %s7282, 32
          %s7284 = scalar_lea.vmem [#allocation17], %s7283
          %7285 = dma.done %s7281, 512
        $region148: #{tpu_custom_call.1} parent=139 // pred_fallthru
          _
        // Predicated region
        $region149: #{tpu_custom_call.1} parent=139 // pred_check
          %p7286 = pneg %p509
        $region150: #{tpu_custom_call.1} parent=139 // pred_check_branch
          %7288 = sbr.rel (%p7286) target = $region152
        $region151: #{tpu_custom_call.1} parent=139 // pred_region
          %s7289 = sand.u32 %s52, 1
          %s7290 = scalar_lea.sflag [#allocation18], %s7289
          %s7291 = sand.u32 %s494, 1
          %s7292 = smul.addr %s7291, 16
          %s7293 = scalar_lea.vmem [#allocation19], %s7292
          %7294 = dma.done %s7290, 256
        $region152: #{tpu_custom_call.1} parent=139 // pred_fallthru
          _
        // Predicated region
        $region153: #{tpu_custom_call.1} parent=139 // pred_check
          %p7295 = pneg %p535
        $region154: #{tpu_custom_call.1} parent=139 // pred_check_branch
          %7297 = sbr.rel (%p7295) target = $region156
        $region155: #{tpu_custom_call.1} parent=139 // pred_region
          %s7298 = sand.u32 %s520, 1
          %s7299 = scalar_lea.sflag [#allocation21], %s7298
          %s7300 = sand.u32 %s520, 1
          %s7301 = smul.addr %s7300, 16
          %s7302 = scalar_lea.vmem [#allocation20], %s7301
          %7303 = dma.done %s7299, 256
        $region156: #{tpu_custom_call.1} parent=139 // pred_fallthru
          _
        // Predicated region
        $region157: #{tpu_custom_call.1} parent=139 // pred_check
          %p7304 = pneg %p561
        $region158: #{tpu_custom_call.1} parent=139 // pred_check_branch
          %7306 = sbr.rel (%p7304) target = $region160
        $region159: #{tpu_custom_call.1} parent=139 // pred_region
          %p7307 = scmp.lt.s32.totalorder %s52, 1
          %s7308 = scalar_select %p7307, %s52, 1
          %s7309 = smul.addr %s7308, 2
          %s7310 = smul.addr %s7309, 8
          %s7311 = scalar_lea.vmem %s21, %s7310
        $region160: #{tpu_custom_call.1} parent=139 // pred_fallthru
          _
      $region140: #{tpu_custom_call.1} parent=5 // pred_fallthru
        _
    $region6: #{tpu_custom_call.1} parent=1 // loop_footer
      %s50 = sadd.s32 1, %s46
    $region7: #{tpu_custom_call.1} parent=1 // loop_footer_branch
      %45 = sbr.rel target = $region3
    $region8: #{tpu_custom_call.1} parent=1 // loop_exit
      _
    %7312 = vsyncpa [#allocation4], 1
    %s7313 = scalar_lea.sflag [#allocation4], 1
    %7314 = vsyncpa %s7313, 1
    %7315 = vsyncpa [#allocation11], 1
    %s7316 = scalar_lea.sflag [#allocation11], 1
    %7317 = vsyncpa %s7316, 1
    %7318 = vsyncpa [#allocation14], 1
    %7319 = vsyncpa [#allocation5], 1
    %s7320 = scalar_lea.sflag [#allocation5], 1
    %7321 = vsyncpa %s7320, 1
    %7322 = vsyncpa [#allocation18], 1
    %s7323 = scalar_lea.sflag [#allocation18], 1
    %7324 = vsyncpa %s7323, 1
    %7325 = vsyncpa [#allocation21], 1
    %s7326 = scalar_lea.sflag [#allocation21], 1
    %7327 = vsyncpa %s7326, 1
    %7328 = vsyncpa [#allocation6], 1
    %s7329 = scalar_lea.sflag [#allocation6], 1
    %7330 = vsyncpa %s7329, 1
    %7331 = vsyncpa [#allocation7], 1
    %s7332 = scalar_lea.sflag [#allocation7], 1
    %7333 = vsyncpa %s7332, 1

</llo_original>
